<compile_context>
chip_gen: v6e
topology: v6e:2x2x1
jax: 0.10.0
libtpu: 0.0.40
codegen_flags: <defaults>
</compile_context>

<pallas_src>
import functools
import math

import jax
import jax.numpy as jnp
from jax.experimental import pallas as pl
from jax.experimental.pallas import tpu as pltpu

BF16 = jnp.bfloat16


# ----------------------------------------------------------------------------
# The fused forward kernel (GNN encoder + transformer stack + classifier)
# ----------------------------------------------------------------------------

def _forward_kernel(
    adj_ref, x_ref,
    c1_iw, c1_wblk, c1_root, c1_bias,
    c2_iw, c2_wblk, c2_root, c2_bias,
    c3_iw, c3_wblk, c3_root, c3_bias,
    bn_g, bn_b,
    wqkv, bqkv, wo, bo,
    ln1_g, ln1_b, w1, b1, w2, b2, ln2_g, ln2_b,
    clf_w, clf_b,
    o_ref,
    *, K, T, L, nhead, B, S, eps):
    f32 = jnp.float32
    adj = adj_ref[...]                                   # (N, N) bf16, loaded once

    # ---- ARMAConv with the K stacks batched along the lane axis -------------
    # TODO(synk): for large N, tile the adjacency by rows (BlockSpec (tn, N),
    # grid over row tiles marked "parallel") and reduce the BatchNorm batch
    # stats across tiles; the dense full-block adj only fits v7x VMEM for
    # small graphs.
    def arma_conv(x0, iw_ref, wblk_ref, root_ref, bias_ref):
        x0b = x0.astype(BF16)
        KF = iw_ref.shape[-1]                            # K * Fout
        fout = KF // K
        # all T root/skip terms in ONE matmul: (N, Fin) @ (Fin, T*K*Fout)
        roots = jnp.dot(x0b, root_ref[...], preferred_element_type=f32)
        state = None
        for t in range(T):
            if t == 0:
                xw = jnp.dot(x0b, iw_ref[...], preferred_element_type=f32)
            else:
                # block-diagonal (K*Fout, K*Fout): all K recursions in ONE matmul
                xw = jnp.dot(state.astype(BF16), wblk_ref[t - 1],
                             preferred_element_type=f32)
            prop = jnp.dot(adj, xw.astype(BF16), preferred_element_type=f32)
            out = prop + roots[:, t * KF:(t + 1) * KF] + bias_ref[t]
            state = jnp.maximum(out, 0.0)                # ARMA act = ReLU (f32)
        acc = state[:, 0:fout]
        for k in range(1, K):
            acc = acc + state[:, k * fout:(k + 1) * fout]
        return acc * (1.0 / K)                           # mean over stacks

    x0 = x_ref[...]
    h = jnp.maximum(arma_conv(x0, c1_iw, c1_wblk, c1_root, c1_bias), 0.0)
    h = jnp.maximum(arma_conv(h, c2_iw, c2_wblk, c2_root, c2_bias), 0.0)
    h = arma_conv(h, c3_iw, c3_wblk, c3_root, c3_bias)

    # ---- BatchNorm1d (batch stats, biased var) + ReLU, f32 -------------------
    # TODO(synk): running-stat updates of BatchNorm are not tracked.
    mu = jnp.mean(h, axis=0, keepdims=True)
    var = jnp.mean((h - mu) ** 2, axis=0, keepdims=True)
    h = (h - mu) * jax.lax.rsqrt(var + eps) * bn_g[...] + bn_b[...]
    h = jnp.maximum(h, 0.0)                              # (N, D) f32

    # ---- Transformer encoder stack (post-LN, dropout = identity) -------------
    D = h.shape[-1]
    dh = D // nhead
    scale = 1.0 / math.sqrt(dh)
    for l in range(L):
        hb = h.astype(BF16)
        # fused Q/K/V projection for all graphs & heads: (N, D) @ (D, 3D)
        qkv = jnp.dot(hb, wqkv[l], preferred_element_type=f32) + bqkv[l]
        graph_out = []
        for b in range(B):                               # per-graph softmax block
            r0 = b * S
            head_out = []
            for hd in range(nhead):
                c0 = hd * dh
                q_h = qkv[r0:r0 + S, c0:c0 + dh].astype(BF16)
                k_h = qkv[r0:r0 + S, D + c0:D + c0 + dh].astype(BF16)
                v_h = qkv[r0:r0 + S, 2 * D + c0:2 * D + c0 + dh].astype(BF16)
                sc = jax.lax.dot_general(q_h, k_h, (((1,), (1,)), ((), ())),
                                         preferred_element_type=f32) * scale
                sc = sc - jnp.max(sc, axis=-1, keepdims=True)
                p = jnp.exp(sc)
                # EUP approx reciprocal: rows sum to 1 within ~1e-3 (inference-ok)
                p = p * pl.reciprocal(jnp.sum(p, axis=-1, keepdims=True),
                                      approx=True)
                head_out.append(jnp.dot(p.astype(BF16), v_h,
                                        preferred_element_type=f32))
            graph_out.append(jnp.concatenate(head_out, axis=-1))   # (S, D)
        attn = jnp.concatenate(graph_out, axis=0)                  # (N, D)
        # fused output projection: concat(heads) @ Wo
        attn = jnp.dot(attn.astype(BF16), wo[l], preferred_element_type=f32) + bo[l]

        # residual + LayerNorm 1 (f32)
        y = h + attn
        m1 = jnp.mean(y, axis=-1, keepdims=True)
        v1 = jnp.mean((y - m1) ** 2, axis=-1, keepdims=True)
        x1 = (y - m1) * jax.lax.rsqrt(v1 + eps) * ln1_g[l] + ln1_b[l]

        # FFN: the (N, 2048) intermediate never leaves VMEM/vregs.
        # TODO(synk): chunk dff into accumulated 512-wide pieces once N grows
        # beyond ~64 rows to bound live VMEM (matters on v7x's 64 MiB).
        hmid = jnp.maximum(
            jnp.dot(x1.astype(BF16), w1[l], preferred_element_type=f32) + b1[l], 0.0)
        ff = jnp.dot(hmid.astype(BF16), w2[l], preferred_element_type=f32) + b2[l]

        # residual + LayerNorm 2 (f32)
        y2 = x1 + ff
        m2 = jnp.mean(y2, axis=-1, keepdims=True)
        v2 = jnp.mean((y2 - m2) ** 2, axis=-1, keepdims=True)
        h = (y2 - m2) * jax.lax.rsqrt(v2 + eps) * ln2_g[l] + ln2_b[l]

    # ---- classifier: lane-dense 128-wide zero-padded logits ------------------
    o_ref[...] = (jnp.dot(h.astype(BF16), clf_w[...], preferred_element_type=f32)
                  + clf_b[...])


def _full_spec(shape):
    ndim = len(shape)
    return pl.BlockSpec(shape, lambda i, _ndim=ndim: (0,) * _ndim)


def fused_forward(adj, x, p, *, num_stacks, nhead, num_graphs, eps=1e-5):
    """Entire GNNArmaTransformer forward as a single pallas_call."""
    N = x.shape[0]
    T = p["c1_bias"].shape[0]
    L = p["wqkv"].shape[0]
    S = N // num_graphs
    n_pad = p["clf_w_pad"].shape[-1]

    args = [adj, x,
            p["c1_iw"], p["c1_wblk"], p["c1_root"], p["c1_bias"],
            p["c2_iw"], p["c2_wblk"], p["c2_root"], p["c2_bias"],
            p["c3_iw"], p["c3_wblk"], p["c3_root"], p["c3_bias"],
            p["bn_g"], p["bn_b"],
            p["wqkv"], p["bqkv"], p["wo"], p["bo"],
            p["ln1_g"], p["ln1_b"], p["w1"], p["b1"], p["w2"], p["b2"],
            p["ln2_g"], p["ln2_b"],
            p["clf_w_pad"], p["clf_b_pad"]]

    kern = functools.partial(_forward_kernel, K=num_stacks, T=T, L=L,
                             nhead=nhead, B=num_graphs, S=S, eps=eps)
    # grid=(1,): one invocation, every operand a full-array VMEM block.  With a
    # single step there is no revolving double-buffer churn on the weights.
    return pl.pallas_call(
        kern,
        out_shape=jax.ShapeDtypeStruct((N, n_pad), jnp.float32),
        grid=(1,),
        in_specs=[_full_spec(a.shape) for a in args],
        out_specs=_full_spec((N, n_pad)),
        compiler_params=pltpu.CompilerParams(dimension_semantics=("arbitrary",)),
    )(*args)


# ----------------------------------------------------------------------------
# Model glue (plain JAX, inside jit)
# ----------------------------------------------------------------------------

def build_norm_adj(edge_index, weights, num_nodes):
    """PyG gcn_norm with add_self_loops=False; A[i, j] = norm for edge j -> i."""
    # TODO(synk): scatter-based dense adjacency build has no clean Pallas
    # equivalent (XLA scatter-add, duplicate edges summed); ignores sparsity.
    row, col = edge_index[0], edge_index[1]
    deg = jnp.zeros((num_nodes,), jnp.float32).at[col].add(weights)
    dinv = jnp.where(deg > 0, jax.lax.rsqrt(deg), 0.0)
    norm = dinv[row] * weights * dinv[col]
    adj = jnp.zeros((num_nodes, num_nodes), jnp.float32).at[col, row].add(norm)
    return adj


@functools.partial(jax.jit,
                   static_argnames=("num_graphs", "nhead", "num_stacks", "n_classes"))
def gnn_arma_transformer(x, edge_index, weights, batch, params, *,
                         num_graphs, nhead, num_stacks, n_classes):
    del batch  # B is static (num_graphs): no int(batch.max()) host sync.
    n_total = x.shape[0]
    adj = build_norm_adj(edge_index, weights, n_total).astype(BF16)
    logits_pad = fused_forward(adj, x.astype(BF16), params,
                               num_stacks=num_stacks, nhead=nhead,
                               num_graphs=num_graphs)
    return logits_pad[:, :n_classes]          # static slice of the padded slab


# ----------------------------------------------------------------------------
# Deterministic parameter init (kernel-ready shapes: flattened / block-diag /
# stacked-over-layers, bf16 for MXU operands, f32 for bias/LN/BN vectors)
# ----------------------------------------------------------------------------

def init_params(key, in_c, hid_c, out_c, K, T, nhead, tx_layers,
                dff=2048, n_classes=2, pad_lanes=128):
    ks = iter(jax.random.split(key, 64))

    def w(shape, scale=0.1):
        return scale * jax.random.normal(next(ks), shape, jnp.float32)

    def arma_pack(prefix, fin, fout):
        KF = K * fout
        iw = w((K, fin, fout))                       # t=0 input weights
        wt = w((max(1, T - 1), K, fout, fout))       # t>=1 recursion weights
        rt = w((T, K, fin, fout))                    # root / skip weights
        bs = w((T, K, 1, fout), scale=0.01)
        # stacks flattened along lanes: column block k <-> stack k
        iw_flat = jnp.transpose(iw, (1, 0, 2)).reshape(fin, KF)
        wblk = jnp.zeros((max(1, T - 1), KF, KF), jnp.float32)
        for t in range(max(1, T - 1)):
            for k in range(K):
                wblk = wblk.at[t, k * fout:(k + 1) * fout,
                               k * fout:(k + 1) * fout].set(wt[t, k])
        rt_flat = jnp.transpose(rt, (0, 2, 1, 3)).reshape(T, fin, KF)
        rt_flat = jnp.transpose(rt_flat, (1, 0, 2)).reshape(fin, T * KF)
        bs_flat = jnp.transpose(bs, (0, 2, 1, 3)).reshape(T, 1, KF)
        return {
            f"{prefix}_iw": iw_flat.astype(BF16),
            f"{prefix}_wblk": wblk.astype(BF16),
            f"{prefix}_root": rt_flat.astype(BF16),
            f"{prefix}_bias": bs_flat,               # f32, added post-matmul
        }

    D = out_c
    params = {}
    params.update(arma_pack("c1", in_c, hid_c))
    params.update(arma_pack("c2", hid_c, hid_c))
    params.update(arma_pack("c3", hid_c, out_c))
    params["bn_g"] = jnp.ones((1, out_c), jnp.float32)
    params["bn_b"] = jnp.zeros((1, out_c), jnp.float32)

    L = tx_layers
    params.update(dict(
        wqkv=w((L, D, 3 * D)).astype(BF16),          # fused Q/K/V projection
        bqkv=jnp.zeros((L, 1, 3 * D), jnp.float32),
        wo=w((L, D, D)).astype(BF16),                # fused output projection
        bo=jnp.zeros((L, 1, D), jnp.float32),
        ln1_g=jnp.ones((L, 1, D), jnp.float32),
        ln1_b=jnp.zeros((L, 1, D), jnp.float32),
        w1=w((L, D, dff), scale=0.05).astype(BF16),
        b1=jnp.zeros((L, 1, dff), jnp.float32),
        w2=w((L, dff, D), scale=0.05).astype(BF16),
        b2=jnp.zeros((L, 1, D), jnp.float32),
        ln2_g=jnp.ones((L, 1, D), jnp.float32),
        ln2_b=jnp.zeros((L, 1, D), jnp.float32),
    ))

    clf_w = w((D, n_classes))
    clf_w_pad = jnp.zeros((D, pad_lanes), jnp.float32).at[:, :n_classes].set(clf_w)
    params["clf_w_pad"] = clf_w_pad.astype(BF16)
    params["clf_b_pad"] = jnp.zeros((1, pad_lanes), jnp.float32)
    # NOTE: no Python scalars in this pytree (n_classes is a static jit arg).
    return params


# ----------------------------------------------------------------------------
# Main
# ----------------------------------------------------------------------------

if __name__ == "__main__":
    key = jax.random.PRNGKey(0)
    k_x, k_w, k_p = jax.random.split(key, 3)

    B, S = 2, 8                          # 2 graphs, 8 nodes each
    in_c, hid_c, out_c = 8, 16, 16       # out_c divisible by transformer_heads=4
    num_stacks, num_layers = 3, 2
    transformer_heads, transformer_layers = 4, 2
    n_total = B * S

    x = jax.random.normal(k_x, (n_total, in_c), jnp.float32)

    # bidirectional ring within each graph
    src, dst = [], []
    for b in range(B):
        for i in range(S):
            u = b * S + i
            v = b * S + (i + 1) % S
            src += [u, v]
            dst += [v, u]
    edge_index = jnp.array([src, dst], dtype=jnp.int32)      # [2, E]
    E = edge_index.shape[1]
    weights = jax.random.uniform(k_w, (E,), jnp.float32, 0.5, 1.5)
    batch = jnp.repeat(jnp.arange(B, dtype=jnp.int32), S)

    params = init_params(k_p, in_c, hid_c, out_c, num_stacks, num_layers,
                         transformer_heads, transformer_layers)

    logits = gnn_arma_transformer(x, edge_index, weights, batch, params,
                                  num_graphs=B, nhead=transformer_heads,
                                  num_stacks=num_stacks, n_classes=2)
    jax.block_until_ready(logits)
    assert logits.shape == (n_total, 2), logits.shape
    assert bool(jnp.all(jnp.isfinite(logits)))
    print("KERNEL_OK")
</pallas_src>

<mosaic_0001>
module attributes {stable_mosaic.version = 11 : i64} {
  func.func private @main(%arg0: i32) attributes {dimension_semantics = [#tpu.dimension_semantics<core_parallel>], iteration_bounds = array<i64: 2>, tpu.core_type = #tpu.core_type<sc_scalar_subcore>, window_params = []} {
    return
  }
}

module attributes {stable_mosaic.version = 11 : i64} {
  func.func private @main(%arg0: i32) attributes {dimension_semantics = [#tpu.dimension_semantics<core_parallel>], iteration_bounds = array<i64: 2>, tpu.core_type = #tpu.core_type<sc_scalar_subcore>, window_params = []} {
    return
  }
}

module attributes {stable_mosaic.version = 11 : i64} {
  func.func @_forward_kernel(%arg0: i32, %arg1: memref<16x16xbf16, #tpu.memory_space<vmem>>, %arg2: memref<16x8xbf16, #tpu.memory_space<vmem>>, %arg3: memref<8x48xbf16, #tpu.memory_space<vmem>>, %arg4: memref<1x48x48xbf16, #tpu.memory_space<vmem>>, %arg5: memref<8x96xbf16, #tpu.memory_space<vmem>>, %arg6: memref<2x1x48xf32, #tpu.memory_space<vmem>>, %arg7: memref<16x48xbf16, #tpu.memory_space<vmem>>, %arg8: memref<1x48x48xbf16, #tpu.memory_space<vmem>>, %arg9: memref<16x96xbf16, #tpu.memory_space<vmem>>, %arg10: memref<2x1x48xf32, #tpu.memory_space<vmem>>, %arg11: memref<16x48xbf16, #tpu.memory_space<vmem>>, %arg12: memref<1x48x48xbf16, #tpu.memory_space<vmem>>, %arg13: memref<16x96xbf16, #tpu.memory_space<vmem>>, %arg14: memref<2x1x48xf32, #tpu.memory_space<vmem>>, %arg15: memref<1x16xf32, #tpu.memory_space<vmem>>, %arg16: memref<1x16xf32, #tpu.memory_space<vmem>>, %arg17: memref<2x16x48xbf16, #tpu.memory_space<vmem>>, %arg18: memref<2x1x48xf32, #tpu.memory_space<vmem>>, %arg19: memref<2x16x16xbf16, #tpu.memory_space<vmem>>, %arg20: memref<2x1x16xf32, #tpu.memory_space<vmem>>, %arg21: memref<2x1x16xf32, #tpu.memory_space<vmem>>, %arg22: memref<2x1x16xf32, #tpu.memory_space<vmem>>, %arg23: memref<2x16x2048xbf16, #tpu.memory_space<vmem>>, %arg24: memref<2x1x2048xf32, #tpu.memory_space<vmem>>, %arg25: memref<2x2048x16xbf16, #tpu.memory_space<vmem>>, %arg26: memref<2x1x16xf32, #tpu.memory_space<vmem>>, %arg27: memref<2x1x16xf32, #tpu.memory_space<vmem>>, %arg28: memref<2x1x16xf32, #tpu.memory_space<vmem>>, %arg29: memref<16x128xbf16, #tpu.memory_space<vmem>>, %arg30: memref<1x128xf32, #tpu.memory_space<vmem>>, %arg31: memref<16x128xf32, #tpu.memory_space<vmem>>) attributes {dimension_semantics = [#tpu.dimension_semantics<arbitrary>], iteration_bounds = array<i64: 1>, scalar_prefetch = 0 : i64, scratch_operands = 0 : i64, tpu.core_type = #tpu.core_type<tc>, window_params = [{pipeline_mode = #tpu.pipeline_mode<synchronous>, transform_indices = @transform_0, window_bounds = array<i64: 16, 16>}, {pipeline_mode = #tpu.pipeline_mode<synchronous>, transform_indices = @transform_1, window_bounds = array<i64: 16, 8>}, {pipeline_mode = #tpu.pipeline_mode<synchronous>, transform_indices = @transform_2, window_bounds = array<i64: 8, 48>}, {pipeline_mode = #tpu.pipeline_mode<synchronous>, transform_indices = @transform_3, window_bounds = array<i64: 1, 48, 48>}, {pipeline_mode = #tpu.pipeline_mode<synchronous>, transform_indices = @transform_4, window_bounds = array<i64: 8, 96>}, {pipeline_mode = #tpu.pipeline_mode<synchronous>, transform_indices = @transform_5, window_bounds = array<i64: 2, 1, 48>}, {pipeline_mode = #tpu.pipeline_mode<synchronous>, transform_indices = @transform_6, window_bounds = array<i64: 16, 48>}, {pipeline_mode = #tpu.pipeline_mode<synchronous>, transform_indices = @transform_7, window_bounds = array<i64: 1, 48, 48>}, {pipeline_mode = #tpu.pipeline_mode<synchronous>, transform_indices = @transform_8, window_bounds = array<i64: 16, 96>}, {pipeline_mode = #tpu.pipeline_mode<synchronous>, transform_indices = @transform_9, window_bounds = array<i64: 2, 1, 48>}, {pipeline_mode = #tpu.pipeline_mode<synchronous>, transform_indices = @transform_10, window_bounds = array<i64: 16, 48>}, {pipeline_mode = #tpu.pipeline_mode<synchronous>, transform_indices = @transform_11, window_bounds = array<i64: 1, 48, 48>}, {pipeline_mode = #tpu.pipeline_mode<synchronous>, transform_indices = @transform_12, window_bounds = array<i64: 16, 96>}, {pipeline_mode = #tpu.pipeline_mode<synchronous>, transform_indices = @transform_13, window_bounds = array<i64: 2, 1, 48>}, {pipeline_mode = #tpu.pipeline_mode<synchronous>, transform_indices = @transform_14, window_bounds = array<i64: 1, 16>}, {pipeline_mode = #tpu.pipeline_mode<synchronous>, transform_indices = @transform_15, window_bounds = array<i64: 1, 16>}, {pipeline_mode = #tpu.pipeline_mode<synchronous>, transform_indices = @transform_16, window_bounds = array<i64: 2, 16, 48>}, {pipeline_mode = #tpu.pipeline_mode<synchronous>, transform_indices = @transform_17, window_bounds = array<i64: 2, 1, 48>}, {pipeline_mode = #tpu.pipeline_mode<synchronous>, transform_indices = @transform_18, window_bounds = array<i64: 2, 16, 16>}, {pipeline_mode = #tpu.pipeline_mode<synchronous>, transform_indices = @transform_19, window_bounds = array<i64: 2, 1, 16>}, {pipeline_mode = #tpu.pipeline_mode<synchronous>, transform_indices = @transform_20, window_bounds = array<i64: 2, 1, 16>}, {pipeline_mode = #tpu.pipeline_mode<synchronous>, transform_indices = @transform_21, window_bounds = array<i64: 2, 1, 16>}, {pipeline_mode = #tpu.pipeline_mode<synchronous>, transform_indices = @transform_22, window_bounds = array<i64: 2, 16, 2048>}, {pipeline_mode = #tpu.pipeline_mode<synchronous>, transform_indices = @transform_23, window_bounds = array<i64: 2, 1, 2048>}, {pipeline_mode = #tpu.pipeline_mode<synchronous>, transform_indices = @transform_24, window_bounds = array<i64: 2, 2048, 16>}, {pipeline_mode = #tpu.pipeline_mode<synchronous>, transform_indices = @transform_25, window_bounds = array<i64: 2, 1, 16>}, {pipeline_mode = #tpu.pipeline_mode<synchronous>, transform_indices = @transform_26, window_bounds = array<i64: 2, 1, 16>}, {pipeline_mode = #tpu.pipeline_mode<synchronous>, transform_indices = @transform_27, window_bounds = array<i64: 2, 1, 16>}, {pipeline_mode = #tpu.pipeline_mode<synchronous>, transform_indices = @transform_28, window_bounds = array<i64: 16, 128>}, {pipeline_mode = #tpu.pipeline_mode<synchronous>, transform_indices = @transform_29, window_bounds = array<i64: 1, 128>}, {pipeline_mode = #tpu.pipeline_mode<synchronous>, transform_indices = @transform_30, window_bounds = array<i64: 16, 128>}]} {
    %c0 = arith.constant 0 : index
    %c0_0 = arith.constant 0 : index
    %0 = vector.load %arg1[%c0, %c0_0] : memref<16x16xbf16, #tpu.memory_space<vmem>>, vector<16x16xbf16>
    %c0_1 = arith.constant 0 : index
    %c0_2 = arith.constant 0 : index
    %1 = vector.load %arg2[%c0_1, %c0_2] : memref<16x8xbf16, #tpu.memory_space<vmem>>, vector<16x8xbf16>
    %c0_3 = arith.constant 0 : index
    %c0_4 = arith.constant 0 : index
    %2 = vector.load %arg5[%c0_3, %c0_4] : memref<8x96xbf16, #tpu.memory_space<vmem>>, vector<8x96xbf16>
    %cst = arith.constant dense<0.000000e+00> : vector<16x96xf32>
    %3 = tpu.matmul %1, %2, %cst {dimension_numbers = #tpu.dot_dimension_numbers<[1], [0], [0], [1], [0, 0, 1, 1], [], []>} : vector<16x8xbf16>, vector<8x96xbf16>, vector<16x96xf32> -> vector<16x96xf32>
    %c0_5 = arith.constant 0 : index
    %c0_6 = arith.constant 0 : index
    %4 = vector.load %arg3[%c0_5, %c0_6] : memref<8x48xbf16, #tpu.memory_space<vmem>>, vector<8x48xbf16>
    %cst_7 = arith.constant dense<0.000000e+00> : vector<16x48xf32>
    %5 = tpu.matmul %1, %4, %cst_7 {dimension_numbers = #tpu.dot_dimension_numbers<[1], [0], [0], [1], [0, 0, 1, 1], [], []>} : vector<16x8xbf16>, vector<8x48xbf16>, vector<16x48xf32> -> vector<16x48xf32>
    %6 = arith.truncf %5 : vector<16x48xf32> to vector<16x48xbf16>
    %cst_8 = arith.constant dense<0.000000e+00> : vector<16x48xf32>
    %7 = tpu.matmul %0, %6, %cst_8 {dimension_numbers = #tpu.dot_dimension_numbers<[1], [0], [0], [1], [0, 0, 1, 1], [], []>} : vector<16x16xbf16>, vector<16x48xbf16>, vector<16x48xf32> -> vector<16x48xf32>
    %8 = vector.extract_strided_slice %3 {offsets = [0, 0], sizes = [16, 48], strides = [1, 1]} : vector<16x96xf32> to vector<16x48xf32>
    %9 = arith.addf %7, %8 : vector<16x48xf32>
    %c0_9 = arith.constant 0 : index
    %c0_10 = arith.constant 0 : index
    %c0_11 = arith.constant 0 : index
    %10 = vector.load %arg6[%c0_9, %c0_10, %c0_11] : memref<2x1x48xf32, #tpu.memory_space<vmem>>, vector<1x1x48xf32>
    %11 = vector.shape_cast %10 : vector<1x1x48xf32> to vector<1x48xf32>
    %12 = vector.broadcast %11 : vector<1x48xf32> to vector<16x48xf32>
    %13 = arith.addf %9, %12 : vector<16x48xf32>
    %cst_12 = arith.constant 0.000000e+00 : f32
    %14 = vector.broadcast %cst_12 : f32 to vector<16x48xf32>
    %15 = arith.maximumf %13, %14 : vector<16x48xf32>
    %16 = arith.truncf %15 : vector<16x48xf32> to vector<16x48xbf16>
    %c0_13 = arith.constant 0 : index
    %c0_14 = arith.constant 0 : index
    %c0_15 = arith.constant 0 : index
    %17 = vector.load %arg4[%c0_13, %c0_14, %c0_15] : memref<1x48x48xbf16, #tpu.memory_space<vmem>>, vector<1x48x48xbf16>
    %18 = vector.shape_cast %17 : vector<1x48x48xbf16> to vector<48x48xbf16>
    %cst_16 = arith.constant dense<0.000000e+00> : vector<16x48xf32>
    %19 = tpu.matmul %16, %18, %cst_16 {dimension_numbers = #tpu.dot_dimension_numbers<[1], [0], [0], [1], [0, 0, 1, 1], [], []>} : vector<16x48xbf16>, vector<48x48xbf16>, vector<16x48xf32> -> vector<16x48xf32>
    %20 = arith.truncf %19 : vector<16x48xf32> to vector<16x48xbf16>
    %cst_17 = arith.constant dense<0.000000e+00> : vector<16x48xf32>
    %21 = tpu.matmul %0, %20, %cst_17 {dimension_numbers = #tpu.dot_dimension_numbers<[1], [0], [0], [1], [0, 0, 1, 1], [], []>} : vector<16x16xbf16>, vector<16x48xbf16>, vector<16x48xf32> -> vector<16x48xf32>
    %22 = vector.extract_strided_slice %3 {offsets = [0, 48], sizes = [16, 48], strides = [1, 1]} : vector<16x96xf32> to vector<16x48xf32>
    %23 = arith.addf %21, %22 : vector<16x48xf32>
    %c1 = arith.constant 1 : index
    %c0_18 = arith.constant 0 : index
    %c0_19 = arith.constant 0 : index
    %24 = vector.load %arg6[%c1, %c0_18, %c0_19] : memref<2x1x48xf32, #tpu.memory_space<vmem>>, vector<1x1x48xf32>
    %25 = vector.shape_cast %24 : vector<1x1x48xf32> to vector<1x48xf32>
    %26 = vector.broadcast %25 : vector<1x48xf32> to vector<16x48xf32>
    %27 = arith.addf %23, %26 : vector<16x48xf32>
    %cst_20 = arith.constant 0.000000e+00 : f32
    %28 = vector.broadcast %cst_20 : f32 to vector<16x48xf32>
    %29 = arith.maximumf %27, %28 : vector<16x48xf32>
    %30 = vector.extract_strided_slice %29 {offsets = [0, 0], sizes = [16, 16], strides = [1, 1]} : vector<16x48xf32> to vector<16x16xf32>
    %31 = vector.extract_strided_slice %29 {offsets = [0, 16], sizes = [16, 16], strides = [1, 1]} : vector<16x48xf32> to vector<16x16xf32>
    %32 = arith.addf %30, %31 : vector<16x16xf32>
    %33 = vector.extract_strided_slice %29 {offsets = [0, 32], sizes = [16, 16], strides = [1, 1]} : vector<16x48xf32> to vector<16x16xf32>
    %34 = arith.addf %32, %33 : vector<16x16xf32>
    %cst_21 = arith.constant 0.333333343 : f32
    %35 = vector.broadcast %cst_21 : f32 to vector<16x16xf32>
    %36 = arith.mulf %34, %35 : vector<16x16xf32>
    %cst_22 = arith.constant 0.000000e+00 : f32
    %37 = vector.broadcast %cst_22 : f32 to vector<16x16xf32>
    %38 = arith.maximumf %36, %37 : vector<16x16xf32>
    %39 = arith.truncf %38 : vector<16x16xf32> to vector<16x16xbf16>
    %c0_23 = arith.constant 0 : index
    %c0_24 = arith.constant 0 : index
    %40 = vector.load %arg9[%c0_23, %c0_24] : memref<16x96xbf16, #tpu.memory_space<vmem>>, vector<16x96xbf16>
    %cst_25 = arith.constant dense<0.000000e+00> : vector<16x96xf32>
    %41 = tpu.matmul %39, %40, %cst_25 {dimension_numbers = #tpu.dot_dimension_numbers<[1], [0], [0], [1], [0, 0, 1, 1], [], []>} : vector<16x16xbf16>, vector<16x96xbf16>, vector<16x96xf32> -> vector<16x96xf32>
    %c0_26 = arith.constant 0 : index
    %c0_27 = arith.constant 0 : index
    %42 = vector.load %arg7[%c0_26, %c0_27] : memref<16x48xbf16, #tpu.memory_space<vmem>>, vector<16x48xbf16>
    %cst_28 = arith.constant dense<0.000000e+00> : vector<16x48xf32>
    %43 = tpu.matmul %39, %42, %cst_28 {dimension_numbers = #tpu.dot_dimension_numbers<[1], [0], [0], [1], [0, 0, 1, 1], [], []>} : vector<16x16xbf16>, vector<16x48xbf16>, vector<16x48xf32> -> vector<16x48xf32>
    %44 = arith.truncf %43 : vector<16x48xf32> to vector<16x48xbf16>
    %cst_29 = arith.constant dense<0.000000e+00> : vector<16x48xf32>
    %45 = tpu.matmul %0, %44, %cst_29 {dimension_numbers = #tpu.dot_dimension_numbers<[1], [0], [0], [1], [0, 0, 1, 1], [], []>} : vector<16x16xbf16>, vector<16x48xbf16>, vector<16x48xf32> -> vector<16x48xf32>
    %46 = vector.extract_strided_slice %41 {offsets = [0, 0], sizes = [16, 48], strides = [1, 1]} : vector<16x96xf32> to vector<16x48xf32>
    %47 = arith.addf %45, %46 : vector<16x48xf32>
    %c0_30 = arith.constant 0 : index
    %c0_31 = arith.constant 0 : index
    %c0_32 = arith.constant 0 : index
    %48 = vector.load %arg10[%c0_30, %c0_31, %c0_32] : memref<2x1x48xf32, #tpu.memory_space<vmem>>, vector<1x1x48xf32>
    %49 = vector.shape_cast %48 : vector<1x1x48xf32> to vector<1x48xf32>
    %50 = vector.broadcast %49 : vector<1x48xf32> to vector<16x48xf32>
    %51 = arith.addf %47, %50 : vector<16x48xf32>
    %cst_33 = arith.constant 0.000000e+00 : f32
    %52 = vector.broadcast %cst_33 : f32 to vector<16x48xf32>
    %53 = arith.maximumf %51, %52 : vector<16x48xf32>
    %54 = arith.truncf %53 : vector<16x48xf32> to vector<16x48xbf16>
    %c0_34 = arith.constant 0 : index
    %c0_35 = arith.constant 0 : index
    %c0_36 = arith.constant 0 : index
    %55 = vector.load %arg8[%c0_34, %c0_35, %c0_36] : memref<1x48x48xbf16, #tpu.memory_space<vmem>>, vector<1x48x48xbf16>
    %56 = vector.shape_cast %55 : vector<1x48x48xbf16> to vector<48x48xbf16>
    %cst_37 = arith.constant dense<0.000000e+00> : vector<16x48xf32>
    %57 = tpu.matmul %54, %56, %cst_37 {dimension_numbers = #tpu.dot_dimension_numbers<[1], [0], [0], [1], [0, 0, 1, 1], [], []>} : vector<16x48xbf16>, vector<48x48xbf16>, vector<16x48xf32> -> vector<16x48xf32>
    %58 = arith.truncf %57 : vector<16x48xf32> to vector<16x48xbf16>
    %cst_38 = arith.constant dense<0.000000e+00> : vector<16x48xf32>
    %59 = tpu.matmul %0, %58, %cst_38 {dimension_numbers = #tpu.dot_dimension_numbers<[1], [0], [0], [1], [0, 0, 1, 1], [], []>} : vector<16x16xbf16>, vector<16x48xbf16>, vector<16x48xf32> -> vector<16x48xf32>
    %60 = vector.extract_strided_slice %41 {offsets = [0, 48], sizes = [16, 48], strides = [1, 1]} : vector<16x96xf32> to vector<16x48xf32>
    %61 = arith.addf %59, %60 : vector<16x48xf32>
    %c1_39 = arith.constant 1 : index
    %c0_40 = arith.constant 0 : index
    %c0_41 = arith.constant 0 : index
    %62 = vector.load %arg10[%c1_39, %c0_40, %c0_41] : memref<2x1x48xf32, #tpu.memory_space<vmem>>, vector<1x1x48xf32>
    %63 = vector.shape_cast %62 : vector<1x1x48xf32> to vector<1x48xf32>
    %64 = vector.broadcast %63 : vector<1x48xf32> to vector<16x48xf32>
    %65 = arith.addf %61, %64 : vector<16x48xf32>
    %cst_42 = arith.constant 0.000000e+00 : f32
    %66 = vector.broadcast %cst_42 : f32 to vector<16x48xf32>
    %67 = arith.maximumf %65, %66 : vector<16x48xf32>
    %68 = vector.extract_strided_slice %67 {offsets = [0, 0], sizes = [16, 16], strides = [1, 1]} : vector<16x48xf32> to vector<16x16xf32>
    %69 = vector.extract_strided_slice %67 {offsets = [0, 16], sizes = [16, 16], strides = [1, 1]} : vector<16x48xf32> to vector<16x16xf32>
    %70 = arith.addf %68, %69 : vector<16x16xf32>
    %71 = vector.extract_strided_slice %67 {offsets = [0, 32], sizes = [16, 16], strides = [1, 1]} : vector<16x48xf32> to vector<16x16xf32>
    %72 = arith.addf %70, %71 : vector<16x16xf32>
    %cst_43 = arith.constant 0.333333343 : f32
    %73 = vector.broadcast %cst_43 : f32 to vector<16x16xf32>
    %74 = arith.mulf %72, %73 : vector<16x16xf32>
    %cst_44 = arith.constant 0.000000e+00 : f32
    %75 = vector.broadcast %cst_44 : f32 to vector<16x16xf32>
    %76 = arith.maximumf %74, %75 : vector<16x16xf32>
    %77 = arith.truncf %76 : vector<16x16xf32> to vector<16x16xbf16>
    %c0_45 = arith.constant 0 : index
    %c0_46 = arith.constant 0 : index
    %78 = vector.load %arg13[%c0_45, %c0_46] : memref<16x96xbf16, #tpu.memory_space<vmem>>, vector<16x96xbf16>
    %cst_47 = arith.constant dense<0.000000e+00> : vector<16x96xf32>
    %79 = tpu.matmul %77, %78, %cst_47 {dimension_numbers = #tpu.dot_dimension_numbers<[1], [0], [0], [1], [0, 0, 1, 1], [], []>} : vector<16x16xbf16>, vector<16x96xbf16>, vector<16x96xf32> -> vector<16x96xf32>
    %c0_48 = arith.constant 0 : index
    %c0_49 = arith.constant 0 : index
    %80 = vector.load %arg11[%c0_48, %c0_49] : memref<16x48xbf16, #tpu.memory_space<vmem>>, vector<16x48xbf16>
    %cst_50 = arith.constant dense<0.000000e+00> : vector<16x48xf32>
    %81 = tpu.matmul %77, %80, %cst_50 {dimension_numbers = #tpu.dot_dimension_numbers<[1], [0], [0], [1], [0, 0, 1, 1], [], []>} : vector<16x16xbf16>, vector<16x48xbf16>, vector<16x48xf32> -> vector<16x48xf32>
    %82 = arith.truncf %81 : vector<16x48xf32> to vector<16x48xbf16>
    %cst_51 = arith.constant dense<0.000000e+00> : vector<16x48xf32>
    %83 = tpu.matmul %0, %82, %cst_51 {dimension_numbers = #tpu.dot_dimension_numbers<[1], [0], [0], [1], [0, 0, 1, 1], [], []>} : vector<16x16xbf16>, vector<16x48xbf16>, vector<16x48xf32> -> vector<16x48xf32>
    %84 = vector.extract_strided_slice %79 {offsets = [0, 0], sizes = [16, 48], strides = [1, 1]} : vector<16x96xf32> to vector<16x48xf32>
    %85 = arith.addf %83, %84 : vector<16x48xf32>
    %c0_52 = arith.constant 0 : index
    %c0_53 = arith.constant 0 : index
    %c0_54 = arith.constant 0 : index
    %86 = vector.load %arg14[%c0_52, %c0_53, %c0_54] : memref<2x1x48xf32, #tpu.memory_space<vmem>>, vector<1x1x48xf32>
    %87 = vector.shape_cast %86 : vector<1x1x48xf32> to vector<1x48xf32>
    %88 = vector.broadcast %87 : vector<1x48xf32> to vector<16x48xf32>
    %89 = arith.addf %85, %88 : vector<16x48xf32>
    %cst_55 = arith.constant 0.000000e+00 : f32
    %90 = vector.broadcast %cst_55 : f32 to vector<16x48xf32>
    %91 = arith.maximumf %89, %90 : vector<16x48xf32>
    %92 = arith.truncf %91 : vector<16x48xf32> to vector<16x48xbf16>
    %c0_56 = arith.constant 0 : index
    %c0_57 = arith.constant 0 : index
    %c0_58 = arith.constant 0 : index
    %93 = vector.load %arg12[%c0_56, %c0_57, %c0_58] : memref<1x48x48xbf16, #tpu.memory_space<vmem>>, vector<1x48x48xbf16>
    %94 = vector.shape_cast %93 : vector<1x48x48xbf16> to vector<48x48xbf16>
    %cst_59 = arith.constant dense<0.000000e+00> : vector<16x48xf32>
    %95 = tpu.matmul %92, %94, %cst_59 {dimension_numbers = #tpu.dot_dimension_numbers<[1], [0], [0], [1], [0, 0, 1, 1], [], []>} : vector<16x48xbf16>, vector<48x48xbf16>, vector<16x48xf32> -> vector<16x48xf32>
    %96 = arith.truncf %95 : vector<16x48xf32> to vector<16x48xbf16>
    %cst_60 = arith.constant dense<0.000000e+00> : vector<16x48xf32>
    %97 = tpu.matmul %0, %96, %cst_60 {dimension_numbers = #tpu.dot_dimension_numbers<[1], [0], [0], [1], [0, 0, 1, 1], [], []>} : vector<16x16xbf16>, vector<16x48xbf16>, vector<16x48xf32> -> vector<16x48xf32>
    %98 = vector.extract_strided_slice %79 {offsets = [0, 48], sizes = [16, 48], strides = [1, 1]} : vector<16x96xf32> to vector<16x48xf32>
    %99 = arith.addf %97, %98 : vector<16x48xf32>
    %c1_61 = arith.constant 1 : index
    %c0_62 = arith.constant 0 : index
    %c0_63 = arith.constant 0 : index
    %100 = vector.load %arg14[%c1_61, %c0_62, %c0_63] : memref<2x1x48xf32, #tpu.memory_space<vmem>>, vector<1x1x48xf32>
    %101 = vector.shape_cast %100 : vector<1x1x48xf32> to vector<1x48xf32>
    %102 = vector.broadcast %101 : vector<1x48xf32> to vector<16x48xf32>
    %103 = arith.addf %99, %102 : vector<16x48xf32>
    %cst_64 = arith.constant 0.000000e+00 : f32
    %104 = vector.broadcast %cst_64 : f32 to vector<16x48xf32>
    %105 = arith.maximumf %103, %104 : vector<16x48xf32>
    %106 = vector.extract_strided_slice %105 {offsets = [0, 0], sizes = [16, 16], strides = [1, 1]} : vector<16x48xf32> to vector<16x16xf32>
    %107 = vector.extract_strided_slice %105 {offsets = [0, 16], sizes = [16, 16], strides = [1, 1]} : vector<16x48xf32> to vector<16x16xf32>
    %108 = arith.addf %106, %107 : vector<16x16xf32>
    %109 = vector.extract_strided_slice %105 {offsets = [0, 32], sizes = [16, 16], strides = [1, 1]} : vector<16x48xf32> to vector<16x16xf32>
    %110 = arith.addf %108, %109 : vector<16x16xf32>
    %cst_65 = arith.constant 0.333333343 : f32
    %111 = vector.broadcast %cst_65 : f32 to vector<16x16xf32>
    %112 = arith.mulf %110, %111 : vector<16x16xf32>
    %cst_66 = arith.constant dense<0.000000e+00> : vector<16xf32>
    %113 = vector.multi_reduction <add>, %112, %cst_66 [0] : vector<16x16xf32> to vector<16xf32>
    %114 = vector.shape_cast %113 : vector<16xf32> to vector<1x16xf32>
    %cst_67 = arith.constant 1.600000e+01 : f32
    %115 = vector.broadcast %cst_67 : f32 to vector<1x16xf32>
    %116 = arith.divf %114, %115 : vector<1x16xf32>
    %117 = vector.broadcast %116 : vector<1x16xf32> to vector<16x16xf32>
    %118 = arith.subf %112, %117 : vector<16x16xf32>
    %119 = arith.mulf %118, %118 : vector<16x16xf32>
    %cst_68 = arith.constant dense<0.000000e+00> : vector<16xf32>
    %120 = vector.multi_reduction <add>, %119, %cst_68 [0] : vector<16x16xf32> to vector<16xf32>
    %121 = vector.shape_cast %120 : vector<16xf32> to vector<1x16xf32>
    %cst_69 = arith.constant 1.600000e+01 : f32
    %122 = vector.broadcast %cst_69 : f32 to vector<1x16xf32>
    %123 = arith.divf %121, %122 : vector<1x16xf32>
    %124 = vector.broadcast %116 : vector<1x16xf32> to vector<16x16xf32>
    %125 = arith.subf %112, %124 : vector<16x16xf32>
    %cst_70 = arith.constant 9.99999974E-6 : f32
    %126 = vector.broadcast %cst_70 : f32 to vector<1x16xf32>
    %127 = arith.addf %123, %126 : vector<1x16xf32>
    %128 = math.rsqrt %127 : vector<1x16xf32>
    %129 = vector.broadcast %128 : vector<1x16xf32> to vector<16x16xf32>
    %130 = arith.mulf %125, %129 : vector<16x16xf32>
    %c0_71 = arith.constant 0 : index
    %c0_72 = arith.constant 0 : index
    %131 = vector.load %arg15[%c0_71, %c0_72] : memref<1x16xf32, #tpu.memory_space<vmem>>, vector<1x16xf32>
    %132 = vector.broadcast %131 : vector<1x16xf32> to vector<16x16xf32>
    %133 = arith.mulf %130, %132 : vector<16x16xf32>
    %c0_73 = arith.constant 0 : index
    %c0_74 = arith.constant 0 : index
    %134 = vector.load %arg16[%c0_73, %c0_74] : memref<1x16xf32, #tpu.memory_space<vmem>>, vector<1x16xf32>
    %135 = vector.broadcast %134 : vector<1x16xf32> to vector<16x16xf32>
    %136 = arith.addf %133, %135 : vector<16x16xf32>
    %cst_75 = arith.constant 0.000000e+00 : f32
    %137 = vector.broadcast %cst_75 : f32 to vector<16x16xf32>
    %138 = arith.maximumf %136, %137 : vector<16x16xf32>
    %139 = arith.truncf %138 : vector<16x16xf32> to vector<16x16xbf16>
    %c0_76 = arith.constant 0 : index
    %c0_77 = arith.constant 0 : index
    %c0_78 = arith.constant 0 : index
    %140 = vector.load %arg17[%c0_76, %c0_77, %c0_78] : memref<2x16x48xbf16, #tpu.memory_space<vmem>>, vector<1x16x48xbf16>
    %141 = vector.shape_cast %140 : vector<1x16x48xbf16> to vector<16x48xbf16>
    %cst_79 = arith.constant dense<0.000000e+00> : vector<16x48xf32>
    %142 = tpu.matmul %139, %141, %cst_79 {dimension_numbers = #tpu.dot_dimension_numbers<[1], [0], [0], [1], [0, 0, 1, 1], [], []>} : vector<16x16xbf16>, vector<16x48xbf16>, vector<16x48xf32> -> vector<16x48xf32>
    %c0_80 = arith.constant 0 : index
    %c0_81 = arith.constant 0 : index
    %c0_82 = arith.constant 0 : index
    %143 = vector.load %arg18[%c0_80, %c0_81, %c0_82] : memref<2x1x48xf32, #tpu.memory_space<vmem>>, vector<1x1x48xf32>
    %144 = vector.shape_cast %143 : vector<1x1x48xf32> to vector<1x48xf32>
    %145 = vector.broadcast %144 : vector<1x48xf32> to vector<16x48xf32>
    %146 = arith.addf %142, %145 : vector<16x48xf32>
    %147 = vector.extract_strided_slice %146 {offsets = [0, 0], sizes = [8, 4], strides = [1, 1]} : vector<16x48xf32> to vector<8x4xf32>
    %148 = arith.truncf %147 : vector<8x4xf32> to vector<8x4xbf16>
    %149 = vector.extract_strided_slice %146 {offsets = [0, 16], sizes = [8, 4], strides = [1, 1]} : vector<16x48xf32> to vector<8x4xf32>
    %150 = arith.truncf %149 : vector<8x4xf32> to vector<8x4xbf16>
    %151 = vector.extract_strided_slice %146 {offsets = [0, 32], sizes = [8, 4], strides = [1, 1]} : vector<16x48xf32> to vector<8x4xf32>
    %152 = arith.truncf %151 : vector<8x4xf32> to vector<8x4xbf16>
    %cst_83 = arith.constant dense<0.000000e+00> : vector<8x8xf32>
    %153 = tpu.matmul %148, %150, %cst_83 {dimension_numbers = #tpu.dot_dimension_numbers<[1], [1], [0], [0], [0, 0, 1, 0], [], []>} : vector<8x4xbf16>, vector<8x4xbf16>, vector<8x8xf32> -> vector<8x8xf32>
    %cst_84 = arith.constant 5.000000e-01 : f32
    %154 = vector.broadcast %cst_84 : f32 to vector<8x8xf32>
    %155 = arith.mulf %153, %154 : vector<8x8xf32>
    %cst_85 = arith.constant dense<0xFF800000> : vector<8xf32>
    %156 = vector.multi_reduction <maximumf>, %155, %cst_85 [1] : vector<8x8xf32> to vector<8xf32>
    %157 = vector.shape_cast %156 : vector<8xf32> to vector<8x1xf32>
    %158 = vector.broadcast %157 : vector<8x1xf32> to vector<8x8xf32>
    %159 = arith.subf %155, %158 : vector<8x8xf32>
    %160 = math.exp %159 : vector<8x8xf32>
    %cst_86 = arith.constant dense<0.000000e+00> : vector<8xf32>
    %161 = vector.multi_reduction <add>, %160, %cst_86 [1] : vector<8x8xf32> to vector<8xf32>
    %162 = vector.shape_cast %161 : vector<8xf32> to vector<8x1xf32>
    %163 = tpu.reciprocal %162 {approx = true} : vector<8x1xf32> -> vector<8x1xf32>
    %164 = vector.broadcast %163 : vector<8x1xf32> to vector<8x8xf32>
    %165 = arith.mulf %160, %164 : vector<8x8xf32>
    %166 = arith.truncf %165 : vector<8x8xf32> to vector<8x8xbf16>
    %cst_87 = arith.constant dense<0.000000e+00> : vector<8x4xf32>
    %167 = tpu.matmul %166, %152, %cst_87 {dimension_numbers = #tpu.dot_dimension_numbers<[1], [0], [0], [1], [0, 0, 1, 1], [], []>} : vector<8x8xbf16>, vector<8x4xbf16>, vector<8x4xf32> -> vector<8x4xf32>
    %168 = vector.extract_strided_slice %146 {offsets = [0, 4], sizes = [8, 4], strides = [1, 1]} : vector<16x48xf32> to vector<8x4xf32>
    %169 = arith.truncf %168 : vector<8x4xf32> to vector<8x4xbf16>
    %170 = vector.extract_strided_slice %146 {offsets = [0, 20], sizes = [8, 4], strides = [1, 1]} : vector<16x48xf32> to vector<8x4xf32>
    %171 = arith.truncf %170 : vector<8x4xf32> to vector<8x4xbf16>
    %172 = vector.extract_strided_slice %146 {offsets = [0, 36], sizes = [8, 4], strides = [1, 1]} : vector<16x48xf32> to vector<8x4xf32>
    %173 = arith.truncf %172 : vector<8x4xf32> to vector<8x4xbf16>
    %cst_88 = arith.constant dense<0.000000e+00> : vector<8x8xf32>
    %174 = tpu.matmul %169, %171, %cst_88 {dimension_numbers = #tpu.dot_dimension_numbers<[1], [1], [0], [0], [0, 0, 1, 0], [], []>} : vector<8x4xbf16>, vector<8x4xbf16>, vector<8x8xf32> -> vector<8x8xf32>
    %cst_89 = arith.constant 5.000000e-01 : f32
    %175 = vector.broadcast %cst_89 : f32 to vector<8x8xf32>
    %176 = arith.mulf %174, %175 : vector<8x8xf32>
    %cst_90 = arith.constant dense<0xFF800000> : vector<8xf32>
    %177 = vector.multi_reduction <maximumf>, %176, %cst_90 [1] : vector<8x8xf32> to vector<8xf32>
    %178 = vector.shape_cast %177 : vector<8xf32> to vector<8x1xf32>
    %179 = vector.broadcast %178 : vector<8x1xf32> to vector<8x8xf32>
    %180 = arith.subf %176, %179 : vector<8x8xf32>
    %181 = math.exp %180 : vector<8x8xf32>
    %cst_91 = arith.constant dense<0.000000e+00> : vector<8xf32>
    %182 = vector.multi_reduction <add>, %181, %cst_91 [1] : vector<8x8xf32> to vector<8xf32>
    %183 = vector.shape_cast %182 : vector<8xf32> to vector<8x1xf32>
    %184 = tpu.reciprocal %183 {approx = true} : vector<8x1xf32> -> vector<8x1xf32>
    %185 = vector.broadcast %184 : vector<8x1xf32> to vector<8x8xf32>
    %186 = arith.mulf %181, %185 : vector<8x8xf32>
    %187 = arith.truncf %186 : vector<8x8xf32> to vector<8x8xbf16>
    %cst_92 = arith.constant dense<0.000000e+00> : vector<8x4xf32>
    %188 = tpu.matmul %187, %173, %cst_92 {dimension_numbers = #tpu.dot_dimension_numbers<[1], [0], [0], [1], [0, 0, 1, 1], [], []>} : vector<8x8xbf16>, vector<8x4xbf16>, vector<8x4xf32> -> vector<8x4xf32>
    %189 = vector.extract_strided_slice %146 {offsets = [0, 8], sizes = [8, 4], strides = [1, 1]} : vector<16x48xf32> to vector<8x4xf32>
    %190 = arith.truncf %189 : vector<8x4xf32> to vector<8x4xbf16>
    %191 = vector.extract_strided_slice %146 {offsets = [0, 24], sizes = [8, 4], strides = [1, 1]} : vector<16x48xf32> to vector<8x4xf32>
    %192 = arith.truncf %191 : vector<8x4xf32> to vector<8x4xbf16>
    %193 = vector.extract_strided_slice %146 {offsets = [0, 40], sizes = [8, 4], strides = [1, 1]} : vector<16x48xf32> to vector<8x4xf32>
    %194 = arith.truncf %193 : vector<8x4xf32> to vector<8x4xbf16>
    %cst_93 = arith.constant dense<0.000000e+00> : vector<8x8xf32>
    %195 = tpu.matmul %190, %192, %cst_93 {dimension_numbers = #tpu.dot_dimension_numbers<[1], [1], [0], [0], [0, 0, 1, 0], [], []>} : vector<8x4xbf16>, vector<8x4xbf16>, vector<8x8xf32> -> vector<8x8xf32>
    %cst_94 = arith.constant 5.000000e-01 : f32
    %196 = vector.broadcast %cst_94 : f32 to vector<8x8xf32>
    %197 = arith.mulf %195, %196 : vector<8x8xf32>
    %cst_95 = arith.constant dense<0xFF800000> : vector<8xf32>
    %198 = vector.multi_reduction <maximumf>, %197, %cst_95 [1] : vector<8x8xf32> to vector<8xf32>
    %199 = vector.shape_cast %198 : vector<8xf32> to vector<8x1xf32>
    %200 = vector.broadcast %199 : vector<8x1xf32> to vector<8x8xf32>
    %201 = arith.subf %197, %200 : vector<8x8xf32>
    %202 = math.exp %201 : vector<8x8xf32>
    %cst_96 = arith.constant dense<0.000000e+00> : vector<8xf32>
    %203 = vector.multi_reduction <add>, %202, %cst_96 [1] : vector<8x8xf32> to vector<8xf32>
    %204 = vector.shape_cast %203 : vector<8xf32> to vector<8x1xf32>
    %205 = tpu.reciprocal %204 {approx = true} : vector<8x1xf32> -> vector<8x1xf32>
    %206 = vector.broadcast %205 : vector<8x1xf32> to vector<8x8xf32>
    %207 = arith.mulf %202, %206 : vector<8x8xf32>
    %208 = arith.truncf %207 : vector<8x8xf32> to vector<8x8xbf16>
    %cst_97 = arith.constant dense<0.000000e+00> : vector<8x4xf32>
    %209 = tpu.matmul %208, %194, %cst_97 {dimension_numbers = #tpu.dot_dimension_numbers<[1], [0], [0], [1], [0, 0, 1, 1], [], []>} : vector<8x8xbf16>, vector<8x4xbf16>, vector<8x4xf32> -> vector<8x4xf32>
    %210 = vector.extract_strided_slice %146 {offsets = [0, 12], sizes = [8, 4], strides = [1, 1]} : vector<16x48xf32> to vector<8x4xf32>
    %211 = arith.truncf %210 : vector<8x4xf32> to vector<8x4xbf16>
    %212 = vector.extract_strided_slice %146 {offsets = [0, 28], sizes = [8, 4], strides = [1, 1]} : vector<16x48xf32> to vector<8x4xf32>
    %213 = arith.truncf %212 : vector<8x4xf32> to vector<8x4xbf16>
    %214 = vector.extract_strided_slice %146 {offsets = [0, 44], sizes = [8, 4], strides = [1, 1]} : vector<16x48xf32> to vector<8x4xf32>
    %215 = arith.truncf %214 : vector<8x4xf32> to vector<8x4xbf16>
    %cst_98 = arith.constant dense<0.000000e+00> : vector<8x8xf32>
    %216 = tpu.matmul %211, %213, %cst_98 {dimension_numbers = #tpu.dot_dimension_numbers<[1], [1], [0], [0], [0, 0, 1, 0], [], []>} : vector<8x4xbf16>, vector<8x4xbf16>, vector<8x8xf32> -> vector<8x8xf32>
    %cst_99 = arith.constant 5.000000e-01 : f32
    %217 = vector.broadcast %cst_99 : f32 to vector<8x8xf32>
    %218 = arith.mulf %216, %217 : vector<8x8xf32>
    %cst_100 = arith.constant dense<0xFF800000> : vector<8xf32>
    %219 = vector.multi_reduction <maximumf>, %218, %cst_100 [1] : vector<8x8xf32> to vector<8xf32>
    %220 = vector.shape_cast %219 : vector<8xf32> to vector<8x1xf32>
    %221 = vector.broadcast %220 : vector<8x1xf32> to vector<8x8xf32>
    %222 = arith.subf %218, %221 : vector<8x8xf32>
    %223 = math.exp %222 : vector<8x8xf32>
    %cst_101 = arith.constant dense<0.000000e+00> : vector<8xf32>
    %224 = vector.multi_reduction <add>, %223, %cst_101 [1] : vector<8x8xf32> to vector<8xf32>
    %225 = vector.shape_cast %224 : vector<8xf32> to vector<8x1xf32>
    %226 = tpu.reciprocal %225 {approx = true} : vector<8x1xf32> -> vector<8x1xf32>
    %227 = vector.broadcast %226 : vector<8x1xf32> to vector<8x8xf32>
    %228 = arith.mulf %223, %227 : vector<8x8xf32>
    %229 = arith.truncf %228 : vector<8x8xf32> to vector<8x8xbf16>
    %cst_102 = arith.constant dense<0.000000e+00> : vector<8x4xf32>
    %230 = tpu.matmul %229, %215, %cst_102 {dimension_numbers = #tpu.dot_dimension_numbers<[1], [0], [0], [1], [0, 0, 1, 1], [], []>} : vector<8x8xbf16>, vector<8x4xbf16>, vector<8x4xf32> -> vector<8x4xf32>
    %231 = tpu.concatenate %167, %188, %209, %230 in 1 : vector<8x4xf32>, vector<8x4xf32>, vector<8x4xf32>, vector<8x4xf32> -> vector<8x16xf32>
    %232 = vector.extract_strided_slice %146 {offsets = [8, 0], sizes = [8, 4], strides = [1, 1]} : vector<16x48xf32> to vector<8x4xf32>
    %233 = arith.truncf %232 : vector<8x4xf32> to vector<8x4xbf16>
    %234 = vector.extract_strided_slice %146 {offsets = [8, 16], sizes = [8, 4], strides = [1, 1]} : vector<16x48xf32> to vector<8x4xf32>
    %235 = arith.truncf %234 : vector<8x4xf32> to vector<8x4xbf16>
    %236 = vector.extract_strided_slice %146 {offsets = [8, 32], sizes = [8, 4], strides = [1, 1]} : vector<16x48xf32> to vector<8x4xf32>
    %237 = arith.truncf %236 : vector<8x4xf32> to vector<8x4xbf16>
    %cst_103 = arith.constant dense<0.000000e+00> : vector<8x8xf32>
    %238 = tpu.matmul %233, %235, %cst_103 {dimension_numbers = #tpu.dot_dimension_numbers<[1], [1], [0], [0], [0, 0, 1, 0], [], []>} : vector<8x4xbf16>, vector<8x4xbf16>, vector<8x8xf32> -> vector<8x8xf32>
    %cst_104 = arith.constant 5.000000e-01 : f32
    %239 = vector.broadcast %cst_104 : f32 to vector<8x8xf32>
    %240 = arith.mulf %238, %239 : vector<8x8xf32>
    %cst_105 = arith.constant dense<0xFF800000> : vector<8xf32>
    %241 = vector.multi_reduction <maximumf>, %240, %cst_105 [1] : vector<8x8xf32> to vector<8xf32>
    %242 = vector.shape_cast %241 : vector<8xf32> to vector<8x1xf32>
    %243 = vector.broadcast %242 : vector<8x1xf32> to vector<8x8xf32>
    %244 = arith.subf %240, %243 : vector<8x8xf32>
    %245 = math.exp %244 : vector<8x8xf32>
    %cst_106 = arith.constant dense<0.000000e+00> : vector<8xf32>
    %246 = vector.multi_reduction <add>, %245, %cst_106 [1] : vector<8x8xf32> to vector<8xf32>
    %247 = vector.shape_cast %246 : vector<8xf32> to vector<8x1xf32>
    %248 = tpu.reciprocal %247 {approx = true} : vector<8x1xf32> -> vector<8x1xf32>
    %249 = vector.broadcast %248 : vector<8x1xf32> to vector<8x8xf32>
    %250 = arith.mulf %245, %249 : vector<8x8xf32>
    %251 = arith.truncf %250 : vector<8x8xf32> to vector<8x8xbf16>
    %cst_107 = arith.constant dense<0.000000e+00> : vector<8x4xf32>
    %252 = tpu.matmul %251, %237, %cst_107 {dimension_numbers = #tpu.dot_dimension_numbers<[1], [0], [0], [1], [0, 0, 1, 1], [], []>} : vector<8x8xbf16>, vector<8x4xbf16>, vector<8x4xf32> -> vector<8x4xf32>
    %253 = vector.extract_strided_slice %146 {offsets = [8, 4], sizes = [8, 4], strides = [1, 1]} : vector<16x48xf32> to vector<8x4xf32>
    %254 = arith.truncf %253 : vector<8x4xf32> to vector<8x4xbf16>
    %255 = vector.extract_strided_slice %146 {offsets = [8, 20], sizes = [8, 4], strides = [1, 1]} : vector<16x48xf32> to vector<8x4xf32>
    %256 = arith.truncf %255 : vector<8x4xf32> to vector<8x4xbf16>
    %257 = vector.extract_strided_slice %146 {offsets = [8, 36], sizes = [8, 4], strides = [1, 1]} : vector<16x48xf32> to vector<8x4xf32>
    %258 = arith.truncf %257 : vector<8x4xf32> to vector<8x4xbf16>
    %cst_108 = arith.constant dense<0.000000e+00> : vector<8x8xf32>
    %259 = tpu.matmul %254, %256, %cst_108 {dimension_numbers = #tpu.dot_dimension_numbers<[1], [1], [0], [0], [0, 0, 1, 0], [], []>} : vector<8x4xbf16>, vector<8x4xbf16>, vector<8x8xf32> -> vector<8x8xf32>
    %cst_109 = arith.constant 5.000000e-01 : f32
    %260 = vector.broadcast %cst_109 : f32 to vector<8x8xf32>
    %261 = arith.mulf %259, %260 : vector<8x8xf32>
    %cst_110 = arith.constant dense<0xFF800000> : vector<8xf32>
    %262 = vector.multi_reduction <maximumf>, %261, %cst_110 [1] : vector<8x8xf32> to vector<8xf32>
    %263 = vector.shape_cast %262 : vector<8xf32> to vector<8x1xf32>
    %264 = vector.broadcast %263 : vector<8x1xf32> to vector<8x8xf32>
    %265 = arith.subf %261, %264 : vector<8x8xf32>
    %266 = math.exp %265 : vector<8x8xf32>
    %cst_111 = arith.constant dense<0.000000e+00> : vector<8xf32>
    %267 = vector.multi_reduction <add>, %266, %cst_111 [1] : vector<8x8xf32> to vector<8xf32>
    %268 = vector.shape_cast %267 : vector<8xf32> to vector<8x1xf32>
    %269 = tpu.reciprocal %268 {approx = true} : vector<8x1xf32> -> vector<8x1xf32>
    %270 = vector.broadcast %269 : vector<8x1xf32> to vector<8x8xf32>
    %271 = arith.mulf %266, %270 : vector<8x8xf32>
    %272 = arith.truncf %271 : vector<8x8xf32> to vector<8x8xbf16>
    %cst_112 = arith.constant dense<0.000000e+00> : vector<8x4xf32>
    %273 = tpu.matmul %272, %258, %cst_112 {dimension_numbers = #tpu.dot_dimension_numbers<[1], [0], [0], [1], [0, 0, 1, 1], [], []>} : vector<8x8xbf16>, vector<8x4xbf16>, vector<8x4xf32> -> vector<8x4xf32>
    %274 = vector.extract_strided_slice %146 {offsets = [8, 8], sizes = [8, 4], strides = [1, 1]} : vector<16x48xf32> to vector<8x4xf32>
    %275 = arith.truncf %274 : vector<8x4xf32> to vector<8x4xbf16>
    %276 = vector.extract_strided_slice %146 {offsets = [8, 24], sizes = [8, 4], strides = [1, 1]} : vector<16x48xf32> to vector<8x4xf32>
    %277 = arith.truncf %276 : vector<8x4xf32> to vector<8x4xbf16>
    %278 = vector.extract_strided_slice %146 {offsets = [8, 40], sizes = [8, 4], strides = [1, 1]} : vector<16x48xf32> to vector<8x4xf32>
    %279 = arith.truncf %278 : vector<8x4xf32> to vector<8x4xbf16>
    %cst_113 = arith.constant dense<0.000000e+00> : vector<8x8xf32>
    %280 = tpu.matmul %275, %277, %cst_113 {dimension_numbers = #tpu.dot_dimension_numbers<[1], [1], [0], [0], [0, 0, 1, 0], [], []>} : vector<8x4xbf16>, vector<8x4xbf16>, vector<8x8xf32> -> vector<8x8xf32>
    %cst_114 = arith.constant 5.000000e-01 : f32
    %281 = vector.broadcast %cst_114 : f32 to vector<8x8xf32>
    %282 = arith.mulf %280, %281 : vector<8x8xf32>
    %cst_115 = arith.constant dense<0xFF800000> : vector<8xf32>
    %283 = vector.multi_reduction <maximumf>, %282, %cst_115 [1] : vector<8x8xf32> to vector<8xf32>
    %284 = vector.shape_cast %283 : vector<8xf32> to vector<8x1xf32>
    %285 = vector.broadcast %284 : vector<8x1xf32> to vector<8x8xf32>
    %286 = arith.subf %282, %285 : vector<8x8xf32>
    %287 = math.exp %286 : vector<8x8xf32>
    %cst_116 = arith.constant dense<0.000000e+00> : vector<8xf32>
    %288 = vector.multi_reduction <add>, %287, %cst_116 [1] : vector<8x8xf32> to vector<8xf32>
    %289 = vector.shape_cast %288 : vector<8xf32> to vector<8x1xf32>
    %290 = tpu.reciprocal %289 {approx = true} : vector<8x1xf32> -> vector<8x1xf32>
    %291 = vector.broadcast %290 : vector<8x1xf32> to vector<8x8xf32>
    %292 = arith.mulf %287, %291 : vector<8x8xf32>
    %293 = arith.truncf %292 : vector<8x8xf32> to vector<8x8xbf16>
    %cst_117 = arith.constant dense<0.000000e+00> : vector<8x4xf32>
    %294 = tpu.matmul %293, %279, %cst_117 {dimension_numbers = #tpu.dot_dimension_numbers<[1], [0], [0], [1], [0, 0, 1, 1], [], []>} : vector<8x8xbf16>, vector<8x4xbf16>, vector<8x4xf32> -> vector<8x4xf32>
    %295 = vector.extract_strided_slice %146 {offsets = [8, 12], sizes = [8, 4], strides = [1, 1]} : vector<16x48xf32> to vector<8x4xf32>
    %296 = arith.truncf %295 : vector<8x4xf32> to vector<8x4xbf16>
    %297 = vector.extract_strided_slice %146 {offsets = [8, 28], sizes = [8, 4], strides = [1, 1]} : vector<16x48xf32> to vector<8x4xf32>
    %298 = arith.truncf %297 : vector<8x4xf32> to vector<8x4xbf16>
    %299 = vector.extract_strided_slice %146 {offsets = [8, 44], sizes = [8, 4], strides = [1, 1]} : vector<16x48xf32> to vector<8x4xf32>
    %300 = arith.truncf %299 : vector<8x4xf32> to vector<8x4xbf16>
    %cst_118 = arith.constant dense<0.000000e+00> : vector<8x8xf32>
    %301 = tpu.matmul %296, %298, %cst_118 {dimension_numbers = #tpu.dot_dimension_numbers<[1], [1], [0], [0], [0, 0, 1, 0], [], []>} : vector<8x4xbf16>, vector<8x4xbf16>, vector<8x8xf32> -> vector<8x8xf32>
    %cst_119 = arith.constant 5.000000e-01 : f32
    %302 = vector.broadcast %cst_119 : f32 to vector<8x8xf32>
    %303 = arith.mulf %301, %302 : vector<8x8xf32>
    %cst_120 = arith.constant dense<0xFF800000> : vector<8xf32>
    %304 = vector.multi_reduction <maximumf>, %303, %cst_120 [1] : vector<8x8xf32> to vector<8xf32>
    %305 = vector.shape_cast %304 : vector<8xf32> to vector<8x1xf32>
    %306 = vector.broadcast %305 : vector<8x1xf32> to vector<8x8xf32>
    %307 = arith.subf %303, %306 : vector<8x8xf32>
    %308 = math.exp %307 : vector<8x8xf32>
    %cst_121 = arith.constant dense<0.000000e+00> : vector<8xf32>
    %309 = vector.multi_reduction <add>, %308, %cst_121 [1] : vector<8x8xf32> to vector<8xf32>
    %310 = vector.shape_cast %309 : vector<8xf32> to vector<8x1xf32>
    %311 = tpu.reciprocal %310 {approx = true} : vector<8x1xf32> -> vector<8x1xf32>
    %312 = vector.broadcast %311 : vector<8x1xf32> to vector<8x8xf32>
    %313 = arith.mulf %308, %312 : vector<8x8xf32>
    %314 = arith.truncf %313 : vector<8x8xf32> to vector<8x8xbf16>
    %cst_122 = arith.constant dense<0.000000e+00> : vector<8x4xf32>
    %315 = tpu.matmul %314, %300, %cst_122 {dimension_numbers = #tpu.dot_dimension_numbers<[1], [0], [0], [1], [0, 0, 1, 1], [], []>} : vector<8x8xbf16>, vector<8x4xbf16>, vector<8x4xf32> -> vector<8x4xf32>
    %316 = tpu.concatenate %252, %273, %294, %315 in 1 : vector<8x4xf32>, vector<8x4xf32>, vector<8x4xf32>, vector<8x4xf32> -> vector<8x16xf32>
    %317 = tpu.concatenate %231, %316 in 0 : vector<8x16xf32>, vector<8x16xf32> -> vector<16x16xf32>
    %318 = arith.truncf %317 : vector<16x16xf32> to vector<16x16xbf16>
    %c0_123 = arith.constant 0 : index
    %c0_124 = arith.constant 0 : index
    %c0_125 = arith.constant 0 : index
    %319 = vector.load %arg19[%c0_123, %c0_124, %c0_125] : memref<2x16x16xbf16, #tpu.memory_space<vmem>>, vector<1x16x16xbf16>
    %320 = vector.shape_cast %319 : vector<1x16x16xbf16> to vector<16x16xbf16>
    %cst_126 = arith.constant dense<0.000000e+00> : vector<16x16xf32>
    %321 = tpu.matmul %318, %320, %cst_126 {dimension_numbers = #tpu.dot_dimension_numbers<[1], [0], [0], [1], [0, 0, 1, 1], [], []>} : vector<16x16xbf16>, vector<16x16xbf16>, vector<16x16xf32> -> vector<16x16xf32>
    %c0_127 = arith.constant 0 : index
    %c0_128 = arith.constant 0 : index
    %c0_129 = arith.constant 0 : index
    %322 = vector.load %arg20[%c0_127, %c0_128, %c0_129] : memref<2x1x16xf32, #tpu.memory_space<vmem>>, vector<1x1x16xf32>
    %323 = vector.shape_cast %322 : vector<1x1x16xf32> to vector<1x16xf32>
    %324 = vector.broadcast %323 : vector<1x16xf32> to vector<16x16xf32>
    %325 = arith.addf %321, %324 : vector<16x16xf32>
    %326 = arith.addf %138, %325 : vector<16x16xf32>
    %cst_130 = arith.constant dense<0.000000e+00> : vector<16xf32>
    %327 = vector.multi_reduction <add>, %326, %cst_130 [1] : vector<16x16xf32> to vector<16xf32>
    %328 = vector.shape_cast %327 : vector<16xf32> to vector<16x1xf32>
    %cst_131 = arith.constant 1.600000e+01 : f32
    %329 = vector.broadcast %cst_131 : f32 to vector<16x1xf32>
    %330 = arith.divf %328, %329 : vector<16x1xf32>
    %331 = vector.broadcast %330 : vector<16x1xf32> to vector<16x16xf32>
    %332 = arith.subf %326, %331 : vector<16x16xf32>
    %333 = arith.mulf %332, %332 : vector<16x16xf32>
    %cst_132 = arith.constant dense<0.000000e+00> : vector<16xf32>
    %334 = vector.multi_reduction <add>, %333, %cst_132 [1] : vector<16x16xf32> to vector<16xf32>
    %335 = vector.shape_cast %334 : vector<16xf32> to vector<16x1xf32>
    %cst_133 = arith.constant 1.600000e+01 : f32
    %336 = vector.broadcast %cst_133 : f32 to vector<16x1xf32>
    %337 = arith.divf %335, %336 : vector<16x1xf32>
    %338 = vector.broadcast %330 : vector<16x1xf32> to vector<16x16xf32>
    %339 = arith.subf %326, %338 : vector<16x16xf32>
    %cst_134 = arith.constant 9.99999974E-6 : f32
    %340 = vector.broadcast %cst_134 : f32 to vector<16x1xf32>
    %341 = arith.addf %337, %340 : vector<16x1xf32>
    %342 = math.rsqrt %341 : vector<16x1xf32>
    %343 = vector.broadcast %342 : vector<16x1xf32> to vector<16x16xf32>
    %344 = arith.mulf %339, %343 : vector<16x16xf32>
    %c0_135 = arith.constant 0 : index
    %c0_136 = arith.constant 0 : index
    %c0_137 = arith.constant 0 : index
    %345 = vector.load %arg21[%c0_135, %c0_136, %c0_137] : memref<2x1x16xf32, #tpu.memory_space<vmem>>, vector<1x1x16xf32>
    %346 = vector.shape_cast %345 : vector<1x1x16xf32> to vector<1x16xf32>
    %347 = vector.broadcast %346 : vector<1x16xf32> to vector<16x16xf32>
    %348 = arith.mulf %344, %347 : vector<16x16xf32>
    %c0_138 = arith.constant 0 : index
    %c0_139 = arith.constant 0 : index
    %c0_140 = arith.constant 0 : index
    %349 = vector.load %arg22[%c0_138, %c0_139, %c0_140] : memref<2x1x16xf32, #tpu.memory_space<vmem>>, vector<1x1x16xf32>
    %350 = vector.shape_cast %349 : vector<1x1x16xf32> to vector<1x16xf32>
    %351 = vector.broadcast %350 : vector<1x16xf32> to vector<16x16xf32>
    %352 = arith.addf %348, %351 : vector<16x16xf32>
    %353 = arith.truncf %352 : vector<16x16xf32> to vector<16x16xbf16>
    %c0_141 = arith.constant 0 : index
    %c0_142 = arith.constant 0 : index
    %c0_143 = arith.constant 0 : index
    %354 = vector.load %arg23[%c0_141, %c0_142, %c0_143] : memref<2x16x2048xbf16, #tpu.memory_space<vmem>>, vector<1x16x2048xbf16>
    %355 = vector.shape_cast %354 : vector<1x16x2048xbf16> to vector<16x2048xbf16>
    %cst_144 = arith.constant dense<0.000000e+00> : vector<16x2048xf32>
    %356 = tpu.matmul %353, %355, %cst_144 {dimension_numbers = #tpu.dot_dimension_numbers<[1], [0], [0], [1], [0, 0, 1, 1], [], []>} : vector<16x16xbf16>, vector<16x2048xbf16>, vector<16x2048xf32> -> vector<16x2048xf32>
    %c0_145 = arith.constant 0 : index
    %c0_146 = arith.constant 0 : index
    %c0_147 = arith.constant 0 : index
    %357 = vector.load %arg24[%c0_145, %c0_146, %c0_147] : memref<2x1x2048xf32, #tpu.memory_space<vmem>>, vector<1x1x2048xf32>
    %358 = vector.shape_cast %357 : vector<1x1x2048xf32> to vector<1x2048xf32>
    %359 = vector.broadcast %358 : vector<1x2048xf32> to vector<16x2048xf32>
    %360 = arith.addf %356, %359 : vector<16x2048xf32>
    %cst_148 = arith.constant 0.000000e+00 : f32
    %361 = vector.broadcast %cst_148 : f32 to vector<16x2048xf32>
    %362 = arith.maximumf %360, %361 : vector<16x2048xf32>
    %363 = arith.truncf %362 : vector<16x2048xf32> to vector<16x2048xbf16>
    %c0_149 = arith.constant 0 : index
    %c0_150 = arith.constant 0 : index
    %c0_151 = arith.constant 0 : index
    %364 = vector.load %arg25[%c0_149, %c0_150, %c0_151] : memref<2x2048x16xbf16, #tpu.memory_space<vmem>>, vector<1x2048x16xbf16>
    %365 = vector.shape_cast %364 : vector<1x2048x16xbf16> to vector<2048x16xbf16>
    %cst_152 = arith.constant dense<0.000000e+00> : vector<16x16xf32>
    %366 = tpu.matmul %363, %365, %cst_152 {dimension_numbers = #tpu.dot_dimension_numbers<[1], [0], [0], [1], [0, 0, 1, 1], [], []>} : vector<16x2048xbf16>, vector<2048x16xbf16>, vector<16x16xf32> -> vector<16x16xf32>
    %c0_153 = arith.constant 0 : index
    %c0_154 = arith.constant 0 : index
    %c0_155 = arith.constant 0 : index
    %367 = vector.load %arg26[%c0_153, %c0_154, %c0_155] : memref<2x1x16xf32, #tpu.memory_space<vmem>>, vector<1x1x16xf32>
    %368 = vector.shape_cast %367 : vector<1x1x16xf32> to vector<1x16xf32>
    %369 = vector.broadcast %368 : vector<1x16xf32> to vector<16x16xf32>
    %370 = arith.addf %366, %369 : vector<16x16xf32>
    %371 = arith.addf %352, %370 : vector<16x16xf32>
    %cst_156 = arith.constant dense<0.000000e+00> : vector<16xf32>
    %372 = vector.multi_reduction <add>, %371, %cst_156 [1] : vector<16x16xf32> to vector<16xf32>
    %373 = vector.shape_cast %372 : vector<16xf32> to vector<16x1xf32>
    %cst_157 = arith.constant 1.600000e+01 : f32
    %374 = vector.broadcast %cst_157 : f32 to vector<16x1xf32>
    %375 = arith.divf %373, %374 : vector<16x1xf32>
    %376 = vector.broadcast %375 : vector<16x1xf32> to vector<16x16xf32>
    %377 = arith.subf %371, %376 : vector<16x16xf32>
    %378 = arith.mulf %377, %377 : vector<16x16xf32>
    %cst_158 = arith.constant dense<0.000000e+00> : vector<16xf32>
    %379 = vector.multi_reduction <add>, %378, %cst_158 [1] : vector<16x16xf32> to vector<16xf32>
    %380 = vector.shape_cast %379 : vector<16xf32> to vector<16x1xf32>
    %cst_159 = arith.constant 1.600000e+01 : f32
    %381 = vector.broadcast %cst_159 : f32 to vector<16x1xf32>
    %382 = arith.divf %380, %381 : vector<16x1xf32>
    %383 = vector.broadcast %375 : vector<16x1xf32> to vector<16x16xf32>
    %384 = arith.subf %371, %383 : vector<16x16xf32>
    %cst_160 = arith.constant 9.99999974E-6 : f32
    %385 = vector.broadcast %cst_160 : f32 to vector<16x1xf32>
    %386 = arith.addf %382, %385 : vector<16x1xf32>
    %387 = math.rsqrt %386 : vector<16x1xf32>
    %388 = vector.broadcast %387 : vector<16x1xf32> to vector<16x16xf32>
    %389 = arith.mulf %384, %388 : vector<16x16xf32>
    %c0_161 = arith.constant 0 : index
    %c0_162 = arith.constant 0 : index
    %c0_163 = arith.constant 0 : index
    %390 = vector.load %arg27[%c0_161, %c0_162, %c0_163] : memref<2x1x16xf32, #tpu.memory_space<vmem>>, vector<1x1x16xf32>
    %391 = vector.shape_cast %390 : vector<1x1x16xf32> to vector<1x16xf32>
    %392 = vector.broadcast %391 : vector<1x16xf32> to vector<16x16xf32>
    %393 = arith.mulf %389, %392 : vector<16x16xf32>
    %c0_164 = arith.constant 0 : index
    %c0_165 = arith.constant 0 : index
    %c0_166 = arith.constant 0 : index
    %394 = vector.load %arg28[%c0_164, %c0_165, %c0_166] : memref<2x1x16xf32, #tpu.memory_space<vmem>>, vector<1x1x16xf32>
    %395 = vector.shape_cast %394 : vector<1x1x16xf32> to vector<1x16xf32>
    %396 = vector.broadcast %395 : vector<1x16xf32> to vector<16x16xf32>
    %397 = arith.addf %393, %396 : vector<16x16xf32>
    %398 = arith.truncf %397 : vector<16x16xf32> to vector<16x16xbf16>
    %c1_167 = arith.constant 1 : index
    %c0_168 = arith.constant 0 : index
    %c0_169 = arith.constant 0 : index
    %399 = vector.load %arg17[%c1_167, %c0_168, %c0_169] : memref<2x16x48xbf16, #tpu.memory_space<vmem>>, vector<1x16x48xbf16>
    %400 = vector.shape_cast %399 : vector<1x16x48xbf16> to vector<16x48xbf16>
    %cst_170 = arith.constant dense<0.000000e+00> : vector<16x48xf32>
    %401 = tpu.matmul %398, %400, %cst_170 {dimension_numbers = #tpu.dot_dimension_numbers<[1], [0], [0], [1], [0, 0, 1, 1], [], []>} : vector<16x16xbf16>, vector<16x48xbf16>, vector<16x48xf32> -> vector<16x48xf32>
    %c1_171 = arith.constant 1 : index
    %c0_172 = arith.constant 0 : index
    %c0_173 = arith.constant 0 : index
    %402 = vector.load %arg18[%c1_171, %c0_172, %c0_173] : memref<2x1x48xf32, #tpu.memory_space<vmem>>, vector<1x1x48xf32>
    %403 = vector.shape_cast %402 : vector<1x1x48xf32> to vector<1x48xf32>
    %404 = vector.broadcast %403 : vector<1x48xf32> to vector<16x48xf32>
    %405 = arith.addf %401, %404 : vector<16x48xf32>
    %406 = vector.extract_strided_slice %405 {offsets = [0, 0], sizes = [8, 4], strides = [1, 1]} : vector<16x48xf32> to vector<8x4xf32>
    %407 = arith.truncf %406 : vector<8x4xf32> to vector<8x4xbf16>
    %408 = vector.extract_strided_slice %405 {offsets = [0, 16], sizes = [8, 4], strides = [1, 1]} : vector<16x48xf32> to vector<8x4xf32>
    %409 = arith.truncf %408 : vector<8x4xf32> to vector<8x4xbf16>
    %410 = vector.extract_strided_slice %405 {offsets = [0, 32], sizes = [8, 4], strides = [1, 1]} : vector<16x48xf32> to vector<8x4xf32>
    %411 = arith.truncf %410 : vector<8x4xf32> to vector<8x4xbf16>
    %cst_174 = arith.constant dense<0.000000e+00> : vector<8x8xf32>
    %412 = tpu.matmul %407, %409, %cst_174 {dimension_numbers = #tpu.dot_dimension_numbers<[1], [1], [0], [0], [0, 0, 1, 0], [], []>} : vector<8x4xbf16>, vector<8x4xbf16>, vector<8x8xf32> -> vector<8x8xf32>
    %cst_175 = arith.constant 5.000000e-01 : f32
    %413 = vector.broadcast %cst_175 : f32 to vector<8x8xf32>
    %414 = arith.mulf %412, %413 : vector<8x8xf32>
    %cst_176 = arith.constant dense<0xFF800000> : vector<8xf32>
    %415 = vector.multi_reduction <maximumf>, %414, %cst_176 [1] : vector<8x8xf32> to vector<8xf32>
    %416 = vector.shape_cast %415 : vector<8xf32> to vector<8x1xf32>
    %417 = vector.broadcast %416 : vector<8x1xf32> to vector<8x8xf32>
    %418 = arith.subf %414, %417 : vector<8x8xf32>
    %419 = math.exp %418 : vector<8x8xf32>
    %cst_177 = arith.constant dense<0.000000e+00> : vector<8xf32>
    %420 = vector.multi_reduction <add>, %419, %cst_177 [1] : vector<8x8xf32> to vector<8xf32>
    %421 = vector.shape_cast %420 : vector<8xf32> to vector<8x1xf32>
    %422 = tpu.reciprocal %421 {approx = true} : vector<8x1xf32> -> vector<8x1xf32>
    %423 = vector.broadcast %422 : vector<8x1xf32> to vector<8x8xf32>
    %424 = arith.mulf %419, %423 : vector<8x8xf32>
    %425 = arith.truncf %424 : vector<8x8xf32> to vector<8x8xbf16>
    %cst_178 = arith.constant dense<0.000000e+00> : vector<8x4xf32>
    %426 = tpu.matmul %425, %411, %cst_178 {dimension_numbers = #tpu.dot_dimension_numbers<[1], [0], [0], [1], [0, 0, 1, 1], [], []>} : vector<8x8xbf16>, vector<8x4xbf16>, vector<8x4xf32> -> vector<8x4xf32>
    %427 = vector.extract_strided_slice %405 {offsets = [0, 4], sizes = [8, 4], strides = [1, 1]} : vector<16x48xf32> to vector<8x4xf32>
    %428 = arith.truncf %427 : vector<8x4xf32> to vector<8x4xbf16>
    %429 = vector.extract_strided_slice %405 {offsets = [0, 20], sizes = [8, 4], strides = [1, 1]} : vector<16x48xf32> to vector<8x4xf32>
    %430 = arith.truncf %429 : vector<8x4xf32> to vector<8x4xbf16>
    %431 = vector.extract_strided_slice %405 {offsets = [0, 36], sizes = [8, 4], strides = [1, 1]} : vector<16x48xf32> to vector<8x4xf32>
    %432 = arith.truncf %431 : vector<8x4xf32> to vector<8x4xbf16>
    %cst_179 = arith.constant dense<0.000000e+00> : vector<8x8xf32>
    %433 = tpu.matmul %428, %430, %cst_179 {dimension_numbers = #tpu.dot_dimension_numbers<[1], [1], [0], [0], [0, 0, 1, 0], [], []>} : vector<8x4xbf16>, vector<8x4xbf16>, vector<8x8xf32> -> vector<8x8xf32>
    %cst_180 = arith.constant 5.000000e-01 : f32
    %434 = vector.broadcast %cst_180 : f32 to vector<8x8xf32>
    %435 = arith.mulf %433, %434 : vector<8x8xf32>
    %cst_181 = arith.constant dense<0xFF800000> : vector<8xf32>
    %436 = vector.multi_reduction <maximumf>, %435, %cst_181 [1] : vector<8x8xf32> to vector<8xf32>
    %437 = vector.shape_cast %436 : vector<8xf32> to vector<8x1xf32>
    %438 = vector.broadcast %437 : vector<8x1xf32> to vector<8x8xf32>
    %439 = arith.subf %435, %438 : vector<8x8xf32>
    %440 = math.exp %439 : vector<8x8xf32>
    %cst_182 = arith.constant dense<0.000000e+00> : vector<8xf32>
    %441 = vector.multi_reduction <add>, %440, %cst_182 [1] : vector<8x8xf32> to vector<8xf32>
    %442 = vector.shape_cast %441 : vector<8xf32> to vector<8x1xf32>
    %443 = tpu.reciprocal %442 {approx = true} : vector<8x1xf32> -> vector<8x1xf32>
    %444 = vector.broadcast %443 : vector<8x1xf32> to vector<8x8xf32>
    %445 = arith.mulf %440, %444 : vector<8x8xf32>
    %446 = arith.truncf %445 : vector<8x8xf32> to vector<8x8xbf16>
    %cst_183 = arith.constant dense<0.000000e+00> : vector<8x4xf32>
    %447 = tpu.matmul %446, %432, %cst_183 {dimension_numbers = #tpu.dot_dimension_numbers<[1], [0], [0], [1], [0, 0, 1, 1], [], []>} : vector<8x8xbf16>, vector<8x4xbf16>, vector<8x4xf32> -> vector<8x4xf32>
    %448 = vector.extract_strided_slice %405 {offsets = [0, 8], sizes = [8, 4], strides = [1, 1]} : vector<16x48xf32> to vector<8x4xf32>
    %449 = arith.truncf %448 : vector<8x4xf32> to vector<8x4xbf16>
    %450 = vector.extract_strided_slice %405 {offsets = [0, 24], sizes = [8, 4], strides = [1, 1]} : vector<16x48xf32> to vector<8x4xf32>
    %451 = arith.truncf %450 : vector<8x4xf32> to vector<8x4xbf16>
    %452 = vector.extract_strided_slice %405 {offsets = [0, 40], sizes = [8, 4], strides = [1, 1]} : vector<16x48xf32> to vector<8x4xf32>
    %453 = arith.truncf %452 : vector<8x4xf32> to vector<8x4xbf16>
    %cst_184 = arith.constant dense<0.000000e+00> : vector<8x8xf32>
    %454 = tpu.matmul %449, %451, %cst_184 {dimension_numbers = #tpu.dot_dimension_numbers<[1], [1], [0], [0], [0, 0, 1, 0], [], []>} : vector<8x4xbf16>, vector<8x4xbf16>, vector<8x8xf32> -> vector<8x8xf32>
    %cst_185 = arith.constant 5.000000e-01 : f32
    %455 = vector.broadcast %cst_185 : f32 to vector<8x8xf32>
    %456 = arith.mulf %454, %455 : vector<8x8xf32>
    %cst_186 = arith.constant dense<0xFF800000> : vector<8xf32>
    %457 = vector.multi_reduction <maximumf>, %456, %cst_186 [1] : vector<8x8xf32> to vector<8xf32>
    %458 = vector.shape_cast %457 : vector<8xf32> to vector<8x1xf32>
    %459 = vector.broadcast %458 : vector<8x1xf32> to vector<8x8xf32>
    %460 = arith.subf %456, %459 : vector<8x8xf32>
    %461 = math.exp %460 : vector<8x8xf32>
    %cst_187 = arith.constant dense<0.000000e+00> : vector<8xf32>
    %462 = vector.multi_reduction <add>, %461, %cst_187 [1] : vector<8x8xf32> to vector<8xf32>
    %463 = vector.shape_cast %462 : vector<8xf32> to vector<8x1xf32>
    %464 = tpu.reciprocal %463 {approx = true} : vector<8x1xf32> -> vector<8x1xf32>
    %465 = vector.broadcast %464 : vector<8x1xf32> to vector<8x8xf32>
    %466 = arith.mulf %461, %465 : vector<8x8xf32>
    %467 = arith.truncf %466 : vector<8x8xf32> to vector<8x8xbf16>
    %cst_188 = arith.constant dense<0.000000e+00> : vector<8x4xf32>
    %468 = tpu.matmul %467, %453, %cst_188 {dimension_numbers = #tpu.dot_dimension_numbers<[1], [0], [0], [1], [0, 0, 1, 1], [], []>} : vector<8x8xbf16>, vector<8x4xbf16>, vector<8x4xf32> -> vector<8x4xf32>
    %469 = vector.extract_strided_slice %405 {offsets = [0, 12], sizes = [8, 4], strides = [1, 1]} : vector<16x48xf32> to vector<8x4xf32>
    %470 = arith.truncf %469 : vector<8x4xf32> to vector<8x4xbf16>
    %471 = vector.extract_strided_slice %405 {offsets = [0, 28], sizes = [8, 4], strides = [1, 1]} : vector<16x48xf32> to vector<8x4xf32>
    %472 = arith.truncf %471 : vector<8x4xf32> to vector<8x4xbf16>
    %473 = vector.extract_strided_slice %405 {offsets = [0, 44], sizes = [8, 4], strides = [1, 1]} : vector<16x48xf32> to vector<8x4xf32>
    %474 = arith.truncf %473 : vector<8x4xf32> to vector<8x4xbf16>
    %cst_189 = arith.constant dense<0.000000e+00> : vector<8x8xf32>
    %475 = tpu.matmul %470, %472, %cst_189 {dimension_numbers = #tpu.dot_dimension_numbers<[1], [1], [0], [0], [0, 0, 1, 0], [], []>} : vector<8x4xbf16>, vector<8x4xbf16>, vector<8x8xf32> -> vector<8x8xf32>
    %cst_190 = arith.constant 5.000000e-01 : f32
    %476 = vector.broadcast %cst_190 : f32 to vector<8x8xf32>
    %477 = arith.mulf %475, %476 : vector<8x8xf32>
    %cst_191 = arith.constant dense<0xFF800000> : vector<8xf32>
    %478 = vector.multi_reduction <maximumf>, %477, %cst_191 [1] : vector<8x8xf32> to vector<8xf32>
    %479 = vector.shape_cast %478 : vector<8xf32> to vector<8x1xf32>
    %480 = vector.broadcast %479 : vector<8x1xf32> to vector<8x8xf32>
    %481 = arith.subf %477, %480 : vector<8x8xf32>
    %482 = math.exp %481 : vector<8x8xf32>
    %cst_192 = arith.constant dense<0.000000e+00> : vector<8xf32>
    %483 = vector.multi_reduction <add>, %482, %cst_192 [1] : vector<8x8xf32> to vector<8xf32>
    %484 = vector.shape_cast %483 : vector<8xf32> to vector<8x1xf32>
    %485 = tpu.reciprocal %484 {approx = true} : vector<8x1xf32> -> vector<8x1xf32>
    %486 = vector.broadcast %485 : vector<8x1xf32> to vector<8x8xf32>
    %487 = arith.mulf %482, %486 : vector<8x8xf32>
    %488 = arith.truncf %487 : vector<8x8xf32> to vector<8x8xbf16>
    %cst_193 = arith.constant dense<0.000000e+00> : vector<8x4xf32>
    %489 = tpu.matmul %488, %474, %cst_193 {dimension_numbers = #tpu.dot_dimension_numbers<[1], [0], [0], [1], [0, 0, 1, 1], [], []>} : vector<8x8xbf16>, vector<8x4xbf16>, vector<8x4xf32> -> vector<8x4xf32>
    %490 = tpu.concatenate %426, %447, %468, %489 in 1 : vector<8x4xf32>, vector<8x4xf32>, vector<8x4xf32>, vector<8x4xf32> -> vector<8x16xf32>
    %491 = vector.extract_strided_slice %405 {offsets = [8, 0], sizes = [8, 4], strides = [1, 1]} : vector<16x48xf32> to vector<8x4xf32>
    %492 = arith.truncf %491 : vector<8x4xf32> to vector<8x4xbf16>
    %493 = vector.extract_strided_slice %405 {offsets = [8, 16], sizes = [8, 4], strides = [1, 1]} : vector<16x48xf32> to vector<8x4xf32>
    %494 = arith.truncf %493 : vector<8x4xf32> to vector<8x4xbf16>
    %495 = vector.extract_strided_slice %405 {offsets = [8, 32], sizes = [8, 4], strides = [1, 1]} : vector<16x48xf32> to vector<8x4xf32>
    %496 = arith.truncf %495 : vector<8x4xf32> to vector<8x4xbf16>
    %cst_194 = arith.constant dense<0.000000e+00> : vector<8x8xf32>
    %497 = tpu.matmul %492, %494, %cst_194 {dimension_numbers = #tpu.dot_dimension_numbers<[1], [1], [0], [0], [0, 0, 1, 0], [], []>} : vector<8x4xbf16>, vector<8x4xbf16>, vector<8x8xf32> -> vector<8x8xf32>
    %cst_195 = arith.constant 5.000000e-01 : f32
    %498 = vector.broadcast %cst_195 : f32 to vector<8x8xf32>
    %499 = arith.mulf %497, %498 : vector<8x8xf32>
    %cst_196 = arith.constant dense<0xFF800000> : vector<8xf32>
    %500 = vector.multi_reduction <maximumf>, %499, %cst_196 [1] : vector<8x8xf32> to vector<8xf32>
    %501 = vector.shape_cast %500 : vector<8xf32> to vector<8x1xf32>
    %502 = vector.broadcast %501 : vector<8x1xf32> to vector<8x8xf32>
    %503 = arith.subf %499, %502 : vector<8x8xf32>
    %504 = math.exp %503 : vector<8x8xf32>
    %cst_197 = arith.constant dense<0.000000e+00> : vector<8xf32>
    %505 = vector.multi_reduction <add>, %504, %cst_197 [1] : vector<8x8xf32> to vector<8xf32>
    %506 = vector.shape_cast %505 : vector<8xf32> to vector<8x1xf32>
    %507 = tpu.reciprocal %506 {approx = true} : vector<8x1xf32> -> vector<8x1xf32>
    %508 = vector.broadcast %507 : vector<8x1xf32> to vector<8x8xf32>
    %509 = arith.mulf %504, %508 : vector<8x8xf32>
    %510 = arith.truncf %509 : vector<8x8xf32> to vector<8x8xbf16>
    %cst_198 = arith.constant dense<0.000000e+00> : vector<8x4xf32>
    %511 = tpu.matmul %510, %496, %cst_198 {dimension_numbers = #tpu.dot_dimension_numbers<[1], [0], [0], [1], [0, 0, 1, 1], [], []>} : vector<8x8xbf16>, vector<8x4xbf16>, vector<8x4xf32> -> vector<8x4xf32>
    %512 = vector.extract_strided_slice %405 {offsets = [8, 4], sizes = [8, 4], strides = [1, 1]} : vector<16x48xf32> to vector<8x4xf32>
    %513 = arith.truncf %512 : vector<8x4xf32> to vector<8x4xbf16>
    %514 = vector.extract_strided_slice %405 {offsets = [8, 20], sizes = [8, 4], strides = [1, 1]} : vector<16x48xf32> to vector<8x4xf32>
    %515 = arith.truncf %514 : vector<8x4xf32> to vector<8x4xbf16>
    %516 = vector.extract_strided_slice %405 {offsets = [8, 36], sizes = [8, 4], strides = [1, 1]} : vector<16x48xf32> to vector<8x4xf32>
    %517 = arith.truncf %516 : vector<8x4xf32> to vector<8x4xbf16>
    %cst_199 = arith.constant dense<0.000000e+00> : vector<8x8xf32>
    %518 = tpu.matmul %513, %515, %cst_199 {dimension_numbers = #tpu.dot_dimension_numbers<[1], [1], [0], [0], [0, 0, 1, 0], [], []>} : vector<8x4xbf16>, vector<8x4xbf16>, vector<8x8xf32> -> vector<8x8xf32>
    %cst_200 = arith.constant 5.000000e-01 : f32
    %519 = vector.broadcast %cst_200 : f32 to vector<8x8xf32>
    %520 = arith.mulf %518, %519 : vector<8x8xf32>
    %cst_201 = arith.constant dense<0xFF800000> : vector<8xf32>
    %521 = vector.multi_reduction <maximumf>, %520, %cst_201 [1] : vector<8x8xf32> to vector<8xf32>
    %522 = vector.shape_cast %521 : vector<8xf32> to vector<8x1xf32>
    %523 = vector.broadcast %522 : vector<8x1xf32> to vector<8x8xf32>
    %524 = arith.subf %520, %523 : vector<8x8xf32>
    %525 = math.exp %524 : vector<8x8xf32>
    %cst_202 = arith.constant dense<0.000000e+00> : vector<8xf32>
    %526 = vector.multi_reduction <add>, %525, %cst_202 [1] : vector<8x8xf32> to vector<8xf32>
    %527 = vector.shape_cast %526 : vector<8xf32> to vector<8x1xf32>
    %528 = tpu.reciprocal %527 {approx = true} : vector<8x1xf32> -> vector<8x1xf32>
    %529 = vector.broadcast %528 : vector<8x1xf32> to vector<8x8xf32>
    %530 = arith.mulf %525, %529 : vector<8x8xf32>
    %531 = arith.truncf %530 : vector<8x8xf32> to vector<8x8xbf16>
    %cst_203 = arith.constant dense<0.000000e+00> : vector<8x4xf32>
    %532 = tpu.matmul %531, %517, %cst_203 {dimension_numbers = #tpu.dot_dimension_numbers<[1], [0], [0], [1], [0, 0, 1, 1], [], []>} : vector<8x8xbf16>, vector<8x4xbf16>, vector<8x4xf32> -> vector<8x4xf32>
    %533 = vector.extract_strided_slice %405 {offsets = [8, 8], sizes = [8, 4], strides = [1, 1]} : vector<16x48xf32> to vector<8x4xf32>
    %534 = arith.truncf %533 : vector<8x4xf32> to vector<8x4xbf16>
    %535 = vector.extract_strided_slice %405 {offsets = [8, 24], sizes = [8, 4], strides = [1, 1]} : vector<16x48xf32> to vector<8x4xf32>
    %536 = arith.truncf %535 : vector<8x4xf32> to vector<8x4xbf16>
    %537 = vector.extract_strided_slice %405 {offsets = [8, 40], sizes = [8, 4], strides = [1, 1]} : vector<16x48xf32> to vector<8x4xf32>
    %538 = arith.truncf %537 : vector<8x4xf32> to vector<8x4xbf16>
    %cst_204 = arith.constant dense<0.000000e+00> : vector<8x8xf32>
    %539 = tpu.matmul %534, %536, %cst_204 {dimension_numbers = #tpu.dot_dimension_numbers<[1], [1], [0], [0], [0, 0, 1, 0], [], []>} : vector<8x4xbf16>, vector<8x4xbf16>, vector<8x8xf32> -> vector<8x8xf32>
    %cst_205 = arith.constant 5.000000e-01 : f32
    %540 = vector.broadcast %cst_205 : f32 to vector<8x8xf32>
    %541 = arith.mulf %539, %540 : vector<8x8xf32>
    %cst_206 = arith.constant dense<0xFF800000> : vector<8xf32>
    %542 = vector.multi_reduction <maximumf>, %541, %cst_206 [1] : vector<8x8xf32> to vector<8xf32>
    %543 = vector.shape_cast %542 : vector<8xf32> to vector<8x1xf32>
    %544 = vector.broadcast %543 : vector<8x1xf32> to vector<8x8xf32>
    %545 = arith.subf %541, %544 : vector<8x8xf32>
    %546 = math.exp %545 : vector<8x8xf32>
    %cst_207 = arith.constant dense<0.000000e+00> : vector<8xf32>
    %547 = vector.multi_reduction <add>, %546, %cst_207 [1] : vector<8x8xf32> to vector<8xf32>
    %548 = vector.shape_cast %547 : vector<8xf32> to vector<8x1xf32>
    %549 = tpu.reciprocal %548 {approx = true} : vector<8x1xf32> -> vector<8x1xf32>
    %550 = vector.broadcast %549 : vector<8x1xf32> to vector<8x8xf32>
    %551 = arith.mulf %546, %550 : vector<8x8xf32>
    %552 = arith.truncf %551 : vector<8x8xf32> to vector<8x8xbf16>
    %cst_208 = arith.constant dense<0.000000e+00> : vector<8x4xf32>
    %553 = tpu.matmul %552, %538, %cst_208 {dimension_numbers = #tpu.dot_dimension_numbers<[1], [0], [0], [1], [0, 0, 1, 1], [], []>} : vector<8x8xbf16>, vector<8x4xbf16>, vector<8x4xf32> -> vector<8x4xf32>
    %554 = vector.extract_strided_slice %405 {offsets = [8, 12], sizes = [8, 4], strides = [1, 1]} : vector<16x48xf32> to vector<8x4xf32>
    %555 = arith.truncf %554 : vector<8x4xf32> to vector<8x4xbf16>
    %556 = vector.extract_strided_slice %405 {offsets = [8, 28], sizes = [8, 4], strides = [1, 1]} : vector<16x48xf32> to vector<8x4xf32>
    %557 = arith.truncf %556 : vector<8x4xf32> to vector<8x4xbf16>
    %558 = vector.extract_strided_slice %405 {offsets = [8, 44], sizes = [8, 4], strides = [1, 1]} : vector<16x48xf32> to vector<8x4xf32>
    %559 = arith.truncf %558 : vector<8x4xf32> to vector<8x4xbf16>
    %cst_209 = arith.constant dense<0.000000e+00> : vector<8x8xf32>
    %560 = tpu.matmul %555, %557, %cst_209 {dimension_numbers = #tpu.dot_dimension_numbers<[1], [1], [0], [0], [0, 0, 1, 0], [], []>} : vector<8x4xbf16>, vector<8x4xbf16>, vector<8x8xf32> -> vector<8x8xf32>
    %cst_210 = arith.constant 5.000000e-01 : f32
    %561 = vector.broadcast %cst_210 : f32 to vector<8x8xf32>
    %562 = arith.mulf %560, %561 : vector<8x8xf32>
    %cst_211 = arith.constant dense<0xFF800000> : vector<8xf32>
    %563 = vector.multi_reduction <maximumf>, %562, %cst_211 [1] : vector<8x8xf32> to vector<8xf32>
    %564 = vector.shape_cast %563 : vector<8xf32> to vector<8x1xf32>
    %565 = vector.broadcast %564 : vector<8x1xf32> to vector<8x8xf32>
    %566 = arith.subf %562, %565 : vector<8x8xf32>
    %567 = math.exp %566 : vector<8x8xf32>
    %cst_212 = arith.constant dense<0.000000e+00> : vector<8xf32>
    %568 = vector.multi_reduction <add>, %567, %cst_212 [1] : vector<8x8xf32> to vector<8xf32>
    %569 = vector.shape_cast %568 : vector<8xf32> to vector<8x1xf32>
    %570 = tpu.reciprocal %569 {approx = true} : vector<8x1xf32> -> vector<8x1xf32>
    %571 = vector.broadcast %570 : vector<8x1xf32> to vector<8x8xf32>
    %572 = arith.mulf %567, %571 : vector<8x8xf32>
    %573 = arith.truncf %572 : vector<8x8xf32> to vector<8x8xbf16>
    %cst_213 = arith.constant dense<0.000000e+00> : vector<8x4xf32>
    %574 = tpu.matmul %573, %559, %cst_213 {dimension_numbers = #tpu.dot_dimension_numbers<[1], [0], [0], [1], [0, 0, 1, 1], [], []>} : vector<8x8xbf16>, vector<8x4xbf16>, vector<8x4xf32> -> vector<8x4xf32>
    %575 = tpu.concatenate %511, %532, %553, %574 in 1 : vector<8x4xf32>, vector<8x4xf32>, vector<8x4xf32>, vector<8x4xf32> -> vector<8x16xf32>
    %576 = tpu.concatenate %490, %575 in 0 : vector<8x16xf32>, vector<8x16xf32> -> vector<16x16xf32>
    %577 = arith.truncf %576 : vector<16x16xf32> to vector<16x16xbf16>
    %c1_214 = arith.constant 1 : index
    %c0_215 = arith.constant 0 : index
    %c0_216 = arith.constant 0 : index
    %578 = vector.load %arg19[%c1_214, %c0_215, %c0_216] : memref<2x16x16xbf16, #tpu.memory_space<vmem>>, vector<1x16x16xbf16>
    %579 = vector.shape_cast %578 : vector<1x16x16xbf16> to vector<16x16xbf16>
    %cst_217 = arith.constant dense<0.000000e+00> : vector<16x16xf32>
    %580 = tpu.matmul %577, %579, %cst_217 {dimension_numbers = #tpu.dot_dimension_numbers<[1], [0], [0], [1], [0, 0, 1, 1], [], []>} : vector<16x16xbf16>, vector<16x16xbf16>, vector<16x16xf32> -> vector<16x16xf32>
    %c1_218 = arith.constant 1 : index
    %c0_219 = arith.constant 0 : index
    %c0_220 = arith.constant 0 : index
    %581 = vector.load %arg20[%c1_218, %c0_219, %c0_220] : memref<2x1x16xf32, #tpu.memory_space<vmem>>, vector<1x1x16xf32>
    %582 = vector.shape_cast %581 : vector<1x1x16xf32> to vector<1x16xf32>
    %583 = vector.broadcast %582 : vector<1x16xf32> to vector<16x16xf32>
    %584 = arith.addf %580, %583 : vector<16x16xf32>
    %585 = arith.addf %397, %584 : vector<16x16xf32>
    %cst_221 = arith.constant dense<0.000000e+00> : vector<16xf32>
    %586 = vector.multi_reduction <add>, %585, %cst_221 [1] : vector<16x16xf32> to vector<16xf32>
    %587 = vector.shape_cast %586 : vector<16xf32> to vector<16x1xf32>
    %cst_222 = arith.constant 1.600000e+01 : f32
    %588 = vector.broadcast %cst_222 : f32 to vector<16x1xf32>
    %589 = arith.divf %587, %588 : vector<16x1xf32>
    %590 = vector.broadcast %589 : vector<16x1xf32> to vector<16x16xf32>
    %591 = arith.subf %585, %590 : vector<16x16xf32>
    %592 = arith.mulf %591, %591 : vector<16x16xf32>
    %cst_223 = arith.constant dense<0.000000e+00> : vector<16xf32>
    %593 = vector.multi_reduction <add>, %592, %cst_223 [1] : vector<16x16xf32> to vector<16xf32>
    %594 = vector.shape_cast %593 : vector<16xf32> to vector<16x1xf32>
    %cst_224 = arith.constant 1.600000e+01 : f32
    %595 = vector.broadcast %cst_224 : f32 to vector<16x1xf32>
    %596 = arith.divf %594, %595 : vector<16x1xf32>
    %597 = vector.broadcast %589 : vector<16x1xf32> to vector<16x16xf32>
    %598 = arith.subf %585, %597 : vector<16x16xf32>
    %cst_225 = arith.constant 9.99999974E-6 : f32
    %599 = vector.broadcast %cst_225 : f32 to vector<16x1xf32>
    %600 = arith.addf %596, %599 : vector<16x1xf32>
    %601 = math.rsqrt %600 : vector<16x1xf32>
    %602 = vector.broadcast %601 : vector<16x1xf32> to vector<16x16xf32>
    %603 = arith.mulf %598, %602 : vector<16x16xf32>
    %c1_226 = arith.constant 1 : index
    %c0_227 = arith.constant 0 : index
    %c0_228 = arith.constant 0 : index
    %604 = vector.load %arg21[%c1_226, %c0_227, %c0_228] : memref<2x1x16xf32, #tpu.memory_space<vmem>>, vector<1x1x16xf32>
    %605 = vector.shape_cast %604 : vector<1x1x16xf32> to vector<1x16xf32>
    %606 = vector.broadcast %605 : vector<1x16xf32> to vector<16x16xf32>
    %607 = arith.mulf %603, %606 : vector<16x16xf32>
    %c1_229 = arith.constant 1 : index
    %c0_230 = arith.constant 0 : index
    %c0_231 = arith.constant 0 : index
    %608 = vector.load %arg22[%c1_229, %c0_230, %c0_231] : memref<2x1x16xf32, #tpu.memory_space<vmem>>, vector<1x1x16xf32>
    %609 = vector.shape_cast %608 : vector<1x1x16xf32> to vector<1x16xf32>
    %610 = vector.broadcast %609 : vector<1x16xf32> to vector<16x16xf32>
    %611 = arith.addf %607, %610 : vector<16x16xf32>
    %612 = arith.truncf %611 : vector<16x16xf32> to vector<16x16xbf16>
    %c1_232 = arith.constant 1 : index
    %c0_233 = arith.constant 0 : index
    %c0_234 = arith.constant 0 : index
    %613 = vector.load %arg23[%c1_232, %c0_233, %c0_234] : memref<2x16x2048xbf16, #tpu.memory_space<vmem>>, vector<1x16x2048xbf16>
    %614 = vector.shape_cast %613 : vector<1x16x2048xbf16> to vector<16x2048xbf16>
    %cst_235 = arith.constant dense<0.000000e+00> : vector<16x2048xf32>
    %615 = tpu.matmul %612, %614, %cst_235 {dimension_numbers = #tpu.dot_dimension_numbers<[1], [0], [0], [1], [0, 0, 1, 1], [], []>} : vector<16x16xbf16>, vector<16x2048xbf16>, vector<16x2048xf32> -> vector<16x2048xf32>
    %c1_236 = arith.constant 1 : index
    %c0_237 = arith.constant 0 : index
    %c0_238 = arith.constant 0 : index
    %616 = vector.load %arg24[%c1_236, %c0_237, %c0_238] : memref<2x1x2048xf32, #tpu.memory_space<vmem>>, vector<1x1x2048xf32>
    %617 = vector.shape_cast %616 : vector<1x1x2048xf32> to vector<1x2048xf32>
    %618 = vector.broadcast %617 : vector<1x2048xf32> to vector<16x2048xf32>
    %619 = arith.addf %615, %618 : vector<16x2048xf32>
    %cst_239 = arith.constant 0.000000e+00 : f32
    %620 = vector.broadcast %cst_239 : f32 to vector<16x2048xf32>
    %621 = arith.maximumf %619, %620 : vector<16x2048xf32>
    %622 = arith.truncf %621 : vector<16x2048xf32> to vector<16x2048xbf16>
    %c1_240 = arith.constant 1 : index
    %c0_241 = arith.constant 0 : index
    %c0_242 = arith.constant 0 : index
    %623 = vector.load %arg25[%c1_240, %c0_241, %c0_242] : memref<2x2048x16xbf16, #tpu.memory_space<vmem>>, vector<1x2048x16xbf16>
    %624 = vector.shape_cast %623 : vector<1x2048x16xbf16> to vector<2048x16xbf16>
    %cst_243 = arith.constant dense<0.000000e+00> : vector<16x16xf32>
    %625 = tpu.matmul %622, %624, %cst_243 {dimension_numbers = #tpu.dot_dimension_numbers<[1], [0], [0], [1], [0, 0, 1, 1], [], []>} : vector<16x2048xbf16>, vector<2048x16xbf16>, vector<16x16xf32> -> vector<16x16xf32>
    %c1_244 = arith.constant 1 : index
    %c0_245 = arith.constant 0 : index
    %c0_246 = arith.constant 0 : index
    %626 = vector.load %arg26[%c1_244, %c0_245, %c0_246] : memref<2x1x16xf32, #tpu.memory_space<vmem>>, vector<1x1x16xf32>
    %627 = vector.shape_cast %626 : vector<1x1x16xf32> to vector<1x16xf32>
    %628 = vector.broadcast %627 : vector<1x16xf32> to vector<16x16xf32>
    %629 = arith.addf %625, %628 : vector<16x16xf32>
    %630 = arith.addf %611, %629 : vector<16x16xf32>
    %cst_247 = arith.constant dense<0.000000e+00> : vector<16xf32>
    %631 = vector.multi_reduction <add>, %630, %cst_247 [1] : vector<16x16xf32> to vector<16xf32>
    %632 = vector.shape_cast %631 : vector<16xf32> to vector<16x1xf32>
    %cst_248 = arith.constant 1.600000e+01 : f32
    %633 = vector.broadcast %cst_248 : f32 to vector<16x1xf32>
    %634 = arith.divf %632, %633 : vector<16x1xf32>
    %635 = vector.broadcast %634 : vector<16x1xf32> to vector<16x16xf32>
    %636 = arith.subf %630, %635 : vector<16x16xf32>
    %637 = arith.mulf %636, %636 : vector<16x16xf32>
    %cst_249 = arith.constant dense<0.000000e+00> : vector<16xf32>
    %638 = vector.multi_reduction <add>, %637, %cst_249 [1] : vector<16x16xf32> to vector<16xf32>
    %639 = vector.shape_cast %638 : vector<16xf32> to vector<16x1xf32>
    %cst_250 = arith.constant 1.600000e+01 : f32
    %640 = vector.broadcast %cst_250 : f32 to vector<16x1xf32>
    %641 = arith.divf %639, %640 : vector<16x1xf32>
    %642 = vector.broadcast %634 : vector<16x1xf32> to vector<16x16xf32>
    %643 = arith.subf %630, %642 : vector<16x16xf32>
    %cst_251 = arith.constant 9.99999974E-6 : f32
    %644 = vector.broadcast %cst_251 : f32 to vector<16x1xf32>
    %645 = arith.addf %641, %644 : vector<16x1xf32>
    %646 = math.rsqrt %645 : vector<16x1xf32>
    %647 = vector.broadcast %646 : vector<16x1xf32> to vector<16x16xf32>
    %648 = arith.mulf %643, %647 : vector<16x16xf32>
    %c1_252 = arith.constant 1 : index
    %c0_253 = arith.constant 0 : index
    %c0_254 = arith.constant 0 : index
    %649 = vector.load %arg27[%c1_252, %c0_253, %c0_254] : memref<2x1x16xf32, #tpu.memory_space<vmem>>, vector<1x1x16xf32>
    %650 = vector.shape_cast %649 : vector<1x1x16xf32> to vector<1x16xf32>
    %651 = vector.broadcast %650 : vector<1x16xf32> to vector<16x16xf32>
    %652 = arith.mulf %648, %651 : vector<16x16xf32>
    %c1_255 = arith.constant 1 : index
    %c0_256 = arith.constant 0 : index
    %c0_257 = arith.constant 0 : index
    %653 = vector.load %arg28[%c1_255, %c0_256, %c0_257] : memref<2x1x16xf32, #tpu.memory_space<vmem>>, vector<1x1x16xf32>
    %654 = vector.shape_cast %653 : vector<1x1x16xf32> to vector<1x16xf32>
    %655 = vector.broadcast %654 : vector<1x16xf32> to vector<16x16xf32>
    %656 = arith.addf %652, %655 : vector<16x16xf32>
    %657 = arith.truncf %656 : vector<16x16xf32> to vector<16x16xbf16>
    %c0_258 = arith.constant 0 : index
    %c0_259 = arith.constant 0 : index
    %658 = vector.load %arg29[%c0_258, %c0_259] : memref<16x128xbf16, #tpu.memory_space<vmem>>, vector<16x128xbf16>
    %cst_260 = arith.constant dense<0.000000e+00> : vector<16x128xf32>
    %659 = tpu.matmul %657, %658, %cst_260 {dimension_numbers = #tpu.dot_dimension_numbers<[1], [0], [0], [1], [0, 0, 1, 1], [], []>} : vector<16x16xbf16>, vector<16x128xbf16>, vector<16x128xf32> -> vector<16x128xf32>
    %c0_261 = arith.constant 0 : index
    %c0_262 = arith.constant 0 : index
    %660 = vector.load %arg30[%c0_261, %c0_262] : memref<1x128xf32, #tpu.memory_space<vmem>>, vector<1x128xf32>
    %661 = vector.broadcast %660 : vector<1x128xf32> to vector<16x128xf32>
    %662 = arith.addf %659, %661 : vector<16x128xf32>
    %c0_263 = arith.constant 0 : index
    %c0_264 = arith.constant 0 : index
    %663 = vector.load %arg31[%c0_263, %c0_264] : memref<16x128xf32, #tpu.memory_space<vmem>>, vector<16x128xf32>
    tpu.vector_store %arg31[%c0_263, %c0_264], %662 {strides = array<i32>} : memref<16x128xf32, #tpu.memory_space<vmem>>, vector<16x128xf32>,
    return
  }
  func.func @transform_0(%arg0: i32) -> (i32, i32) {
    %c0_i32 = arith.constant 0 : i32
    %c0_i32_0 = arith.constant 0 : i32
    %c0_i32_1 = arith.constant 0 : i32
    return %c0_i32, %c0_i32_0 : i32, i32
  }
  func.func @transform_1(%arg0: i32) -> (i32, i32) {
    %c0_i32 = arith.constant 0 : i32
    %c0_i32_0 = arith.constant 0 : i32
    %c0_i32_1 = arith.constant 0 : i32
    return %c0_i32, %c0_i32_0 : i32, i32
  }
  func.func @transform_2(%arg0: i32) -> (i32, i32) {
    %c0_i32 = arith.constant 0 : i32
    %c0_i32_0 = arith.constant 0 : i32
    %c0_i32_1 = arith.constant 0 : i32
    return %c0_i32, %c0_i32_0 : i32, i32
  }
  func.func @transform_3(%arg0: i32) -> (i32, i32, i32) {
    %c0_i32 = arith.constant 0 : i32
    %c0_i32_0 = arith.constant 0 : i32
    %c0_i32_1 = arith.constant 0 : i32
    %c0_i32_2 = arith.constant 0 : i32
    return %c0_i32, %c0_i32_0, %c0_i32_1 : i32, i32, i32
  }
  func.func @transform_4(%arg0: i32) -> (i32, i32) {
    %c0_i32 = arith.constant 0 : i32
    %c0_i32_0 = arith.constant 0 : i32
    %c0_i32_1 = arith.constant 0 : i32
    return %c0_i32, %c0_i32_0 : i32, i32
  }
  func.func @transform_5(%arg0: i32) -> (i32, i32, i32) {
    %c0_i32 = arith.constant 0 : i32
    %c0_i32_0 = arith.constant 0 : i32
    %c0_i32_1 = arith.constant 0 : i32
    %c0_i32_2 = arith.constant 0 : i32
    return %c0_i32, %c0_i32_0, %c0_i32_1 : i32, i32, i32
  }
  func.func @transform_6(%arg0: i32) -> (i32, i32) {
    %c0_i32 = arith.constant 0 : i32
    %c0_i32_0 = arith.constant 0 : i32
    %c0_i32_1 = arith.constant 0 : i32
    return %c0_i32, %c0_i32_0 : i32, i32
  }
  func.func @transform_7(%arg0: i32) -> (i32, i32, i32) {
    %c0_i32 = arith.constant 0 : i32
    %c0_i32_0 = arith.constant 0 : i32
    %c0_i32_1 = arith.constant 0 : i32
    %c0_i32_2 = arith.constant 0 : i32
    return %c0_i32, %c0_i32_0, %c0_i32_1 : i32, i32, i32
  }
  func.func @transform_8(%arg0: i32) -> (i32, i32) {
    %c0_i32 = arith.constant 0 : i32
    %c0_i32_0 = arith.constant 0 : i32
    %c0_i32_1 = arith.constant 0 : i32
    return %c0_i32, %c0_i32_0 : i32, i32
  }
  func.func @transform_9(%arg0: i32) -> (i32, i32, i32) {
    %c0_i32 = arith.constant 0 : i32
    %c0_i32_0 = arith.constant 0 : i32
    %c0_i32_1 = arith.constant 0 : i32
    %c0_i32_2 = arith.constant 0 : i32
    return %c0_i32, %c0_i32_0, %c0_i32_1 : i32, i32, i32
  }
  func.func @transform_10(%arg0: i32) -> (i32, i32) {
    %c0_i32 = arith.constant 0 : i32
    %c0_i32_0 = arith.constant 0 : i32
    %c0_i32_1 = arith.constant 0 : i32
    return %c0_i32, %c0_i32_0 : i32, i32
  }
  func.func @transform_11(%arg0: i32) -> (i32, i32, i32) {
    %c0_i32 = arith.constant 0 : i32
    %c0_i32_0 = arith.constant 0 : i32
    %c0_i32_1 = arith.constant 0 : i32
    %c0_i32_2 = arith.constant 0 : i32
    return %c0_i32, %c0_i32_0, %c0_i32_1 : i32, i32, i32
  }
  func.func @transform_12(%arg0: i32) -> (i32, i32) {
    %c0_i32 = arith.constant 0 : i32
    %c0_i32_0 = arith.constant 0 : i32
    %c0_i32_1 = arith.constant 0 : i32
    return %c0_i32, %c0_i32_0 : i32, i32
  }
  func.func @transform_13(%arg0: i32) -> (i32, i32, i32) {
    %c0_i32 = arith.constant 0 : i32
    %c0_i32_0 = arith.constant 0 : i32
    %c0_i32_1 = arith.constant 0 : i32
    %c0_i32_2 = arith.constant 0 : i32
    return %c0_i32, %c0_i32_0, %c0_i32_1 : i32, i32, i32
  }
  func.func @transform_14(%arg0: i32) -> (i32, i32) {
    %c0_i32 = arith.constant 0 : i32
    %c0_i32_0 = arith.constant 0 : i32
    %c0_i32_1 = arith.constant 0 : i32
    return %c0_i32, %c0_i32_0 : i32, i32
  }
  func.func @transform_15(%arg0: i32) -> (i32, i32) {
    %c0_i32 = arith.constant 0 : i32
    %c0_i32_0 = arith.constant 0 : i32
    %c0_i32_1 = arith.constant 0 : i32
    return %c0_i32, %c0_i32_0 : i32, i32
  }
  func.func @transform_16(%arg0: i32) -> (i32, i32, i32) {
    %c0_i32 = arith.constant 0 : i32
    %c0_i32_0 = arith.constant 0 : i32
    %c0_i32_1 = arith.constant 0 : i32
    %c0_i32_2 = arith.constant 0 : i32
    return %c0_i32, %c0_i32_0, %c0_i32_1 : i32, i32, i32
  }
  func.func @transform_17(%arg0: i32) -> (i32, i32, i32) {
    %c0_i32 = arith.constant 0 : i32
    %c0_i32_0 = arith.constant 0 : i32
    %c0_i32_1 = arith.constant 0 : i32
    %c0_i32_2 = arith.constant 0 : i32
    return %c0_i32, %c0_i32_0, %c0_i32_1 : i32, i32, i32
  }
  func.func @transform_18(%arg0: i32) -> (i32, i32, i32) {
    %c0_i32 = arith.constant 0 : i32
    %c0_i32_0 = arith.constant 0 : i32
    %c0_i32_1 = arith.constant 0 : i32
    %c0_i32_2 = arith.constant 0 : i32
    return %c0_i32, %c0_i32_0, %c0_i32_1 : i32, i32, i32
  }
  func.func @transform_19(%arg0: i32) -> (i32, i32, i32) {
    %c0_i32 = arith.constant 0 : i32
    %c0_i32_0 = arith.constant 0 : i32
    %c0_i32_1 = arith.constant 0 : i32
    %c0_i32_2 = arith.constant 0 : i32
    return %c0_i32, %c0_i32_0, %c0_i32_1 : i32, i32, i32
  }
  func.func @transform_20(%arg0: i32) -> (i32, i32, i32) {
    %c0_i32 = arith.constant 0 : i32
    %c0_i32_0 = arith.constant 0 : i32
    %c0_i32_1 = arith.constant 0 : i32
    %c0_i32_2 = arith.constant 0 : i32
    return %c0_i32, %c0_i32_0, %c0_i32_1 : i32, i32, i32
  }
  func.func @transform_21(%arg0: i32) -> (i32, i32, i32) {
    %c0_i32 = arith.constant 0 : i32
    %c0_i32_0 = arith.constant 0 : i32
    %c0_i32_1 = arith.constant 0 : i32
    %c0_i32_2 = arith.constant 0 : i32
    return %c0_i32, %c0_i32_0, %c0_i32_1 : i32, i32, i32
  }
  func.func @transform_22(%arg0: i32) -> (i32, i32, i32) {
    %c0_i32 = arith.constant 0 : i32
    %c0_i32_0 = arith.constant 0 : i32
    %c0_i32_1 = arith.constant 0 : i32
    %c0_i32_2 = arith.constant 0 : i32
    return %c0_i32, %c0_i32_0, %c0_i32_1 : i32, i32, i32
  }
  func.func @transform_23(%arg0: i32) -> (i32, i32, i32) {
    %c0_i32 = arith.constant 0 : i32
    %c0_i32_0 = arith.constant 0 : i32
    %c0_i32_1 = arith.constant 0 : i32
    %c0_i32_2 = arith.constant 0 : i32
    return %c0_i32, %c0_i32_0, %c0_i32_1 : i32, i32, i32
  }
  func.func @transform_24(%arg0: i32) -> (i32, i32, i32) {
    %c0_i32 = arith.constant 0 : i32
    %c0_i32_0 = arith.constant 0 : i32
    %c0_i32_1 = arith.constant 0 : i32
    %c0_i32_2 = arith.constant 0 : i32
    return %c0_i32, %c0_i32_0, %c0_i32_1 : i32, i32, i32
  }
  func.func @transform_25(%arg0: i32) -> (i32, i32, i32) {
    %c0_i32 = arith.constant 0 : i32
    %c0_i32_0 = arith.constant 0 : i32
    %c0_i32_1 = arith.constant 0 : i32
    %c0_i32_2 = arith.constant 0 : i32
    return %c0_i32, %c0_i32_0, %c0_i32_1 : i32, i32, i32
  }
  func.func @transform_26(%arg0: i32) -> (i32, i32, i32) {
    %c0_i32 = arith.constant 0 : i32
    %c0_i32_0 = arith.constant 0 : i32
    %c0_i32_1 = arith.constant 0 : i32
    %c0_i32_2 = arith.constant 0 : i32
    return %c0_i32, %c0_i32_0, %c0_i32_1 : i32, i32, i32
  }
  func.func @transform_27(%arg0: i32) -> (i32, i32, i32) {
    %c0_i32 = arith.constant 0 : i32
    %c0_i32_0 = arith.constant 0 : i32
    %c0_i32_1 = arith.constant 0 : i32
    %c0_i32_2 = arith.constant 0 : i32
    return %c0_i32, %c0_i32_0, %c0_i32_1 : i32, i32, i32
  }
  func.func @transform_28(%arg0: i32) -> (i32, i32) {
    %c0_i32 = arith.constant 0 : i32
    %c0_i32_0 = arith.constant 0 : i32
    %c0_i32_1 = arith.constant 0 : i32
    return %c0_i32, %c0_i32_0 : i32, i32
  }
  func.func @transform_29(%arg0: i32) -> (i32, i32) {
    %c0_i32 = arith.constant 0 : i32
    %c0_i32_0 = arith.constant 0 : i32
    %c0_i32_1 = arith.constant 0 : i32
    return %c0_i32, %c0_i32_0 : i32, i32
  }
  func.func @transform_30(%arg0: i32) -> (i32, i32) {
    %c0_i32 = arith.constant 0 : i32
    %c0_i32_0 = arith.constant 0 : i32
    %c0_i32_1 = arith.constant 0 : i32
    return %c0_i32, %c0_i32_0 : i32, i32
  }
}

</mosaic_0001>

<llo_original>
// kernel: gnn_arma_transformer.1
$region0: #{gnn_arma_transformer.1}
  #allocation0 [shape = 'u32[]', space=smem, size = 0x4, offset = 0x4, fixed_abs, tag = 'smem constant byte address 0x4 - core index']
  #allocation1 [shape = 'u32[144,128]{1,0:T(1,128)}', space=vmem, size = 0x12000, scoped, tag = 'internal scratch']
  %s0 = inlined_call_operand.smem [shape: u32[31], index: -1, kind: input, shape index: {}]
  %s1 = sld [smem:[%s0]]
  %s2 = scalar_lea.smem %s0, 1
  %s3 = sld [smem:[%s2]]
  %s4 = scalar_lea.smem %s0, 2
  %s5 = sld [smem:[%s4]]
  %s6 = scalar_lea.smem %s0, 3
  %s7 = sld [smem:[%s6]]
  %s8 = scalar_lea.smem %s0, 4
  %s9 = sld [smem:[%s8]]
  %s10 = scalar_lea.smem %s0, 5
  %s11 = sld [smem:[%s10]]
  %s12 = scalar_lea.smem %s0, 6
  %s13 = sld [smem:[%s12]]
  %s14 = scalar_lea.smem %s0, 7
  %s15 = sld [smem:[%s14]]
  %s16 = scalar_lea.smem %s0, 8
  %s17 = sld [smem:[%s16]]
  %s18 = scalar_lea.smem %s0, 9
  %s19 = sld [smem:[%s18]]
  %s20 = scalar_lea.smem %s0, 10
  %s21 = sld [smem:[%s20]]
  %s22 = scalar_lea.smem %s0, 11
  %s23 = sld [smem:[%s22]]
  %s24 = scalar_lea.smem %s0, 12
  %s25 = sld [smem:[%s24]]
  %s26 = scalar_lea.smem %s0, 13
  %s27 = sld [smem:[%s26]]
  %s28 = scalar_lea.smem %s0, 14
  %s29 = sld [smem:[%s28]]
  %s30 = scalar_lea.smem %s0, 15
  %s31 = sld [smem:[%s30]]
  %s32 = scalar_lea.smem %s0, 16
  %s33 = sld [smem:[%s32]]
  %s34 = scalar_lea.smem %s0, 17
  %s35 = sld [smem:[%s34]]
  %s36 = scalar_lea.smem %s0, 18
  %s37 = sld [smem:[%s36]]
  %s38 = scalar_lea.smem %s0, 19
  %s39 = sld [smem:[%s38]]
  %s40 = scalar_lea.smem %s0, 20
  %s41 = sld [smem:[%s40]]
  %s42 = scalar_lea.smem %s0, 21
  %s43 = sld [smem:[%s42]]
  %s44 = scalar_lea.smem %s0, 22
  %s45 = sld [smem:[%s44]]
  %s46 = scalar_lea.smem %s0, 23
  %s47 = sld [smem:[%s46]]
  %s48 = scalar_lea.smem %s0, 24
  %s49 = sld [smem:[%s48]]
  %s50 = scalar_lea.smem %s0, 25
  %s51 = sld [smem:[%s50]]
  %s52 = scalar_lea.smem %s0, 26
  %s53 = sld [smem:[%s52]]
  %s54 = scalar_lea.smem %s0, 27
  %s55 = sld [smem:[%s54]]
  %s56 = scalar_lea.smem %s0, 28
  %s57 = sld [smem:[%s56]]
  %s58 = scalar_lea.smem %s0, 29
  %s59 = sld [smem:[%s58]]
  %s60 = scalar_lea.smem %s0, 30
  %s61 = sld [smem:[%s60]]
  %s62 = sld [smem:[#allocation0]]
  $region130: #{gnn_arma_transformer.1} parent=0
    _
  %s64 = ssub.s32 1, %s62
  %s65 = scalar_select 0, %s64, %s62
  // Predicated region
  $region2: #{gnn_arma_transformer.1} parent=0 // pred_check
    _
  $region3: #{gnn_arma_transformer.1} parent=0 // pred_check_branch
    %67 = sbr.rel (0) target = $region5
  $region4: #{gnn_arma_transformer.1} parent=0 // pred_region
    _
  $region5: #{gnn_arma_transformer.1} parent=0 // pred_fallthru
    _
  // Predicated region
  $region6: #{gnn_arma_transformer.1} parent=0 // pred_check
    _
  $region7: #{gnn_arma_transformer.1} parent=0 // pred_check_branch
    %69 = sbr.rel (0) target = $region9
  $region8: #{gnn_arma_transformer.1} parent=0 // pred_region
    _
  $region9: #{gnn_arma_transformer.1} parent=0 // pred_fallthru
    _
  // Predicated region
  $region10: #{gnn_arma_transformer.1} parent=0 // pred_check
    _
  $region11: #{gnn_arma_transformer.1} parent=0 // pred_check_branch
    %71 = sbr.rel (0) target = $region13
  $region12: #{gnn_arma_transformer.1} parent=0 // pred_region
    _
  $region13: #{gnn_arma_transformer.1} parent=0 // pred_fallthru
    _
  // Predicated region
  $region14: #{gnn_arma_transformer.1} parent=0 // pred_check
    _
  $region15: #{gnn_arma_transformer.1} parent=0 // pred_check_branch
    %73 = sbr.rel (0) target = $region17
  $region16: #{gnn_arma_transformer.1} parent=0 // pred_region
    _
  $region17: #{gnn_arma_transformer.1} parent=0 // pred_fallthru
    _
  // Predicated region
  $region18: #{gnn_arma_transformer.1} parent=0 // pred_check
    _
  $region19: #{gnn_arma_transformer.1} parent=0 // pred_check_branch
    %75 = sbr.rel (0) target = $region21
  $region20: #{gnn_arma_transformer.1} parent=0 // pred_region
    _
  $region21: #{gnn_arma_transformer.1} parent=0 // pred_fallthru
    _
  // Predicated region
  $region22: #{gnn_arma_transformer.1} parent=0 // pred_check
    _
  $region23: #{gnn_arma_transformer.1} parent=0 // pred_check_branch
    %77 = sbr.rel (0) target = $region25
  $region24: #{gnn_arma_transformer.1} parent=0 // pred_region
    _
  $region25: #{gnn_arma_transformer.1} parent=0 // pred_fallthru
    _
  // Predicated region
  $region26: #{gnn_arma_transformer.1} parent=0 // pred_check
    _
  $region27: #{gnn_arma_transformer.1} parent=0 // pred_check_branch
    %79 = sbr.rel (0) target = $region29
  $region28: #{gnn_arma_transformer.1} parent=0 // pred_region
    _
  $region29: #{gnn_arma_transformer.1} parent=0 // pred_fallthru
    _
  // Predicated region
  $region30: #{gnn_arma_transformer.1} parent=0 // pred_check
    _
  $region31: #{gnn_arma_transformer.1} parent=0 // pred_check_branch
    %81 = sbr.rel (0) target = $region33
  $region32: #{gnn_arma_transformer.1} parent=0 // pred_region
    _
  $region33: #{gnn_arma_transformer.1} parent=0 // pred_fallthru
    _
  // Predicated region
  $region34: #{gnn_arma_transformer.1} parent=0 // pred_check
    _
  $region35: #{gnn_arma_transformer.1} parent=0 // pred_check_branch
    %83 = sbr.rel (0) target = $region37
  $region36: #{gnn_arma_transformer.1} parent=0 // pred_region
    _
  $region37: #{gnn_arma_transformer.1} parent=0 // pred_fallthru
    _
  // Predicated region
  $region38: #{gnn_arma_transformer.1} parent=0 // pred_check
    _
  $region39: #{gnn_arma_transformer.1} parent=0 // pred_check_branch
    %85 = sbr.rel (0) target = $region41
  $region40: #{gnn_arma_transformer.1} parent=0 // pred_region
    _
  $region41: #{gnn_arma_transformer.1} parent=0 // pred_fallthru
    _
  // Predicated region
  $region42: #{gnn_arma_transformer.1} parent=0 // pred_check
    _
  $region43: #{gnn_arma_transformer.1} parent=0 // pred_check_branch
    %87 = sbr.rel (0) target = $region45
  $region44: #{gnn_arma_transformer.1} parent=0 // pred_region
    _
  $region45: #{gnn_arma_transformer.1} parent=0 // pred_fallthru
    _
  // Predicated region
  $region46: #{gnn_arma_transformer.1} parent=0 // pred_check
    _
  $region47: #{gnn_arma_transformer.1} parent=0 // pred_check_branch
    %89 = sbr.rel (0) target = $region49
  $region48: #{gnn_arma_transformer.1} parent=0 // pred_region
    _
  $region49: #{gnn_arma_transformer.1} parent=0 // pred_fallthru
    _
  // Predicated region
  $region50: #{gnn_arma_transformer.1} parent=0 // pred_check
    _
  $region51: #{gnn_arma_transformer.1} parent=0 // pred_check_branch
    %91 = sbr.rel (0) target = $region53
  $region52: #{gnn_arma_transformer.1} parent=0 // pred_region
    _
  $region53: #{gnn_arma_transformer.1} parent=0 // pred_fallthru
    _
  // Predicated region
  $region54: #{gnn_arma_transformer.1} parent=0 // pred_check
    _
  $region55: #{gnn_arma_transformer.1} parent=0 // pred_check_branch
    %93 = sbr.rel (0) target = $region57
  $region56: #{gnn_arma_transformer.1} parent=0 // pred_region
    _
  $region57: #{gnn_arma_transformer.1} parent=0 // pred_fallthru
    _
  // Predicated region
  $region58: #{gnn_arma_transformer.1} parent=0 // pred_check
    _
  $region59: #{gnn_arma_transformer.1} parent=0 // pred_check_branch
    %95 = sbr.rel (0) target = $region61
  $region60: #{gnn_arma_transformer.1} parent=0 // pred_region
    _
  $region61: #{gnn_arma_transformer.1} parent=0 // pred_fallthru
    _
  // Predicated region
  $region62: #{gnn_arma_transformer.1} parent=0 // pred_check
    _
  $region63: #{gnn_arma_transformer.1} parent=0 // pred_check_branch
    %97 = sbr.rel (0) target = $region65
  $region64: #{gnn_arma_transformer.1} parent=0 // pred_region
    _
  $region65: #{gnn_arma_transformer.1} parent=0 // pred_fallthru
    _
  // Predicated region
  $region66: #{gnn_arma_transformer.1} parent=0 // pred_check
    _
  $region67: #{gnn_arma_transformer.1} parent=0 // pred_check_branch
    %99 = sbr.rel (0) target = $region69
  $region68: #{gnn_arma_transformer.1} parent=0 // pred_region
    _
  $region69: #{gnn_arma_transformer.1} parent=0 // pred_fallthru
    _
  // Predicated region
  $region70: #{gnn_arma_transformer.1} parent=0 // pred_check
    _
  $region71: #{gnn_arma_transformer.1} parent=0 // pred_check_branch
    %101 = sbr.rel (0) target = $region73
  $region72: #{gnn_arma_transformer.1} parent=0 // pred_region
    _
  $region73: #{gnn_arma_transformer.1} parent=0 // pred_fallthru
    _
  // Predicated region
  $region74: #{gnn_arma_transformer.1} parent=0 // pred_check
    _
  $region75: #{gnn_arma_transformer.1} parent=0 // pred_check_branch
    %103 = sbr.rel (0) target = $region77
  $region76: #{gnn_arma_transformer.1} parent=0 // pred_region
    _
  $region77: #{gnn_arma_transformer.1} parent=0 // pred_fallthru
    _
  // Predicated region
  $region78: #{gnn_arma_transformer.1} parent=0 // pred_check
    _
  $region79: #{gnn_arma_transformer.1} parent=0 // pred_check_branch
    %105 = sbr.rel (0) target = $region81
  $region80: #{gnn_arma_transformer.1} parent=0 // pred_region
    _
  $region81: #{gnn_arma_transformer.1} parent=0 // pred_fallthru
    _
  // Predicated region
  $region82: #{gnn_arma_transformer.1} parent=0 // pred_check
    _
  $region83: #{gnn_arma_transformer.1} parent=0 // pred_check_branch
    %107 = sbr.rel (0) target = $region85
  $region84: #{gnn_arma_transformer.1} parent=0 // pred_region
    _
  $region85: #{gnn_arma_transformer.1} parent=0 // pred_fallthru
    _
  // Predicated region
  $region86: #{gnn_arma_transformer.1} parent=0 // pred_check
    _
  $region87: #{gnn_arma_transformer.1} parent=0 // pred_check_branch
    %109 = sbr.rel (0) target = $region89
  $region88: #{gnn_arma_transformer.1} parent=0 // pred_region
    _
  $region89: #{gnn_arma_transformer.1} parent=0 // pred_fallthru
    _
  // Predicated region
  $region90: #{gnn_arma_transformer.1} parent=0 // pred_check
    _
  $region91: #{gnn_arma_transformer.1} parent=0 // pred_check_branch
    %111 = sbr.rel (0) target = $region93
  $region92: #{gnn_arma_transformer.1} parent=0 // pred_region
    _
  $region93: #{gnn_arma_transformer.1} parent=0 // pred_fallthru
    _
  // Predicated region
  $region94: #{gnn_arma_transformer.1} parent=0 // pred_check
    _
  $region95: #{gnn_arma_transformer.1} parent=0 // pred_check_branch
    %113 = sbr.rel (0) target = $region97
  $region96: #{gnn_arma_transformer.1} parent=0 // pred_region
    _
  $region97: #{gnn_arma_transformer.1} parent=0 // pred_fallthru
    _
  // Predicated region
  $region98: #{gnn_arma_transformer.1} parent=0 // pred_check
    _
  $region99: #{gnn_arma_transformer.1} parent=0 // pred_check_branch
    %115 = sbr.rel (0) target = $region101
  $region100: #{gnn_arma_transformer.1} parent=0 // pred_region
    _
  $region101: #{gnn_arma_transformer.1} parent=0 // pred_fallthru
    _
  // Predicated region
  $region102: #{gnn_arma_transformer.1} parent=0 // pred_check
    _
  $region103: #{gnn_arma_transformer.1} parent=0 // pred_check_branch
    %117 = sbr.rel (0) target = $region105
  $region104: #{gnn_arma_transformer.1} parent=0 // pred_region
    _
  $region105: #{gnn_arma_transformer.1} parent=0 // pred_fallthru
    _
  // Predicated region
  $region106: #{gnn_arma_transformer.1} parent=0 // pred_check
    _
  $region107: #{gnn_arma_transformer.1} parent=0 // pred_check_branch
    %119 = sbr.rel (0) target = $region109
  $region108: #{gnn_arma_transformer.1} parent=0 // pred_region
    _
  $region109: #{gnn_arma_transformer.1} parent=0 // pred_fallthru
    _
  // Predicated region
  $region110: #{gnn_arma_transformer.1} parent=0 // pred_check
    _
  $region111: #{gnn_arma_transformer.1} parent=0 // pred_check_branch
    %121 = sbr.rel (0) target = $region113
  $region112: #{gnn_arma_transformer.1} parent=0 // pred_region
    _
  $region113: #{gnn_arma_transformer.1} parent=0 // pred_fallthru
    _
  // Predicated region
  $region114: #{gnn_arma_transformer.1} parent=0 // pred_check
    _
  $region115: #{gnn_arma_transformer.1} parent=0 // pred_check_branch
    %123 = sbr.rel (0) target = $region117
  $region116: #{gnn_arma_transformer.1} parent=0 // pred_region
    _
  $region117: #{gnn_arma_transformer.1} parent=0 // pred_fallthru
    _
  // Predicated region
  $region118: #{gnn_arma_transformer.1} parent=0 // pred_check
    _
  $region119: #{gnn_arma_transformer.1} parent=0 // pred_check_branch
    %125 = sbr.rel (0) target = $region121
  $region120: #{gnn_arma_transformer.1} parent=0 // pred_region
    _
  $region121: #{gnn_arma_transformer.1} parent=0 // pred_fallthru
    _
  %v127 = vld [vmem:[%s1] sm:$0xf]
  %v128 = vld [vmem:[%s1 + $0x4] sm:$0xf]
  %v129 = vld [vmem:[%s3] sm:$0xf]
  %v130 = vld [vmem:[%s3 + $0x4] sm:$0xf]
  %v131 = vld [vmem:[%s9] sm:$0xf]
  %v134 = vunpack.c.l.b16 %v129
  %v135 = vunpack.c.l.b16 %v130
  %v136 = vpack.c.b16 %v135, %v134
  %vm137 = vcmask 64512
  %v139 = vsel %vm137, %v136, 0
  %vm141 = vcmask 1043456
  %v143 = vsel %vm141, %v131, 0
  %145 = vmatprep.subr.bf16.mxu0 0
  %146 = vmatpush1.bf16.msra.mxu0 0
  %147 = vmatprep.subr.bf16.mxu0 0
  %148 = vmatpush1.bf16.msra.mxu0 0
  %149 = vmatprep.subr.bf16.mxu0 0
  %150 = vmatpush1.bf16.msra.mxu0 0
  %151 = vmatprep.subr.bf16.mxu0 0
  %152 = vmatpush1.bf16.msra.mxu0 0
  %153 = vmatprep.subr.bf16.mxu0 0
  %154 = vmatpush1.bf16.msra.mxu0 0
  %155 = vmatprep.subr.bf16.mxu0 0
  %156 = vmatpush1.bf16.msra.mxu0 0
  %157 = vmatprep.subr.bf16.mxu0 0
  %158 = vmatpush1.bf16.msra.mxu0 0
  %159 = vmatprep.subr.bf16.mxu0 0
  %160 = vmatpush1.bf16.msra.mxu0 %v143
  %161 = vmatprep.subr.bf16.mxu0 0
  %162 = vmatpush2.bf16.msra.mxu0 0
  %163 = vmatprep.subr.bf16.mxu0 0
  %164 = vmatpush2.bf16.msra.mxu0 0
  %165 = vmatprep.subr.bf16.mxu0 0
  %166 = vmatpush2.bf16.msra.mxu0 0
  %167 = vmatprep.subr.bf16.mxu0 0
  %168 = vmatpush2.bf16.msra.mxu0 0
  %169 = vmatprep.subr.bf16.mxu0 0
  %170 = vmatpush2.bf16.msra.mxu0 0
  %171 = vmatprep.subr.bf16.mxu0 0
  %172 = vmatpush2.bf16.msra.mxu0 0
  %173 = vmatprep.subr.bf16.mxu0 0
  %174 = vmatpush2.bf16.msra.mxu0 0
  %175 = vmatprep.subr.bf16.mxu0 0
  %176 = vmatpush2.bf16.msra.mxu0 0
  %177 = vmatprep.mubr.bf16.mxu0 0
  %178 = vmatmul.mubr.bf16.gmra.mxu0 %v139
  %v179 = vpop.f32.mrf.mxu0
  %v180 = vadd.f32 0.0, %v179
  %v181 = vpop.f32.mrf.mxu0
  %v182 = vpop.f32.mrf.mxu0
  %v183 = vadd.f32 0.0, %v182
  %v184 = vpop.f32.mrf.mxu0
  %185 = vdwg.mxu0
  %v186 = vld [vmem:[%s5] sm:$0xf]
  %v188 = vsel %vm141, %v186, 0
  %190 = vmatprep.subr.bf16.mxu0 0
  %191 = vmatpush1.bf16.msra.mxu0 0
  %192 = vmatprep.subr.bf16.mxu0 0
  %193 = vmatpush1.bf16.msra.mxu0 0
  %194 = vmatprep.subr.bf16.mxu0 0
  %195 = vmatpush1.bf16.msra.mxu0 0
  %196 = vmatprep.subr.bf16.mxu0 0
  %197 = vmatpush1.bf16.msra.mxu0 0
  %198 = vmatprep.subr.bf16.mxu0 0
  %199 = vmatpush1.bf16.msra.mxu0 0
  %200 = vmatprep.subr.bf16.mxu0 0
  %201 = vmatpush1.bf16.msra.mxu0 0
  %202 = vmatprep.subr.bf16.mxu0 0
  %203 = vmatpush1.bf16.msra.mxu0 0
  %204 = vmatprep.subr.bf16.mxu0 0
  %205 = vmatpush1.bf16.msra.mxu0 %v188
  %206 = vmatprep.subr.bf16.mxu0 0
  %207 = vmatpush2.bf16.msra.mxu0 0
  %208 = vmatprep.subr.bf16.mxu0 0
  %209 = vmatpush2.bf16.msra.mxu0 0
  %210 = vmatprep.subr.bf16.mxu0 0
  %211 = vmatpush2.bf16.msra.mxu0 0
  %212 = vmatprep.subr.bf16.mxu0 0
  %213 = vmatpush2.bf16.msra.mxu0 0
  %214 = vmatprep.subr.bf16.mxu0 0
  %215 = vmatpush2.bf16.msra.mxu0 0
  %216 = vmatprep.subr.bf16.mxu0 0
  %217 = vmatpush2.bf16.msra.mxu0 0
  %218 = vmatprep.subr.bf16.mxu0 0
  %219 = vmatpush2.bf16.msra.mxu0 0
  %220 = vmatprep.subr.bf16.mxu0 0
  %221 = vmatpush2.bf16.msra.mxu0 0
  %222 = vmatprep.mubr.bf16.mxu0 0
  %223 = vmatmul.mubr.bf16.gmra.mxu0 %v139
  %v224 = vpop.f32.mrf.mxu0
  %v225 = vadd.f32 0.0, %v224
  %v226 = vpop.f32.mrf.mxu0
  %v227 = vpop.f32.mrf.mxu0
  %v228 = vadd.f32 0.0, %v227
  %v229 = vpop.f32.mrf.mxu0
  %230 = vdwg.mxu0
  %v231 = vpack.c.bf16 %v228, %v225
  %v234 = vunpack.c.l.b16 %v127
  %v235 = vunpack.c.l.b16 %v128
  %v236 = vpack.c.b16 %v235, %v234
  %vm237 = vcmask 130048
  %v239 = vsel %vm237, %v236, 0
  %241 = vmatprep.subr.bf16.mxu0 0
  %242 = vmatpush1.bf16.msra.mxu0 0
  %243 = vmatprep.subr.bf16.mxu0 0
  %244 = vmatpush1.bf16.msra.mxu0 0
  %245 = vmatprep.subr.bf16.mxu0 0
  %246 = vmatpush1.bf16.msra.mxu0 0
  %247 = vmatprep.subr.bf16.mxu0 0
  %248 = vmatpush1.bf16.msra.mxu0 0
  %249 = vmatprep.subr.bf16.mxu0 0
  %250 = vmatpush1.bf16.msra.mxu0 0
  %251 = vmatprep.subr.bf16.mxu0 0
  %252 = vmatpush1.bf16.msra.mxu0 0
  %253 = vmatprep.subr.bf16.mxu0 0
  %254 = vmatpush1.bf16.msra.mxu0 0
  %255 = vmatprep.subr.bf16.mxu0 0
  %256 = vmatpush1.bf16.msra.mxu0 %v231
  %257 = vmatprep.subr.bf16.mxu0 0
  %258 = vmatpush2.bf16.msra.mxu0 0
  %259 = vmatprep.subr.bf16.mxu0 0
  %260 = vmatpush2.bf16.msra.mxu0 0
  %261 = vmatprep.subr.bf16.mxu0 0
  %262 = vmatpush2.bf16.msra.mxu0 0
  %263 = vmatprep.subr.bf16.mxu0 0
  %264 = vmatpush2.bf16.msra.mxu0 0
  %265 = vmatprep.subr.bf16.mxu0 0
  %266 = vmatpush2.bf16.msra.mxu0 0
  %267 = vmatprep.subr.bf16.mxu0 0
  %268 = vmatpush2.bf16.msra.mxu0 0
  %269 = vmatprep.subr.bf16.mxu0 0
  %270 = vmatpush2.bf16.msra.mxu0 0
  %271 = vmatprep.subr.bf16.mxu0 0
  %272 = vmatpush2.bf16.msra.mxu0 0
  %273 = vmatprep.mubr.bf16.mxu0 0
  %274 = vmatmul.mubr.bf16.gmra.mxu0 %v239
  %v275 = vpop.f32.mrf.mxu0
  %v276 = vadd.f32 %v180, %v275
  %v277 = vpop.f32.mrf.mxu0
  %v278 = vpop.f32.mrf.mxu0
  %v279 = vadd.f32 %v183, %v278
  %v280 = vpop.f32.mrf.mxu0
  %281 = vdwg.mxu0
  %v282 = vld [vmem:[%s11] sm:$0x1]
  %v284 = vlaneseq
  %v285 = vshrl.u32 %v284, 7
  %v286 = vsub.s32 0, %v285
  %v287 = vrot.slane %v282, %v286
  %v289 = vadd.f32 %v276, %v287
  %v290 = vadd.f32 %v279, %v287
  %v291 = vmax.f32 %v289, 0.0
  %v292 = vmax.f32 %v290, 0.0
  %v293 = vpack.c.bf16 %v292, %v291
  %v294 = vld [vmem:[%s7] sm:$0xf]
  %v295 = vld [vmem:[%s7 + $0x4] sm:$0xf]
  %v296 = vld [vmem:[%s7 + $0x8] sm:$0xf]
  %v297 = vld [vmem:[%s7 + $0xc] sm:$0xf]
  %v298 = vld [vmem:[%s7 + $0x10] sm:$0xf]
  %v299 = vld [vmem:[%s7 + $0x14] sm:$0xf]
  %v306 = vunpack.c.l.b16 %v294
  %v307 = vunpack.c.l.b16 %v295
  %v308 = vunpack.c.l.b16 %v296
  %v309 = vunpack.c.l.b16 %v297
  %v310 = vunpack.c.l.b16 %v298
  %v311 = vunpack.c.l.b16 %v299
  %v312 = vpack.c.b16 %v307, %v306
  %v313 = vpack.c.b16 %v309, %v308
  %v314 = vpack.c.b16 %v311, %v310
  %vm318 = vcmask 392192
  %v320 = vsel %vm318, %v293, 0
  %322 = vmatprep.subr.bf16.mxu0 0
  %323 = vmatpush1.bf16.msra.mxu0 0
  %324 = vmatprep.subr.bf16.mxu0 0
  %325 = vmatpush1.bf16.msra.mxu0 0
  %326 = vmatprep.subr.bf16.mxu0 0
  %327 = vmatpush1.bf16.msra.mxu0 0
  %328 = vmatprep.subr.bf16.mxu0 0
  %329 = vmatpush1.bf16.msra.mxu0 0
  %330 = vmatprep.subr.bf16.mxu0 0
  %331 = vmatpush1.bf16.msra.mxu0 0
  %332 = vmatprep.subr.bf16.mxu0 0
  %333 = vmatpush1.bf16.msra.mxu0 %v314
  %334 = vmatprep.subr.bf16.mxu0 0
  %335 = vmatpush1.bf16.msra.mxu0 %v313
  %336 = vmatprep.subr.bf16.mxu0 0
  %337 = vmatpush1.bf16.msra.mxu0 %v312
  %338 = vmatprep.subr.bf16.mxu0 0
  %339 = vmatpush2.bf16.msra.mxu0 0
  %340 = vmatprep.subr.bf16.mxu0 0
  %341 = vmatpush2.bf16.msra.mxu0 0
  %342 = vmatprep.subr.bf16.mxu0 0
  %343 = vmatpush2.bf16.msra.mxu0 0
  %344 = vmatprep.subr.bf16.mxu0 0
  %345 = vmatpush2.bf16.msra.mxu0 0
  %346 = vmatprep.subr.bf16.mxu0 0
  %347 = vmatpush2.bf16.msra.mxu0 0
  %348 = vmatprep.subr.bf16.mxu0 0
  %349 = vmatpush2.bf16.msra.mxu0 0
  %350 = vmatprep.subr.bf16.mxu0 0
  %351 = vmatpush2.bf16.msra.mxu0 0
  %352 = vmatprep.subr.bf16.mxu0 0
  %353 = vmatpush2.bf16.msra.mxu0 0
  %354 = vmatprep.mubr.bf16.mxu0 0
  %355 = vmatmul.mubr.bf16.gmra.mxu0 %v320
  %v356 = vpop.f32.mrf.mxu0
  %v357 = vadd.f32 0.0, %v356
  %v358 = vpop.f32.mrf.mxu0
  %v359 = vpop.f32.mrf.mxu0
  %v360 = vadd.f32 0.0, %v359
  %v361 = vpop.f32.mrf.mxu0
  %362 = vdwg.mxu0
  %v363 = vpack.c.bf16 %v360, %v357
  %366 = vrot.lane.b32.xlu0 %v180, 80
  %v367 = vpop.permute.xlu0 %366
  %368 = vrot.lane.b32.xlu0 %v183, 80
  %v369 = vpop.permute.xlu0 %368
  %372 = vmatprep.subr.bf16.mxu0 0
  %373 = vmatpush1.bf16.msra.mxu0 0
  %374 = vmatprep.subr.bf16.mxu0 0
  %375 = vmatpush1.bf16.msra.mxu0 0
  %376 = vmatprep.subr.bf16.mxu0 0
  %377 = vmatpush1.bf16.msra.mxu0 0
  %378 = vmatprep.subr.bf16.mxu0 0
  %379 = vmatpush1.bf16.msra.mxu0 0
  %380 = vmatprep.subr.bf16.mxu0 0
  %381 = vmatpush1.bf16.msra.mxu0 0
  %382 = vmatprep.subr.bf16.mxu0 0
  %383 = vmatpush1.bf16.msra.mxu0 0
  %384 = vmatprep.subr.bf16.mxu0 0
  %385 = vmatpush1.bf16.msra.mxu0 0
  %386 = vmatprep.subr.bf16.mxu0 0
  %387 = vmatpush1.bf16.msra.mxu0 %v363
  %388 = vmatprep.subr.bf16.mxu0 0
  %389 = vmatpush2.bf16.msra.mxu0 0
  %390 = vmatprep.subr.bf16.mxu0 0
  %391 = vmatpush2.bf16.msra.mxu0 0
  %392 = vmatprep.subr.bf16.mxu0 0
  %393 = vmatpush2.bf16.msra.mxu0 0
  %394 = vmatprep.subr.bf16.mxu0 0
  %395 = vmatpush2.bf16.msra.mxu0 0
  %396 = vmatprep.subr.bf16.mxu0 0
  %397 = vmatpush2.bf16.msra.mxu0 0
  %398 = vmatprep.subr.bf16.mxu0 0
  %399 = vmatpush2.bf16.msra.mxu0 0
  %400 = vmatprep.subr.bf16.mxu0 0
  %401 = vmatpush2.bf16.msra.mxu0 0
  %402 = vmatprep.subr.bf16.mxu0 0
  %403 = vmatpush2.bf16.msra.mxu0 0
  %404 = vmatprep.mubr.bf16.mxu0 0
  %405 = vmatmul.mubr.bf16.gmra.mxu0 %v239
  %v406 = vpop.f32.mrf.mxu0
  %v407 = vadd.f32 %v367, %v406
  %v408 = vpop.f32.mrf.mxu0
  %v409 = vpop.f32.mrf.mxu0
  %v410 = vadd.f32 %v369, %v409
  %v411 = vpop.f32.mrf.mxu0
  %412 = vdwg.mxu0
  %s413 = scalar_lea.vmem %s11, 1
  %v414 = vld [vmem:[%s413] sm:$0x1]
  %v416 = vlaneseq
  %v417 = vshrl.u32 %v416, 7
  %v418 = vsub.s32 0, %v417
  %v419 = vrot.slane %v414, %v418
  %v421 = vadd.f32 %v407, %v419
  %v422 = vadd.f32 %v410, %v419
  %v423 = vmax.f32 %v421, 0.0
  %v424 = vmax.f32 %v422, 0.0
  %427 = vrot.lane.b32.xlu0 %v423, 112
  %v428 = vpop.permute.xlu0 %427
  %429 = vrot.lane.b32.xlu0 %v424, 112
  %v430 = vpop.permute.xlu0 %429
  %v433 = vadd.f32 %v423, %v428
  %v434 = vadd.f32 %v424, %v430
  %435 = vrot.lane.b32.xlu0 %v423, 96
  %v436 = vpop.permute.xlu0 %435
  %437 = vrot.lane.b32.xlu0 %v424, 96
  %v438 = vpop.permute.xlu0 %437
  %v441 = vadd.f32 %v433, %v436
  %v442 = vadd.f32 %v434, %v438
  %v443 = vmul.f32 %v441, 0.33333334
  %v444 = vmul.f32 %v442, 0.33333334
  %v445 = vmax.f32 %v443, 0.0
  %v446 = vmax.f32 %v444, 0.0
  %v447 = vpack.c.bf16 %v446, %v445
  %v448 = vld [vmem:[%s17] sm:$0xf]
  %v449 = vld [vmem:[%s17 + $0x4] sm:$0xf]
  %v452 = vunpack.c.l.b16 %v448
  %v453 = vunpack.c.l.b16 %v449
  %v454 = vpack.c.b16 %v453, %v452
  %v457 = vsel %vm237, %v447, 0
  %459 = vmatprep.subr.bf16.mxu0 0
  %460 = vmatpush1.bf16.msra.mxu0 0
  %461 = vmatprep.subr.bf16.mxu0 0
  %462 = vmatpush1.bf16.msra.mxu0 0
  %463 = vmatprep.subr.bf16.mxu0 0
  %464 = vmatpush1.bf16.msra.mxu0 0
  %465 = vmatprep.subr.bf16.mxu0 0
  %466 = vmatpush1.bf16.msra.mxu0 0
  %467 = vmatprep.subr.bf16.mxu0 0
  %468 = vmatpush1.bf16.msra.mxu0 0
  %469 = vmatprep.subr.bf16.mxu0 0
  %470 = vmatpush1.bf16.msra.mxu0 0
  %471 = vmatprep.subr.bf16.mxu0 0
  %472 = vmatpush1.bf16.msra.mxu0 0
  %473 = vmatprep.subr.bf16.mxu0 0
  %474 = vmatpush1.bf16.msra.mxu0 %v454
  %475 = vmatprep.subr.bf16.mxu0 0
  %476 = vmatpush2.bf16.msra.mxu0 0
  %477 = vmatprep.subr.bf16.mxu0 0
  %478 = vmatpush2.bf16.msra.mxu0 0
  %479 = vmatprep.subr.bf16.mxu0 0
  %480 = vmatpush2.bf16.msra.mxu0 0
  %481 = vmatprep.subr.bf16.mxu0 0
  %482 = vmatpush2.bf16.msra.mxu0 0
  %483 = vmatprep.subr.bf16.mxu0 0
  %484 = vmatpush2.bf16.msra.mxu0 0
  %485 = vmatprep.subr.bf16.mxu0 0
  %486 = vmatpush2.bf16.msra.mxu0 0
  %487 = vmatprep.subr.bf16.mxu0 0
  %488 = vmatpush2.bf16.msra.mxu0 0
  %489 = vmatprep.subr.bf16.mxu0 0
  %490 = vmatpush2.bf16.msra.mxu0 0
  %491 = vmatprep.mubr.bf16.mxu0 0
  %492 = vmatmul.mubr.bf16.gmra.mxu0 %v457
  %v493 = vpop.f32.mrf.mxu0
  %v494 = vadd.f32 0.0, %v493
  %v495 = vpop.f32.mrf.mxu0
  %v496 = vpop.f32.mrf.mxu0
  %v497 = vadd.f32 0.0, %v496
  %v498 = vpop.f32.mrf.mxu0
  %499 = vdwg.mxu0
  %v500 = vld [vmem:[%s13] sm:$0xf]
  %v501 = vld [vmem:[%s13 + $0x4] sm:$0xf]
  %v504 = vunpack.c.l.b16 %v500
  %v505 = vunpack.c.l.b16 %v501
  %v506 = vpack.c.b16 %v505, %v504
  %508 = vmatprep.subr.bf16.mxu0 0
  %509 = vmatpush1.bf16.msra.mxu0 0
  %510 = vmatprep.subr.bf16.mxu0 0
  %511 = vmatpush1.bf16.msra.mxu0 0
  %512 = vmatprep.subr.bf16.mxu0 0
  %513 = vmatpush1.bf16.msra.mxu0 0
  %514 = vmatprep.subr.bf16.mxu0 0
  %515 = vmatpush1.bf16.msra.mxu0 0
  %516 = vmatprep.subr.bf16.mxu0 0
  %517 = vmatpush1.bf16.msra.mxu0 0
  %518 = vmatprep.subr.bf16.mxu0 0
  %519 = vmatpush1.bf16.msra.mxu0 0
  %520 = vmatprep.subr.bf16.mxu0 0
  %521 = vmatpush1.bf16.msra.mxu0 0
  %522 = vmatprep.subr.bf16.mxu0 0
  %523 = vmatpush1.bf16.msra.mxu0 %v506
  %524 = vmatprep.subr.bf16.mxu0 0
  %525 = vmatpush2.bf16.msra.mxu0 0
  %526 = vmatprep.subr.bf16.mxu0 0
  %527 = vmatpush2.bf16.msra.mxu0 0
  %528 = vmatprep.subr.bf16.mxu0 0
  %529 = vmatpush2.bf16.msra.mxu0 0
  %530 = vmatprep.subr.bf16.mxu0 0
  %531 = vmatpush2.bf16.msra.mxu0 0
  %532 = vmatprep.subr.bf16.mxu0 0
  %533 = vmatpush2.bf16.msra.mxu0 0
  %534 = vmatprep.subr.bf16.mxu0 0
  %535 = vmatpush2.bf16.msra.mxu0 0
  %536 = vmatprep.subr.bf16.mxu0 0
  %537 = vmatpush2.bf16.msra.mxu0 0
  %538 = vmatprep.subr.bf16.mxu0 0
  %539 = vmatpush2.bf16.msra.mxu0 0
  %540 = vmatprep.mubr.bf16.mxu0 0
  %541 = vmatmul.mubr.bf16.gmra.mxu0 %v457
  %v542 = vpop.f32.mrf.mxu0
  %v543 = vadd.f32 0.0, %v542
  %v544 = vpop.f32.mrf.mxu0
  %v545 = vpop.f32.mrf.mxu0
  %v546 = vadd.f32 0.0, %v545
  %v547 = vpop.f32.mrf.mxu0
  %548 = vdwg.mxu0
  %v549 = vpack.c.bf16 %v546, %v543
  %550 = vmatprep.subr.bf16.mxu0 0
  %551 = vmatpush1.bf16.msra.mxu0 0
  %552 = vmatprep.subr.bf16.mxu0 0
  %553 = vmatpush1.bf16.msra.mxu0 0
  %554 = vmatprep.subr.bf16.mxu0 0
  %555 = vmatpush1.bf16.msra.mxu0 0
  %556 = vmatprep.subr.bf16.mxu0 0
  %557 = vmatpush1.bf16.msra.mxu0 0
  %558 = vmatprep.subr.bf16.mxu0 0
  %559 = vmatpush1.bf16.msra.mxu0 0
  %560 = vmatprep.subr.bf16.mxu0 0
  %561 = vmatpush1.bf16.msra.mxu0 0
  %562 = vmatprep.subr.bf16.mxu0 0
  %563 = vmatpush1.bf16.msra.mxu0 0
  %564 = vmatprep.subr.bf16.mxu0 0
  %565 = vmatpush1.bf16.msra.mxu0 %v549
  %566 = vmatprep.subr.bf16.mxu0 0
  %567 = vmatpush2.bf16.msra.mxu0 0
  %568 = vmatprep.subr.bf16.mxu0 0
  %569 = vmatpush2.bf16.msra.mxu0 0
  %570 = vmatprep.subr.bf16.mxu0 0
  %571 = vmatpush2.bf16.msra.mxu0 0
  %572 = vmatprep.subr.bf16.mxu0 0
  %573 = vmatpush2.bf16.msra.mxu0 0
  %574 = vmatprep.subr.bf16.mxu0 0
  %575 = vmatpush2.bf16.msra.mxu0 0
  %576 = vmatprep.subr.bf16.mxu0 0
  %577 = vmatpush2.bf16.msra.mxu0 0
  %578 = vmatprep.subr.bf16.mxu0 0
  %579 = vmatpush2.bf16.msra.mxu0 0
  %580 = vmatprep.subr.bf16.mxu0 0
  %581 = vmatpush2.bf16.msra.mxu0 0
  %582 = vmatprep.mubr.bf16.mxu0 0
  %583 = vmatmul.mubr.bf16.gmra.mxu0 %v239
  %v584 = vpop.f32.mrf.mxu0
  %v585 = vadd.f32 %v494, %v584
  %v586 = vpop.f32.mrf.mxu0
  %v587 = vpop.f32.mrf.mxu0
  %v588 = vadd.f32 %v497, %v587
  %v589 = vpop.f32.mrf.mxu0
  %590 = vdwg.mxu0
  %v591 = vld [vmem:[%s19] sm:$0x1]
  %v593 = vlaneseq
  %v594 = vshrl.u32 %v593, 7
  %v595 = vsub.s32 0, %v594
  %v596 = vrot.slane %v591, %v595
  %v598 = vadd.f32 %v585, %v596
  %v599 = vadd.f32 %v588, %v596
  %v600 = vmax.f32 %v598, 0.0
  %v601 = vmax.f32 %v599, 0.0
  %v602 = vpack.c.bf16 %v601, %v600
  %v603 = vld [vmem:[%s15] sm:$0xf]
  %v604 = vld [vmem:[%s15 + $0x4] sm:$0xf]
  %v605 = vld [vmem:[%s15 + $0x8] sm:$0xf]
  %v606 = vld [vmem:[%s15 + $0xc] sm:$0xf]
  %v607 = vld [vmem:[%s15 + $0x10] sm:$0xf]
  %v608 = vld [vmem:[%s15 + $0x14] sm:$0xf]
  %v615 = vunpack.c.l.b16 %v603
  %v616 = vunpack.c.l.b16 %v604
  %v617 = vunpack.c.l.b16 %v605
  %v618 = vunpack.c.l.b16 %v606
  %v619 = vunpack.c.l.b16 %v607
  %v620 = vunpack.c.l.b16 %v608
  %v621 = vpack.c.b16 %v616, %v615
  %v622 = vpack.c.b16 %v618, %v617
  %v623 = vpack.c.b16 %v620, %v619
  %v628 = vsel %vm318, %v602, 0
  %630 = vmatprep.subr.bf16.mxu0 0
  %631 = vmatpush1.bf16.msra.mxu0 0
  %632 = vmatprep.subr.bf16.mxu0 0
  %633 = vmatpush1.bf16.msra.mxu0 0
  %634 = vmatprep.subr.bf16.mxu0 0
  %635 = vmatpush1.bf16.msra.mxu0 0
  %636 = vmatprep.subr.bf16.mxu0 0
  %637 = vmatpush1.bf16.msra.mxu0 0
  %638 = vmatprep.subr.bf16.mxu0 0
  %639 = vmatpush1.bf16.msra.mxu0 0
  %640 = vmatprep.subr.bf16.mxu0 0
  %641 = vmatpush1.bf16.msra.mxu0 %v623
  %642 = vmatprep.subr.bf16.mxu0 0
  %643 = vmatpush1.bf16.msra.mxu0 %v622
  %644 = vmatprep.subr.bf16.mxu0 0
  %645 = vmatpush1.bf16.msra.mxu0 %v621
  %646 = vmatprep.subr.bf16.mxu0 0
  %647 = vmatpush2.bf16.msra.mxu0 0
  %648 = vmatprep.subr.bf16.mxu0 0
  %649 = vmatpush2.bf16.msra.mxu0 0
  %650 = vmatprep.subr.bf16.mxu0 0
  %651 = vmatpush2.bf16.msra.mxu0 0
  %652 = vmatprep.subr.bf16.mxu0 0
  %653 = vmatpush2.bf16.msra.mxu0 0
  %654 = vmatprep.subr.bf16.mxu0 0
  %655 = vmatpush2.bf16.msra.mxu0 0
  %656 = vmatprep.subr.bf16.mxu0 0
  %657 = vmatpush2.bf16.msra.mxu0 0
  %658 = vmatprep.subr.bf16.mxu0 0
  %659 = vmatpush2.bf16.msra.mxu0 0
  %660 = vmatprep.subr.bf16.mxu0 0
  %661 = vmatpush2.bf16.msra.mxu0 0
  %662 = vmatprep.mubr.bf16.mxu0 0
  %663 = vmatmul.mubr.bf16.gmra.mxu0 %v628
  %v664 = vpop.f32.mrf.mxu0
  %v665 = vadd.f32 0.0, %v664
  %v666 = vpop.f32.mrf.mxu0
  %v667 = vpop.f32.mrf.mxu0
  %v668 = vadd.f32 0.0, %v667
  %v669 = vpop.f32.mrf.mxu0
  %670 = vdwg.mxu0
  %v671 = vpack.c.bf16 %v668, %v665
  %674 = vrot.lane.b32.xlu0 %v494, 80
  %v675 = vpop.permute.xlu0 %674
  %676 = vrot.lane.b32.xlu0 %v497, 80
  %v677 = vpop.permute.xlu0 %676
  %680 = vmatprep.subr.bf16.mxu0 0
  %681 = vmatpush1.bf16.msra.mxu0 0
  %682 = vmatprep.subr.bf16.mxu0 0
  %683 = vmatpush1.bf16.msra.mxu0 0
  %684 = vmatprep.subr.bf16.mxu0 0
  %685 = vmatpush1.bf16.msra.mxu0 0
  %686 = vmatprep.subr.bf16.mxu0 0
  %687 = vmatpush1.bf16.msra.mxu0 0
  %688 = vmatprep.subr.bf16.mxu0 0
  %689 = vmatpush1.bf16.msra.mxu0 0
  %690 = vmatprep.subr.bf16.mxu0 0
  %691 = vmatpush1.bf16.msra.mxu0 0
  %692 = vmatprep.subr.bf16.mxu0 0
  %693 = vmatpush1.bf16.msra.mxu0 0
  %694 = vmatprep.subr.bf16.mxu0 0
  %695 = vmatpush1.bf16.msra.mxu0 %v671
  %696 = vmatprep.subr.bf16.mxu0 0
  %697 = vmatpush2.bf16.msra.mxu0 0
  %698 = vmatprep.subr.bf16.mxu0 0
  %699 = vmatpush2.bf16.msra.mxu0 0
  %700 = vmatprep.subr.bf16.mxu0 0
  %701 = vmatpush2.bf16.msra.mxu0 0
  %702 = vmatprep.subr.bf16.mxu0 0
  %703 = vmatpush2.bf16.msra.mxu0 0
  %704 = vmatprep.subr.bf16.mxu0 0
  %705 = vmatpush2.bf16.msra.mxu0 0
  %706 = vmatprep.subr.bf16.mxu0 0
  %707 = vmatpush2.bf16.msra.mxu0 0
  %708 = vmatprep.subr.bf16.mxu0 0
  %709 = vmatpush2.bf16.msra.mxu0 0
  %710 = vmatprep.subr.bf16.mxu0 0
  %711 = vmatpush2.bf16.msra.mxu0 0
  %712 = vmatprep.mubr.bf16.mxu0 0
  %713 = vmatmul.mubr.bf16.gmra.mxu0 %v239
  %v714 = vpop.f32.mrf.mxu0
  %v715 = vadd.f32 %v675, %v714
  %v716 = vpop.f32.mrf.mxu0
  %v717 = vpop.f32.mrf.mxu0
  %v718 = vadd.f32 %v677, %v717
  %v719 = vpop.f32.mrf.mxu0
  %720 = vdwg.mxu0
  %s721 = scalar_lea.vmem %s19, 1
  %v722 = vld [vmem:[%s721] sm:$0x1]
  %v724 = vlaneseq
  %v725 = vshrl.u32 %v724, 7
  %v726 = vsub.s32 0, %v725
  %v727 = vrot.slane %v722, %v726
  %v729 = vadd.f32 %v715, %v727
  %v730 = vadd.f32 %v718, %v727
  %v731 = vmax.f32 %v729, 0.0
  %v732 = vmax.f32 %v730, 0.0
  %735 = vrot.lane.b32.xlu0 %v731, 112
  %v736 = vpop.permute.xlu0 %735
  %737 = vrot.lane.b32.xlu0 %v732, 112
  %v738 = vpop.permute.xlu0 %737
  %v741 = vadd.f32 %v731, %v736
  %v742 = vadd.f32 %v732, %v738
  %743 = vrot.lane.b32.xlu0 %v731, 96
  %v744 = vpop.permute.xlu0 %743
  %745 = vrot.lane.b32.xlu0 %v732, 96
  %v746 = vpop.permute.xlu0 %745
  %v749 = vadd.f32 %v741, %v744
  %v750 = vadd.f32 %v742, %v746
  %v751 = vmul.f32 %v749, 0.33333334
  %v752 = vmul.f32 %v750, 0.33333334
  %v753 = vmax.f32 %v751, 0.0
  %v754 = vmax.f32 %v752, 0.0
  %v755 = vpack.c.bf16 %v754, %v753
  %v756 = vld [vmem:[%s25] sm:$0xf]
  %v757 = vld [vmem:[%s25 + $0x4] sm:$0xf]
  %v760 = vunpack.c.l.b16 %v756
  %v761 = vunpack.c.l.b16 %v757
  %v762 = vpack.c.b16 %v761, %v760
  %v765 = vsel %vm237, %v755, 0
  %767 = vmatprep.subr.bf16.mxu0 0
  %768 = vmatpush1.bf16.msra.mxu0 0
  %769 = vmatprep.subr.bf16.mxu0 0
  %770 = vmatpush1.bf16.msra.mxu0 0
  %771 = vmatprep.subr.bf16.mxu0 0
  %772 = vmatpush1.bf16.msra.mxu0 0
  %773 = vmatprep.subr.bf16.mxu0 0
  %774 = vmatpush1.bf16.msra.mxu0 0
  %775 = vmatprep.subr.bf16.mxu0 0
  %776 = vmatpush1.bf16.msra.mxu0 0
  %777 = vmatprep.subr.bf16.mxu0 0
  %778 = vmatpush1.bf16.msra.mxu0 0
  %779 = vmatprep.subr.bf16.mxu0 0
  %780 = vmatpush1.bf16.msra.mxu0 0
  %781 = vmatprep.subr.bf16.mxu0 0
  %782 = vmatpush1.bf16.msra.mxu0 %v762
  %783 = vmatprep.subr.bf16.mxu0 0
  %784 = vmatpush2.bf16.msra.mxu0 0
  %785 = vmatprep.subr.bf16.mxu0 0
  %786 = vmatpush2.bf16.msra.mxu0 0
  %787 = vmatprep.subr.bf16.mxu0 0
  %788 = vmatpush2.bf16.msra.mxu0 0
  %789 = vmatprep.subr.bf16.mxu0 0
  %790 = vmatpush2.bf16.msra.mxu0 0
  %791 = vmatprep.subr.bf16.mxu0 0
  %792 = vmatpush2.bf16.msra.mxu0 0
  %793 = vmatprep.subr.bf16.mxu0 0
  %794 = vmatpush2.bf16.msra.mxu0 0
  %795 = vmatprep.subr.bf16.mxu0 0
  %796 = vmatpush2.bf16.msra.mxu0 0
  %797 = vmatprep.subr.bf16.mxu0 0
  %798 = vmatpush2.bf16.msra.mxu0 0
  %799 = vmatprep.mubr.bf16.mxu0 0
  %800 = vmatmul.mubr.bf16.gmra.mxu0 %v765
  %v801 = vpop.f32.mrf.mxu0
  %v802 = vadd.f32 0.0, %v801
  %v803 = vpop.f32.mrf.mxu0
  %v804 = vpop.f32.mrf.mxu0
  %v805 = vadd.f32 0.0, %v804
  %v806 = vpop.f32.mrf.mxu0
  %807 = vdwg.mxu0
  %v808 = vld [vmem:[%s21] sm:$0xf]
  %v809 = vld [vmem:[%s21 + $0x4] sm:$0xf]
  %v812 = vunpack.c.l.b16 %v808
  %v813 = vunpack.c.l.b16 %v809
  %v814 = vpack.c.b16 %v813, %v812
  %816 = vmatprep.subr.bf16.mxu0 0
  %817 = vmatpush1.bf16.msra.mxu0 0
  %818 = vmatprep.subr.bf16.mxu0 0
  %819 = vmatpush1.bf16.msra.mxu0 0
  %820 = vmatprep.subr.bf16.mxu0 0
  %821 = vmatpush1.bf16.msra.mxu0 0
  %822 = vmatprep.subr.bf16.mxu0 0
  %823 = vmatpush1.bf16.msra.mxu0 0
  %824 = vmatprep.subr.bf16.mxu0 0
  %825 = vmatpush1.bf16.msra.mxu0 0
  %826 = vmatprep.subr.bf16.mxu0 0
  %827 = vmatpush1.bf16.msra.mxu0 0
  %828 = vmatprep.subr.bf16.mxu0 0
  %829 = vmatpush1.bf16.msra.mxu0 0
  %830 = vmatprep.subr.bf16.mxu0 0
  %831 = vmatpush1.bf16.msra.mxu0 %v814
  %832 = vmatprep.subr.bf16.mxu0 0
  %833 = vmatpush2.bf16.msra.mxu0 0
  %834 = vmatprep.subr.bf16.mxu0 0
  %835 = vmatpush2.bf16.msra.mxu0 0
  %836 = vmatprep.subr.bf16.mxu0 0
  %837 = vmatpush2.bf16.msra.mxu0 0
  %838 = vmatprep.subr.bf16.mxu0 0
  %839 = vmatpush2.bf16.msra.mxu0 0
  %840 = vmatprep.subr.bf16.mxu0 0
  %841 = vmatpush2.bf16.msra.mxu0 0
  %842 = vmatprep.subr.bf16.mxu0 0
  %843 = vmatpush2.bf16.msra.mxu0 0
  %844 = vmatprep.subr.bf16.mxu0 0
  %845 = vmatpush2.bf16.msra.mxu0 0
  %846 = vmatprep.subr.bf16.mxu0 0
  %847 = vmatpush2.bf16.msra.mxu0 0
  %848 = vmatprep.mubr.bf16.mxu0 0
  %849 = vmatmul.mubr.bf16.gmra.mxu0 %v765
  %v850 = vpop.f32.mrf.mxu0
  %v851 = vadd.f32 0.0, %v850
  %v852 = vpop.f32.mrf.mxu0
  %v853 = vpop.f32.mrf.mxu0
  %v854 = vadd.f32 0.0, %v853
  %v855 = vpop.f32.mrf.mxu0
  %856 = vdwg.mxu0
  %v857 = vpack.c.bf16 %v854, %v851
  %858 = vmatprep.subr.bf16.mxu0 0
  %859 = vmatpush1.bf16.msra.mxu0 0
  %860 = vmatprep.subr.bf16.mxu0 0
  %861 = vmatpush1.bf16.msra.mxu0 0
  %862 = vmatprep.subr.bf16.mxu0 0
  %863 = vmatpush1.bf16.msra.mxu0 0
  %864 = vmatprep.subr.bf16.mxu0 0
  %865 = vmatpush1.bf16.msra.mxu0 0
  %866 = vmatprep.subr.bf16.mxu0 0
  %867 = vmatpush1.bf16.msra.mxu0 0
  %868 = vmatprep.subr.bf16.mxu0 0
  %869 = vmatpush1.bf16.msra.mxu0 0
  %870 = vmatprep.subr.bf16.mxu0 0
  %871 = vmatpush1.bf16.msra.mxu0 0
  %872 = vmatprep.subr.bf16.mxu0 0
  %873 = vmatpush1.bf16.msra.mxu0 %v857
  %874 = vmatprep.subr.bf16.mxu0 0
  %875 = vmatpush2.bf16.msra.mxu0 0
  %876 = vmatprep.subr.bf16.mxu0 0
  %877 = vmatpush2.bf16.msra.mxu0 0
  %878 = vmatprep.subr.bf16.mxu0 0
  %879 = vmatpush2.bf16.msra.mxu0 0
  %880 = vmatprep.subr.bf16.mxu0 0
  %881 = vmatpush2.bf16.msra.mxu0 0
  %882 = vmatprep.subr.bf16.mxu0 0
  %883 = vmatpush2.bf16.msra.mxu0 0
  %884 = vmatprep.subr.bf16.mxu0 0
  %885 = vmatpush2.bf16.msra.mxu0 0
  %886 = vmatprep.subr.bf16.mxu0 0
  %887 = vmatpush2.bf16.msra.mxu0 0
  %888 = vmatprep.subr.bf16.mxu0 0
  %889 = vmatpush2.bf16.msra.mxu0 0
  %890 = vmatprep.mubr.bf16.mxu0 0
  %891 = vmatmul.mubr.bf16.gmra.mxu0 %v239
  %v892 = vpop.f32.mrf.mxu0
  %v893 = vadd.f32 %v802, %v892
  %v894 = vpop.f32.mrf.mxu0
  %v895 = vpop.f32.mrf.mxu0
  %v896 = vadd.f32 %v805, %v895
  %v897 = vpop.f32.mrf.mxu0
  %898 = vdwg.mxu0
  %v899 = vld [vmem:[%s27] sm:$0x1]
  %v901 = vlaneseq
  %v902 = vshrl.u32 %v901, 7
  %v903 = vsub.s32 0, %v902
  %v904 = vrot.slane %v899, %v903
  %v906 = vadd.f32 %v893, %v904
  %v907 = vadd.f32 %v896, %v904
  %v908 = vmax.f32 %v906, 0.0
  %v909 = vmax.f32 %v907, 0.0
  %v910 = vpack.c.bf16 %v909, %v908
  %v911 = vld [vmem:[%s23] sm:$0xf]
  %v912 = vld [vmem:[%s23 + $0x4] sm:$0xf]
  %v913 = vld [vmem:[%s23 + $0x8] sm:$0xf]
  %v914 = vld [vmem:[%s23 + $0xc] sm:$0xf]
  %v915 = vld [vmem:[%s23 + $0x10] sm:$0xf]
  %v916 = vld [vmem:[%s23 + $0x14] sm:$0xf]
  %v923 = vunpack.c.l.b16 %v911
  %v924 = vunpack.c.l.b16 %v912
  %v925 = vunpack.c.l.b16 %v913
  %v926 = vunpack.c.l.b16 %v914
  %v927 = vunpack.c.l.b16 %v915
  %v928 = vunpack.c.l.b16 %v916
  %v929 = vpack.c.b16 %v924, %v923
  %v930 = vpack.c.b16 %v926, %v925
  %v931 = vpack.c.b16 %v928, %v927
  %v936 = vsel %vm318, %v910, 0
  %938 = vmatprep.subr.bf16.mxu0 0
  %939 = vmatpush1.bf16.msra.mxu0 0
  %940 = vmatprep.subr.bf16.mxu0 0
  %941 = vmatpush1.bf16.msra.mxu0 0
  %942 = vmatprep.subr.bf16.mxu0 0
  %943 = vmatpush1.bf16.msra.mxu0 0
  %944 = vmatprep.subr.bf16.mxu0 0
  %945 = vmatpush1.bf16.msra.mxu0 0
  %946 = vmatprep.subr.bf16.mxu0 0
  %947 = vmatpush1.bf16.msra.mxu0 0
  %948 = vmatprep.subr.bf16.mxu0 0
  %949 = vmatpush1.bf16.msra.mxu0 %v931
  %950 = vmatprep.subr.bf16.mxu0 0
  %951 = vmatpush1.bf16.msra.mxu0 %v930
  %952 = vmatprep.subr.bf16.mxu0 0
  %953 = vmatpush1.bf16.msra.mxu0 %v929
  %954 = vmatprep.subr.bf16.mxu0 0
  %955 = vmatpush2.bf16.msra.mxu0 0
  %956 = vmatprep.subr.bf16.mxu0 0
  %957 = vmatpush2.bf16.msra.mxu0 0
  %958 = vmatprep.subr.bf16.mxu0 0
  %959 = vmatpush2.bf16.msra.mxu0 0
  %960 = vmatprep.subr.bf16.mxu0 0
  %961 = vmatpush2.bf16.msra.mxu0 0
  %962 = vmatprep.subr.bf16.mxu0 0
  %963 = vmatpush2.bf16.msra.mxu0 0
  %964 = vmatprep.subr.bf16.mxu0 0
  %965 = vmatpush2.bf16.msra.mxu0 0
  %966 = vmatprep.subr.bf16.mxu0 0
  %967 = vmatpush2.bf16.msra.mxu0 0
  %968 = vmatprep.subr.bf16.mxu0 0
  %969 = vmatpush2.bf16.msra.mxu0 0
  %970 = vmatprep.mubr.bf16.mxu0 0
  %971 = vmatmul.mubr.bf16.gmra.mxu0 %v936
  %v972 = vpop.f32.mrf.mxu0
  %v973 = vadd.f32 0.0, %v972
  %v974 = vpop.f32.mrf.mxu0
  %v975 = vpop.f32.mrf.mxu0
  %v976 = vadd.f32 0.0, %v975
  %v977 = vpop.f32.mrf.mxu0
  %978 = vdwg.mxu0
  %v979 = vpack.c.bf16 %v976, %v973
  %982 = vrot.lane.b32.xlu0 %v802, 80
  %v983 = vpop.permute.xlu0 %982
  %984 = vrot.lane.b32.xlu0 %v805, 80
  %v985 = vpop.permute.xlu0 %984
  %988 = vmatprep.subr.bf16.mxu0 0
  %989 = vmatpush1.bf16.msra.mxu0 0
  %990 = vmatprep.subr.bf16.mxu0 0
  %991 = vmatpush1.bf16.msra.mxu0 0
  %992 = vmatprep.subr.bf16.mxu0 0
  %993 = vmatpush1.bf16.msra.mxu0 0
  %994 = vmatprep.subr.bf16.mxu0 0
  %995 = vmatpush1.bf16.msra.mxu0 0
  %996 = vmatprep.subr.bf16.mxu0 0
  %997 = vmatpush1.bf16.msra.mxu0 0
  %998 = vmatprep.subr.bf16.mxu0 0
  %999 = vmatpush1.bf16.msra.mxu0 0
  %1000 = vmatprep.subr.bf16.mxu0 0
  %1001 = vmatpush1.bf16.msra.mxu0 0
  %1002 = vmatprep.subr.bf16.mxu0 0
  %1003 = vmatpush1.bf16.msra.mxu0 %v979
  %1004 = vmatprep.subr.bf16.mxu0 0
  %1005 = vmatpush2.bf16.msra.mxu0 0
  %1006 = vmatprep.subr.bf16.mxu0 0
  %1007 = vmatpush2.bf16.msra.mxu0 0
  %1008 = vmatprep.subr.bf16.mxu0 0
  %1009 = vmatpush2.bf16.msra.mxu0 0
  %1010 = vmatprep.subr.bf16.mxu0 0
  %1011 = vmatpush2.bf16.msra.mxu0 0
  %1012 = vmatprep.subr.bf16.mxu0 0
  %1013 = vmatpush2.bf16.msra.mxu0 0
  %1014 = vmatprep.subr.bf16.mxu0 0
  %1015 = vmatpush2.bf16.msra.mxu0 0
  %1016 = vmatprep.subr.bf16.mxu0 0
  %1017 = vmatpush2.bf16.msra.mxu0 0
  %1018 = vmatprep.subr.bf16.mxu0 0
  %1019 = vmatpush2.bf16.msra.mxu0 0
  %1020 = vmatprep.mubr.bf16.mxu0 0
  %1021 = vmatmul.mubr.bf16.gmra.mxu0 %v239
  %v1022 = vpop.f32.mrf.mxu0
  %v1023 = vadd.f32 %v983, %v1022
  %v1024 = vpop.f32.mrf.mxu0
  %v1025 = vpop.f32.mrf.mxu0
  %v1026 = vadd.f32 %v985, %v1025
  %v1027 = vpop.f32.mrf.mxu0
  %1028 = vdwg.mxu0
  %s1029 = scalar_lea.vmem %s27, 1
  %v1030 = vld [vmem:[%s1029] sm:$0x1]
  %v1032 = vlaneseq
  %v1033 = vshrl.u32 %v1032, 7
  %v1034 = vsub.s32 0, %v1033
  %v1035 = vrot.slane %v1030, %v1034
  %v1037 = vadd.f32 %v1023, %v1035
  %v1038 = vadd.f32 %v1026, %v1035
  %v1039 = vmax.f32 %v1037, 0.0
  %v1040 = vmax.f32 %v1038, 0.0
  %1043 = vrot.lane.b32.xlu0 %v1039, 112
  %v1044 = vpop.permute.xlu0 %1043
  %1045 = vrot.lane.b32.xlu0 %v1040, 112
  %v1046 = vpop.permute.xlu0 %1045
  %v1049 = vadd.f32 %v1039, %v1044
  %v1050 = vadd.f32 %v1040, %v1046
  %1051 = vrot.lane.b32.xlu0 %v1039, 96
  %v1052 = vpop.permute.xlu0 %1051
  %1053 = vrot.lane.b32.xlu0 %v1040, 96
  %v1054 = vpop.permute.xlu0 %1053
  %v1057 = vadd.f32 %v1049, %v1052
  %v1058 = vadd.f32 %v1050, %v1054
  %v1059 = vmul.f32 %v1057, 0.33333334
  %v1060 = vmul.f32 %v1058, 0.33333334
  %v1061 = vsel %vm237, %v1059, 0.0
  %v1062 = vsel %vm237, %v1060, 0.0
  %v1063 = vadd.f32 %v1061, %v1062
  %v1064 = vrot.slane %v1063, 4
  %v1065 = vadd.f32 %v1063, %v1064
  %v1066 = vrot.slane %v1065, 2
  %v1067 = vadd.f32 %v1065, %v1066
  %v1068 = vrot.slane %v1067, 1
  %v1069 = vadd.f32 %v1067, %v1068
  %v1070 = vrcp.pop 16.0
  %v1071 = vmul.f32 %v1069, %v1070
  %v1072 = vsub.f32 %v1059, %v1071
  %v1073 = vsub.f32 %v1060, %v1071
  %v1074 = vmul.f32 %v1072, %v1072
  %v1075 = vmul.f32 %v1073, %v1073
  %v1076 = vsel %vm237, %v1074, 0.0
  %v1077 = vsel %vm237, %v1075, 0.0
  %v1078 = vadd.f32 %v1076, %v1077
  %v1079 = vrot.slane %v1078, 4
  %v1080 = vadd.f32 %v1078, %v1079
  %v1081 = vrot.slane %v1080, 2
  %v1082 = vadd.f32 %v1080, %v1081
  %v1083 = vrot.slane %v1082, 1
  %v1084 = vadd.f32 %v1082, %v1083
  %v1085 = vmul.f32 %v1084, %v1070
  %v1086 = vadd.f32 %v1085, 1e-05
  %v1087 = vrsqrt.pop %v1086
  %v1088 = vmul.f32 %v1072, %v1087
  %v1089 = vmul.f32 %v1073, %v1087
  %v1090 = vld [vmem:[%s29] sm:$0x1]
  %v1092 = vlaneseq
  %v1093 = vshrl.u32 %v1092, 7
  %v1094 = vsub.s32 0, %v1093
  %v1095 = vrot.slane %v1090, %v1094
  %v1097 = vmul.f32 %v1088, %v1095
  %v1098 = vmul.f32 %v1089, %v1095
  %v1099 = vld [vmem:[%s31] sm:$0x1]
  %v1101 = vlaneseq
  %v1102 = vshrl.u32 %v1101, 7
  %v1103 = vsub.s32 0, %v1102
  %v1104 = vrot.slane %v1099, %v1103
  %v1106 = vadd.f32 %v1097, %v1104
  %v1107 = vadd.f32 %v1098, %v1104
  %v1108 = vmax.f32 %v1106, 0.0
  %v1109 = vmax.f32 %v1107, 0.0
  %v1110 = vpack.c.bf16 %v1109, %v1108
  %v1111 = vld [vmem:[%s33] sm:$0xf]
  %v1112 = vld [vmem:[%s33 + $0x4] sm:$0xf]
  %v1113 = vld [vmem:[%s35] sm:$0x1]
  %v1115 = vlaneseq
  %v1116 = vshrl.u32 %v1115, 7
  %v1117 = vsub.s32 0, %v1116
  %v1118 = vrot.slane %v1113, %v1117
  %v1122 = vunpack.c.l.b16 %v1111
  %v1123 = vunpack.c.l.b16 %v1112
  %v1124 = vpack.c.b16 %v1123, %v1122
  %v1127 = vsel %vm237, %v1110, 0
  %1129 = vmatprep.subr.bf16.mxu0 0
  %1130 = vmatpush1.bf16.msra.mxu0 0
  %1131 = vmatprep.subr.bf16.mxu0 0
  %1132 = vmatpush1.bf16.msra.mxu0 0
  %1133 = vmatprep.subr.bf16.mxu0 0
  %1134 = vmatpush1.bf16.msra.mxu0 0
  %1135 = vmatprep.subr.bf16.mxu0 0
  %1136 = vmatpush1.bf16.msra.mxu0 0
  %1137 = vmatprep.subr.bf16.mxu0 0
  %1138 = vmatpush1.bf16.msra.mxu0 0
  %1139 = vmatprep.subr.bf16.mxu0 0
  %1140 = vmatpush1.bf16.msra.mxu0 0
  %1141 = vmatprep.subr.bf16.mxu0 0
  %1142 = vmatpush1.bf16.msra.mxu0 0
  %1143 = vmatprep.subr.bf16.mxu0 0
  %1144 = vmatpush1.bf16.msra.mxu0 %v1124
  %1145 = vmatprep.subr.bf16.mxu0 0
  %1146 = vmatpush2.bf16.msra.mxu0 0
  %1147 = vmatprep.subr.bf16.mxu0 0
  %1148 = vmatpush2.bf16.msra.mxu0 0
  %1149 = vmatprep.subr.bf16.mxu0 0
  %1150 = vmatpush2.bf16.msra.mxu0 0
  %1151 = vmatprep.subr.bf16.mxu0 0
  %1152 = vmatpush2.bf16.msra.mxu0 0
  %1153 = vmatprep.subr.bf16.mxu0 0
  %1154 = vmatpush2.bf16.msra.mxu0 0
  %1155 = vmatprep.subr.bf16.mxu0 0
  %1156 = vmatpush2.bf16.msra.mxu0 0
  %1157 = vmatprep.subr.bf16.mxu0 0
  %1158 = vmatpush2.bf16.msra.mxu0 0
  %1159 = vmatprep.subr.bf16.mxu0 0
  %1160 = vmatpush2.bf16.msra.mxu0 0
  %1161 = vmatprep.mubr.bf16.mxu0 0
  %1162 = vmatmul.mubr.bf16.gmra.mxu0 %v1127
  %v1163 = vpop.f32.mrf.mxu0
  %v1164 = vadd.f32 %v1118, %v1163
  %v1165 = vpop.f32.mrf.mxu0
  %v1166 = vpop.f32.mrf.mxu0
  %v1167 = vadd.f32 %v1118, %v1166
  %v1168 = vpop.f32.mrf.mxu0
  %1169 = vdwg.mxu0
  %v1170 = vpack.c.bf16 %v1164, %v1164
  %1172 = vrot.lane.b32.xlu0 %v1170, 112
  %v1173 = vpop.permute.xlu0 %1172
  %vm1174 = vcmask 31744
  %v1176 = vsel %vm1174, %v1170, 0
  %v1179 = vsel %vm1174, %v1173, 0
  %1181 = vmatprep.subr.bf16.mxu0 0
  %1182 = vmatpush1.bf16.xpose.msra.mxu0 0
  %1183 = vmatprep.subr.bf16.mxu0 0
  %1184 = vmatpush1.bf16.xpose.msra.mxu0 0
  %1185 = vmatprep.subr.bf16.mxu0 0
  %1186 = vmatpush1.bf16.xpose.msra.mxu0 0
  %1187 = vmatprep.subr.bf16.mxu0 0
  %1188 = vmatpush1.bf16.xpose.msra.mxu0 0
  %1189 = vmatprep.subr.bf16.mxu0 0
  %1190 = vmatpush1.bf16.xpose.msra.mxu0 0
  %1191 = vmatprep.subr.bf16.mxu0 0
  %1192 = vmatpush1.bf16.xpose.msra.mxu0 0
  %1193 = vmatprep.subr.bf16.mxu0 0
  %1194 = vmatpush1.bf16.xpose.msra.mxu0 0
  %1195 = vmatprep.subr.bf16.mxu0 0
  %1196 = vmatpush1.bf16.xpose.msra.mxu0 %v1179
  %1197 = vmatprep.subr.bf16.mxu0 0
  %1198 = vmatpush2.bf16.xpose.msra.mxu0 0
  %1199 = vmatprep.subr.bf16.mxu0 0
  %1200 = vmatpush2.bf16.xpose.msra.mxu0 0
  %1201 = vmatprep.subr.bf16.mxu0 0
  %1202 = vmatpush2.bf16.xpose.msra.mxu0 0
  %1203 = vmatprep.subr.bf16.mxu0 0
  %1204 = vmatpush2.bf16.xpose.msra.mxu0 0
  %1205 = vmatprep.subr.bf16.mxu0 0
  %1206 = vmatpush2.bf16.xpose.msra.mxu0 0
  %1207 = vmatprep.subr.bf16.mxu0 0
  %1208 = vmatpush2.bf16.xpose.msra.mxu0 0
  %1209 = vmatprep.subr.bf16.mxu0 0
  %1210 = vmatpush2.bf16.xpose.msra.mxu0 0
  %1211 = vmatprep.subr.bf16.mxu0 0
  %1212 = vmatpush2.bf16.xpose.msra.mxu0 0
  %1213 = vmatprep.mubr.bf16.mxu0 0
  %1214 = vmatmul.mubr.bf16.gmra.mxu0 %v1176
  %v1215 = vpop.f32.mrf.mxu0
  %v1216 = vadd.f32 0.0, %v1215
  %v1217 = vpop.f32.mrf.mxu0
  %v1218 = vpop.f32.mrf.mxu0
  %v1219 = vpop.f32.mrf.mxu0
  %1220 = vdwg.mxu0
  %v1221 = vmul.f32 %v1216, 0.5
  %v1222 = vsel %vm137, %v1221, -inf
  %1223 = vmax.xlane.f32.xlu0 %v1222
  %v1224 = vpop.xlane.xlu0 %1223
  %v1225 = vsub.f32 %v1221, %v1224
  %v1226 = vmul.f32 %v1225, 1.442695
  %v1227 = vpow.pop %v1226
  %v1228 = vsel %vm137, %v1227, 0.0
  %1229 = vadd.xlane.f32.xlu0 %v1228
  %v1230 = vpop.xlane.xlu0 %1229
  %v1231 = vrcp.pop %v1230
  %v1232 = vmul.f32 %v1227, %v1231
  %v1233 = vpack.c.bf16 %v1232, %v1232
  %1234 = vrot.lane.b32.xlu0 %v1170, 96
  %v1235 = vpop.permute.xlu0 %1234
  %v1237 = vsel %vm137, %v1233, 0
  %v1240 = vsel %vm141, %v1235, 0
  %1242 = vmatprep.subr.bf16.mxu0 0
  %1243 = vmatpush1.bf16.msra.mxu0 0
  %1244 = vmatprep.subr.bf16.mxu0 0
  %1245 = vmatpush1.bf16.msra.mxu0 0
  %1246 = vmatprep.subr.bf16.mxu0 0
  %1247 = vmatpush1.bf16.msra.mxu0 0
  %1248 = vmatprep.subr.bf16.mxu0 0
  %1249 = vmatpush1.bf16.msra.mxu0 0
  %1250 = vmatprep.subr.bf16.mxu0 0
  %1251 = vmatpush1.bf16.msra.mxu0 0
  %1252 = vmatprep.subr.bf16.mxu0 0
  %1253 = vmatpush1.bf16.msra.mxu0 0
  %1254 = vmatprep.subr.bf16.mxu0 0
  %1255 = vmatpush1.bf16.msra.mxu0 0
  %1256 = vmatprep.subr.bf16.mxu0 0
  %1257 = vmatpush1.bf16.msra.mxu0 %v1240
  %1258 = vmatprep.subr.bf16.mxu0 0
  %1259 = vmatpush2.bf16.msra.mxu0 0
  %1260 = vmatprep.subr.bf16.mxu0 0
  %1261 = vmatpush2.bf16.msra.mxu0 0
  %1262 = vmatprep.subr.bf16.mxu0 0
  %1263 = vmatpush2.bf16.msra.mxu0 0
  %1264 = vmatprep.subr.bf16.mxu0 0
  %1265 = vmatpush2.bf16.msra.mxu0 0
  %1266 = vmatprep.subr.bf16.mxu0 0
  %1267 = vmatpush2.bf16.msra.mxu0 0
  %1268 = vmatprep.subr.bf16.mxu0 0
  %1269 = vmatpush2.bf16.msra.mxu0 0
  %1270 = vmatprep.subr.bf16.mxu0 0
  %1271 = vmatpush2.bf16.msra.mxu0 0
  %1272 = vmatprep.subr.bf16.mxu0 0
  %1273 = vmatpush2.bf16.msra.mxu0 0
  %1274 = vmatprep.mubr.bf16.mxu0 0
  %1275 = vmatmul.mubr.bf16.gmra.mxu0 %v1237
  %v1276 = vpop.f32.mrf.mxu0
  %v1277 = vadd.f32 0.0, %v1276
  %v1278 = vpop.f32.mrf.mxu0
  %v1279 = vpop.f32.mrf.mxu0
  %v1280 = vpop.f32.mrf.mxu0
  %1281 = vdwg.mxu0
  %1282 = vrot.lane.b32.xlu0 %v1170, 124
  %v1283 = vpop.permute.xlu0 %1282
  %1284 = vrot.lane.b32.xlu0 %v1170, 108
  %v1285 = vpop.permute.xlu0 %1284
  %v1287 = vsel %vm1174, %v1283, 0
  %v1290 = vsel %vm1174, %v1285, 0
  %1292 = vmatprep.subr.bf16.mxu0 0
  %1293 = vmatpush1.bf16.xpose.msra.mxu0 0
  %1294 = vmatprep.subr.bf16.mxu0 0
  %1295 = vmatpush1.bf16.xpose.msra.mxu0 0
  %1296 = vmatprep.subr.bf16.mxu0 0
  %1297 = vmatpush1.bf16.xpose.msra.mxu0 0
  %1298 = vmatprep.subr.bf16.mxu0 0
  %1299 = vmatpush1.bf16.xpose.msra.mxu0 0
  %1300 = vmatprep.subr.bf16.mxu0 0
  %1301 = vmatpush1.bf16.xpose.msra.mxu0 0
  %1302 = vmatprep.subr.bf16.mxu0 0
  %1303 = vmatpush1.bf16.xpose.msra.mxu0 0
  %1304 = vmatprep.subr.bf16.mxu0 0
  %1305 = vmatpush1.bf16.xpose.msra.mxu0 0
  %1306 = vmatprep.subr.bf16.mxu0 0
  %1307 = vmatpush1.bf16.xpose.msra.mxu0 %v1290
  %1308 = vmatprep.subr.bf16.mxu0 0
  %1309 = vmatpush2.bf16.xpose.msra.mxu0 0
  %1310 = vmatprep.subr.bf16.mxu0 0
  %1311 = vmatpush2.bf16.xpose.msra.mxu0 0
  %1312 = vmatprep.subr.bf16.mxu0 0
  %1313 = vmatpush2.bf16.xpose.msra.mxu0 0
  %1314 = vmatprep.subr.bf16.mxu0 0
  %1315 = vmatpush2.bf16.xpose.msra.mxu0 0
  %1316 = vmatprep.subr.bf16.mxu0 0
  %1317 = vmatpush2.bf16.xpose.msra.mxu0 0
  %1318 = vmatprep.subr.bf16.mxu0 0
  %1319 = vmatpush2.bf16.xpose.msra.mxu0 0
  %1320 = vmatprep.subr.bf16.mxu0 0
  %1321 = vmatpush2.bf16.xpose.msra.mxu0 0
  %1322 = vmatprep.subr.bf16.mxu0 0
  %1323 = vmatpush2.bf16.xpose.msra.mxu0 0
  %1324 = vmatprep.mubr.bf16.mxu0 0
  %1325 = vmatmul.mubr.bf16.gmra.mxu0 %v1287
  %v1326 = vpop.f32.mrf.mxu0
  %v1327 = vadd.f32 0.0, %v1326
  %v1328 = vpop.f32.mrf.mxu0
  %v1329 = vpop.f32.mrf.mxu0
  %v1330 = vpop.f32.mrf.mxu0
  %1331 = vdwg.mxu0
  %v1332 = vmul.f32 %v1327, 0.5
  %v1333 = vsel %vm137, %v1332, -inf
  %1334 = vmax.xlane.f32.xlu0 %v1333
  %v1335 = vpop.xlane.xlu0 %1334
  %v1336 = vsub.f32 %v1332, %v1335
  %v1337 = vmul.f32 %v1336, 1.442695
  %v1338 = vpow.pop %v1337
  %v1339 = vsel %vm137, %v1338, 0.0
  %1340 = vadd.xlane.f32.xlu0 %v1339
  %v1341 = vpop.xlane.xlu0 %1340
  %v1342 = vrcp.pop %v1341
  %v1343 = vmul.f32 %v1338, %v1342
  %v1344 = vpack.c.bf16 %v1343, %v1343
  %1345 = vrot.lane.b32.xlu0 %v1170, 92
  %v1346 = vpop.permute.xlu0 %1345
  %v1348 = vsel %vm137, %v1344, 0
  %v1351 = vsel %vm141, %v1346, 0
  %1353 = vmatprep.subr.bf16.mxu0 0
  %1354 = vmatpush1.bf16.msra.mxu0 0
  %1355 = vmatprep.subr.bf16.mxu0 0
  %1356 = vmatpush1.bf16.msra.mxu0 0
  %1357 = vmatprep.subr.bf16.mxu0 0
  %1358 = vmatpush1.bf16.msra.mxu0 0
  %1359 = vmatprep.subr.bf16.mxu0 0
  %1360 = vmatpush1.bf16.msra.mxu0 0
  %1361 = vmatprep.subr.bf16.mxu0 0
  %1362 = vmatpush1.bf16.msra.mxu0 0
  %1363 = vmatprep.subr.bf16.mxu0 0
  %1364 = vmatpush1.bf16.msra.mxu0 0
  %1365 = vmatprep.subr.bf16.mxu0 0
  %1366 = vmatpush1.bf16.msra.mxu0 0
  %1367 = vmatprep.subr.bf16.mxu0 0
  %1368 = vmatpush1.bf16.msra.mxu0 %v1351
  %1369 = vmatprep.subr.bf16.mxu0 0
  %1370 = vmatpush2.bf16.msra.mxu0 0
  %1371 = vmatprep.subr.bf16.mxu0 0
  %1372 = vmatpush2.bf16.msra.mxu0 0
  %1373 = vmatprep.subr.bf16.mxu0 0
  %1374 = vmatpush2.bf16.msra.mxu0 0
  %1375 = vmatprep.subr.bf16.mxu0 0
  %1376 = vmatpush2.bf16.msra.mxu0 0
  %1377 = vmatprep.subr.bf16.mxu0 0
  %1378 = vmatpush2.bf16.msra.mxu0 0
  %1379 = vmatprep.subr.bf16.mxu0 0
  %1380 = vmatpush2.bf16.msra.mxu0 0
  %1381 = vmatprep.subr.bf16.mxu0 0
  %1382 = vmatpush2.bf16.msra.mxu0 0
  %1383 = vmatprep.subr.bf16.mxu0 0
  %1384 = vmatpush2.bf16.msra.mxu0 0
  %1385 = vmatprep.mubr.bf16.mxu0 0
  %1386 = vmatmul.mubr.bf16.gmra.mxu0 %v1348
  %v1387 = vpop.f32.mrf.mxu0
  %v1388 = vadd.f32 0.0, %v1387
  %v1389 = vpop.f32.mrf.mxu0
  %v1390 = vpop.f32.mrf.mxu0
  %v1391 = vpop.f32.mrf.mxu0
  %1392 = vdwg.mxu0
  %1393 = vrot.lane.b32.xlu0 %v1170, 120
  %v1394 = vpop.permute.xlu0 %1393
  %1395 = vrot.lane.b32.xlu0 %v1170, 104
  %v1396 = vpop.permute.xlu0 %1395
  %v1398 = vsel %vm1174, %v1394, 0
  %v1401 = vsel %vm1174, %v1396, 0
  %1403 = vmatprep.subr.bf16.mxu0 0
  %1404 = vmatpush1.bf16.xpose.msra.mxu0 0
  %1405 = vmatprep.subr.bf16.mxu0 0
  %1406 = vmatpush1.bf16.xpose.msra.mxu0 0
  %1407 = vmatprep.subr.bf16.mxu0 0
  %1408 = vmatpush1.bf16.xpose.msra.mxu0 0
  %1409 = vmatprep.subr.bf16.mxu0 0
  %1410 = vmatpush1.bf16.xpose.msra.mxu0 0
  %1411 = vmatprep.subr.bf16.mxu0 0
  %1412 = vmatpush1.bf16.xpose.msra.mxu0 0
  %1413 = vmatprep.subr.bf16.mxu0 0
  %1414 = vmatpush1.bf16.xpose.msra.mxu0 0
  %1415 = vmatprep.subr.bf16.mxu0 0
  %1416 = vmatpush1.bf16.xpose.msra.mxu0 0
  %1417 = vmatprep.subr.bf16.mxu0 0
  %1418 = vmatpush1.bf16.xpose.msra.mxu0 %v1401
  %1419 = vmatprep.subr.bf16.mxu0 0
  %1420 = vmatpush2.bf16.xpose.msra.mxu0 0
  %1421 = vmatprep.subr.bf16.mxu0 0
  %1422 = vmatpush2.bf16.xpose.msra.mxu0 0
  %1423 = vmatprep.subr.bf16.mxu0 0
  %1424 = vmatpush2.bf16.xpose.msra.mxu0 0
  %1425 = vmatprep.subr.bf16.mxu0 0
  %1426 = vmatpush2.bf16.xpose.msra.mxu0 0
  %1427 = vmatprep.subr.bf16.mxu0 0
  %1428 = vmatpush2.bf16.xpose.msra.mxu0 0
  %1429 = vmatprep.subr.bf16.mxu0 0
  %1430 = vmatpush2.bf16.xpose.msra.mxu0 0
  %1431 = vmatprep.subr.bf16.mxu0 0
  %1432 = vmatpush2.bf16.xpose.msra.mxu0 0
  %1433 = vmatprep.subr.bf16.mxu0 0
  %1434 = vmatpush2.bf16.xpose.msra.mxu0 0
  %1435 = vmatprep.mubr.bf16.mxu0 0
  %1436 = vmatmul.mubr.bf16.gmra.mxu0 %v1398
  %v1437 = vpop.f32.mrf.mxu0
  %v1438 = vadd.f32 0.0, %v1437
  %v1439 = vpop.f32.mrf.mxu0
  %v1440 = vpop.f32.mrf.mxu0
  %v1441 = vpop.f32.mrf.mxu0
  %1442 = vdwg.mxu0
  %v1443 = vmul.f32 %v1438, 0.5
  %v1444 = vsel %vm137, %v1443, -inf
  %1445 = vmax.xlane.f32.xlu0 %v1444
  %v1446 = vpop.xlane.xlu0 %1445
  %v1447 = vsub.f32 %v1443, %v1446
  %v1448 = vmul.f32 %v1447, 1.442695
  %v1449 = vpow.pop %v1448
  %v1450 = vsel %vm137, %v1449, 0.0
  %1451 = vadd.xlane.f32.xlu0 %v1450
  %v1452 = vpop.xlane.xlu0 %1451
  %v1453 = vrcp.pop %v1452
  %v1454 = vmul.f32 %v1449, %v1453
  %v1455 = vpack.c.bf16 %v1454, %v1454
  %1456 = vrot.lane.b32.xlu0 %v1170, 88
  %v1457 = vpop.permute.xlu0 %1456
  %v1459 = vsel %vm137, %v1455, 0
  %v1462 = vsel %vm141, %v1457, 0
  %1464 = vmatprep.subr.bf16.mxu0 0
  %1465 = vmatpush1.bf16.msra.mxu0 0
  %1466 = vmatprep.subr.bf16.mxu0 0
  %1467 = vmatpush1.bf16.msra.mxu0 0
  %1468 = vmatprep.subr.bf16.mxu0 0
  %1469 = vmatpush1.bf16.msra.mxu0 0
  %1470 = vmatprep.subr.bf16.mxu0 0
  %1471 = vmatpush1.bf16.msra.mxu0 0
  %1472 = vmatprep.subr.bf16.mxu0 0
  %1473 = vmatpush1.bf16.msra.mxu0 0
  %1474 = vmatprep.subr.bf16.mxu0 0
  %1475 = vmatpush1.bf16.msra.mxu0 0
  %1476 = vmatprep.subr.bf16.mxu0 0
  %1477 = vmatpush1.bf16.msra.mxu0 0
  %1478 = vmatprep.subr.bf16.mxu0 0
  %1479 = vmatpush1.bf16.msra.mxu0 %v1462
  %1480 = vmatprep.subr.bf16.mxu0 0
  %1481 = vmatpush2.bf16.msra.mxu0 0
  %1482 = vmatprep.subr.bf16.mxu0 0
  %1483 = vmatpush2.bf16.msra.mxu0 0
  %1484 = vmatprep.subr.bf16.mxu0 0
  %1485 = vmatpush2.bf16.msra.mxu0 0
  %1486 = vmatprep.subr.bf16.mxu0 0
  %1487 = vmatpush2.bf16.msra.mxu0 0
  %1488 = vmatprep.subr.bf16.mxu0 0
  %1489 = vmatpush2.bf16.msra.mxu0 0
  %1490 = vmatprep.subr.bf16.mxu0 0
  %1491 = vmatpush2.bf16.msra.mxu0 0
  %1492 = vmatprep.subr.bf16.mxu0 0
  %1493 = vmatpush2.bf16.msra.mxu0 0
  %1494 = vmatprep.subr.bf16.mxu0 0
  %1495 = vmatpush2.bf16.msra.mxu0 0
  %1496 = vmatprep.mubr.bf16.mxu0 0
  %1497 = vmatmul.mubr.bf16.gmra.mxu0 %v1459
  %v1498 = vpop.f32.mrf.mxu0
  %v1499 = vadd.f32 0.0, %v1498
  %v1500 = vpop.f32.mrf.mxu0
  %v1501 = vpop.f32.mrf.mxu0
  %v1502 = vpop.f32.mrf.mxu0
  %1503 = vdwg.mxu0
  %1504 = vrot.lane.b32.xlu0 %v1170, 116
  %v1505 = vpop.permute.xlu0 %1504
  %1506 = vrot.lane.b32.xlu0 %v1170, 100
  %v1507 = vpop.permute.xlu0 %1506
  %v1509 = vsel %vm1174, %v1505, 0
  %v1512 = vsel %vm1174, %v1507, 0
  %1514 = vmatprep.subr.bf16.mxu0 0
  %1515 = vmatpush1.bf16.xpose.msra.mxu0 0
  %1516 = vmatprep.subr.bf16.mxu0 0
  %1517 = vmatpush1.bf16.xpose.msra.mxu0 0
  %1518 = vmatprep.subr.bf16.mxu0 0
  %1519 = vmatpush1.bf16.xpose.msra.mxu0 0
  %1520 = vmatprep.subr.bf16.mxu0 0
  %1521 = vmatpush1.bf16.xpose.msra.mxu0 0
  %1522 = vmatprep.subr.bf16.mxu0 0
  %1523 = vmatpush1.bf16.xpose.msra.mxu0 0
  %1524 = vmatprep.subr.bf16.mxu0 0
  %1525 = vmatpush1.bf16.xpose.msra.mxu0 0
  %1526 = vmatprep.subr.bf16.mxu0 0
  %1527 = vmatpush1.bf16.xpose.msra.mxu0 0
  %1528 = vmatprep.subr.bf16.mxu0 0
  %1529 = vmatpush1.bf16.xpose.msra.mxu0 %v1512
  %1530 = vmatprep.subr.bf16.mxu0 0
  %1531 = vmatpush2.bf16.xpose.msra.mxu0 0
  %1532 = vmatprep.subr.bf16.mxu0 0
  %1533 = vmatpush2.bf16.xpose.msra.mxu0 0
  %1534 = vmatprep.subr.bf16.mxu0 0
  %1535 = vmatpush2.bf16.xpose.msra.mxu0 0
  %1536 = vmatprep.subr.bf16.mxu0 0
  %1537 = vmatpush2.bf16.xpose.msra.mxu0 0
  %1538 = vmatprep.subr.bf16.mxu0 0
  %1539 = vmatpush2.bf16.xpose.msra.mxu0 0
  %1540 = vmatprep.subr.bf16.mxu0 0
  %1541 = vmatpush2.bf16.xpose.msra.mxu0 0
  %1542 = vmatprep.subr.bf16.mxu0 0
  %1543 = vmatpush2.bf16.xpose.msra.mxu0 0
  %1544 = vmatprep.subr.bf16.mxu0 0
  %1545 = vmatpush2.bf16.xpose.msra.mxu0 0
  %1546 = vmatprep.mubr.bf16.mxu0 0
  %1547 = vmatmul.mubr.bf16.gmra.mxu0 %v1509
  %v1548 = vpop.f32.mrf.mxu0
  %v1549 = vadd.f32 0.0, %v1548
  %v1550 = vpop.f32.mrf.mxu0
  %v1551 = vpop.f32.mrf.mxu0
  %v1552 = vpop.f32.mrf.mxu0
  %1553 = vdwg.mxu0
  %v1554 = vmul.f32 %v1549, 0.5
  %v1555 = vsel %vm137, %v1554, -inf
  %1556 = vmax.xlane.f32.xlu0 %v1555
  %v1557 = vpop.xlane.xlu0 %1556
  %v1558 = vsub.f32 %v1554, %v1557
  %v1559 = vmul.f32 %v1558, 1.442695
  %v1560 = vpow.pop %v1559
  %v1561 = vsel %vm137, %v1560, 0.0
  %1562 = vadd.xlane.f32.xlu0 %v1561
  %v1563 = vpop.xlane.xlu0 %1562
  %v1564 = vrcp.pop %v1563
  %v1565 = vmul.f32 %v1560, %v1564
  %v1566 = vpack.c.bf16 %v1565, %v1565
  %1567 = vrot.lane.b32.xlu0 %v1170, 84
  %v1568 = vpop.permute.xlu0 %1567
  %v1570 = vsel %vm137, %v1566, 0
  %v1573 = vsel %vm141, %v1568, 0
  %1575 = vmatprep.subr.bf16.mxu0 0
  %1576 = vmatpush1.bf16.msra.mxu0 0
  %1577 = vmatprep.subr.bf16.mxu0 0
  %1578 = vmatpush1.bf16.msra.mxu0 0
  %1579 = vmatprep.subr.bf16.mxu0 0
  %1580 = vmatpush1.bf16.msra.mxu0 0
  %1581 = vmatprep.subr.bf16.mxu0 0
  %1582 = vmatpush1.bf16.msra.mxu0 0
  %1583 = vmatprep.subr.bf16.mxu0 0
  %1584 = vmatpush1.bf16.msra.mxu0 0
  %1585 = vmatprep.subr.bf16.mxu0 0
  %1586 = vmatpush1.bf16.msra.mxu0 0
  %1587 = vmatprep.subr.bf16.mxu0 0
  %1588 = vmatpush1.bf16.msra.mxu0 0
  %1589 = vmatprep.subr.bf16.mxu0 0
  %1590 = vmatpush1.bf16.msra.mxu0 %v1573
  %1591 = vmatprep.subr.bf16.mxu0 0
  %1592 = vmatpush2.bf16.msra.mxu0 0
  %1593 = vmatprep.subr.bf16.mxu0 0
  %1594 = vmatpush2.bf16.msra.mxu0 0
  %1595 = vmatprep.subr.bf16.mxu0 0
  %1596 = vmatpush2.bf16.msra.mxu0 0
  %1597 = vmatprep.subr.bf16.mxu0 0
  %1598 = vmatpush2.bf16.msra.mxu0 0
  %1599 = vmatprep.subr.bf16.mxu0 0
  %1600 = vmatpush2.bf16.msra.mxu0 0
  %1601 = vmatprep.subr.bf16.mxu0 0
  %1602 = vmatpush2.bf16.msra.mxu0 0
  %1603 = vmatprep.subr.bf16.mxu0 0
  %1604 = vmatpush2.bf16.msra.mxu0 0
  %1605 = vmatprep.subr.bf16.mxu0 0
  %1606 = vmatpush2.bf16.msra.mxu0 0
  %1607 = vmatprep.mubr.bf16.mxu0 0
  %1608 = vmatmul.mubr.bf16.gmra.mxu0 %v1570
  %v1609 = vpop.f32.mrf.mxu0
  %v1610 = vadd.f32 0.0, %v1609
  %v1611 = vpop.f32.mrf.mxu0
  %v1612 = vpop.f32.mrf.mxu0
  %v1613 = vpop.f32.mrf.mxu0
  %1614 = vdwg.mxu0
  %1616 = vrot.lane.b32.xlu0 %v1388, 4
  %v1617 = vpop.permute.xlu0 %1616
  %1620 = vrot.lane.b32.xlu0 %v1499, 8
  %v1621 = vpop.permute.xlu0 %1620
  %1624 = vrot.lane.b32.xlu0 %v1610, 12
  %v1625 = vpop.permute.xlu0 %1624
  %v1627 = vsel %vm1174, %v1277, %v1617
  %v1628 = vsel %vm137, %v1627, %v1621
  %vm1629 = vcmask 97280
  %v1630 = vsel %vm1629, %v1628, %v1625
  %v1631 = vpack.c.bf16 %v1167, %v1167
  %1633 = vrot.lane.b32.xlu0 %v1631, 112
  %v1634 = vpop.permute.xlu0 %1633
  %v1636 = vsel %vm1174, %v1631, 0
  %v1639 = vsel %vm1174, %v1634, 0
  %1641 = vmatprep.subr.bf16.mxu0 0
  %1642 = vmatpush1.bf16.xpose.msra.mxu0 0
  %1643 = vmatprep.subr.bf16.mxu0 0
  %1644 = vmatpush1.bf16.xpose.msra.mxu0 0
  %1645 = vmatprep.subr.bf16.mxu0 0
  %1646 = vmatpush1.bf16.xpose.msra.mxu0 0
  %1647 = vmatprep.subr.bf16.mxu0 0
  %1648 = vmatpush1.bf16.xpose.msra.mxu0 0
  %1649 = vmatprep.subr.bf16.mxu0 0
  %1650 = vmatpush1.bf16.xpose.msra.mxu0 0
  %1651 = vmatprep.subr.bf16.mxu0 0
  %1652 = vmatpush1.bf16.xpose.msra.mxu0 0
  %1653 = vmatprep.subr.bf16.mxu0 0
  %1654 = vmatpush1.bf16.xpose.msra.mxu0 0
  %1655 = vmatprep.subr.bf16.mxu0 0
  %1656 = vmatpush1.bf16.xpose.msra.mxu0 %v1639
  %1657 = vmatprep.subr.bf16.mxu0 0
  %1658 = vmatpush2.bf16.xpose.msra.mxu0 0
  %1659 = vmatprep.subr.bf16.mxu0 0
  %1660 = vmatpush2.bf16.xpose.msra.mxu0 0
  %1661 = vmatprep.subr.bf16.mxu0 0
  %1662 = vmatpush2.bf16.xpose.msra.mxu0 0
  %1663 = vmatprep.subr.bf16.mxu0 0
  %1664 = vmatpush2.bf16.xpose.msra.mxu0 0
  %1665 = vmatprep.subr.bf16.mxu0 0
  %1666 = vmatpush2.bf16.xpose.msra.mxu0 0
  %1667 = vmatprep.subr.bf16.mxu0 0
  %1668 = vmatpush2.bf16.xpose.msra.mxu0 0
  %1669 = vmatprep.subr.bf16.mxu0 0
  %1670 = vmatpush2.bf16.xpose.msra.mxu0 0
  %1671 = vmatprep.subr.bf16.mxu0 0
  %1672 = vmatpush2.bf16.xpose.msra.mxu0 0
  %1673 = vmatprep.mubr.bf16.mxu0 0
  %1674 = vmatmul.mubr.bf16.gmra.mxu0 %v1636
  %v1675 = vpop.f32.mrf.mxu0
  %v1676 = vadd.f32 0.0, %v1675
  %v1677 = vpop.f32.mrf.mxu0
  %v1678 = vpop.f32.mrf.mxu0
  %v1679 = vpop.f32.mrf.mxu0
  %1680 = vdwg.mxu0
  %v1681 = vmul.f32 %v1676, 0.5
  %v1682 = vsel %vm137, %v1681, -inf
  %1683 = vmax.xlane.f32.xlu0 %v1682
  %v1684 = vpop.xlane.xlu0 %1683
  %v1685 = vsub.f32 %v1681, %v1684
  %v1686 = vmul.f32 %v1685, 1.442695
  %v1687 = vpow.pop %v1686
  %v1688 = vsel %vm137, %v1687, 0.0
  %1689 = vadd.xlane.f32.xlu0 %v1688
  %v1690 = vpop.xlane.xlu0 %1689
  %v1691 = vrcp.pop %v1690
  %v1692 = vmul.f32 %v1687, %v1691
  %v1693 = vpack.c.bf16 %v1692, %v1692
  %1694 = vrot.lane.b32.xlu0 %v1631, 96
  %v1695 = vpop.permute.xlu0 %1694
  %v1697 = vsel %vm137, %v1693, 0
  %v1700 = vsel %vm141, %v1695, 0
  %1702 = vmatprep.subr.bf16.mxu0 0
  %1703 = vmatpush1.bf16.msra.mxu0 0
  %1704 = vmatprep.subr.bf16.mxu0 0
  %1705 = vmatpush1.bf16.msra.mxu0 0
  %1706 = vmatprep.subr.bf16.mxu0 0
  %1707 = vmatpush1.bf16.msra.mxu0 0
  %1708 = vmatprep.subr.bf16.mxu0 0
  %1709 = vmatpush1.bf16.msra.mxu0 0
  %1710 = vmatprep.subr.bf16.mxu0 0
  %1711 = vmatpush1.bf16.msra.mxu0 0
  %1712 = vmatprep.subr.bf16.mxu0 0
  %1713 = vmatpush1.bf16.msra.mxu0 0
  %1714 = vmatprep.subr.bf16.mxu0 0
  %1715 = vmatpush1.bf16.msra.mxu0 0
  %1716 = vmatprep.subr.bf16.mxu0 0
  %1717 = vmatpush1.bf16.msra.mxu0 %v1700
  %1718 = vmatprep.subr.bf16.mxu0 0
  %1719 = vmatpush2.bf16.msra.mxu0 0
  %1720 = vmatprep.subr.bf16.mxu0 0
  %1721 = vmatpush2.bf16.msra.mxu0 0
  %1722 = vmatprep.subr.bf16.mxu0 0
  %1723 = vmatpush2.bf16.msra.mxu0 0
  %1724 = vmatprep.subr.bf16.mxu0 0
  %1725 = vmatpush2.bf16.msra.mxu0 0
  %1726 = vmatprep.subr.bf16.mxu0 0
  %1727 = vmatpush2.bf16.msra.mxu0 0
  %1728 = vmatprep.subr.bf16.mxu0 0
  %1729 = vmatpush2.bf16.msra.mxu0 0
  %1730 = vmatprep.subr.bf16.mxu0 0
  %1731 = vmatpush2.bf16.msra.mxu0 0
  %1732 = vmatprep.subr.bf16.mxu0 0
  %1733 = vmatpush2.bf16.msra.mxu0 0
  %1734 = vmatprep.mubr.bf16.mxu0 0
  %1735 = vmatmul.mubr.bf16.gmra.mxu0 %v1697
  %v1736 = vpop.f32.mrf.mxu0
  %v1737 = vadd.f32 0.0, %v1736
  %v1738 = vpop.f32.mrf.mxu0
  %v1739 = vpop.f32.mrf.mxu0
  %v1740 = vpop.f32.mrf.mxu0
  %1741 = vdwg.mxu0
  %1742 = vrot.lane.b32.xlu0 %v1631, 124
  %v1743 = vpop.permute.xlu0 %1742
  %1744 = vrot.lane.b32.xlu0 %v1631, 108
  %v1745 = vpop.permute.xlu0 %1744
  %v1747 = vsel %vm1174, %v1743, 0
  %v1750 = vsel %vm1174, %v1745, 0
  %1752 = vmatprep.subr.bf16.mxu0 0
  %1753 = vmatpush1.bf16.xpose.msra.mxu0 0
  %1754 = vmatprep.subr.bf16.mxu0 0
  %1755 = vmatpush1.bf16.xpose.msra.mxu0 0
  %1756 = vmatprep.subr.bf16.mxu0 0
  %1757 = vmatpush1.bf16.xpose.msra.mxu0 0
  %1758 = vmatprep.subr.bf16.mxu0 0
  %1759 = vmatpush1.bf16.xpose.msra.mxu0 0
  %1760 = vmatprep.subr.bf16.mxu0 0
  %1761 = vmatpush1.bf16.xpose.msra.mxu0 0
  %1762 = vmatprep.subr.bf16.mxu0 0
  %1763 = vmatpush1.bf16.xpose.msra.mxu0 0
  %1764 = vmatprep.subr.bf16.mxu0 0
  %1765 = vmatpush1.bf16.xpose.msra.mxu0 0
  %1766 = vmatprep.subr.bf16.mxu0 0
  %1767 = vmatpush1.bf16.xpose.msra.mxu0 %v1750
  %1768 = vmatprep.subr.bf16.mxu0 0
  %1769 = vmatpush2.bf16.xpose.msra.mxu0 0
  %1770 = vmatprep.subr.bf16.mxu0 0
  %1771 = vmatpush2.bf16.xpose.msra.mxu0 0
  %1772 = vmatprep.subr.bf16.mxu0 0
  %1773 = vmatpush2.bf16.xpose.msra.mxu0 0
  %1774 = vmatprep.subr.bf16.mxu0 0
  %1775 = vmatpush2.bf16.xpose.msra.mxu0 0
  %1776 = vmatprep.subr.bf16.mxu0 0
  %1777 = vmatpush2.bf16.xpose.msra.mxu0 0
  %1778 = vmatprep.subr.bf16.mxu0 0
  %1779 = vmatpush2.bf16.xpose.msra.mxu0 0
  %1780 = vmatprep.subr.bf16.mxu0 0
  %1781 = vmatpush2.bf16.xpose.msra.mxu0 0
  %1782 = vmatprep.subr.bf16.mxu0 0
  %1783 = vmatpush2.bf16.xpose.msra.mxu0 0
  %1784 = vmatprep.mubr.bf16.mxu0 0
  %1785 = vmatmul.mubr.bf16.gmra.mxu0 %v1747
  %v1786 = vpop.f32.mrf.mxu0
  %v1787 = vadd.f32 0.0, %v1786
  %v1788 = vpop.f32.mrf.mxu0
  %v1789 = vpop.f32.mrf.mxu0
  %v1790 = vpop.f32.mrf.mxu0
  %1791 = vdwg.mxu0
  %v1792 = vmul.f32 %v1787, 0.5
  %v1793 = vsel %vm137, %v1792, -inf
  %1794 = vmax.xlane.f32.xlu0 %v1793
  %v1795 = vpop.xlane.xlu0 %1794
  %v1796 = vsub.f32 %v1792, %v1795
  %v1797 = vmul.f32 %v1796, 1.442695
  %v1798 = vpow.pop %v1797
  %v1799 = vsel %vm137, %v1798, 0.0
  %1800 = vadd.xlane.f32.xlu0 %v1799
  %v1801 = vpop.xlane.xlu0 %1800
  %v1802 = vrcp.pop %v1801
  %v1803 = vmul.f32 %v1798, %v1802
  %v1804 = vpack.c.bf16 %v1803, %v1803
  %1805 = vrot.lane.b32.xlu0 %v1631, 92
  %v1806 = vpop.permute.xlu0 %1805
  %v1808 = vsel %vm137, %v1804, 0
  %v1811 = vsel %vm141, %v1806, 0
  %1813 = vmatprep.subr.bf16.mxu0 0
  %1814 = vmatpush1.bf16.msra.mxu0 0
  %1815 = vmatprep.subr.bf16.mxu0 0
  %1816 = vmatpush1.bf16.msra.mxu0 0
  %1817 = vmatprep.subr.bf16.mxu0 0
  %1818 = vmatpush1.bf16.msra.mxu0 0
  %1819 = vmatprep.subr.bf16.mxu0 0
  %1820 = vmatpush1.bf16.msra.mxu0 0
  %1821 = vmatprep.subr.bf16.mxu0 0
  %1822 = vmatpush1.bf16.msra.mxu0 0
  %1823 = vmatprep.subr.bf16.mxu0 0
  %1824 = vmatpush1.bf16.msra.mxu0 0
  %1825 = vmatprep.subr.bf16.mxu0 0
  %1826 = vmatpush1.bf16.msra.mxu0 0
  %1827 = vmatprep.subr.bf16.mxu0 0
  %1828 = vmatpush1.bf16.msra.mxu0 %v1811
  %1829 = vmatprep.subr.bf16.mxu0 0
  %1830 = vmatpush2.bf16.msra.mxu0 0
  %1831 = vmatprep.subr.bf16.mxu0 0
  %1832 = vmatpush2.bf16.msra.mxu0 0
  %1833 = vmatprep.subr.bf16.mxu0 0
  %1834 = vmatpush2.bf16.msra.mxu0 0
  %1835 = vmatprep.subr.bf16.mxu0 0
  %1836 = vmatpush2.bf16.msra.mxu0 0
  %1837 = vmatprep.subr.bf16.mxu0 0
  %1838 = vmatpush2.bf16.msra.mxu0 0
  %1839 = vmatprep.subr.bf16.mxu0 0
  %1840 = vmatpush2.bf16.msra.mxu0 0
  %1841 = vmatprep.subr.bf16.mxu0 0
  %1842 = vmatpush2.bf16.msra.mxu0 0
  %1843 = vmatprep.subr.bf16.mxu0 0
  %1844 = vmatpush2.bf16.msra.mxu0 0
  %1845 = vmatprep.mubr.bf16.mxu0 0
  %1846 = vmatmul.mubr.bf16.gmra.mxu0 %v1808
  %v1847 = vpop.f32.mrf.mxu0
  %v1848 = vadd.f32 0.0, %v1847
  %v1849 = vpop.f32.mrf.mxu0
  %v1850 = vpop.f32.mrf.mxu0
  %v1851 = vpop.f32.mrf.mxu0
  %1852 = vdwg.mxu0
  %1853 = vrot.lane.b32.xlu0 %v1631, 120
  %v1854 = vpop.permute.xlu0 %1853
  %1855 = vrot.lane.b32.xlu0 %v1631, 104
  %v1856 = vpop.permute.xlu0 %1855
  %v1858 = vsel %vm1174, %v1854, 0
  %v1861 = vsel %vm1174, %v1856, 0
  %1863 = vmatprep.subr.bf16.mxu0 0
  %1864 = vmatpush1.bf16.xpose.msra.mxu0 0
  %1865 = vmatprep.subr.bf16.mxu0 0
  %1866 = vmatpush1.bf16.xpose.msra.mxu0 0
  %1867 = vmatprep.subr.bf16.mxu0 0
  %1868 = vmatpush1.bf16.xpose.msra.mxu0 0
  %1869 = vmatprep.subr.bf16.mxu0 0
  %1870 = vmatpush1.bf16.xpose.msra.mxu0 0
  %1871 = vmatprep.subr.bf16.mxu0 0
  %1872 = vmatpush1.bf16.xpose.msra.mxu0 0
  %1873 = vmatprep.subr.bf16.mxu0 0
  %1874 = vmatpush1.bf16.xpose.msra.mxu0 0
  %1875 = vmatprep.subr.bf16.mxu0 0
  %1876 = vmatpush1.bf16.xpose.msra.mxu0 0
  %1877 = vmatprep.subr.bf16.mxu0 0
  %1878 = vmatpush1.bf16.xpose.msra.mxu0 %v1861
  %1879 = vmatprep.subr.bf16.mxu0 0
  %1880 = vmatpush2.bf16.xpose.msra.mxu0 0
  %1881 = vmatprep.subr.bf16.mxu0 0
  %1882 = vmatpush2.bf16.xpose.msra.mxu0 0
  %1883 = vmatprep.subr.bf16.mxu0 0
  %1884 = vmatpush2.bf16.xpose.msra.mxu0 0
  %1885 = vmatprep.subr.bf16.mxu0 0
  %1886 = vmatpush2.bf16.xpose.msra.mxu0 0
  %1887 = vmatprep.subr.bf16.mxu0 0
  %1888 = vmatpush2.bf16.xpose.msra.mxu0 0
  %1889 = vmatprep.subr.bf16.mxu0 0
  %1890 = vmatpush2.bf16.xpose.msra.mxu0 0
  %1891 = vmatprep.subr.bf16.mxu0 0
  %1892 = vmatpush2.bf16.xpose.msra.mxu0 0
  %1893 = vmatprep.subr.bf16.mxu0 0
  %1894 = vmatpush2.bf16.xpose.msra.mxu0 0
  %1895 = vmatprep.mubr.bf16.mxu0 0
  %1896 = vmatmul.mubr.bf16.gmra.mxu0 %v1858
  %v1897 = vpop.f32.mrf.mxu0
  %v1898 = vadd.f32 0.0, %v1897
  %v1899 = vpop.f32.mrf.mxu0
  %v1900 = vpop.f32.mrf.mxu0
  %v1901 = vpop.f32.mrf.mxu0
  %1902 = vdwg.mxu0
  %v1903 = vmul.f32 %v1898, 0.5
  %v1904 = vsel %vm137, %v1903, -inf
  %1905 = vmax.xlane.f32.xlu0 %v1904
  %v1906 = vpop.xlane.xlu0 %1905
  %v1907 = vsub.f32 %v1903, %v1906
  %v1908 = vmul.f32 %v1907, 1.442695
  %v1909 = vpow.pop %v1908
  %v1910 = vsel %vm137, %v1909, 0.0
  %1911 = vadd.xlane.f32.xlu0 %v1910
  %v1912 = vpop.xlane.xlu0 %1911
  %v1913 = vrcp.pop %v1912
  %v1914 = vmul.f32 %v1909, %v1913
  %v1915 = vpack.c.bf16 %v1914, %v1914
  %1916 = vrot.lane.b32.xlu0 %v1631, 88
  %v1917 = vpop.permute.xlu0 %1916
  %v1919 = vsel %vm137, %v1915, 0
  %v1922 = vsel %vm141, %v1917, 0
  %1924 = vmatprep.subr.bf16.mxu0 0
  %1925 = vmatpush1.bf16.msra.mxu0 0
  %1926 = vmatprep.subr.bf16.mxu0 0
  %1927 = vmatpush1.bf16.msra.mxu0 0
  %1928 = vmatprep.subr.bf16.mxu0 0
  %1929 = vmatpush1.bf16.msra.mxu0 0
  %1930 = vmatprep.subr.bf16.mxu0 0
  %1931 = vmatpush1.bf16.msra.mxu0 0
  %1932 = vmatprep.subr.bf16.mxu0 0
  %1933 = vmatpush1.bf16.msra.mxu0 0
  %1934 = vmatprep.subr.bf16.mxu0 0
  %1935 = vmatpush1.bf16.msra.mxu0 0
  %1936 = vmatprep.subr.bf16.mxu0 0
  %1937 = vmatpush1.bf16.msra.mxu0 0
  %1938 = vmatprep.subr.bf16.mxu0 0
  %1939 = vmatpush1.bf16.msra.mxu0 %v1922
  %1940 = vmatprep.subr.bf16.mxu0 0
  %1941 = vmatpush2.bf16.msra.mxu0 0
  %1942 = vmatprep.subr.bf16.mxu0 0
  %1943 = vmatpush2.bf16.msra.mxu0 0
  %1944 = vmatprep.subr.bf16.mxu0 0
  %1945 = vmatpush2.bf16.msra.mxu0 0
  %1946 = vmatprep.subr.bf16.mxu0 0
  %1947 = vmatpush2.bf16.msra.mxu0 0
  %1948 = vmatprep.subr.bf16.mxu0 0
  %1949 = vmatpush2.bf16.msra.mxu0 0
  %1950 = vmatprep.subr.bf16.mxu0 0
  %1951 = vmatpush2.bf16.msra.mxu0 0
  %1952 = vmatprep.subr.bf16.mxu0 0
  %1953 = vmatpush2.bf16.msra.mxu0 0
  %1954 = vmatprep.subr.bf16.mxu0 0
  %1955 = vmatpush2.bf16.msra.mxu0 0
  %1956 = vmatprep.mubr.bf16.mxu0 0
  %1957 = vmatmul.mubr.bf16.gmra.mxu0 %v1919
  %v1958 = vpop.f32.mrf.mxu0
  %v1959 = vadd.f32 0.0, %v1958
  %v1960 = vpop.f32.mrf.mxu0
  %v1961 = vpop.f32.mrf.mxu0
  %v1962 = vpop.f32.mrf.mxu0
  %1963 = vdwg.mxu0
  %1964 = vrot.lane.b32.xlu0 %v1631, 116
  %v1965 = vpop.permute.xlu0 %1964
  %1966 = vrot.lane.b32.xlu0 %v1631, 100
  %v1967 = vpop.permute.xlu0 %1966
  %v1969 = vsel %vm1174, %v1965, 0
  %v1972 = vsel %vm1174, %v1967, 0
  %1974 = vmatprep.subr.bf16.mxu0 0
  %1975 = vmatpush1.bf16.xpose.msra.mxu0 0
  %1976 = vmatprep.subr.bf16.mxu0 0
  %1977 = vmatpush1.bf16.xpose.msra.mxu0 0
  %1978 = vmatprep.subr.bf16.mxu0 0
  %1979 = vmatpush1.bf16.xpose.msra.mxu0 0
  %1980 = vmatprep.subr.bf16.mxu0 0
  %1981 = vmatpush1.bf16.xpose.msra.mxu0 0
  %1982 = vmatprep.subr.bf16.mxu0 0
  %1983 = vmatpush1.bf16.xpose.msra.mxu0 0
  %1984 = vmatprep.subr.bf16.mxu0 0
  %1985 = vmatpush1.bf16.xpose.msra.mxu0 0
  %1986 = vmatprep.subr.bf16.mxu0 0
  %1987 = vmatpush1.bf16.xpose.msra.mxu0 0
  %1988 = vmatprep.subr.bf16.mxu0 0
  %1989 = vmatpush1.bf16.xpose.msra.mxu0 %v1972
  %1990 = vmatprep.subr.bf16.mxu0 0
  %1991 = vmatpush2.bf16.xpose.msra.mxu0 0
  %1992 = vmatprep.subr.bf16.mxu0 0
  %1993 = vmatpush2.bf16.xpose.msra.mxu0 0
  %1994 = vmatprep.subr.bf16.mxu0 0
  %1995 = vmatpush2.bf16.xpose.msra.mxu0 0
  %1996 = vmatprep.subr.bf16.mxu0 0
  %1997 = vmatpush2.bf16.xpose.msra.mxu0 0
  %1998 = vmatprep.subr.bf16.mxu0 0
  %1999 = vmatpush2.bf16.xpose.msra.mxu0 0
  %2000 = vmatprep.subr.bf16.mxu0 0
  %2001 = vmatpush2.bf16.xpose.msra.mxu0 0
  %2002 = vmatprep.subr.bf16.mxu0 0
  %2003 = vmatpush2.bf16.xpose.msra.mxu0 0
  %2004 = vmatprep.subr.bf16.mxu0 0
  %2005 = vmatpush2.bf16.xpose.msra.mxu0 0
  %2006 = vmatprep.mubr.bf16.mxu0 0
  %2007 = vmatmul.mubr.bf16.gmra.mxu0 %v1969
  %v2008 = vpop.f32.mrf.mxu0
  %v2009 = vadd.f32 0.0, %v2008
  %v2010 = vpop.f32.mrf.mxu0
  %v2011 = vpop.f32.mrf.mxu0
  %v2012 = vpop.f32.mrf.mxu0
  %2013 = vdwg.mxu0
  %v2014 = vmul.f32 %v2009, 0.5
  %v2015 = vsel %vm137, %v2014, -inf
  %2016 = vmax.xlane.f32.xlu0 %v2015
  %v2017 = vpop.xlane.xlu0 %2016
  %v2018 = vsub.f32 %v2014, %v2017
  %v2019 = vmul.f32 %v2018, 1.442695
  %v2020 = vpow.pop %v2019
  %v2021 = vsel %vm137, %v2020, 0.0
  %2022 = vadd.xlane.f32.xlu0 %v2021
  %v2023 = vpop.xlane.xlu0 %2022
  %v2024 = vrcp.pop %v2023
  %v2025 = vmul.f32 %v2020, %v2024
  %v2026 = vpack.c.bf16 %v2025, %v2025
  %2027 = vrot.lane.b32.xlu0 %v1631, 84
  %v2028 = vpop.permute.xlu0 %2027
  %v2030 = vsel %vm137, %v2026, 0
  %v2033 = vsel %vm141, %v2028, 0
  %2035 = vmatprep.subr.bf16.mxu0 0
  %2036 = vmatpush1.bf16.msra.mxu0 0
  %2037 = vmatprep.subr.bf16.mxu0 0
  %2038 = vmatpush1.bf16.msra.mxu0 0
  %2039 = vmatprep.subr.bf16.mxu0 0
  %2040 = vmatpush1.bf16.msra.mxu0 0
  %2041 = vmatprep.subr.bf16.mxu0 0
  %2042 = vmatpush1.bf16.msra.mxu0 0
  %2043 = vmatprep.subr.bf16.mxu0 0
  %2044 = vmatpush1.bf16.msra.mxu0 0
  %2045 = vmatprep.subr.bf16.mxu0 0
  %2046 = vmatpush1.bf16.msra.mxu0 0
  %2047 = vmatprep.subr.bf16.mxu0 0
  %2048 = vmatpush1.bf16.msra.mxu0 0
  %2049 = vmatprep.subr.bf16.mxu0 0
  %2050 = vmatpush1.bf16.msra.mxu0 %v2033
  %2051 = vmatprep.subr.bf16.mxu0 0
  %2052 = vmatpush2.bf16.msra.mxu0 0
  %2053 = vmatprep.subr.bf16.mxu0 0
  %2054 = vmatpush2.bf16.msra.mxu0 0
  %2055 = vmatprep.subr.bf16.mxu0 0
  %2056 = vmatpush2.bf16.msra.mxu0 0
  %2057 = vmatprep.subr.bf16.mxu0 0
  %2058 = vmatpush2.bf16.msra.mxu0 0
  %2059 = vmatprep.subr.bf16.mxu0 0
  %2060 = vmatpush2.bf16.msra.mxu0 0
  %2061 = vmatprep.subr.bf16.mxu0 0
  %2062 = vmatpush2.bf16.msra.mxu0 0
  %2063 = vmatprep.subr.bf16.mxu0 0
  %2064 = vmatpush2.bf16.msra.mxu0 0
  %2065 = vmatprep.subr.bf16.mxu0 0
  %2066 = vmatpush2.bf16.msra.mxu0 0
  %2067 = vmatprep.mubr.bf16.mxu0 0
  %2068 = vmatmul.mubr.bf16.gmra.mxu0 %v2030
  %v2069 = vpop.f32.mrf.mxu0
  %v2070 = vadd.f32 0.0, %v2069
  %v2071 = vpop.f32.mrf.mxu0
  %v2072 = vpop.f32.mrf.mxu0
  %v2073 = vpop.f32.mrf.mxu0
  %2074 = vdwg.mxu0
  %2076 = vrot.lane.b32.xlu0 %v1848, 4
  %v2077 = vpop.permute.xlu0 %2076
  %2080 = vrot.lane.b32.xlu0 %v1959, 8
  %v2081 = vpop.permute.xlu0 %2080
  %2084 = vrot.lane.b32.xlu0 %v2070, 12
  %v2085 = vpop.permute.xlu0 %2084
  %v2087 = vsel %vm1174, %v1737, %v2077
  %v2088 = vsel %vm137, %v2087, %v2081
  %v2089 = vsel %vm1629, %v2088, %v2085
  %v2090 = vpack.c.bf16 %v2089, %v1630
  %v2091 = vld [vmem:[%s37] sm:$0xf]
  %v2092 = vld [vmem:[%s37 + $0x4] sm:$0xf]
  %v2093 = vld [vmem:[%s39] sm:$0x1]
  %v2095 = vlaneseq
  %v2096 = vshrl.u32 %v2095, 7
  %v2097 = vsub.s32 0, %v2096
  %v2098 = vrot.slane %v2093, %v2097
  %v2102 = vunpack.c.l.b16 %v2091
  %v2103 = vunpack.c.l.b16 %v2092
  %v2104 = vpack.c.b16 %v2103, %v2102
  %v2107 = vsel %vm237, %v2090, 0
  %2109 = vmatprep.subr.bf16.mxu0 0
  %2110 = vmatpush1.bf16.msra.mxu0 0
  %2111 = vmatprep.subr.bf16.mxu0 0
  %2112 = vmatpush1.bf16.msra.mxu0 0
  %2113 = vmatprep.subr.bf16.mxu0 0
  %2114 = vmatpush1.bf16.msra.mxu0 0
  %2115 = vmatprep.subr.bf16.mxu0 0
  %2116 = vmatpush1.bf16.msra.mxu0 0
  %2117 = vmatprep.subr.bf16.mxu0 0
  %2118 = vmatpush1.bf16.msra.mxu0 0
  %2119 = vmatprep.subr.bf16.mxu0 0
  %2120 = vmatpush1.bf16.msra.mxu0 0
  %2121 = vmatprep.subr.bf16.mxu0 0
  %2122 = vmatpush1.bf16.msra.mxu0 0
  %2123 = vmatprep.subr.bf16.mxu0 0
  %2124 = vmatpush1.bf16.msra.mxu0 %v2104
  %2125 = vmatprep.subr.bf16.mxu0 0
  %2126 = vmatpush2.bf16.msra.mxu0 0
  %2127 = vmatprep.subr.bf16.mxu0 0
  %2128 = vmatpush2.bf16.msra.mxu0 0
  %2129 = vmatprep.subr.bf16.mxu0 0
  %2130 = vmatpush2.bf16.msra.mxu0 0
  %2131 = vmatprep.subr.bf16.mxu0 0
  %2132 = vmatpush2.bf16.msra.mxu0 0
  %2133 = vmatprep.subr.bf16.mxu0 0
  %2134 = vmatpush2.bf16.msra.mxu0 0
  %2135 = vmatprep.subr.bf16.mxu0 0
  %2136 = vmatpush2.bf16.msra.mxu0 0
  %2137 = vmatprep.subr.bf16.mxu0 0
  %2138 = vmatpush2.bf16.msra.mxu0 0
  %2139 = vmatprep.subr.bf16.mxu0 0
  %2140 = vmatpush2.bf16.msra.mxu0 0
  %2141 = vmatprep.mubr.bf16.mxu0 0
  %2142 = vmatmul.mubr.bf16.gmra.mxu0 %v2107
  %v2143 = vpop.f32.mrf.mxu0
  %v2144 = vadd.f32 %v2098, %v2143
  %v2145 = vpop.f32.mrf.mxu0
  %v2146 = vpop.f32.mrf.mxu0
  %v2147 = vadd.f32 %v2098, %v2146
  %v2148 = vpop.f32.mrf.mxu0
  %2149 = vdwg.mxu0
  %v2150 = vadd.f32 %v1108, %v2144
  %v2151 = vadd.f32 %v1109, %v2147
  %v2152 = vsel %vm237, %v2150, 0.0
  %2153 = vadd.xlane.f32.xlu0 %v2152
  %v2154 = vpop.xlane.xlu0 %2153
  %v2155 = vsel %vm237, %v2151, 0.0
  %2156 = vadd.xlane.f32.xlu0 %v2155
  %v2157 = vpop.xlane.xlu0 %2156
  %v2158 = vmul.f32 %v2154, %v1070
  %v2159 = vmul.f32 %v2157, %v1070
  %v2160 = vsub.f32 %v2150, %v2158
  %v2161 = vsub.f32 %v2151, %v2159
  %v2162 = vmul.f32 %v2160, %v2160
  %v2163 = vmul.f32 %v2161, %v2161
  %v2164 = vsel %vm237, %v2162, 0.0
  %2165 = vadd.xlane.f32.xlu0 %v2164
  %v2166 = vpop.xlane.xlu0 %2165
  %v2167 = vsel %vm237, %v2163, 0.0
  %2168 = vadd.xlane.f32.xlu0 %v2167
  %v2169 = vpop.xlane.xlu0 %2168
  %v2170 = vmul.f32 %v2166, %v1070
  %v2171 = vmul.f32 %v2169, %v1070
  %v2172 = vadd.f32 %v2170, 1e-05
  %v2173 = vadd.f32 %v2171, 1e-05
  %v2174 = vrsqrt.pop %v2172
  %v2175 = vrsqrt.pop %v2173
  %v2176 = vmul.f32 %v2160, %v2174
  %v2177 = vmul.f32 %v2161, %v2175
  %v2178 = vld [vmem:[%s41] sm:$0x1]
  %v2180 = vlaneseq
  %v2181 = vshrl.u32 %v2180, 7
  %v2182 = vsub.s32 0, %v2181
  %v2183 = vrot.slane %v2178, %v2182
  %v2185 = vmul.f32 %v2176, %v2183
  %v2186 = vmul.f32 %v2177, %v2183
  %v2187 = vld [vmem:[%s43] sm:$0x1]
  %v2189 = vlaneseq
  %v2190 = vshrl.u32 %v2189, 7
  %v2191 = vsub.s32 0, %v2190
  %v2192 = vrot.slane %v2187, %v2191
  %v2194 = vadd.f32 %v2185, %v2192
  %v2195 = vadd.f32 %v2186, %v2192
  %v2196 = vpack.c.bf16 %v2195, %v2194
  %v2197 = vld [vmem:[%s45] sm:$0xff]
  %v2198 = vld [vmem:[%s45 + $0x8] sm:$0xff]
  %v2199 = vld [vmem:[%s45 + $0x10] sm:$0xff]
  %v2200 = vld [vmem:[%s45 + $0x18] sm:$0xff]
  %v2201 = vld [vmem:[%s45 + $0x20] sm:$0xff]
  %v2202 = vld [vmem:[%s45 + $0x28] sm:$0xff]
  %v2203 = vld [vmem:[%s45 + $0x30] sm:$0xff]
  %v2204 = vld [vmem:[%s45 + $0x38] sm:$0xff]
  %v2205 = vld [vmem:[%s45 + $0x40] sm:$0xff]
  %v2206 = vld [vmem:[%s45 + $0x48] sm:$0xff]
  %v2207 = vld [vmem:[%s45 + $0x50] sm:$0xff]
  %v2208 = vld [vmem:[%s45 + $0x58] sm:$0xff]
  %v2209 = vld [vmem:[%s45 + $0x60] sm:$0xff]
  %v2210 = vld [vmem:[%s45 + $0x68] sm:$0xff]
  %v2211 = vld [vmem:[%s45 + $0x70] sm:$0xff]
  %v2212 = vld [vmem:[%s45 + $0x78] sm:$0xff]
  %v2213 = vld [vmem:[%s47] sm:$0xff]
  %v2214 = vld [vmem:[%s47 + $0x8] sm:$0xff]
  %v2217 = vlaneseq
  %v2218 = vshrl.u32 %v2217, 7
  %v2219 = vsub.s32 0, %v2218
  %v2220 = vrot.slane %v2213, %v2219
  %v2221 = vlaneseq
  %v2222 = vshrl.u32 %v2221, 7
  %v2223 = vsub.s32 1, %v2222
  %v2224 = vrot.slane %v2213, %v2223
  %v2225 = vlaneseq
  %v2226 = vshrl.u32 %v2225, 7
  %v2227 = vsub.s32 2, %v2226
  %v2228 = vrot.slane %v2213, %v2227
  %v2229 = vlaneseq
  %v2230 = vshrl.u32 %v2229, 7
  %v2231 = vsub.s32 3, %v2230
  %v2232 = vrot.slane %v2213, %v2231
  %v2233 = vlaneseq
  %v2234 = vshrl.u32 %v2233, 7
  %v2235 = vsub.s32 4, %v2234
  %v2236 = vrot.slane %v2213, %v2235
  %v2237 = vlaneseq
  %v2238 = vshrl.u32 %v2237, 7
  %v2239 = vsub.s32 5, %v2238
  %v2240 = vrot.slane %v2213, %v2239
  %v2241 = vlaneseq
  %v2242 = vshrl.u32 %v2241, 7
  %v2243 = vsub.s32 6, %v2242
  %v2244 = vrot.slane %v2213, %v2243
  %v2245 = vlaneseq
  %v2246 = vshrl.u32 %v2245, 7
  %v2247 = vsub.s32 7, %v2246
  %v2248 = vrot.slane %v2213, %v2247
  %v2249 = vlaneseq
  %v2250 = vshrl.u32 %v2249, 7
  %v2251 = vsub.s32 0, %v2250
  %v2252 = vrot.slane %v2214, %v2251
  %v2253 = vlaneseq
  %v2254 = vshrl.u32 %v2253, 7
  %v2255 = vsub.s32 1, %v2254
  %v2256 = vrot.slane %v2214, %v2255
  %v2257 = vlaneseq
  %v2258 = vshrl.u32 %v2257, 7
  %v2259 = vsub.s32 2, %v2258
  %v2260 = vrot.slane %v2214, %v2259
  %v2261 = vlaneseq
  %v2262 = vshrl.u32 %v2261, 7
  %v2263 = vsub.s32 3, %v2262
  %v2264 = vrot.slane %v2214, %v2263
  %v2265 = vlaneseq
  %v2266 = vshrl.u32 %v2265, 7
  %v2267 = vsub.s32 4, %v2266
  %v2268 = vrot.slane %v2214, %v2267
  %v2269 = vlaneseq
  %v2270 = vshrl.u32 %v2269, 7
  %v2271 = vsub.s32 5, %v2270
  %v2272 = vrot.slane %v2214, %v2271
  %v2273 = vlaneseq
  %v2274 = vshrl.u32 %v2273, 7
  %v2275 = vsub.s32 6, %v2274
  %v2276 = vrot.slane %v2214, %v2275
  %v2277 = vlaneseq
  %v2278 = vshrl.u32 %v2277, 7
  %v2279 = vsub.s32 7, %v2278
  %v2280 = vrot.slane %v2214, %v2279
  %v2313 = vunpack.c.l.b16 %v2197
  %v2314 = vunpack.c.h.b16 %v2197
  %v2315 = vunpack.c.l.b16 %v2198
  %v2316 = vunpack.c.h.b16 %v2198
  %v2317 = vunpack.c.l.b16 %v2199
  %v2318 = vunpack.c.h.b16 %v2199
  %v2319 = vunpack.c.l.b16 %v2200
  %v2320 = vunpack.c.h.b16 %v2200
  %v2321 = vunpack.c.l.b16 %v2201
  %v2322 = vunpack.c.h.b16 %v2201
  %v2323 = vunpack.c.l.b16 %v2202
  %v2324 = vunpack.c.h.b16 %v2202
  %v2325 = vunpack.c.l.b16 %v2203
  %v2326 = vunpack.c.h.b16 %v2203
  %v2327 = vunpack.c.l.b16 %v2204
  %v2328 = vunpack.c.h.b16 %v2204
  %v2329 = vunpack.c.l.b16 %v2205
  %v2330 = vunpack.c.h.b16 %v2205
  %v2331 = vunpack.c.l.b16 %v2206
  %v2332 = vunpack.c.h.b16 %v2206
  %v2333 = vunpack.c.l.b16 %v2207
  %v2334 = vunpack.c.h.b16 %v2207
  %v2335 = vunpack.c.l.b16 %v2208
  %v2336 = vunpack.c.h.b16 %v2208
  %v2337 = vunpack.c.l.b16 %v2209
  %v2338 = vunpack.c.h.b16 %v2209
  %v2339 = vunpack.c.l.b16 %v2210
  %v2340 = vunpack.c.h.b16 %v2210
  %v2341 = vunpack.c.l.b16 %v2211
  %v2342 = vunpack.c.h.b16 %v2211
  %v2343 = vunpack.c.l.b16 %v2212
  %v2344 = vunpack.c.h.b16 %v2212
  %v2345 = vpack.c.b16 %v2329, %v2313
  %v2346 = vpack.c.b16 %v2330, %v2314
  %v2347 = vpack.c.b16 %v2331, %v2315
  %v2348 = vpack.c.b16 %v2332, %v2316
  %v2349 = vpack.c.b16 %v2333, %v2317
  %v2350 = vpack.c.b16 %v2334, %v2318
  %v2351 = vpack.c.b16 %v2335, %v2319
  %v2352 = vpack.c.b16 %v2336, %v2320
  %v2353 = vpack.c.b16 %v2337, %v2321
  %v2354 = vpack.c.b16 %v2338, %v2322
  %v2355 = vpack.c.b16 %v2339, %v2323
  %v2356 = vpack.c.b16 %v2340, %v2324
  %v2357 = vpack.c.b16 %v2341, %v2325
  %v2358 = vpack.c.b16 %v2342, %v2326
  %v2359 = vpack.c.b16 %v2343, %v2327
  %v2360 = vpack.c.b16 %v2344, %v2328
  %v2378 = vsel %vm237, %v2196, 0
  %2380 = vmatprep.subr.bf16.mxu0 0
  %2381 = vmatpush1.bf16.msra.mxu0 0
  %2382 = vmatprep.subr.bf16.mxu0 0
  %2383 = vmatpush1.bf16.msra.mxu0 0
  %2384 = vmatprep.subr.bf16.mxu0 0
  %2385 = vmatpush1.bf16.msra.mxu0 0
  %2386 = vmatprep.subr.bf16.mxu0 0
  %2387 = vmatpush1.bf16.msra.mxu0 0
  %2388 = vmatprep.subr.bf16.mxu0 0
  %2389 = vmatpush1.bf16.msra.mxu0 0
  %2390 = vmatprep.subr.bf16.mxu0 0
  %2391 = vmatpush1.bf16.msra.mxu0 0
  %2392 = vmatprep.subr.bf16.mxu0 0
  %2393 = vmatpush1.bf16.msra.mxu0 0
  %2394 = vmatprep.subr.bf16.mxu0 %v2346
  %2395 = vmatpush1.bf16.msra.mxu0 %v2345
  %2396 = vmatprep.subr.bf16.mxu0 0
  %2397 = vmatpush2.bf16.msra.mxu0 0
  %2398 = vmatprep.subr.bf16.mxu0 0
  %2399 = vmatpush2.bf16.msra.mxu0 0
  %2400 = vmatprep.subr.bf16.mxu0 0
  %2401 = vmatpush2.bf16.msra.mxu0 0
  %2402 = vmatprep.subr.bf16.mxu0 0
  %2403 = vmatpush2.bf16.msra.mxu0 0
  %2404 = vmatprep.subr.bf16.mxu0 0
  %2405 = vmatpush2.bf16.msra.mxu0 0
  %2406 = vmatprep.subr.bf16.mxu0 0
  %2407 = vmatpush2.bf16.msra.mxu0 0
  %2408 = vmatprep.subr.bf16.mxu0 0
  %2409 = vmatpush2.bf16.msra.mxu0 0
  %2410 = vmatprep.subr.bf16.mxu0 0
  %2411 = vmatpush2.bf16.msra.mxu0 0
  %2412 = vmatprep.mubr.bf16.mxu0 0
  %2413 = vmatmul.mubr.bf16.gmra.mxu0 %v2378
  %v2414 = vpop.f32.mrf.mxu0
  %v2415 = vadd.f32 %v2220, %v2414
  %v2416 = vpop.f32.mrf.mxu0
  %v2417 = vadd.f32 %v2224, %v2416
  %v2418 = vpop.f32.mrf.mxu0
  %v2419 = vadd.f32 %v2220, %v2418
  %v2420 = vpop.f32.mrf.mxu0
  %v2421 = vadd.f32 %v2224, %v2420
  %2422 = vdwg.mxu0
  %2423 = vmatprep.subr.bf16.mxu0 0
  %2424 = vmatpush1.bf16.msra.mxu0 0
  %2425 = vmatprep.subr.bf16.mxu0 0
  %2426 = vmatpush1.bf16.msra.mxu0 0
  %2427 = vmatprep.subr.bf16.mxu0 0
  %2428 = vmatpush1.bf16.msra.mxu0 0
  %2429 = vmatprep.subr.bf16.mxu0 0
  %2430 = vmatpush1.bf16.msra.mxu0 0
  %2431 = vmatprep.subr.bf16.mxu0 0
  %2432 = vmatpush1.bf16.msra.mxu0 0
  %2433 = vmatprep.subr.bf16.mxu0 0
  %2434 = vmatpush1.bf16.msra.mxu0 0
  %2435 = vmatprep.subr.bf16.mxu0 0
  %2436 = vmatpush1.bf16.msra.mxu0 0
  %2437 = vmatprep.subr.bf16.mxu0 %v2348
  %2438 = vmatpush1.bf16.msra.mxu0 %v2347
  %2439 = vmatprep.subr.bf16.mxu0 0
  %2440 = vmatpush2.bf16.msra.mxu0 0
  %2441 = vmatprep.subr.bf16.mxu0 0
  %2442 = vmatpush2.bf16.msra.mxu0 0
  %2443 = vmatprep.subr.bf16.mxu0 0
  %2444 = vmatpush2.bf16.msra.mxu0 0
  %2445 = vmatprep.subr.bf16.mxu0 0
  %2446 = vmatpush2.bf16.msra.mxu0 0
  %2447 = vmatprep.subr.bf16.mxu0 0
  %2448 = vmatpush2.bf16.msra.mxu0 0
  %2449 = vmatprep.subr.bf16.mxu0 0
  %2450 = vmatpush2.bf16.msra.mxu0 0
  %2451 = vmatprep.subr.bf16.mxu0 0
  %2452 = vmatpush2.bf16.msra.mxu0 0
  %2453 = vmatprep.subr.bf16.mxu0 0
  %2454 = vmatpush2.bf16.msra.mxu0 0
  %2455 = vmatprep.mubr.bf16.mxu0 0
  %2456 = vmatmul.mubr.bf16.gmra.mxu0 %v2378
  %v2457 = vpop.f32.mrf.mxu0
  %v2458 = vadd.f32 %v2228, %v2457
  %v2459 = vpop.f32.mrf.mxu0
  %v2460 = vadd.f32 %v2232, %v2459
  %v2461 = vpop.f32.mrf.mxu0
  %v2462 = vadd.f32 %v2228, %v2461
  %v2463 = vpop.f32.mrf.mxu0
  %v2464 = vadd.f32 %v2232, %v2463
  %2465 = vdwg.mxu0
  %2466 = vmatprep.subr.bf16.mxu0 0
  %2467 = vmatpush1.bf16.msra.mxu0 0
  %2468 = vmatprep.subr.bf16.mxu0 0
  %2469 = vmatpush1.bf16.msra.mxu0 0
  %2470 = vmatprep.subr.bf16.mxu0 0
  %2471 = vmatpush1.bf16.msra.mxu0 0
  %2472 = vmatprep.subr.bf16.mxu0 0
  %2473 = vmatpush1.bf16.msra.mxu0 0
  %2474 = vmatprep.subr.bf16.mxu0 0
  %2475 = vmatpush1.bf16.msra.mxu0 0
  %2476 = vmatprep.subr.bf16.mxu0 0
  %2477 = vmatpush1.bf16.msra.mxu0 0
  %2478 = vmatprep.subr.bf16.mxu0 0
  %2479 = vmatpush1.bf16.msra.mxu0 0
  %2480 = vmatprep.subr.bf16.mxu0 %v2350
  %2481 = vmatpush1.bf16.msra.mxu0 %v2349
  %2482 = vmatprep.subr.bf16.mxu0 0
  %2483 = vmatpush2.bf16.msra.mxu0 0
  %2484 = vmatprep.subr.bf16.mxu0 0
  %2485 = vmatpush2.bf16.msra.mxu0 0
  %2486 = vmatprep.subr.bf16.mxu0 0
  %2487 = vmatpush2.bf16.msra.mxu0 0
  %2488 = vmatprep.subr.bf16.mxu0 0
  %2489 = vmatpush2.bf16.msra.mxu0 0
  %2490 = vmatprep.subr.bf16.mxu0 0
  %2491 = vmatpush2.bf16.msra.mxu0 0
  %2492 = vmatprep.subr.bf16.mxu0 0
  %2493 = vmatpush2.bf16.msra.mxu0 0
  %2494 = vmatprep.subr.bf16.mxu0 0
  %2495 = vmatpush2.bf16.msra.mxu0 0
  %2496 = vmatprep.subr.bf16.mxu0 0
  %2497 = vmatpush2.bf16.msra.mxu0 0
  %2498 = vmatprep.mubr.bf16.mxu0 0
  %2499 = vmatmul.mubr.bf16.gmra.mxu0 %v2378
  %v2500 = vpop.f32.mrf.mxu0
  %v2501 = vadd.f32 %v2236, %v2500
  %v2502 = vpop.f32.mrf.mxu0
  %v2503 = vadd.f32 %v2240, %v2502
  %v2504 = vpop.f32.mrf.mxu0
  %v2505 = vadd.f32 %v2236, %v2504
  %v2506 = vpop.f32.mrf.mxu0
  %v2507 = vadd.f32 %v2240, %v2506
  %2508 = vdwg.mxu0
  %2509 = vmatprep.subr.bf16.mxu0 0
  %2510 = vmatpush1.bf16.msra.mxu0 0
  %2511 = vmatprep.subr.bf16.mxu0 0
  %2512 = vmatpush1.bf16.msra.mxu0 0
  %2513 = vmatprep.subr.bf16.mxu0 0
  %2514 = vmatpush1.bf16.msra.mxu0 0
  %2515 = vmatprep.subr.bf16.mxu0 0
  %2516 = vmatpush1.bf16.msra.mxu0 0
  %2517 = vmatprep.subr.bf16.mxu0 0
  %2518 = vmatpush1.bf16.msra.mxu0 0
  %2519 = vmatprep.subr.bf16.mxu0 0
  %2520 = vmatpush1.bf16.msra.mxu0 0
  %2521 = vmatprep.subr.bf16.mxu0 0
  %2522 = vmatpush1.bf16.msra.mxu0 0
  %2523 = vmatprep.subr.bf16.mxu0 %v2352
  %2524 = vmatpush1.bf16.msra.mxu0 %v2351
  %2525 = vmatprep.subr.bf16.mxu0 0
  %2526 = vmatpush2.bf16.msra.mxu0 0
  %2527 = vmatprep.subr.bf16.mxu0 0
  %2528 = vmatpush2.bf16.msra.mxu0 0
  %2529 = vmatprep.subr.bf16.mxu0 0
  %2530 = vmatpush2.bf16.msra.mxu0 0
  %2531 = vmatprep.subr.bf16.mxu0 0
  %2532 = vmatpush2.bf16.msra.mxu0 0
  %2533 = vmatprep.subr.bf16.mxu0 0
  %2534 = vmatpush2.bf16.msra.mxu0 0
  %2535 = vmatprep.subr.bf16.mxu0 0
  %2536 = vmatpush2.bf16.msra.mxu0 0
  %2537 = vmatprep.subr.bf16.mxu0 0
  %2538 = vmatpush2.bf16.msra.mxu0 0
  %2539 = vmatprep.subr.bf16.mxu0 0
  %2540 = vmatpush2.bf16.msra.mxu0 0
  %2541 = vmatprep.mubr.bf16.mxu0 0
  %2542 = vmatmul.mubr.bf16.gmra.mxu0 %v2378
  %v2543 = vpop.f32.mrf.mxu0
  %v2544 = vadd.f32 %v2244, %v2543
  %v2545 = vpop.f32.mrf.mxu0
  %v2546 = vadd.f32 %v2248, %v2545
  %v2547 = vpop.f32.mrf.mxu0
  %v2548 = vadd.f32 %v2244, %v2547
  %v2549 = vpop.f32.mrf.mxu0
  %v2550 = vadd.f32 %v2248, %v2549
  %2551 = vdwg.mxu0
  %2552 = vmatprep.subr.bf16.mxu0 0
  %2553 = vmatpush1.bf16.msra.mxu0 0
  %2554 = vmatprep.subr.bf16.mxu0 0
  %2555 = vmatpush1.bf16.msra.mxu0 0
  %2556 = vmatprep.subr.bf16.mxu0 0
  %2557 = vmatpush1.bf16.msra.mxu0 0
  %2558 = vmatprep.subr.bf16.mxu0 0
  %2559 = vmatpush1.bf16.msra.mxu0 0
  %2560 = vmatprep.subr.bf16.mxu0 0
  %2561 = vmatpush1.bf16.msra.mxu0 0
  %2562 = vmatprep.subr.bf16.mxu0 0
  %2563 = vmatpush1.bf16.msra.mxu0 0
  %2564 = vmatprep.subr.bf16.mxu0 0
  %2565 = vmatpush1.bf16.msra.mxu0 0
  %2566 = vmatprep.subr.bf16.mxu0 %v2354
  %2567 = vmatpush1.bf16.msra.mxu0 %v2353
  %2568 = vmatprep.subr.bf16.mxu0 0
  %2569 = vmatpush2.bf16.msra.mxu0 0
  %2570 = vmatprep.subr.bf16.mxu0 0
  %2571 = vmatpush2.bf16.msra.mxu0 0
  %2572 = vmatprep.subr.bf16.mxu0 0
  %2573 = vmatpush2.bf16.msra.mxu0 0
  %2574 = vmatprep.subr.bf16.mxu0 0
  %2575 = vmatpush2.bf16.msra.mxu0 0
  %2576 = vmatprep.subr.bf16.mxu0 0
  %2577 = vmatpush2.bf16.msra.mxu0 0
  %2578 = vmatprep.subr.bf16.mxu0 0
  %2579 = vmatpush2.bf16.msra.mxu0 0
  %2580 = vmatprep.subr.bf16.mxu0 0
  %2581 = vmatpush2.bf16.msra.mxu0 0
  %2582 = vmatprep.subr.bf16.mxu0 0
  %2583 = vmatpush2.bf16.msra.mxu0 0
  %2584 = vmatprep.mubr.bf16.mxu0 0
  %2585 = vmatmul.mubr.bf16.gmra.mxu0 %v2378
  %v2586 = vpop.f32.mrf.mxu0
  %v2587 = vadd.f32 %v2252, %v2586
  %v2588 = vpop.f32.mrf.mxu0
  %v2589 = vadd.f32 %v2256, %v2588
  %v2590 = vpop.f32.mrf.mxu0
  %v2591 = vadd.f32 %v2252, %v2590
  %v2592 = vpop.f32.mrf.mxu0
  %v2593 = vadd.f32 %v2256, %v2592
  %2594 = vdwg.mxu0
  %2595 = vmatprep.subr.bf16.mxu0 0
  %2596 = vmatpush1.bf16.msra.mxu0 0
  %2597 = vmatprep.subr.bf16.mxu0 0
  %2598 = vmatpush1.bf16.msra.mxu0 0
  %2599 = vmatprep.subr.bf16.mxu0 0
  %2600 = vmatpush1.bf16.msra.mxu0 0
  %2601 = vmatprep.subr.bf16.mxu0 0
  %2602 = vmatpush1.bf16.msra.mxu0 0
  %2603 = vmatprep.subr.bf16.mxu0 0
  %2604 = vmatpush1.bf16.msra.mxu0 0
  %2605 = vmatprep.subr.bf16.mxu0 0
  %2606 = vmatpush1.bf16.msra.mxu0 0
  %2607 = vmatprep.subr.bf16.mxu0 0
  %2608 = vmatpush1.bf16.msra.mxu0 0
  %2609 = vmatprep.subr.bf16.mxu0 %v2356
  %2610 = vmatpush1.bf16.msra.mxu0 %v2355
  %2611 = vmatprep.subr.bf16.mxu0 0
  %2612 = vmatpush2.bf16.msra.mxu0 0
  %2613 = vmatprep.subr.bf16.mxu0 0
  %2614 = vmatpush2.bf16.msra.mxu0 0
  %2615 = vmatprep.subr.bf16.mxu0 0
  %2616 = vmatpush2.bf16.msra.mxu0 0
  %2617 = vmatprep.subr.bf16.mxu0 0
  %2618 = vmatpush2.bf16.msra.mxu0 0
  %2619 = vmatprep.subr.bf16.mxu0 0
  %2620 = vmatpush2.bf16.msra.mxu0 0
  %2621 = vmatprep.subr.bf16.mxu0 0
  %2622 = vmatpush2.bf16.msra.mxu0 0
  %2623 = vmatprep.subr.bf16.mxu0 0
  %2624 = vmatpush2.bf16.msra.mxu0 0
  %2625 = vmatprep.subr.bf16.mxu0 0
  %2626 = vmatpush2.bf16.msra.mxu0 0
  %2627 = vmatprep.mubr.bf16.mxu0 0
  %2628 = vmatmul.mubr.bf16.gmra.mxu0 %v2378
  %v2629 = vpop.f32.mrf.mxu0
  %v2630 = vadd.f32 %v2260, %v2629
  %v2631 = vpop.f32.mrf.mxu0
  %v2632 = vadd.f32 %v2264, %v2631
  %v2633 = vpop.f32.mrf.mxu0
  %v2634 = vadd.f32 %v2260, %v2633
  %v2635 = vpop.f32.mrf.mxu0
  %v2636 = vadd.f32 %v2264, %v2635
  %2637 = vdwg.mxu0
  %2638 = vmatprep.subr.bf16.mxu0 0
  %2639 = vmatpush1.bf16.msra.mxu0 0
  %2640 = vmatprep.subr.bf16.mxu0 0
  %2641 = vmatpush1.bf16.msra.mxu0 0
  %2642 = vmatprep.subr.bf16.mxu0 0
  %2643 = vmatpush1.bf16.msra.mxu0 0
  %2644 = vmatprep.subr.bf16.mxu0 0
  %2645 = vmatpush1.bf16.msra.mxu0 0
  %2646 = vmatprep.subr.bf16.mxu0 0
  %2647 = vmatpush1.bf16.msra.mxu0 0
  %2648 = vmatprep.subr.bf16.mxu0 0
  %2649 = vmatpush1.bf16.msra.mxu0 0
  %2650 = vmatprep.subr.bf16.mxu0 0
  %2651 = vmatpush1.bf16.msra.mxu0 0
  %2652 = vmatprep.subr.bf16.mxu0 %v2358
  %2653 = vmatpush1.bf16.msra.mxu0 %v2357
  %2654 = vmatprep.subr.bf16.mxu0 0
  %2655 = vmatpush2.bf16.msra.mxu0 0
  %2656 = vmatprep.subr.bf16.mxu0 0
  %2657 = vmatpush2.bf16.msra.mxu0 0
  %2658 = vmatprep.subr.bf16.mxu0 0
  %2659 = vmatpush2.bf16.msra.mxu0 0
  %2660 = vmatprep.subr.bf16.mxu0 0
  %2661 = vmatpush2.bf16.msra.mxu0 0
  %2662 = vmatprep.subr.bf16.mxu0 0
  %2663 = vmatpush2.bf16.msra.mxu0 0
  %2664 = vmatprep.subr.bf16.mxu0 0
  %2665 = vmatpush2.bf16.msra.mxu0 0
  %2666 = vmatprep.subr.bf16.mxu0 0
  %2667 = vmatpush2.bf16.msra.mxu0 0
  %2668 = vmatprep.subr.bf16.mxu0 0
  %2669 = vmatpush2.bf16.msra.mxu0 0
  %2670 = vmatprep.mubr.bf16.mxu0 0
  %2671 = vmatmul.mubr.bf16.gmra.mxu0 %v2378
  %v2672 = vpop.f32.mrf.mxu0
  %v2673 = vadd.f32 %v2268, %v2672
  %v2674 = vpop.f32.mrf.mxu0
  %v2675 = vadd.f32 %v2272, %v2674
  %v2676 = vpop.f32.mrf.mxu0
  %v2677 = vadd.f32 %v2268, %v2676
  %v2678 = vpop.f32.mrf.mxu0
  %v2679 = vadd.f32 %v2272, %v2678
  %2680 = vdwg.mxu0
  %2681 = vmatprep.subr.bf16.mxu0 0
  %2682 = vmatpush1.bf16.msra.mxu0 0
  %2683 = vmatprep.subr.bf16.mxu0 0
  %2684 = vmatpush1.bf16.msra.mxu0 0
  %2685 = vmatprep.subr.bf16.mxu0 0
  %2686 = vmatpush1.bf16.msra.mxu0 0
  %2687 = vmatprep.subr.bf16.mxu0 0
  %2688 = vmatpush1.bf16.msra.mxu0 0
  %2689 = vmatprep.subr.bf16.mxu0 0
  %2690 = vmatpush1.bf16.msra.mxu0 0
  %2691 = vmatprep.subr.bf16.mxu0 0
  %2692 = vmatpush1.bf16.msra.mxu0 0
  %2693 = vmatprep.subr.bf16.mxu0 0
  %2694 = vmatpush1.bf16.msra.mxu0 0
  %2695 = vmatprep.subr.bf16.mxu0 %v2360
  %2696 = vmatpush1.bf16.msra.mxu0 %v2359
  %2697 = vmatprep.subr.bf16.mxu0 0
  %2698 = vmatpush2.bf16.msra.mxu0 0
  %2699 = vmatprep.subr.bf16.mxu0 0
  %2700 = vmatpush2.bf16.msra.mxu0 0
  %2701 = vmatprep.subr.bf16.mxu0 0
  %2702 = vmatpush2.bf16.msra.mxu0 0
  %2703 = vmatprep.subr.bf16.mxu0 0
  %2704 = vmatpush2.bf16.msra.mxu0 0
  %2705 = vmatprep.subr.bf16.mxu0 0
  %2706 = vmatpush2.bf16.msra.mxu0 0
  %2707 = vmatprep.subr.bf16.mxu0 0
  %2708 = vmatpush2.bf16.msra.mxu0 0
  %2709 = vmatprep.subr.bf16.mxu0 0
  %2710 = vmatpush2.bf16.msra.mxu0 0
  %2711 = vmatprep.subr.bf16.mxu0 0
  %2712 = vmatpush2.bf16.msra.mxu0 0
  %2713 = vmatprep.mubr.bf16.mxu0 0
  %2714 = vmatmul.mubr.bf16.gmra.mxu0 %v2378
  %v2715 = vpop.f32.mrf.mxu0
  %v2716 = vadd.f32 %v2276, %v2715
  %v2717 = vpop.f32.mrf.mxu0
  %v2718 = vadd.f32 %v2280, %v2717
  %v2719 = vpop.f32.mrf.mxu0
  %v2720 = vadd.f32 %v2276, %v2719
  %v2721 = vpop.f32.mrf.mxu0
  %v2722 = vadd.f32 %v2280, %v2721
  %2723 = vdwg.mxu0
  %v2724 = vmax.f32 %v2415, 0.0
  %v2725 = vmax.f32 %v2417, 0.0
  %v2726 = vmax.f32 %v2458, 0.0
  %v2727 = vmax.f32 %v2460, 0.0
  %v2728 = vmax.f32 %v2501, 0.0
  %v2729 = vmax.f32 %v2503, 0.0
  %v2730 = vmax.f32 %v2544, 0.0
  %v2731 = vmax.f32 %v2546, 0.0
  %v2732 = vmax.f32 %v2587, 0.0
  %v2733 = vmax.f32 %v2589, 0.0
  %v2734 = vmax.f32 %v2630, 0.0
  %v2735 = vmax.f32 %v2632, 0.0
  %v2736 = vmax.f32 %v2673, 0.0
  %v2737 = vmax.f32 %v2675, 0.0
  %v2738 = vmax.f32 %v2716, 0.0
  %v2739 = vmax.f32 %v2718, 0.0
  %v2740 = vmax.f32 %v2419, 0.0
  %v2741 = vmax.f32 %v2421, 0.0
  %v2742 = vmax.f32 %v2462, 0.0
  %v2743 = vmax.f32 %v2464, 0.0
  %v2744 = vmax.f32 %v2505, 0.0
  %v2745 = vmax.f32 %v2507, 0.0
  %v2746 = vmax.f32 %v2548, 0.0
  %v2747 = vmax.f32 %v2550, 0.0
  %v2748 = vmax.f32 %v2591, 0.0
  %v2749 = vmax.f32 %v2593, 0.0
  %v2750 = vmax.f32 %v2634, 0.0
  %v2751 = vmax.f32 %v2636, 0.0
  %v2752 = vmax.f32 %v2677, 0.0
  %v2753 = vmax.f32 %v2679, 0.0
  %v2754 = vmax.f32 %v2720, 0.0
  %v2755 = vmax.f32 %v2722, 0.0
  %v2756 = vpack.c.bf16 %v2740, %v2724
  %v2757 = vpack.c.bf16 %v2741, %v2725
  %v2758 = vpack.c.bf16 %v2742, %v2726
  %v2759 = vpack.c.bf16 %v2743, %v2727
  %v2760 = vpack.c.bf16 %v2744, %v2728
  %v2761 = vpack.c.bf16 %v2745, %v2729
  %v2762 = vpack.c.bf16 %v2746, %v2730
  %v2763 = vpack.c.bf16 %v2747, %v2731
  %v2764 = vpack.c.bf16 %v2748, %v2732
  %v2765 = vpack.c.bf16 %v2749, %v2733
  %v2766 = vpack.c.bf16 %v2750, %v2734
  %v2767 = vpack.c.bf16 %v2751, %v2735
  %v2768 = vpack.c.bf16 %v2752, %v2736
  %v2769 = vpack.c.bf16 %v2753, %v2737
  %v2770 = vpack.c.bf16 %v2754, %v2738
  %v2771 = vpack.c.bf16 %v2755, %v2739
  %v2772 = vld [vmem:[%s49] sm:$0xf]
  %v2773 = vld [vmem:[%s49 + $0x4] sm:$0xf]
  %v2774 = vld [vmem:[%s49 + $0x8] sm:$0xf]
  %v2775 = vld [vmem:[%s49 + $0xc] sm:$0xf]
  %v2776 = vld [vmem:[%s49 + $0x10] sm:$0xf]
  %v2777 = vld [vmem:[%s49 + $0x14] sm:$0xf]
  %v2778 = vld [vmem:[%s49 + $0x18] sm:$0xf]
  %v2779 = vld [vmem:[%s49 + $0x1c] sm:$0xf]
  %v2780 = vld [vmem:[%s49 + $0x20] sm:$0xf]
  %v2781 = vld [vmem:[%s49 + $0x24] sm:$0xf]
  %v2782 = vld [vmem:[%s49 + $0x28] sm:$0xf]
  %v2783 = vld [vmem:[%s49 + $0x2c] sm:$0xf]
  %v2784 = vld [vmem:[%s49 + $0x30] sm:$0xf]
  %v2785 = vld [vmem:[%s49 + $0x34] sm:$0xf]
  %v2786 = vld [vmem:[%s49 + $0x38] sm:$0xf]
  %v2787 = vld [vmem:[%s49 + $0x3c] sm:$0xf]
  %v2788 = vld [vmem:[%s49 + $0x40] sm:$0xf]
  %v2789 = vld [vmem:[%s49 + $0x44] sm:$0xf]
  %v2790 = vld [vmem:[%s49 + $0x48] sm:$0xf]
  %v2791 = vld [vmem:[%s49 + $0x4c] sm:$0xf]
  %v2792 = vld [vmem:[%s49 + $0x50] sm:$0xf]
  %v2793 = vld [vmem:[%s49 + $0x54] sm:$0xf]
  %v2794 = vld [vmem:[%s49 + $0x58] sm:$0xf]
  %v2795 = vld [vmem:[%s49 + $0x5c] sm:$0xf]
  %v2796 = vld [vmem:[%s49 + $0x60] sm:$0xf]
  %v2797 = vld [vmem:[%s49 + $0x64] sm:$0xf]
  %v2798 = vld [vmem:[%s49 + $0x68] sm:$0xf]
  %v2799 = vld [vmem:[%s49 + $0x6c] sm:$0xf]
  %v2800 = vld [vmem:[%s49 + $0x70] sm:$0xf]
  %v2801 = vld [vmem:[%s49 + $0x74] sm:$0xf]
  %v2802 = vld [vmem:[%s49 + $0x78] sm:$0xf]
  %v2803 = vld [vmem:[%s49 + $0x7c] sm:$0xf]
  %v2804 = vld [vmem:[%s49 + $0x80] sm:$0xf]
  %v2805 = vld [vmem:[%s49 + $0x84] sm:$0xf]
  %v2806 = vld [vmem:[%s49 + $0x88] sm:$0xf]
  %v2807 = vld [vmem:[%s49 + $0x8c] sm:$0xf]
  %v2808 = vld [vmem:[%s49 + $0x90] sm:$0xf]
  %v2809 = vld [vmem:[%s49 + $0x94] sm:$0xf]
  %v2810 = vld [vmem:[%s49 + $0x98] sm:$0xf]
  %v2811 = vld [vmem:[%s49 + $0x9c] sm:$0xf]
  %v2812 = vld [vmem:[%s49 + $0xa0] sm:$0xf]
  %v2813 = vld [vmem:[%s49 + $0xa4] sm:$0xf]
  %v2814 = vld [vmem:[%s49 + $0xa8] sm:$0xf]
  %v2815 = vld [vmem:[%s49 + $0xac] sm:$0xf]
  %v2816 = vld [vmem:[%s49 + $0xb0] sm:$0xf]
  %v2817 = vld [vmem:[%s49 + $0xb4] sm:$0xf]
  %v2818 = vld [vmem:[%s49 + $0xb8] sm:$0xf]
  %v2819 = vld [vmem:[%s49 + $0xbc] sm:$0xf]
  %v2820 = vld [vmem:[%s49 + $0xc0] sm:$0xf]
  %v2821 = vld [vmem:[%s49 + $0xc4] sm:$0xf]
  %v2822 = vld [vmem:[%s49 + $0xc8] sm:$0xf]
  %v2823 = vld [vmem:[%s49 + $0xcc] sm:$0xf]
  %v2824 = vld [vmem:[%s49 + $0xd0] sm:$0xf]
  %v2825 = vld [vmem:[%s49 + $0xd4] sm:$0xf]
  %v2826 = vld [vmem:[%s49 + $0xd8] sm:$0xf]
  %v2827 = vld [vmem:[%s49 + $0xdc] sm:$0xf]
  %v2828 = vld [vmem:[%s49 + $0xe0] sm:$0xf]
  %v2829 = vld [vmem:[%s49 + $0xe4] sm:$0xf]
  %v2830 = vld [vmem:[%s49 + $0xe8] sm:$0xf]
  %v2831 = vld [vmem:[%s49 + $0xec] sm:$0xf]
  %v2832 = vld [vmem:[%s49 + $0xf0] sm:$0xf]
  %v2833 = vld [vmem:[%s49 + $0xf4] sm:$0xf]
  %v2834 = vld [vmem:[%s49 + $0xf8] sm:$0xf]
  %v2835 = vld [vmem:[%s49 + $0xfc] sm:$0xf]
  %v2836 = vld [vmem:[%s49 + $0x100] sm:$0xf]
  %v2837 = vld [vmem:[%s49 + $0x104] sm:$0xf]
  %v2838 = vld [vmem:[%s49 + $0x108] sm:$0xf]
  %v2839 = vld [vmem:[%s49 + $0x10c] sm:$0xf]
  %v2840 = vld [vmem:[%s49 + $0x110] sm:$0xf]
  %v2841 = vld [vmem:[%s49 + $0x114] sm:$0xf]
  %v2842 = vld [vmem:[%s49 + $0x118] sm:$0xf]
  %v2843 = vld [vmem:[%s49 + $0x11c] sm:$0xf]
  %v2844 = vld [vmem:[%s49 + $0x120] sm:$0xf]
  %v2845 = vld [vmem:[%s49 + $0x124] sm:$0xf]
  %v2846 = vld [vmem:[%s49 + $0x128] sm:$0xf]
  %v2847 = vld [vmem:[%s49 + $0x12c] sm:$0xf]
  %v2848 = vld [vmem:[%s49 + $0x130] sm:$0xf]
  %v2849 = vld [vmem:[%s49 + $0x134] sm:$0xf]
  %v2850 = vld [vmem:[%s49 + $0x138] sm:$0xf]
  %v2851 = vld [vmem:[%s49 + $0x13c] sm:$0xf]
  %v2852 = vld [vmem:[%s49 + $0x140] sm:$0xf]
  %v2853 = vld [vmem:[%s49 + $0x144] sm:$0xf]
  %v2854 = vld [vmem:[%s49 + $0x148] sm:$0xf]
  %v2855 = vld [vmem:[%s49 + $0x14c] sm:$0xf]
  %v2856 = vld [vmem:[%s49 + $0x150] sm:$0xf]
  %v2857 = vld [vmem:[%s49 + $0x154] sm:$0xf]
  %v2858 = vld [vmem:[%s49 + $0x158] sm:$0xf]
  %v2859 = vld [vmem:[%s49 + $0x15c] sm:$0xf]
  %v2860 = vld [vmem:[%s49 + $0x160] sm:$0xf]
  %v2861 = vld [vmem:[%s49 + $0x164] sm:$0xf]
  %v2862 = vld [vmem:[%s49 + $0x168] sm:$0xf]
  %v2863 = vld [vmem:[%s49 + $0x16c] sm:$0xf]
  %v2864 = vld [vmem:[%s49 + $0x170] sm:$0xf]
  %v2865 = vld [vmem:[%s49 + $0x174] sm:$0xf]
  %v2866 = vld [vmem:[%s49 + $0x178] sm:$0xf]
  %v2867 = vld [vmem:[%s49 + $0x17c] sm:$0xf]
  %v2868 = vld [vmem:[%s49 + $0x180] sm:$0xf]
  %v2869 = vld [vmem:[%s49 + $0x184] sm:$0xf]
  %v2870 = vld [vmem:[%s49 + $0x188] sm:$0xf]
  %v2871 = vld [vmem:[%s49 + $0x18c] sm:$0xf]
  %v2872 = vld [vmem:[%s49 + $0x190] sm:$0xf]
  %v2873 = vld [vmem:[%s49 + $0x194] sm:$0xf]
  %v2874 = vld [vmem:[%s49 + $0x198] sm:$0xf]
  %v2875 = vld [vmem:[%s49 + $0x19c] sm:$0xf]
  %v2876 = vld [vmem:[%s49 + $0x1a0] sm:$0xf]
  %v2877 = vld [vmem:[%s49 + $0x1a4] sm:$0xf]
  %v2878 = vld [vmem:[%s49 + $0x1a8] sm:$0xf]
  %v2879 = vld [vmem:[%s49 + $0x1ac] sm:$0xf]
  %v2880 = vld [vmem:[%s49 + $0x1b0] sm:$0xf]
  %v2881 = vld [vmem:[%s49 + $0x1b4] sm:$0xf]
  %v2882 = vld [vmem:[%s49 + $0x1b8] sm:$0xf]
  %v2883 = vld [vmem:[%s49 + $0x1bc] sm:$0xf]
  %v2884 = vld [vmem:[%s49 + $0x1c0] sm:$0xf]
  %v2885 = vld [vmem:[%s49 + $0x1c4] sm:$0xf]
  %v2886 = vld [vmem:[%s49 + $0x1c8] sm:$0xf]
  %v2887 = vld [vmem:[%s49 + $0x1cc] sm:$0xf]
  %v2888 = vld [vmem:[%s49 + $0x1d0] sm:$0xf]
  %v2889 = vld [vmem:[%s49 + $0x1d4] sm:$0xf]
  %v2890 = vld [vmem:[%s49 + $0x1d8] sm:$0xf]
  %v2891 = vld [vmem:[%s49 + $0x1dc] sm:$0xf]
  %v2892 = vld [vmem:[%s49 + $0x1e0] sm:$0xf]
  %v2893 = vld [vmem:[%s49 + $0x1e4] sm:$0xf]
  %v2894 = vld [vmem:[%s49 + $0x1e8] sm:$0xf]
  %v2895 = vld [vmem:[%s49 + $0x1ec] sm:$0xf]
  %v2896 = vld [vmem:[%s49 + $0x1f0] sm:$0xf]
  %v2897 = vld [vmem:[%s49 + $0x1f4] sm:$0xf]
  %v2898 = vld [vmem:[%s49 + $0x1f8] sm:$0xf]
  %v2899 = vld [vmem:[%s49 + $0x1fc] sm:$0xf]
  %v2900 = vld [vmem:[%s49 + $0x200] sm:$0xf]
  %v2901 = vld [vmem:[%s49 + $0x204] sm:$0xf]
  %v2902 = vld [vmem:[%s49 + $0x208] sm:$0xf]
  %v2903 = vld [vmem:[%s49 + $0x20c] sm:$0xf]
  %v2904 = vld [vmem:[%s49 + $0x210] sm:$0xf]
  %v2905 = vld [vmem:[%s49 + $0x214] sm:$0xf]
  %v2906 = vld [vmem:[%s49 + $0x218] sm:$0xf]
  %v2907 = vld [vmem:[%s49 + $0x21c] sm:$0xf]
  %v2908 = vld [vmem:[%s49 + $0x220] sm:$0xf]
  %v2909 = vld [vmem:[%s49 + $0x224] sm:$0xf]
  %v2910 = vld [vmem:[%s49 + $0x228] sm:$0xf]
  %v2911 = vld [vmem:[%s49 + $0x22c] sm:$0xf]
  %v2912 = vld [vmem:[%s49 + $0x230] sm:$0xf]
  %v2913 = vld [vmem:[%s49 + $0x234] sm:$0xf]
  %v2914 = vld [vmem:[%s49 + $0x238] sm:$0xf]
  %v2915 = vld [vmem:[%s49 + $0x23c] sm:$0xf]
  %v2916 = vld [vmem:[%s49 + $0x240] sm:$0xf]
  %v2917 = vld [vmem:[%s49 + $0x244] sm:$0xf]
  %v2918 = vld [vmem:[%s49 + $0x248] sm:$0xf]
  %v2919 = vld [vmem:[%s49 + $0x24c] sm:$0xf]
  %v2920 = vld [vmem:[%s49 + $0x250] sm:$0xf]
  %v2921 = vld [vmem:[%s49 + $0x254] sm:$0xf]
  %v2922 = vld [vmem:[%s49 + $0x258] sm:$0xf]
  %v2923 = vld [vmem:[%s49 + $0x25c] sm:$0xf]
  %v2924 = vld [vmem:[%s49 + $0x260] sm:$0xf]
  %v2925 = vld [vmem:[%s49 + $0x264] sm:$0xf]
  %v2926 = vld [vmem:[%s49 + $0x268] sm:$0xf]
  %v2927 = vld [vmem:[%s49 + $0x26c] sm:$0xf]
  %v2928 = vld [vmem:[%s49 + $0x270] sm:$0xf]
  %v2929 = vld [vmem:[%s49 + $0x274] sm:$0xf]
  %v2930 = vld [vmem:[%s49 + $0x278] sm:$0xf]
  %v2931 = vld [vmem:[%s49 + $0x27c] sm:$0xf]
  %v2932 = vld [vmem:[%s49 + $0x280] sm:$0xf]
  %v2933 = vld [vmem:[%s49 + $0x284] sm:$0xf]
  %v2934 = vld [vmem:[%s49 + $0x288] sm:$0xf]
  %v2935 = vld [vmem:[%s49 + $0x28c] sm:$0xf]
  %v2936 = vld [vmem:[%s49 + $0x290] sm:$0xf]
  %v2937 = vld [vmem:[%s49 + $0x294] sm:$0xf]
  %v2938 = vld [vmem:[%s49 + $0x298] sm:$0xf]
  %v2939 = vld [vmem:[%s49 + $0x29c] sm:$0xf]
  %v2940 = vld [vmem:[%s49 + $0x2a0] sm:$0xf]
  %v2941 = vld [vmem:[%s49 + $0x2a4] sm:$0xf]
  %v2942 = vld [vmem:[%s49 + $0x2a8] sm:$0xf]
  %v2943 = vld [vmem:[%s49 + $0x2ac] sm:$0xf]
  %v2944 = vld [vmem:[%s49 + $0x2b0] sm:$0xf]
  %v2945 = vld [vmem:[%s49 + $0x2b4] sm:$0xf]
  %v2946 = vld [vmem:[%s49 + $0x2b8] sm:$0xf]
  %v2947 = vld [vmem:[%s49 + $0x2bc] sm:$0xf]
  %v2948 = vld [vmem:[%s49 + $0x2c0] sm:$0xf]
  %v2949 = vld [vmem:[%s49 + $0x2c4] sm:$0xf]
  %v2950 = vld [vmem:[%s49 + $0x2c8] sm:$0xf]
  %v2951 = vld [vmem:[%s49 + $0x2cc] sm:$0xf]
  %v2952 = vld [vmem:[%s49 + $0x2d0] sm:$0xf]
  %v2953 = vld [vmem:[%s49 + $0x2d4] sm:$0xf]
  %v2954 = vld [vmem:[%s49 + $0x2d8] sm:$0xf]
  %v2955 = vld [vmem:[%s49 + $0x2dc] sm:$0xf]
  %v2956 = vld [vmem:[%s49 + $0x2e0] sm:$0xf]
  %v2957 = vld [vmem:[%s49 + $0x2e4] sm:$0xf]
  %v2958 = vld [vmem:[%s49 + $0x2e8] sm:$0xf]
  %v2959 = vld [vmem:[%s49 + $0x2ec] sm:$0xf]
  %v2960 = vld [vmem:[%s49 + $0x2f0] sm:$0xf]
  %v2961 = vld [vmem:[%s49 + $0x2f4] sm:$0xf]
  %v2962 = vld [vmem:[%s49 + $0x2f8] sm:$0xf]
  %v2963 = vld [vmem:[%s49 + $0x2fc] sm:$0xf]
  %v2964 = vld [vmem:[%s49 + $0x300] sm:$0xf]
  %v2965 = vld [vmem:[%s49 + $0x304] sm:$0xf]
  %v2966 = vld [vmem:[%s49 + $0x308] sm:$0xf]
  %v2967 = vld [vmem:[%s49 + $0x30c] sm:$0xf]
  %v2968 = vld [vmem:[%s49 + $0x310] sm:$0xf]
  %v2969 = vld [vmem:[%s49 + $0x314] sm:$0xf]
  %v2970 = vld [vmem:[%s49 + $0x318] sm:$0xf]
  %v2971 = vld [vmem:[%s49 + $0x31c] sm:$0xf]
  %v2972 = vld [vmem:[%s49 + $0x320] sm:$0xf]
  %v2973 = vld [vmem:[%s49 + $0x324] sm:$0xf]
  %v2974 = vld [vmem:[%s49 + $0x328] sm:$0xf]
  %v2975 = vld [vmem:[%s49 + $0x32c] sm:$0xf]
  %v2976 = vld [vmem:[%s49 + $0x330] sm:$0xf]
  %v2977 = vld [vmem:[%s49 + $0x334] sm:$0xf]
  %v2978 = vld [vmem:[%s49 + $0x338] sm:$0xf]
  %v2979 = vld [vmem:[%s49 + $0x33c] sm:$0xf]
  %v2980 = vld [vmem:[%s49 + $0x340] sm:$0xf]
  %v2981 = vld [vmem:[%s49 + $0x344] sm:$0xf]
  %v2982 = vld [vmem:[%s49 + $0x348] sm:$0xf]
  %v2983 = vld [vmem:[%s49 + $0x34c] sm:$0xf]
  %v2984 = vld [vmem:[%s49 + $0x350] sm:$0xf]
  %v2985 = vld [vmem:[%s49 + $0x354] sm:$0xf]
  %v2986 = vld [vmem:[%s49 + $0x358] sm:$0xf]
  %v2987 = vld [vmem:[%s49 + $0x35c] sm:$0xf]
  %v2988 = vld [vmem:[%s49 + $0x360] sm:$0xf]
  %v2989 = vld [vmem:[%s49 + $0x364] sm:$0xf]
  %v2990 = vld [vmem:[%s49 + $0x368] sm:$0xf]
  %v2991 = vld [vmem:[%s49 + $0x36c] sm:$0xf]
  %v2992 = vld [vmem:[%s49 + $0x370] sm:$0xf]
  %v2993 = vld [vmem:[%s49 + $0x374] sm:$0xf]
  %v2994 = vld [vmem:[%s49 + $0x378] sm:$0xf]
  %v2995 = vld [vmem:[%s49 + $0x37c] sm:$0xf]
  %v2996 = vld [vmem:[%s49 + $0x380] sm:$0xf]
  %v2997 = vld [vmem:[%s49 + $0x384] sm:$0xf]
  %v2998 = vld [vmem:[%s49 + $0x388] sm:$0xf]
  %v2999 = vld [vmem:[%s49 + $0x38c] sm:$0xf]
  %v3000 = vld [vmem:[%s49 + $0x390] sm:$0xf]
  %v3001 = vld [vmem:[%s49 + $0x394] sm:$0xf]
  %v3002 = vld [vmem:[%s49 + $0x398] sm:$0xf]
  %v3003 = vld [vmem:[%s49 + $0x39c] sm:$0xf]
  %v3004 = vld [vmem:[%s49 + $0x3a0] sm:$0xf]
  %v3005 = vld [vmem:[%s49 + $0x3a4] sm:$0xf]
  %v3006 = vld [vmem:[%s49 + $0x3a8] sm:$0xf]
  %v3007 = vld [vmem:[%s49 + $0x3ac] sm:$0xf]
  %v3008 = vld [vmem:[%s49 + $0x3b0] sm:$0xf]
  %v3009 = vld [vmem:[%s49 + $0x3b4] sm:$0xf]
  %v3010 = vld [vmem:[%s49 + $0x3b8] sm:$0xf]
  %v3011 = vld [vmem:[%s49 + $0x3bc] sm:$0xf]
  %v3012 = vld [vmem:[%s49 + $0x3c0] sm:$0xf]
  %v3013 = vld [vmem:[%s49 + $0x3c4] sm:$0xf]
  %v3014 = vld [vmem:[%s49 + $0x3c8] sm:$0xf]
  %v3015 = vld [vmem:[%s49 + $0x3cc] sm:$0xf]
  %v3016 = vld [vmem:[%s49 + $0x3d0] sm:$0xf]
  %v3017 = vld [vmem:[%s49 + $0x3d4] sm:$0xf]
  %v3018 = vld [vmem:[%s49 + $0x3d8] sm:$0xf]
  %v3019 = vld [vmem:[%s49 + $0x3dc] sm:$0xf]
  %v3020 = vld [vmem:[%s49 + $0x3e0] sm:$0xf]
  %v3021 = vld [vmem:[%s49 + $0x3e4] sm:$0xf]
  %v3022 = vld [vmem:[%s49 + $0x3e8] sm:$0xf]
  %v3023 = vld [vmem:[%s49 + $0x3ec] sm:$0xf]
  %v3024 = vld [vmem:[%s49 + $0x3f0] sm:$0xf]
  %v3025 = vld [vmem:[%s49 + $0x3f4] sm:$0xf]
  %v3026 = vld [vmem:[%s49 + $0x3f8] sm:$0xf]
  %v3027 = vld [vmem:[%s49 + $0x3fc] sm:$0xf]
  %v3028 = vld [vmem:[%s51] sm:$0x1]
  %v3030 = vlaneseq
  %v3031 = vshrl.u32 %v3030, 7
  %v3032 = vsub.s32 0, %v3031
  %v3033 = vrot.slane %v3028, %v3032
  %v3291 = vunpack.c.l.b16 %v2772
  %v3292 = vunpack.c.l.b16 %v2773
  %v3293 = vunpack.c.l.b16 %v2774
  %v3294 = vunpack.c.l.b16 %v2775
  %v3295 = vunpack.c.l.b16 %v2776
  %v3296 = vunpack.c.l.b16 %v2777
  %v3297 = vunpack.c.l.b16 %v2778
  %v3298 = vunpack.c.l.b16 %v2779
  %v3299 = vunpack.c.l.b16 %v2780
  %v3300 = vunpack.c.l.b16 %v2781
  %v3301 = vunpack.c.l.b16 %v2782
  %v3302 = vunpack.c.l.b16 %v2783
  %v3303 = vunpack.c.l.b16 %v2784
  %v3304 = vunpack.c.l.b16 %v2785
  %v3305 = vunpack.c.l.b16 %v2786
  %v3306 = vunpack.c.l.b16 %v2787
  %v3307 = vunpack.c.l.b16 %v2788
  %v3308 = vunpack.c.l.b16 %v2789
  %v3309 = vunpack.c.l.b16 %v2790
  %v3310 = vunpack.c.l.b16 %v2791
  %v3311 = vunpack.c.l.b16 %v2792
  %v3312 = vunpack.c.l.b16 %v2793
  %v3313 = vunpack.c.l.b16 %v2794
  %v3314 = vunpack.c.l.b16 %v2795
  %v3315 = vunpack.c.l.b16 %v2796
  %v3316 = vunpack.c.l.b16 %v2797
  %v3317 = vunpack.c.l.b16 %v2798
  %v3318 = vunpack.c.l.b16 %v2799
  %v3319 = vunpack.c.l.b16 %v2800
  %v3320 = vunpack.c.l.b16 %v2801
  %v3321 = vunpack.c.l.b16 %v2802
  %v3322 = vunpack.c.l.b16 %v2803
  %v3323 = vunpack.c.l.b16 %v2804
  %v3324 = vunpack.c.l.b16 %v2805
  %v3325 = vunpack.c.l.b16 %v2806
  %v3326 = vunpack.c.l.b16 %v2807
  %v3327 = vunpack.c.l.b16 %v2808
  %v3328 = vunpack.c.l.b16 %v2809
  %v3329 = vunpack.c.l.b16 %v2810
  %v3330 = vunpack.c.l.b16 %v2811
  %v3331 = vunpack.c.l.b16 %v2812
  %v3332 = vunpack.c.l.b16 %v2813
  %v3333 = vunpack.c.l.b16 %v2814
  %v3334 = vunpack.c.l.b16 %v2815
  %v3335 = vunpack.c.l.b16 %v2816
  %v3336 = vunpack.c.l.b16 %v2817
  %v3337 = vunpack.c.l.b16 %v2818
  %v3338 = vunpack.c.l.b16 %v2819
  %v3339 = vunpack.c.l.b16 %v2820
  %v3340 = vunpack.c.l.b16 %v2821
  %v3341 = vunpack.c.l.b16 %v2822
  %v3342 = vunpack.c.l.b16 %v2823
  %v3343 = vunpack.c.l.b16 %v2824
  %v3344 = vunpack.c.l.b16 %v2825
  %v3345 = vunpack.c.l.b16 %v2826
  %v3346 = vunpack.c.l.b16 %v2827
  %v3347 = vunpack.c.l.b16 %v2828
  %v3348 = vunpack.c.l.b16 %v2829
  %v3349 = vunpack.c.l.b16 %v2830
  %v3350 = vunpack.c.l.b16 %v2831
  %v3351 = vunpack.c.l.b16 %v2832
  %v3352 = vunpack.c.l.b16 %v2833
  %v3353 = vunpack.c.l.b16 %v2834
  %v3354 = vunpack.c.l.b16 %v2835
  %v3355 = vunpack.c.l.b16 %v2836
  %v3356 = vunpack.c.l.b16 %v2837
  %v3357 = vunpack.c.l.b16 %v2838
  %v3358 = vunpack.c.l.b16 %v2839
  %v3359 = vunpack.c.l.b16 %v2840
  %v3360 = vunpack.c.l.b16 %v2841
  %v3361 = vunpack.c.l.b16 %v2842
  %v3362 = vunpack.c.l.b16 %v2843
  %v3363 = vunpack.c.l.b16 %v2844
  %v3364 = vunpack.c.l.b16 %v2845
  %v3365 = vunpack.c.l.b16 %v2846
  %v3366 = vunpack.c.l.b16 %v2847
  %v3367 = vunpack.c.l.b16 %v2848
  %v3368 = vunpack.c.l.b16 %v2849
  %v3369 = vunpack.c.l.b16 %v2850
  %v3370 = vunpack.c.l.b16 %v2851
  %v3371 = vunpack.c.l.b16 %v2852
  %v3372 = vunpack.c.l.b16 %v2853
  %v3373 = vunpack.c.l.b16 %v2854
  %v3374 = vunpack.c.l.b16 %v2855
  %v3375 = vunpack.c.l.b16 %v2856
  %v3376 = vunpack.c.l.b16 %v2857
  %v3377 = vunpack.c.l.b16 %v2858
  %v3378 = vunpack.c.l.b16 %v2859
  %v3379 = vunpack.c.l.b16 %v2860
  %v3380 = vunpack.c.l.b16 %v2861
  %v3381 = vunpack.c.l.b16 %v2862
  %v3382 = vunpack.c.l.b16 %v2863
  %v3383 = vunpack.c.l.b16 %v2864
  %v3384 = vunpack.c.l.b16 %v2865
  %v3385 = vunpack.c.l.b16 %v2866
  %v3386 = vunpack.c.l.b16 %v2867
  %v3387 = vunpack.c.l.b16 %v2868
  %v3388 = vunpack.c.l.b16 %v2869
  %v3389 = vunpack.c.l.b16 %v2870
  %v3390 = vunpack.c.l.b16 %v2871
  %v3391 = vunpack.c.l.b16 %v2872
  %v3392 = vunpack.c.l.b16 %v2873
  %v3393 = vunpack.c.l.b16 %v2874
  %v3394 = vunpack.c.l.b16 %v2875
  %v3395 = vunpack.c.l.b16 %v2876
  %v3396 = vunpack.c.l.b16 %v2877
  %v3397 = vunpack.c.l.b16 %v2878
  %v3398 = vunpack.c.l.b16 %v2879
  %v3399 = vunpack.c.l.b16 %v2880
  %v3400 = vunpack.c.l.b16 %v2881
  %v3401 = vunpack.c.l.b16 %v2882
  %v3402 = vunpack.c.l.b16 %v2883
  %v3403 = vunpack.c.l.b16 %v2884
  %v3404 = vunpack.c.l.b16 %v2885
  %v3405 = vunpack.c.l.b16 %v2886
  %v3406 = vunpack.c.l.b16 %v2887
  %v3407 = vunpack.c.l.b16 %v2888
  %v3408 = vunpack.c.l.b16 %v2889
  %v3409 = vunpack.c.l.b16 %v2890
  %v3410 = vunpack.c.l.b16 %v2891
  %v3411 = vunpack.c.l.b16 %v2892
  %v3412 = vunpack.c.l.b16 %v2893
  %v3413 = vunpack.c.l.b16 %v2894
  %v3414 = vunpack.c.l.b16 %v2895
  %v3415 = vunpack.c.l.b16 %v2896
  %v3416 = vunpack.c.l.b16 %v2897
  %v3417 = vunpack.c.l.b16 %v2898
  %v3418 = vunpack.c.l.b16 %v2899
  %v3419 = vunpack.c.l.b16 %v2900
  %v3420 = vunpack.c.l.b16 %v2901
  %v3421 = vunpack.c.l.b16 %v2902
  %v3422 = vunpack.c.l.b16 %v2903
  %v3423 = vunpack.c.l.b16 %v2904
  %v3424 = vunpack.c.l.b16 %v2905
  %v3425 = vunpack.c.l.b16 %v2906
  %v3426 = vunpack.c.l.b16 %v2907
  %v3427 = vunpack.c.l.b16 %v2908
  %v3428 = vunpack.c.l.b16 %v2909
  %v3429 = vunpack.c.l.b16 %v2910
  %v3430 = vunpack.c.l.b16 %v2911
  %v3431 = vunpack.c.l.b16 %v2912
  %v3432 = vunpack.c.l.b16 %v2913
  %v3433 = vunpack.c.l.b16 %v2914
  %v3434 = vunpack.c.l.b16 %v2915
  %v3435 = vunpack.c.l.b16 %v2916
  %v3436 = vunpack.c.l.b16 %v2917
  %v3437 = vunpack.c.l.b16 %v2918
  %v3438 = vunpack.c.l.b16 %v2919
  %v3439 = vunpack.c.l.b16 %v2920
  %v3440 = vunpack.c.l.b16 %v2921
  %v3441 = vunpack.c.l.b16 %v2922
  %v3442 = vunpack.c.l.b16 %v2923
  %v3443 = vunpack.c.l.b16 %v2924
  %v3444 = vunpack.c.l.b16 %v2925
  %v3445 = vunpack.c.l.b16 %v2926
  %v3446 = vunpack.c.l.b16 %v2927
  %v3447 = vunpack.c.l.b16 %v2928
  %v3448 = vunpack.c.l.b16 %v2929
  %v3449 = vunpack.c.l.b16 %v2930
  %v3450 = vunpack.c.l.b16 %v2931
  %v3451 = vunpack.c.l.b16 %v2932
  %v3452 = vunpack.c.l.b16 %v2933
  %v3453 = vunpack.c.l.b16 %v2934
  %v3454 = vunpack.c.l.b16 %v2935
  %v3455 = vunpack.c.l.b16 %v2936
  %v3456 = vunpack.c.l.b16 %v2937
  %v3457 = vunpack.c.l.b16 %v2938
  %v3458 = vunpack.c.l.b16 %v2939
  %v3459 = vunpack.c.l.b16 %v2940
  %v3460 = vunpack.c.l.b16 %v2941
  %v3461 = vunpack.c.l.b16 %v2942
  %v3462 = vunpack.c.l.b16 %v2943
  %v3463 = vunpack.c.l.b16 %v2944
  %v3464 = vunpack.c.l.b16 %v2945
  %v3465 = vunpack.c.l.b16 %v2946
  %v3466 = vunpack.c.l.b16 %v2947
  %v3467 = vunpack.c.l.b16 %v2948
  %v3468 = vunpack.c.l.b16 %v2949
  %v3469 = vunpack.c.l.b16 %v2950
  %v3470 = vunpack.c.l.b16 %v2951
  %v3471 = vunpack.c.l.b16 %v2952
  %v3472 = vunpack.c.l.b16 %v2953
  %v3473 = vunpack.c.l.b16 %v2954
  %v3474 = vunpack.c.l.b16 %v2955
  %v3475 = vunpack.c.l.b16 %v2956
  %v3476 = vunpack.c.l.b16 %v2957
  %v3477 = vunpack.c.l.b16 %v2958
  %v3478 = vunpack.c.l.b16 %v2959
  %v3479 = vunpack.c.l.b16 %v2960
  %v3480 = vunpack.c.l.b16 %v2961
  %v3481 = vunpack.c.l.b16 %v2962
  %v3482 = vunpack.c.l.b16 %v2963
  %v3483 = vunpack.c.l.b16 %v2964
  %v3484 = vunpack.c.l.b16 %v2965
  %v3485 = vunpack.c.l.b16 %v2966
  %v3486 = vunpack.c.l.b16 %v2967
  %v3487 = vunpack.c.l.b16 %v2968
  %v3488 = vunpack.c.l.b16 %v2969
  %v3489 = vunpack.c.l.b16 %v2970
  %v3490 = vunpack.c.l.b16 %v2971
  %v3491 = vunpack.c.l.b16 %v2972
  %v3492 = vunpack.c.l.b16 %v2973
  %v3493 = vunpack.c.l.b16 %v2974
  %v3494 = vunpack.c.l.b16 %v2975
  %v3495 = vunpack.c.l.b16 %v2976
  %v3496 = vunpack.c.l.b16 %v2977
  %v3497 = vunpack.c.l.b16 %v2978
  %v3498 = vunpack.c.l.b16 %v2979
  %v3499 = vunpack.c.l.b16 %v2980
  %v3500 = vunpack.c.l.b16 %v2981
  %v3501 = vunpack.c.l.b16 %v2982
  %v3502 = vunpack.c.l.b16 %v2983
  %v3503 = vunpack.c.l.b16 %v2984
  %v3504 = vunpack.c.l.b16 %v2985
  %v3505 = vunpack.c.l.b16 %v2986
  %v3506 = vunpack.c.l.b16 %v2987
  %v3507 = vunpack.c.l.b16 %v2988
  %v3508 = vunpack.c.l.b16 %v2989
  %v3509 = vunpack.c.l.b16 %v2990
  %v3510 = vunpack.c.l.b16 %v2991
  %v3511 = vunpack.c.l.b16 %v2992
  %v3512 = vunpack.c.l.b16 %v2993
  %v3513 = vunpack.c.l.b16 %v2994
  %v3514 = vunpack.c.l.b16 %v2995
  %v3515 = vunpack.c.l.b16 %v2996
  %v3516 = vunpack.c.l.b16 %v2997
  %v3517 = vunpack.c.l.b16 %v2998
  %v3518 = vunpack.c.l.b16 %v2999
  %v3519 = vunpack.c.l.b16 %v3000
  %v3520 = vunpack.c.l.b16 %v3001
  %v3521 = vunpack.c.l.b16 %v3002
  %v3522 = vunpack.c.l.b16 %v3003
  %v3523 = vunpack.c.l.b16 %v3004
  %v3524 = vunpack.c.l.b16 %v3005
  %v3525 = vunpack.c.l.b16 %v3006
  %v3526 = vunpack.c.l.b16 %v3007
  %v3527 = vunpack.c.l.b16 %v3008
  %v3528 = vunpack.c.l.b16 %v3009
  %v3529 = vunpack.c.l.b16 %v3010
  %v3530 = vunpack.c.l.b16 %v3011
  %v3531 = vunpack.c.l.b16 %v3012
  %v3532 = vunpack.c.l.b16 %v3013
  %v3533 = vunpack.c.l.b16 %v3014
  %v3534 = vunpack.c.l.b16 %v3015
  %v3535 = vunpack.c.l.b16 %v3016
  %v3536 = vunpack.c.l.b16 %v3017
  %v3537 = vunpack.c.l.b16 %v3018
  %v3538 = vunpack.c.l.b16 %v3019
  %v3539 = vunpack.c.l.b16 %v3020
  %v3540 = vunpack.c.l.b16 %v3021
  %v3541 = vunpack.c.l.b16 %v3022
  %v3542 = vunpack.c.l.b16 %v3023
  %v3543 = vunpack.c.l.b16 %v3024
  %v3544 = vunpack.c.l.b16 %v3025
  %v3545 = vunpack.c.l.b16 %v3026
  %v3546 = vunpack.c.l.b16 %v3027
  %v3547 = vpack.c.b16 %v3292, %v3291
  %v3548 = vpack.c.b16 %v3294, %v3293
  %v3549 = vpack.c.b16 %v3296, %v3295
  %v3550 = vpack.c.b16 %v3298, %v3297
  %v3551 = vpack.c.b16 %v3300, %v3299
  %v3552 = vpack.c.b16 %v3302, %v3301
  %v3553 = vpack.c.b16 %v3304, %v3303
  %v3554 = vpack.c.b16 %v3306, %v3305
  %v3555 = vpack.c.b16 %v3308, %v3307
  %v3556 = vpack.c.b16 %v3310, %v3309
  %v3557 = vpack.c.b16 %v3312, %v3311
  %v3558 = vpack.c.b16 %v3314, %v3313
  %v3559 = vpack.c.b16 %v3316, %v3315
  %v3560 = vpack.c.b16 %v3318, %v3317
  %v3561 = vpack.c.b16 %v3320, %v3319
  %v3562 = vpack.c.b16 %v3322, %v3321
  %v3563 = vpack.c.b16 %v3324, %v3323
  %v3564 = vpack.c.b16 %v3326, %v3325
  %v3565 = vpack.c.b16 %v3328, %v3327
  %v3566 = vpack.c.b16 %v3330, %v3329
  %v3567 = vpack.c.b16 %v3332, %v3331
  %v3568 = vpack.c.b16 %v3334, %v3333
  %v3569 = vpack.c.b16 %v3336, %v3335
  %v3570 = vpack.c.b16 %v3338, %v3337
  %v3571 = vpack.c.b16 %v3340, %v3339
  %v3572 = vpack.c.b16 %v3342, %v3341
  %v3573 = vpack.c.b16 %v3344, %v3343
  %v3574 = vpack.c.b16 %v3346, %v3345
  %v3575 = vpack.c.b16 %v3348, %v3347
  %v3576 = vpack.c.b16 %v3350, %v3349
  %v3577 = vpack.c.b16 %v3352, %v3351
  %v3578 = vpack.c.b16 %v3354, %v3353
  %v3579 = vpack.c.b16 %v3356, %v3355
  %v3580 = vpack.c.b16 %v3358, %v3357
  %v3581 = vpack.c.b16 %v3360, %v3359
  %v3582 = vpack.c.b16 %v3362, %v3361
  %v3583 = vpack.c.b16 %v3364, %v3363
  %v3584 = vpack.c.b16 %v3366, %v3365
  %v3585 = vpack.c.b16 %v3368, %v3367
  %v3586 = vpack.c.b16 %v3370, %v3369
  %v3587 = vpack.c.b16 %v3372, %v3371
  %v3588 = vpack.c.b16 %v3374, %v3373
  %v3589 = vpack.c.b16 %v3376, %v3375
  %v3590 = vpack.c.b16 %v3378, %v3377
  %v3591 = vpack.c.b16 %v3380, %v3379
  %v3592 = vpack.c.b16 %v3382, %v3381
  %v3593 = vpack.c.b16 %v3384, %v3383
  %v3594 = vpack.c.b16 %v3386, %v3385
  %v3595 = vpack.c.b16 %v3388, %v3387
  %v3596 = vpack.c.b16 %v3390, %v3389
  %v3597 = vpack.c.b16 %v3392, %v3391
  %v3598 = vpack.c.b16 %v3394, %v3393
  %v3599 = vpack.c.b16 %v3396, %v3395
  %v3600 = vpack.c.b16 %v3398, %v3397
  %v3601 = vpack.c.b16 %v3400, %v3399
  %v3602 = vpack.c.b16 %v3402, %v3401
  %v3603 = vpack.c.b16 %v3404, %v3403
  %v3604 = vpack.c.b16 %v3406, %v3405
  %v3605 = vpack.c.b16 %v3408, %v3407
  %v3606 = vpack.c.b16 %v3410, %v3409
  %v3607 = vpack.c.b16 %v3412, %v3411
  %v3608 = vpack.c.b16 %v3414, %v3413
  %v3609 = vpack.c.b16 %v3416, %v3415
  %v3610 = vpack.c.b16 %v3418, %v3417
  %v3611 = vpack.c.b16 %v3420, %v3419
  %v3612 = vpack.c.b16 %v3422, %v3421
  %v3613 = vpack.c.b16 %v3424, %v3423
  %v3614 = vpack.c.b16 %v3426, %v3425
  %v3615 = vpack.c.b16 %v3428, %v3427
  %v3616 = vpack.c.b16 %v3430, %v3429
  %v3617 = vpack.c.b16 %v3432, %v3431
  %v3618 = vpack.c.b16 %v3434, %v3433
  %v3619 = vpack.c.b16 %v3436, %v3435
  %v3620 = vpack.c.b16 %v3438, %v3437
  %v3621 = vpack.c.b16 %v3440, %v3439
  %v3622 = vpack.c.b16 %v3442, %v3441
  %v3623 = vpack.c.b16 %v3444, %v3443
  %v3624 = vpack.c.b16 %v3446, %v3445
  %v3625 = vpack.c.b16 %v3448, %v3447
  %v3626 = vpack.c.b16 %v3450, %v3449
  %v3627 = vpack.c.b16 %v3452, %v3451
  %v3628 = vpack.c.b16 %v3454, %v3453
  %v3629 = vpack.c.b16 %v3456, %v3455
  %v3630 = vpack.c.b16 %v3458, %v3457
  %v3631 = vpack.c.b16 %v3460, %v3459
  %v3632 = vpack.c.b16 %v3462, %v3461
  %v3633 = vpack.c.b16 %v3464, %v3463
  %v3634 = vpack.c.b16 %v3466, %v3465
  %v3635 = vpack.c.b16 %v3468, %v3467
  %v3636 = vpack.c.b16 %v3470, %v3469
  %v3637 = vpack.c.b16 %v3472, %v3471
  %v3638 = vpack.c.b16 %v3474, %v3473
  %v3639 = vpack.c.b16 %v3476, %v3475
  %v3640 = vpack.c.b16 %v3478, %v3477
  %v3641 = vpack.c.b16 %v3480, %v3479
  %v3642 = vpack.c.b16 %v3482, %v3481
  %v3643 = vpack.c.b16 %v3484, %v3483
  %v3644 = vpack.c.b16 %v3486, %v3485
  %v3645 = vpack.c.b16 %v3488, %v3487
  %v3646 = vpack.c.b16 %v3490, %v3489
  %v3647 = vpack.c.b16 %v3492, %v3491
  %v3648 = vpack.c.b16 %v3494, %v3493
  %v3649 = vpack.c.b16 %v3496, %v3495
  %v3650 = vpack.c.b16 %v3498, %v3497
  %v3651 = vpack.c.b16 %v3500, %v3499
  %v3652 = vpack.c.b16 %v3502, %v3501
  %v3653 = vpack.c.b16 %v3504, %v3503
  %v3654 = vpack.c.b16 %v3506, %v3505
  %v3655 = vpack.c.b16 %v3508, %v3507
  %v3656 = vpack.c.b16 %v3510, %v3509
  %v3657 = vpack.c.b16 %v3512, %v3511
  %v3658 = vpack.c.b16 %v3514, %v3513
  %v3659 = vpack.c.b16 %v3516, %v3515
  %v3660 = vpack.c.b16 %v3518, %v3517
  %v3661 = vpack.c.b16 %v3520, %v3519
  %v3662 = vpack.c.b16 %v3522, %v3521
  %v3663 = vpack.c.b16 %v3524, %v3523
  %v3664 = vpack.c.b16 %v3526, %v3525
  %v3665 = vpack.c.b16 %v3528, %v3527
  %v3666 = vpack.c.b16 %v3530, %v3529
  %v3667 = vpack.c.b16 %v3532, %v3531
  %v3668 = vpack.c.b16 %v3534, %v3533
  %v3669 = vpack.c.b16 %v3536, %v3535
  %v3670 = vpack.c.b16 %v3538, %v3537
  %v3671 = vpack.c.b16 %v3540, %v3539
  %v3672 = vpack.c.b16 %v3542, %v3541
  %v3673 = vpack.c.b16 %v3544, %v3543
  %v3674 = vpack.c.b16 %v3546, %v3545
  %3803 = vmatprep.subr.bf16.mxu0 0
  %3804 = vmatpush1.bf16.msra.mxu0 %v3554
  %3805 = vmatprep.subr.bf16.mxu0 0
  %3806 = vmatpush1.bf16.msra.mxu0 %v3553
  %3807 = vmatprep.subr.bf16.mxu0 0
  %3808 = vmatpush1.bf16.msra.mxu0 %v3552
  %3809 = vmatprep.subr.bf16.mxu0 0
  %3810 = vmatpush1.bf16.msra.mxu0 %v3551
  %3811 = vmatprep.subr.bf16.mxu0 0
  %3812 = vmatpush1.bf16.msra.mxu0 %v3550
  %3813 = vmatprep.subr.bf16.mxu0 0
  %3814 = vmatpush1.bf16.msra.mxu0 %v3549
  %3815 = vmatprep.subr.bf16.mxu0 0
  %3816 = vmatpush1.bf16.msra.mxu0 %v3548
  %3817 = vmatprep.subr.bf16.mxu0 0
  %3818 = vmatpush1.bf16.msra.mxu0 %v3547
  %3819 = vmatprep.subr.bf16.mxu0 0
  %3820 = vmatpush2.bf16.msra.mxu0 %v3562
  %3821 = vmatprep.subr.bf16.mxu0 0
  %3822 = vmatpush2.bf16.msra.mxu0 %v3561
  %3823 = vmatprep.subr.bf16.mxu0 0
  %3824 = vmatpush2.bf16.msra.mxu0 %v3560
  %3825 = vmatprep.subr.bf16.mxu0 0
  %3826 = vmatpush2.bf16.msra.mxu0 %v3559
  %3827 = vmatprep.subr.bf16.mxu0 0
  %3828 = vmatpush2.bf16.msra.mxu0 %v3558
  %3829 = vmatprep.subr.bf16.mxu0 0
  %3830 = vmatpush2.bf16.msra.mxu0 %v3557
  %3831 = vmatprep.subr.bf16.mxu0 0
  %3832 = vmatpush2.bf16.msra.mxu0 %v3556
  %3833 = vmatprep.subr.bf16.mxu0 0
  %3834 = vmatpush2.bf16.msra.mxu0 %v3555
  %3835 = vmatprep.mubr.bf16.mxu0 %v2757
  %3836 = vmatmul.mubr.bf16.gmra.mxu0 %v2756
  %v3837 = vpop.f32.mrf.mxu0
  %v3838 = vadd.f32 %v3033, %v3837
  %v3839 = vpop.f32.mrf.mxu0
  %v3840 = vpop.f32.mrf.mxu0
  %v3841 = vadd.f32 %v3033, %v3840
  %v3842 = vpop.f32.mrf.mxu0
  %3843 = vdwg.mxu0
  %3844 = vmatprep.subr.bf16.mxu0 0
  %3845 = vmatpush1.bf16.msra.mxu0 %v3570
  %3846 = vmatprep.subr.bf16.mxu0 0
  %3847 = vmatpush1.bf16.msra.mxu0 %v3569
  %3848 = vmatprep.subr.bf16.mxu0 0
  %3849 = vmatpush1.bf16.msra.mxu0 %v3568
  %3850 = vmatprep.subr.bf16.mxu0 0
  %3851 = vmatpush1.bf16.msra.mxu0 %v3567
  %3852 = vmatprep.subr.bf16.mxu0 0
  %3853 = vmatpush1.bf16.msra.mxu0 %v3566
  %3854 = vmatprep.subr.bf16.mxu0 0
  %3855 = vmatpush1.bf16.msra.mxu0 %v3565
  %3856 = vmatprep.subr.bf16.mxu0 0
  %3857 = vmatpush1.bf16.msra.mxu0 %v3564
  %3858 = vmatprep.subr.bf16.mxu0 0
  %3859 = vmatpush1.bf16.msra.mxu0 %v3563
  %3860 = vmatprep.subr.bf16.mxu0 0
  %3861 = vmatpush2.bf16.msra.mxu0 %v3578
  %3862 = vmatprep.subr.bf16.mxu0 0
  %3863 = vmatpush2.bf16.msra.mxu0 %v3577
  %3864 = vmatprep.subr.bf16.mxu0 0
  %3865 = vmatpush2.bf16.msra.mxu0 %v3576
  %3866 = vmatprep.subr.bf16.mxu0 0
  %3867 = vmatpush2.bf16.msra.mxu0 %v3575
  %3868 = vmatprep.subr.bf16.mxu0 0
  %3869 = vmatpush2.bf16.msra.mxu0 %v3574
  %3870 = vmatprep.subr.bf16.mxu0 0
  %3871 = vmatpush2.bf16.msra.mxu0 %v3573
  %3872 = vmatprep.subr.bf16.mxu0 0
  %3873 = vmatpush2.bf16.msra.mxu0 %v3572
  %3874 = vmatprep.subr.bf16.mxu0 0
  %3875 = vmatpush2.bf16.msra.mxu0 %v3571
  %3876 = vmatprep.mubr.bf16.mxu0 %v2759
  %3877 = vmatmul.mubr.bf16.gmra.mxu0 %v2758
  %v3878 = vpop.f32.mrf.mxu0
  %v3879 = vadd.f32 %v3838, %v3878
  %v3880 = vpop.f32.mrf.mxu0
  %v3881 = vpop.f32.mrf.mxu0
  %v3882 = vadd.f32 %v3841, %v3881
  %v3883 = vpop.f32.mrf.mxu0
  %3884 = vdwg.mxu0
  %3885 = vmatprep.subr.bf16.mxu0 0
  %3886 = vmatpush1.bf16.msra.mxu0 %v3586
  %3887 = vmatprep.subr.bf16.mxu0 0
  %3888 = vmatpush1.bf16.msra.mxu0 %v3585
  %3889 = vmatprep.subr.bf16.mxu0 0
  %3890 = vmatpush1.bf16.msra.mxu0 %v3584
  %3891 = vmatprep.subr.bf16.mxu0 0
  %3892 = vmatpush1.bf16.msra.mxu0 %v3583
  %3893 = vmatprep.subr.bf16.mxu0 0
  %3894 = vmatpush1.bf16.msra.mxu0 %v3582
  %3895 = vmatprep.subr.bf16.mxu0 0
  %3896 = vmatpush1.bf16.msra.mxu0 %v3581
  %3897 = vmatprep.subr.bf16.mxu0 0
  %3898 = vmatpush1.bf16.msra.mxu0 %v3580
  %3899 = vmatprep.subr.bf16.mxu0 0
  %3900 = vmatpush1.bf16.msra.mxu0 %v3579
  %3901 = vmatprep.subr.bf16.mxu0 0
  %3902 = vmatpush2.bf16.msra.mxu0 %v3594
  %3903 = vmatprep.subr.bf16.mxu0 0
  %3904 = vmatpush2.bf16.msra.mxu0 %v3593
  %3905 = vmatprep.subr.bf16.mxu0 0
  %3906 = vmatpush2.bf16.msra.mxu0 %v3592
  %3907 = vmatprep.subr.bf16.mxu0 0
  %3908 = vmatpush2.bf16.msra.mxu0 %v3591
  %3909 = vmatprep.subr.bf16.mxu0 0
  %3910 = vmatpush2.bf16.msra.mxu0 %v3590
  %3911 = vmatprep.subr.bf16.mxu0 0
  %3912 = vmatpush2.bf16.msra.mxu0 %v3589
  %3913 = vmatprep.subr.bf16.mxu0 0
  %3914 = vmatpush2.bf16.msra.mxu0 %v3588
  %3915 = vmatprep.subr.bf16.mxu0 0
  %3916 = vmatpush2.bf16.msra.mxu0 %v3587
  %3917 = vmatprep.mubr.bf16.mxu0 %v2761
  %3918 = vmatmul.mubr.bf16.gmra.mxu0 %v2760
  %v3919 = vpop.f32.mrf.mxu0
  %v3920 = vadd.f32 %v3879, %v3919
  %v3921 = vpop.f32.mrf.mxu0
  %v3922 = vpop.f32.mrf.mxu0
  %v3923 = vadd.f32 %v3882, %v3922
  %v3924 = vpop.f32.mrf.mxu0
  %3925 = vdwg.mxu0
  %3926 = vmatprep.subr.bf16.mxu0 0
  %3927 = vmatpush1.bf16.msra.mxu0 %v3602
  %3928 = vmatprep.subr.bf16.mxu0 0
  %3929 = vmatpush1.bf16.msra.mxu0 %v3601
  %3930 = vmatprep.subr.bf16.mxu0 0
  %3931 = vmatpush1.bf16.msra.mxu0 %v3600
  %3932 = vmatprep.subr.bf16.mxu0 0
  %3933 = vmatpush1.bf16.msra.mxu0 %v3599
  %3934 = vmatprep.subr.bf16.mxu0 0
  %3935 = vmatpush1.bf16.msra.mxu0 %v3598
  %3936 = vmatprep.subr.bf16.mxu0 0
  %3937 = vmatpush1.bf16.msra.mxu0 %v3597
  %3938 = vmatprep.subr.bf16.mxu0 0
  %3939 = vmatpush1.bf16.msra.mxu0 %v3596
  %3940 = vmatprep.subr.bf16.mxu0 0
  %3941 = vmatpush1.bf16.msra.mxu0 %v3595
  %3942 = vmatprep.subr.bf16.mxu0 0
  %3943 = vmatpush2.bf16.msra.mxu0 %v3610
  %3944 = vmatprep.subr.bf16.mxu0 0
  %3945 = vmatpush2.bf16.msra.mxu0 %v3609
  %3946 = vmatprep.subr.bf16.mxu0 0
  %3947 = vmatpush2.bf16.msra.mxu0 %v3608
  %3948 = vmatprep.subr.bf16.mxu0 0
  %3949 = vmatpush2.bf16.msra.mxu0 %v3607
  %3950 = vmatprep.subr.bf16.mxu0 0
  %3951 = vmatpush2.bf16.msra.mxu0 %v3606
  %3952 = vmatprep.subr.bf16.mxu0 0
  %3953 = vmatpush2.bf16.msra.mxu0 %v3605
  %3954 = vmatprep.subr.bf16.mxu0 0
  %3955 = vmatpush2.bf16.msra.mxu0 %v3604
  %3956 = vmatprep.subr.bf16.mxu0 0
  %3957 = vmatpush2.bf16.msra.mxu0 %v3603
  %3958 = vmatprep.mubr.bf16.mxu0 %v2763
  %3959 = vmatmul.mubr.bf16.gmra.mxu0 %v2762
  %v3960 = vpop.f32.mrf.mxu0
  %v3961 = vadd.f32 %v3920, %v3960
  %v3962 = vpop.f32.mrf.mxu0
  %v3963 = vpop.f32.mrf.mxu0
  %v3964 = vadd.f32 %v3923, %v3963
  %v3965 = vpop.f32.mrf.mxu0
  %3966 = vdwg.mxu0
  %3967 = vmatprep.subr.bf16.mxu0 0
  %3968 = vmatpush1.bf16.msra.mxu0 %v3618
  %3969 = vmatprep.subr.bf16.mxu0 0
  %3970 = vmatpush1.bf16.msra.mxu0 %v3617
  %3971 = vmatprep.subr.bf16.mxu0 0
  %3972 = vmatpush1.bf16.msra.mxu0 %v3616
  %3973 = vmatprep.subr.bf16.mxu0 0
  %3974 = vmatpush1.bf16.msra.mxu0 %v3615
  %3975 = vmatprep.subr.bf16.mxu0 0
  %3976 = vmatpush1.bf16.msra.mxu0 %v3614
  %3977 = vmatprep.subr.bf16.mxu0 0
  %3978 = vmatpush1.bf16.msra.mxu0 %v3613
  %3979 = vmatprep.subr.bf16.mxu0 0
  %3980 = vmatpush1.bf16.msra.mxu0 %v3612
  %3981 = vmatprep.subr.bf16.mxu0 0
  %3982 = vmatpush1.bf16.msra.mxu0 %v3611
  %3983 = vmatprep.subr.bf16.mxu0 0
  %3984 = vmatpush2.bf16.msra.mxu0 %v3626
  %3985 = vmatprep.subr.bf16.mxu0 0
  %3986 = vmatpush2.bf16.msra.mxu0 %v3625
  %3987 = vmatprep.subr.bf16.mxu0 0
  %3988 = vmatpush2.bf16.msra.mxu0 %v3624
  %3989 = vmatprep.subr.bf16.mxu0 0
  %3990 = vmatpush2.bf16.msra.mxu0 %v3623
  %3991 = vmatprep.subr.bf16.mxu0 0
  %3992 = vmatpush2.bf16.msra.mxu0 %v3622
  %3993 = vmatprep.subr.bf16.mxu0 0
  %3994 = vmatpush2.bf16.msra.mxu0 %v3621
  %3995 = vmatprep.subr.bf16.mxu0 0
  %3996 = vmatpush2.bf16.msra.mxu0 %v3620
  %3997 = vmatprep.subr.bf16.mxu0 0
  %3998 = vmatpush2.bf16.msra.mxu0 %v3619
  %3999 = vmatprep.mubr.bf16.mxu0 %v2765
  %4000 = vmatmul.mubr.bf16.gmra.mxu0 %v2764
  %v4001 = vpop.f32.mrf.mxu0
  %v4002 = vadd.f32 %v3961, %v4001
  %v4003 = vpop.f32.mrf.mxu0
  %v4004 = vpop.f32.mrf.mxu0
  %v4005 = vadd.f32 %v3964, %v4004
  %v4006 = vpop.f32.mrf.mxu0
  %4007 = vdwg.mxu0
  %4008 = vmatprep.subr.bf16.mxu0 0
  %4009 = vmatpush1.bf16.msra.mxu0 %v3634
  %4010 = vmatprep.subr.bf16.mxu0 0
  %4011 = vmatpush1.bf16.msra.mxu0 %v3633
  %4012 = vmatprep.subr.bf16.mxu0 0
  %4013 = vmatpush1.bf16.msra.mxu0 %v3632
  %4014 = vmatprep.subr.bf16.mxu0 0
  %4015 = vmatpush1.bf16.msra.mxu0 %v3631
  %4016 = vmatprep.subr.bf16.mxu0 0
  %4017 = vmatpush1.bf16.msra.mxu0 %v3630
  %4018 = vmatprep.subr.bf16.mxu0 0
  %4019 = vmatpush1.bf16.msra.mxu0 %v3629
  %4020 = vmatprep.subr.bf16.mxu0 0
  %4021 = vmatpush1.bf16.msra.mxu0 %v3628
  %4022 = vmatprep.subr.bf16.mxu0 0
  %4023 = vmatpush1.bf16.msra.mxu0 %v3627
  %4024 = vmatprep.subr.bf16.mxu0 0
  %4025 = vmatpush2.bf16.msra.mxu0 %v3642
  %4026 = vmatprep.subr.bf16.mxu0 0
  %4027 = vmatpush2.bf16.msra.mxu0 %v3641
  %4028 = vmatprep.subr.bf16.mxu0 0
  %4029 = vmatpush2.bf16.msra.mxu0 %v3640
  %4030 = vmatprep.subr.bf16.mxu0 0
  %4031 = vmatpush2.bf16.msra.mxu0 %v3639
  %4032 = vmatprep.subr.bf16.mxu0 0
  %4033 = vmatpush2.bf16.msra.mxu0 %v3638
  %4034 = vmatprep.subr.bf16.mxu0 0
  %4035 = vmatpush2.bf16.msra.mxu0 %v3637
  %4036 = vmatprep.subr.bf16.mxu0 0
  %4037 = vmatpush2.bf16.msra.mxu0 %v3636
  %4038 = vmatprep.subr.bf16.mxu0 0
  %4039 = vmatpush2.bf16.msra.mxu0 %v3635
  %4040 = vmatprep.mubr.bf16.mxu0 %v2767
  %4041 = vmatmul.mubr.bf16.gmra.mxu0 %v2766
  %v4042 = vpop.f32.mrf.mxu0
  %v4043 = vadd.f32 %v4002, %v4042
  %v4044 = vpop.f32.mrf.mxu0
  %v4045 = vpop.f32.mrf.mxu0
  %v4046 = vadd.f32 %v4005, %v4045
  %v4047 = vpop.f32.mrf.mxu0
  %4048 = vdwg.mxu0
  %4049 = vmatprep.subr.bf16.mxu0 0
  %4050 = vmatpush1.bf16.msra.mxu0 %v3650
  %4051 = vmatprep.subr.bf16.mxu0 0
  %4052 = vmatpush1.bf16.msra.mxu0 %v3649
  %4053 = vmatprep.subr.bf16.mxu0 0
  %4054 = vmatpush1.bf16.msra.mxu0 %v3648
  %4055 = vmatprep.subr.bf16.mxu0 0
  %4056 = vmatpush1.bf16.msra.mxu0 %v3647
  %4057 = vmatprep.subr.bf16.mxu0 0
  %4058 = vmatpush1.bf16.msra.mxu0 %v3646
  %4059 = vmatprep.subr.bf16.mxu0 0
  %4060 = vmatpush1.bf16.msra.mxu0 %v3645
  %4061 = vmatprep.subr.bf16.mxu0 0
  %4062 = vmatpush1.bf16.msra.mxu0 %v3644
  %4063 = vmatprep.subr.bf16.mxu0 0
  %4064 = vmatpush1.bf16.msra.mxu0 %v3643
  %4065 = vmatprep.subr.bf16.mxu0 0
  %4066 = vmatpush2.bf16.msra.mxu0 %v3658
  %4067 = vmatprep.subr.bf16.mxu0 0
  %4068 = vmatpush2.bf16.msra.mxu0 %v3657
  %4069 = vmatprep.subr.bf16.mxu0 0
  %4070 = vmatpush2.bf16.msra.mxu0 %v3656
  %4071 = vmatprep.subr.bf16.mxu0 0
  %4072 = vmatpush2.bf16.msra.mxu0 %v3655
  %4073 = vmatprep.subr.bf16.mxu0 0
  %4074 = vmatpush2.bf16.msra.mxu0 %v3654
  %4075 = vmatprep.subr.bf16.mxu0 0
  %4076 = vmatpush2.bf16.msra.mxu0 %v3653
  %4077 = vmatprep.subr.bf16.mxu0 0
  %4078 = vmatpush2.bf16.msra.mxu0 %v3652
  %4079 = vmatprep.subr.bf16.mxu0 0
  %4080 = vmatpush2.bf16.msra.mxu0 %v3651
  %4081 = vmatprep.mubr.bf16.mxu0 %v2769
  %4082 = vmatmul.mubr.bf16.gmra.mxu0 %v2768
  %v4083 = vpop.f32.mrf.mxu0
  %v4084 = vadd.f32 %v4043, %v4083
  %v4085 = vpop.f32.mrf.mxu0
  %v4086 = vpop.f32.mrf.mxu0
  %v4087 = vadd.f32 %v4046, %v4086
  %v4088 = vpop.f32.mrf.mxu0
  %4089 = vdwg.mxu0
  %4090 = vmatprep.subr.bf16.mxu0 0
  %4091 = vmatpush1.bf16.msra.mxu0 %v3666
  %4092 = vmatprep.subr.bf16.mxu0 0
  %4093 = vmatpush1.bf16.msra.mxu0 %v3665
  %4094 = vmatprep.subr.bf16.mxu0 0
  %4095 = vmatpush1.bf16.msra.mxu0 %v3664
  %4096 = vmatprep.subr.bf16.mxu0 0
  %4097 = vmatpush1.bf16.msra.mxu0 %v3663
  %4098 = vmatprep.subr.bf16.mxu0 0
  %4099 = vmatpush1.bf16.msra.mxu0 %v3662
  %4100 = vmatprep.subr.bf16.mxu0 0
  %4101 = vmatpush1.bf16.msra.mxu0 %v3661
  %4102 = vmatprep.subr.bf16.mxu0 0
  %4103 = vmatpush1.bf16.msra.mxu0 %v3660
  %4104 = vmatprep.subr.bf16.mxu0 0
  %4105 = vmatpush1.bf16.msra.mxu0 %v3659
  %4106 = vmatprep.subr.bf16.mxu0 0
  %4107 = vmatpush2.bf16.msra.mxu0 %v3674
  %4108 = vmatprep.subr.bf16.mxu0 0
  %4109 = vmatpush2.bf16.msra.mxu0 %v3673
  %4110 = vmatprep.subr.bf16.mxu0 0
  %4111 = vmatpush2.bf16.msra.mxu0 %v3672
  %4112 = vmatprep.subr.bf16.mxu0 0
  %4113 = vmatpush2.bf16.msra.mxu0 %v3671
  %4114 = vmatprep.subr.bf16.mxu0 0
  %4115 = vmatpush2.bf16.msra.mxu0 %v3670
  %4116 = vmatprep.subr.bf16.mxu0 0
  %4117 = vmatpush2.bf16.msra.mxu0 %v3669
  %4118 = vmatprep.subr.bf16.mxu0 0
  %4119 = vmatpush2.bf16.msra.mxu0 %v3668
  %4120 = vmatprep.subr.bf16.mxu0 0
  %4121 = vmatpush2.bf16.msra.mxu0 %v3667
  %4122 = vmatprep.mubr.bf16.mxu0 %v2771
  %4123 = vmatmul.mubr.bf16.gmra.mxu0 %v2770
  %v4124 = vpop.f32.mrf.mxu0
  %v4125 = vadd.f32 %v4084, %v4124
  %v4126 = vpop.f32.mrf.mxu0
  %v4127 = vpop.f32.mrf.mxu0
  %v4128 = vadd.f32 %v4087, %v4127
  %v4129 = vpop.f32.mrf.mxu0
  %4130 = vdwg.mxu0
  %v4131 = vadd.f32 %v2194, %v4125
  %v4132 = vadd.f32 %v2195, %v4128
  %v4133 = vsel %vm237, %v4131, 0.0
  %4134 = vadd.xlane.f32.xlu0 %v4133
  %v4135 = vpop.xlane.xlu0 %4134
  %v4136 = vsel %vm237, %v4132, 0.0
  %4137 = vadd.xlane.f32.xlu0 %v4136
  %v4138 = vpop.xlane.xlu0 %4137
  %v4139 = vmul.f32 %v4135, %v1070
  %v4140 = vmul.f32 %v4138, %v1070
  %v4141 = vsub.f32 %v4131, %v4139
  %v4142 = vsub.f32 %v4132, %v4140
  %v4143 = vmul.f32 %v4141, %v4141
  %v4144 = vmul.f32 %v4142, %v4142
  %v4145 = vsel %vm237, %v4143, 0.0
  %4146 = vadd.xlane.f32.xlu0 %v4145
  %v4147 = vpop.xlane.xlu0 %4146
  %v4148 = vsel %vm237, %v4144, 0.0
  %4149 = vadd.xlane.f32.xlu0 %v4148
  %v4150 = vpop.xlane.xlu0 %4149
  %v4151 = vmul.f32 %v4147, %v1070
  %v4152 = vmul.f32 %v4150, %v1070
  %v4153 = vadd.f32 %v4151, 1e-05
  %v4154 = vadd.f32 %v4152, 1e-05
  %v4155 = vrsqrt.pop %v4153
  %v4156 = vrsqrt.pop %v4154
  %v4157 = vmul.f32 %v4141, %v4155
  %v4158 = vmul.f32 %v4142, %v4156
  %v4159 = vld [vmem:[%s53] sm:$0x1]
  %v4161 = vlaneseq
  %v4162 = vshrl.u32 %v4161, 7
  %v4163 = vsub.s32 0, %v4162
  %v4164 = vrot.slane %v4159, %v4163
  %v4166 = vmul.f32 %v4157, %v4164
  %v4167 = vmul.f32 %v4158, %v4164
  %v4168 = vld [vmem:[%s55] sm:$0x1]
  %v4170 = vlaneseq
  %v4171 = vshrl.u32 %v4170, 7
  %v4172 = vsub.s32 0, %v4171
  %v4173 = vrot.slane %v4168, %v4172
  %v4175 = vadd.f32 %v4166, %v4173
  %v4176 = vadd.f32 %v4167, %v4173
  %v4177 = vpack.c.bf16 %v4176, %v4175
  %s4178 = scalar_lea.vmem %s33, 8
  %v4179 = vld [vmem:[%s4178] sm:$0xf]
  %v4180 = vld [vmem:[%s4178 + $0x4] sm:$0xf]
  %s4181 = scalar_lea.vmem %s35, 1
  %v4182 = vld [vmem:[%s4181] sm:$0x1]
  %v4184 = vlaneseq
  %v4185 = vshrl.u32 %v4184, 7
  %v4186 = vsub.s32 0, %v4185
  %v4187 = vrot.slane %v4182, %v4186
  %v4191 = vunpack.c.l.b16 %v4179
  %v4192 = vunpack.c.l.b16 %v4180
  %v4193 = vpack.c.b16 %v4192, %v4191
  %v4196 = vsel %vm237, %v4177, 0
  %4198 = vmatprep.subr.bf16.mxu0 0
  %4199 = vmatpush1.bf16.msra.mxu0 0
  %4200 = vmatprep.subr.bf16.mxu0 0
  %4201 = vmatpush1.bf16.msra.mxu0 0
  %4202 = vmatprep.subr.bf16.mxu0 0
  %4203 = vmatpush1.bf16.msra.mxu0 0
  %4204 = vmatprep.subr.bf16.mxu0 0
  %4205 = vmatpush1.bf16.msra.mxu0 0
  %4206 = vmatprep.subr.bf16.mxu0 0
  %4207 = vmatpush1.bf16.msra.mxu0 0
  %4208 = vmatprep.subr.bf16.mxu0 0
  %4209 = vmatpush1.bf16.msra.mxu0 0
  %4210 = vmatprep.subr.bf16.mxu0 0
  %4211 = vmatpush1.bf16.msra.mxu0 0
  %4212 = vmatprep.subr.bf16.mxu0 0
  %4213 = vmatpush1.bf16.msra.mxu0 %v4193
  %4214 = vmatprep.subr.bf16.mxu0 0
  %4215 = vmatpush2.bf16.msra.mxu0 0
  %4216 = vmatprep.subr.bf16.mxu0 0
  %4217 = vmatpush2.bf16.msra.mxu0 0
  %4218 = vmatprep.subr.bf16.mxu0 0
  %4219 = vmatpush2.bf16.msra.mxu0 0
  %4220 = vmatprep.subr.bf16.mxu0 0
  %4221 = vmatpush2.bf16.msra.mxu0 0
  %4222 = vmatprep.subr.bf16.mxu0 0
  %4223 = vmatpush2.bf16.msra.mxu0 0
  %4224 = vmatprep.subr.bf16.mxu0 0
  %4225 = vmatpush2.bf16.msra.mxu0 0
  %4226 = vmatprep.subr.bf16.mxu0 0
  %4227 = vmatpush2.bf16.msra.mxu0 0
  %4228 = vmatprep.subr.bf16.mxu0 0
  %4229 = vmatpush2.bf16.msra.mxu0 0
  %4230 = vmatprep.mubr.bf16.mxu0 0
  %4231 = vmatmul.mubr.bf16.gmra.mxu0 %v4196
  %v4232 = vpop.f32.mrf.mxu0
  %v4233 = vadd.f32 %v4187, %v4232
  %v4234 = vpop.f32.mrf.mxu0
  %v4235 = vpop.f32.mrf.mxu0
  %v4236 = vadd.f32 %v4187, %v4235
  %v4237 = vpop.f32.mrf.mxu0
  %4238 = vdwg.mxu0
  %v4239 = vpack.c.bf16 %v4233, %v4233
  %4241 = vrot.lane.b32.xlu0 %v4239, 112
  %v4242 = vpop.permute.xlu0 %4241
  %v4244 = vsel %vm1174, %v4239, 0
  %v4247 = vsel %vm1174, %v4242, 0
  %4249 = vmatprep.subr.bf16.mxu0 0
  %4250 = vmatpush1.bf16.xpose.msra.mxu0 0
  %4251 = vmatprep.subr.bf16.mxu0 0
  %4252 = vmatpush1.bf16.xpose.msra.mxu0 0
  %4253 = vmatprep.subr.bf16.mxu0 0
  %4254 = vmatpush1.bf16.xpose.msra.mxu0 0
  %4255 = vmatprep.subr.bf16.mxu0 0
  %4256 = vmatpush1.bf16.xpose.msra.mxu0 0
  %4257 = vmatprep.subr.bf16.mxu0 0
  %4258 = vmatpush1.bf16.xpose.msra.mxu0 0
  %4259 = vmatprep.subr.bf16.mxu0 0
  %4260 = vmatpush1.bf16.xpose.msra.mxu0 0
  %4261 = vmatprep.subr.bf16.mxu0 0
  %4262 = vmatpush1.bf16.xpose.msra.mxu0 0
  %4263 = vmatprep.subr.bf16.mxu0 0
  %4264 = vmatpush1.bf16.xpose.msra.mxu0 %v4247
  %4265 = vmatprep.subr.bf16.mxu0 0
  %4266 = vmatpush2.bf16.xpose.msra.mxu0 0
  %4267 = vmatprep.subr.bf16.mxu0 0
  %4268 = vmatpush2.bf16.xpose.msra.mxu0 0
  %4269 = vmatprep.subr.bf16.mxu0 0
  %4270 = vmatpush2.bf16.xpose.msra.mxu0 0
  %4271 = vmatprep.subr.bf16.mxu0 0
  %4272 = vmatpush2.bf16.xpose.msra.mxu0 0
  %4273 = vmatprep.subr.bf16.mxu0 0
  %4274 = vmatpush2.bf16.xpose.msra.mxu0 0
  %4275 = vmatprep.subr.bf16.mxu0 0
  %4276 = vmatpush2.bf16.xpose.msra.mxu0 0
  %4277 = vmatprep.subr.bf16.mxu0 0
  %4278 = vmatpush2.bf16.xpose.msra.mxu0 0
  %4279 = vmatprep.subr.bf16.mxu0 0
  %4280 = vmatpush2.bf16.xpose.msra.mxu0 0
  %4281 = vmatprep.mubr.bf16.mxu0 0
  %4282 = vmatmul.mubr.bf16.gmra.mxu0 %v4244
  %v4283 = vpop.f32.mrf.mxu0
  %v4284 = vadd.f32 0.0, %v4283
  %v4285 = vpop.f32.mrf.mxu0
  %v4286 = vpop.f32.mrf.mxu0
  %v4287 = vpop.f32.mrf.mxu0
  %4288 = vdwg.mxu0
  %v4289 = vmul.f32 %v4284, 0.5
  %v4290 = vsel %vm137, %v4289, -inf
  %4291 = vmax.xlane.f32.xlu0 %v4290
  %v4292 = vpop.xlane.xlu0 %4291
  %v4293 = vsub.f32 %v4289, %v4292
  %v4294 = vmul.f32 %v4293, 1.442695
  %v4295 = vpow.pop %v4294
  %v4296 = vsel %vm137, %v4295, 0.0
  %4297 = vadd.xlane.f32.xlu0 %v4296
  %v4298 = vpop.xlane.xlu0 %4297
  %v4299 = vrcp.pop %v4298
  %v4300 = vmul.f32 %v4295, %v4299
  %v4301 = vpack.c.bf16 %v4300, %v4300
  %4302 = vrot.lane.b32.xlu0 %v4239, 96
  %v4303 = vpop.permute.xlu0 %4302
  %v4305 = vsel %vm137, %v4301, 0
  %v4308 = vsel %vm141, %v4303, 0
  %4310 = vmatprep.subr.bf16.mxu0 0
  %4311 = vmatpush1.bf16.msra.mxu0 0
  %4312 = vmatprep.subr.bf16.mxu0 0
  %4313 = vmatpush1.bf16.msra.mxu0 0
  %4314 = vmatprep.subr.bf16.mxu0 0
  %4315 = vmatpush1.bf16.msra.mxu0 0
  %4316 = vmatprep.subr.bf16.mxu0 0
  %4317 = vmatpush1.bf16.msra.mxu0 0
  %4318 = vmatprep.subr.bf16.mxu0 0
  %4319 = vmatpush1.bf16.msra.mxu0 0
  %4320 = vmatprep.subr.bf16.mxu0 0
  %4321 = vmatpush1.bf16.msra.mxu0 0
  %4322 = vmatprep.subr.bf16.mxu0 0
  %4323 = vmatpush1.bf16.msra.mxu0 0
  %4324 = vmatprep.subr.bf16.mxu0 0
  %4325 = vmatpush1.bf16.msra.mxu0 %v4308
  %4326 = vmatprep.subr.bf16.mxu0 0
  %4327 = vmatpush2.bf16.msra.mxu0 0
  %4328 = vmatprep.subr.bf16.mxu0 0
  %4329 = vmatpush2.bf16.msra.mxu0 0
  %4330 = vmatprep.subr.bf16.mxu0 0
  %4331 = vmatpush2.bf16.msra.mxu0 0
  %4332 = vmatprep.subr.bf16.mxu0 0
  %4333 = vmatpush2.bf16.msra.mxu0 0
  %4334 = vmatprep.subr.bf16.mxu0 0
  %4335 = vmatpush2.bf16.msra.mxu0 0
  %4336 = vmatprep.subr.bf16.mxu0 0
  %4337 = vmatpush2.bf16.msra.mxu0 0
  %4338 = vmatprep.subr.bf16.mxu0 0
  %4339 = vmatpush2.bf16.msra.mxu0 0
  %4340 = vmatprep.subr.bf16.mxu0 0
  %4341 = vmatpush2.bf16.msra.mxu0 0
  %4342 = vmatprep.mubr.bf16.mxu0 0
  %4343 = vmatmul.mubr.bf16.gmra.mxu0 %v4305
  %v4344 = vpop.f32.mrf.mxu0
  %v4345 = vadd.f32 0.0, %v4344
  %v4346 = vpop.f32.mrf.mxu0
  %v4347 = vpop.f32.mrf.mxu0
  %v4348 = vpop.f32.mrf.mxu0
  %4349 = vdwg.mxu0
  %4350 = vrot.lane.b32.xlu0 %v4239, 124
  %v4351 = vpop.permute.xlu0 %4350
  %4352 = vrot.lane.b32.xlu0 %v4239, 108
  %v4353 = vpop.permute.xlu0 %4352
  %v4355 = vsel %vm1174, %v4351, 0
  %v4358 = vsel %vm1174, %v4353, 0
  %4360 = vmatprep.subr.bf16.mxu0 0
  %4361 = vmatpush1.bf16.xpose.msra.mxu0 0
  %4362 = vmatprep.subr.bf16.mxu0 0
  %4363 = vmatpush1.bf16.xpose.msra.mxu0 0
  %4364 = vmatprep.subr.bf16.mxu0 0
  %4365 = vmatpush1.bf16.xpose.msra.mxu0 0
  %4366 = vmatprep.subr.bf16.mxu0 0
  %4367 = vmatpush1.bf16.xpose.msra.mxu0 0
  %4368 = vmatprep.subr.bf16.mxu0 0
  %4369 = vmatpush1.bf16.xpose.msra.mxu0 0
  %4370 = vmatprep.subr.bf16.mxu0 0
  %4371 = vmatpush1.bf16.xpose.msra.mxu0 0
  %4372 = vmatprep.subr.bf16.mxu0 0
  %4373 = vmatpush1.bf16.xpose.msra.mxu0 0
  %4374 = vmatprep.subr.bf16.mxu0 0
  %4375 = vmatpush1.bf16.xpose.msra.mxu0 %v4358
  %4376 = vmatprep.subr.bf16.mxu0 0
  %4377 = vmatpush2.bf16.xpose.msra.mxu0 0
  %4378 = vmatprep.subr.bf16.mxu0 0
  %4379 = vmatpush2.bf16.xpose.msra.mxu0 0
  %4380 = vmatprep.subr.bf16.mxu0 0
  %4381 = vmatpush2.bf16.xpose.msra.mxu0 0
  %4382 = vmatprep.subr.bf16.mxu0 0
  %4383 = vmatpush2.bf16.xpose.msra.mxu0 0
  %4384 = vmatprep.subr.bf16.mxu0 0
  %4385 = vmatpush2.bf16.xpose.msra.mxu0 0
  %4386 = vmatprep.subr.bf16.mxu0 0
  %4387 = vmatpush2.bf16.xpose.msra.mxu0 0
  %4388 = vmatprep.subr.bf16.mxu0 0
  %4389 = vmatpush2.bf16.xpose.msra.mxu0 0
  %4390 = vmatprep.subr.bf16.mxu0 0
  %4391 = vmatpush2.bf16.xpose.msra.mxu0 0
  %4392 = vmatprep.mubr.bf16.mxu0 0
  %4393 = vmatmul.mubr.bf16.gmra.mxu0 %v4355
  %v4394 = vpop.f32.mrf.mxu0
  %v4395 = vadd.f32 0.0, %v4394
  %v4396 = vpop.f32.mrf.mxu0
  %v4397 = vpop.f32.mrf.mxu0
  %v4398 = vpop.f32.mrf.mxu0
  %4399 = vdwg.mxu0
  %v4400 = vmul.f32 %v4395, 0.5
  %v4401 = vsel %vm137, %v4400, -inf
  %4402 = vmax.xlane.f32.xlu0 %v4401
  %v4403 = vpop.xlane.xlu0 %4402
  %v4404 = vsub.f32 %v4400, %v4403
  %v4405 = vmul.f32 %v4404, 1.442695
  %v4406 = vpow.pop %v4405
  %v4407 = vsel %vm137, %v4406, 0.0
  %4408 = vadd.xlane.f32.xlu0 %v4407
  %v4409 = vpop.xlane.xlu0 %4408
  %v4410 = vrcp.pop %v4409
  %v4411 = vmul.f32 %v4406, %v4410
  %v4412 = vpack.c.bf16 %v4411, %v4411
  %4413 = vrot.lane.b32.xlu0 %v4239, 92
  %v4414 = vpop.permute.xlu0 %4413
  %v4416 = vsel %vm137, %v4412, 0
  %v4419 = vsel %vm141, %v4414, 0
  %4421 = vmatprep.subr.bf16.mxu0 0
  %4422 = vmatpush1.bf16.msra.mxu0 0
  %4423 = vmatprep.subr.bf16.mxu0 0
  %4424 = vmatpush1.bf16.msra.mxu0 0
  %4425 = vmatprep.subr.bf16.mxu0 0
  %4426 = vmatpush1.bf16.msra.mxu0 0
  %4427 = vmatprep.subr.bf16.mxu0 0
  %4428 = vmatpush1.bf16.msra.mxu0 0
  %4429 = vmatprep.subr.bf16.mxu0 0
  %4430 = vmatpush1.bf16.msra.mxu0 0
  %4431 = vmatprep.subr.bf16.mxu0 0
  %4432 = vmatpush1.bf16.msra.mxu0 0
  %4433 = vmatprep.subr.bf16.mxu0 0
  %4434 = vmatpush1.bf16.msra.mxu0 0
  %4435 = vmatprep.subr.bf16.mxu0 0
  %4436 = vmatpush1.bf16.msra.mxu0 %v4419
  %4437 = vmatprep.subr.bf16.mxu0 0
  %4438 = vmatpush2.bf16.msra.mxu0 0
  %4439 = vmatprep.subr.bf16.mxu0 0
  %4440 = vmatpush2.bf16.msra.mxu0 0
  %4441 = vmatprep.subr.bf16.mxu0 0
  %4442 = vmatpush2.bf16.msra.mxu0 0
  %4443 = vmatprep.subr.bf16.mxu0 0
  %4444 = vmatpush2.bf16.msra.mxu0 0
  %4445 = vmatprep.subr.bf16.mxu0 0
  %4446 = vmatpush2.bf16.msra.mxu0 0
  %4447 = vmatprep.subr.bf16.mxu0 0
  %4448 = vmatpush2.bf16.msra.mxu0 0
  %4449 = vmatprep.subr.bf16.mxu0 0
  %4450 = vmatpush2.bf16.msra.mxu0 0
  %4451 = vmatprep.subr.bf16.mxu0 0
  %4452 = vmatpush2.bf16.msra.mxu0 0
  %4453 = vmatprep.mubr.bf16.mxu0 0
  %4454 = vmatmul.mubr.bf16.gmra.mxu0 %v4416
  %v4455 = vpop.f32.mrf.mxu0
  %v4456 = vadd.f32 0.0, %v4455
  %v4457 = vpop.f32.mrf.mxu0
  %v4458 = vpop.f32.mrf.mxu0
  %v4459 = vpop.f32.mrf.mxu0
  %4460 = vdwg.mxu0
  %4461 = vrot.lane.b32.xlu0 %v4239, 120
  %v4462 = vpop.permute.xlu0 %4461
  %4463 = vrot.lane.b32.xlu0 %v4239, 104
  %v4464 = vpop.permute.xlu0 %4463
  %v4466 = vsel %vm1174, %v4462, 0
  %v4469 = vsel %vm1174, %v4464, 0
  %4471 = vmatprep.subr.bf16.mxu0 0
  %4472 = vmatpush1.bf16.xpose.msra.mxu0 0
  %4473 = vmatprep.subr.bf16.mxu0 0
  %4474 = vmatpush1.bf16.xpose.msra.mxu0 0
  %4475 = vmatprep.subr.bf16.mxu0 0
  %4476 = vmatpush1.bf16.xpose.msra.mxu0 0
  %4477 = vmatprep.subr.bf16.mxu0 0
  %4478 = vmatpush1.bf16.xpose.msra.mxu0 0
  %4479 = vmatprep.subr.bf16.mxu0 0
  %4480 = vmatpush1.bf16.xpose.msra.mxu0 0
  %4481 = vmatprep.subr.bf16.mxu0 0
  %4482 = vmatpush1.bf16.xpose.msra.mxu0 0
  %4483 = vmatprep.subr.bf16.mxu0 0
  %4484 = vmatpush1.bf16.xpose.msra.mxu0 0
  %4485 = vmatprep.subr.bf16.mxu0 0
  %4486 = vmatpush1.bf16.xpose.msra.mxu0 %v4469
  %4487 = vmatprep.subr.bf16.mxu0 0
  %4488 = vmatpush2.bf16.xpose.msra.mxu0 0
  %4489 = vmatprep.subr.bf16.mxu0 0
  %4490 = vmatpush2.bf16.xpose.msra.mxu0 0
  %4491 = vmatprep.subr.bf16.mxu0 0
  %4492 = vmatpush2.bf16.xpose.msra.mxu0 0
  %4493 = vmatprep.subr.bf16.mxu0 0
  %4494 = vmatpush2.bf16.xpose.msra.mxu0 0
  %4495 = vmatprep.subr.bf16.mxu0 0
  %4496 = vmatpush2.bf16.xpose.msra.mxu0 0
  %4497 = vmatprep.subr.bf16.mxu0 0
  %4498 = vmatpush2.bf16.xpose.msra.mxu0 0
  %4499 = vmatprep.subr.bf16.mxu0 0
  %4500 = vmatpush2.bf16.xpose.msra.mxu0 0
  %4501 = vmatprep.subr.bf16.mxu0 0
  %4502 = vmatpush2.bf16.xpose.msra.mxu0 0
  %4503 = vmatprep.mubr.bf16.mxu0 0
  %4504 = vmatmul.mubr.bf16.gmra.mxu0 %v4466
  %v4505 = vpop.f32.mrf.mxu0
  %v4506 = vadd.f32 0.0, %v4505
  %v4507 = vpop.f32.mrf.mxu0
  %v4508 = vpop.f32.mrf.mxu0
  %v4509 = vpop.f32.mrf.mxu0
  %4510 = vdwg.mxu0
  %v4511 = vmul.f32 %v4506, 0.5
  %v4512 = vsel %vm137, %v4511, -inf
  %4513 = vmax.xlane.f32.xlu0 %v4512
  %v4514 = vpop.xlane.xlu0 %4513
  %v4515 = vsub.f32 %v4511, %v4514
  %v4516 = vmul.f32 %v4515, 1.442695
  %v4517 = vpow.pop %v4516
  %v4518 = vsel %vm137, %v4517, 0.0
  %4519 = vadd.xlane.f32.xlu0 %v4518
  %v4520 = vpop.xlane.xlu0 %4519
  %v4521 = vrcp.pop %v4520
  %v4522 = vmul.f32 %v4517, %v4521
  %v4523 = vpack.c.bf16 %v4522, %v4522
  %4524 = vrot.lane.b32.xlu0 %v4239, 88
  %v4525 = vpop.permute.xlu0 %4524
  %v4527 = vsel %vm137, %v4523, 0
  %v4530 = vsel %vm141, %v4525, 0
  %4532 = vmatprep.subr.bf16.mxu0 0
  %4533 = vmatpush1.bf16.msra.mxu0 0
  %4534 = vmatprep.subr.bf16.mxu0 0
  %4535 = vmatpush1.bf16.msra.mxu0 0
  %4536 = vmatprep.subr.bf16.mxu0 0
  %4537 = vmatpush1.bf16.msra.mxu0 0
  %4538 = vmatprep.subr.bf16.mxu0 0
  %4539 = vmatpush1.bf16.msra.mxu0 0
  %4540 = vmatprep.subr.bf16.mxu0 0
  %4541 = vmatpush1.bf16.msra.mxu0 0
  %4542 = vmatprep.subr.bf16.mxu0 0
  %4543 = vmatpush1.bf16.msra.mxu0 0
  %4544 = vmatprep.subr.bf16.mxu0 0
  %4545 = vmatpush1.bf16.msra.mxu0 0
  %4546 = vmatprep.subr.bf16.mxu0 0
  %4547 = vmatpush1.bf16.msra.mxu0 %v4530
  %4548 = vmatprep.subr.bf16.mxu0 0
  %4549 = vmatpush2.bf16.msra.mxu0 0
  %4550 = vmatprep.subr.bf16.mxu0 0
  %4551 = vmatpush2.bf16.msra.mxu0 0
  %4552 = vmatprep.subr.bf16.mxu0 0
  %4553 = vmatpush2.bf16.msra.mxu0 0
  %4554 = vmatprep.subr.bf16.mxu0 0
  %4555 = vmatpush2.bf16.msra.mxu0 0
  %4556 = vmatprep.subr.bf16.mxu0 0
  %4557 = vmatpush2.bf16.msra.mxu0 0
  %4558 = vmatprep.subr.bf16.mxu0 0
  %4559 = vmatpush2.bf16.msra.mxu0 0
  %4560 = vmatprep.subr.bf16.mxu0 0
  %4561 = vmatpush2.bf16.msra.mxu0 0
  %4562 = vmatprep.subr.bf16.mxu0 0
  %4563 = vmatpush2.bf16.msra.mxu0 0
  %4564 = vmatprep.mubr.bf16.mxu0 0
  %4565 = vmatmul.mubr.bf16.gmra.mxu0 %v4527
  %v4566 = vpop.f32.mrf.mxu0
  %v4567 = vadd.f32 0.0, %v4566
  %v4568 = vpop.f32.mrf.mxu0
  %v4569 = vpop.f32.mrf.mxu0
  %v4570 = vpop.f32.mrf.mxu0
  %4571 = vdwg.mxu0
  %4572 = vrot.lane.b32.xlu0 %v4239, 116
  %v4573 = vpop.permute.xlu0 %4572
  %4574 = vrot.lane.b32.xlu0 %v4239, 100
  %v4575 = vpop.permute.xlu0 %4574
  %v4577 = vsel %vm1174, %v4573, 0
  %v4580 = vsel %vm1174, %v4575, 0
  %4582 = vmatprep.subr.bf16.mxu0 0
  %4583 = vmatpush1.bf16.xpose.msra.mxu0 0
  %4584 = vmatprep.subr.bf16.mxu0 0
  %4585 = vmatpush1.bf16.xpose.msra.mxu0 0
  %4586 = vmatprep.subr.bf16.mxu0 0
  %4587 = vmatpush1.bf16.xpose.msra.mxu0 0
  %4588 = vmatprep.subr.bf16.mxu0 0
  %4589 = vmatpush1.bf16.xpose.msra.mxu0 0
  %4590 = vmatprep.subr.bf16.mxu0 0
  %4591 = vmatpush1.bf16.xpose.msra.mxu0 0
  %4592 = vmatprep.subr.bf16.mxu0 0
  %4593 = vmatpush1.bf16.xpose.msra.mxu0 0
  %4594 = vmatprep.subr.bf16.mxu0 0
  %4595 = vmatpush1.bf16.xpose.msra.mxu0 0
  %4596 = vmatprep.subr.bf16.mxu0 0
  %4597 = vmatpush1.bf16.xpose.msra.mxu0 %v4580
  %4598 = vmatprep.subr.bf16.mxu0 0
  %4599 = vmatpush2.bf16.xpose.msra.mxu0 0
  %4600 = vmatprep.subr.bf16.mxu0 0
  %4601 = vmatpush2.bf16.xpose.msra.mxu0 0
  %4602 = vmatprep.subr.bf16.mxu0 0
  %4603 = vmatpush2.bf16.xpose.msra.mxu0 0
  %4604 = vmatprep.subr.bf16.mxu0 0
  %4605 = vmatpush2.bf16.xpose.msra.mxu0 0
  %4606 = vmatprep.subr.bf16.mxu0 0
  %4607 = vmatpush2.bf16.xpose.msra.mxu0 0
  %4608 = vmatprep.subr.bf16.mxu0 0
  %4609 = vmatpush2.bf16.xpose.msra.mxu0 0
  %4610 = vmatprep.subr.bf16.mxu0 0
  %4611 = vmatpush2.bf16.xpose.msra.mxu0 0
  %4612 = vmatprep.subr.bf16.mxu0 0
  %4613 = vmatpush2.bf16.xpose.msra.mxu0 0
  %4614 = vmatprep.mubr.bf16.mxu0 0
  %4615 = vmatmul.mubr.bf16.gmra.mxu0 %v4577
  %v4616 = vpop.f32.mrf.mxu0
  %v4617 = vadd.f32 0.0, %v4616
  %v4618 = vpop.f32.mrf.mxu0
  %v4619 = vpop.f32.mrf.mxu0
  %v4620 = vpop.f32.mrf.mxu0
  %4621 = vdwg.mxu0
  %v4622 = vmul.f32 %v4617, 0.5
  %v4623 = vsel %vm137, %v4622, -inf
  %4624 = vmax.xlane.f32.xlu0 %v4623
  %v4625 = vpop.xlane.xlu0 %4624
  %v4626 = vsub.f32 %v4622, %v4625
  %v4627 = vmul.f32 %v4626, 1.442695
  %v4628 = vpow.pop %v4627
  %v4629 = vsel %vm137, %v4628, 0.0
  %4630 = vadd.xlane.f32.xlu0 %v4629
  %v4631 = vpop.xlane.xlu0 %4630
  %v4632 = vrcp.pop %v4631
  %v4633 = vmul.f32 %v4628, %v4632
  %v4634 = vpack.c.bf16 %v4633, %v4633
  %4635 = vrot.lane.b32.xlu0 %v4239, 84
  %v4636 = vpop.permute.xlu0 %4635
  %v4638 = vsel %vm137, %v4634, 0
  %v4641 = vsel %vm141, %v4636, 0
  %4643 = vmatprep.subr.bf16.mxu0 0
  %4644 = vmatpush1.bf16.msra.mxu0 0
  %4645 = vmatprep.subr.bf16.mxu0 0
  %4646 = vmatpush1.bf16.msra.mxu0 0
  %4647 = vmatprep.subr.bf16.mxu0 0
  %4648 = vmatpush1.bf16.msra.mxu0 0
  %4649 = vmatprep.subr.bf16.mxu0 0
  %4650 = vmatpush1.bf16.msra.mxu0 0
  %4651 = vmatprep.subr.bf16.mxu0 0
  %4652 = vmatpush1.bf16.msra.mxu0 0
  %4653 = vmatprep.subr.bf16.mxu0 0
  %4654 = vmatpush1.bf16.msra.mxu0 0
  %4655 = vmatprep.subr.bf16.mxu0 0
  %4656 = vmatpush1.bf16.msra.mxu0 0
  %4657 = vmatprep.subr.bf16.mxu0 0
  %4658 = vmatpush1.bf16.msra.mxu0 %v4641
  %4659 = vmatprep.subr.bf16.mxu0 0
  %4660 = vmatpush2.bf16.msra.mxu0 0
  %4661 = vmatprep.subr.bf16.mxu0 0
  %4662 = vmatpush2.bf16.msra.mxu0 0
  %4663 = vmatprep.subr.bf16.mxu0 0
  %4664 = vmatpush2.bf16.msra.mxu0 0
  %4665 = vmatprep.subr.bf16.mxu0 0
  %4666 = vmatpush2.bf16.msra.mxu0 0
  %4667 = vmatprep.subr.bf16.mxu0 0
  %4668 = vmatpush2.bf16.msra.mxu0 0
  %4669 = vmatprep.subr.bf16.mxu0 0
  %4670 = vmatpush2.bf16.msra.mxu0 0
  %4671 = vmatprep.subr.bf16.mxu0 0
  %4672 = vmatpush2.bf16.msra.mxu0 0
  %4673 = vmatprep.subr.bf16.mxu0 0
  %4674 = vmatpush2.bf16.msra.mxu0 0
  %4675 = vmatprep.mubr.bf16.mxu0 0
  %4676 = vmatmul.mubr.bf16.gmra.mxu0 %v4638
  %v4677 = vpop.f32.mrf.mxu0
  %v4678 = vadd.f32 0.0, %v4677
  %v4679 = vpop.f32.mrf.mxu0
  %v4680 = vpop.f32.mrf.mxu0
  %v4681 = vpop.f32.mrf.mxu0
  %4682 = vdwg.mxu0
  %4684 = vrot.lane.b32.xlu0 %v4456, 4
  %v4685 = vpop.permute.xlu0 %4684
  %4688 = vrot.lane.b32.xlu0 %v4567, 8
  %v4689 = vpop.permute.xlu0 %4688
  %4692 = vrot.lane.b32.xlu0 %v4678, 12
  %v4693 = vpop.permute.xlu0 %4692
  %v4695 = vsel %vm1174, %v4345, %v4685
  %v4696 = vsel %vm137, %v4695, %v4689
  %v4697 = vsel %vm1629, %v4696, %v4693
  %v4698 = vpack.c.bf16 %v4236, %v4236
  %4700 = vrot.lane.b32.xlu0 %v4698, 112
  %v4701 = vpop.permute.xlu0 %4700
  %v4703 = vsel %vm1174, %v4698, 0
  %v4706 = vsel %vm1174, %v4701, 0
  %4708 = vmatprep.subr.bf16.mxu0 0
  %4709 = vmatpush1.bf16.xpose.msra.mxu0 0
  %4710 = vmatprep.subr.bf16.mxu0 0
  %4711 = vmatpush1.bf16.xpose.msra.mxu0 0
  %4712 = vmatprep.subr.bf16.mxu0 0
  %4713 = vmatpush1.bf16.xpose.msra.mxu0 0
  %4714 = vmatprep.subr.bf16.mxu0 0
  %4715 = vmatpush1.bf16.xpose.msra.mxu0 0
  %4716 = vmatprep.subr.bf16.mxu0 0
  %4717 = vmatpush1.bf16.xpose.msra.mxu0 0
  %4718 = vmatprep.subr.bf16.mxu0 0
  %4719 = vmatpush1.bf16.xpose.msra.mxu0 0
  %4720 = vmatprep.subr.bf16.mxu0 0
  %4721 = vmatpush1.bf16.xpose.msra.mxu0 0
  %4722 = vmatprep.subr.bf16.mxu0 0
  %4723 = vmatpush1.bf16.xpose.msra.mxu0 %v4706
  %4724 = vmatprep.subr.bf16.mxu0 0
  %4725 = vmatpush2.bf16.xpose.msra.mxu0 0
  %4726 = vmatprep.subr.bf16.mxu0 0
  %4727 = vmatpush2.bf16.xpose.msra.mxu0 0
  %4728 = vmatprep.subr.bf16.mxu0 0
  %4729 = vmatpush2.bf16.xpose.msra.mxu0 0
  %4730 = vmatprep.subr.bf16.mxu0 0
  %4731 = vmatpush2.bf16.xpose.msra.mxu0 0
  %4732 = vmatprep.subr.bf16.mxu0 0
  %4733 = vmatpush2.bf16.xpose.msra.mxu0 0
  %4734 = vmatprep.subr.bf16.mxu0 0
  %4735 = vmatpush2.bf16.xpose.msra.mxu0 0
  %4736 = vmatprep.subr.bf16.mxu0 0
  %4737 = vmatpush2.bf16.xpose.msra.mxu0 0
  %4738 = vmatprep.subr.bf16.mxu0 0
  %4739 = vmatpush2.bf16.xpose.msra.mxu0 0
  %4740 = vmatprep.mubr.bf16.mxu0 0
  %4741 = vmatmul.mubr.bf16.gmra.mxu0 %v4703
  %v4742 = vpop.f32.mrf.mxu0
  %v4743 = vadd.f32 0.0, %v4742
  %v4744 = vpop.f32.mrf.mxu0
  %v4745 = vpop.f32.mrf.mxu0
  %v4746 = vpop.f32.mrf.mxu0
  %4747 = vdwg.mxu0
  %v4748 = vmul.f32 %v4743, 0.5
  %v4749 = vsel %vm137, %v4748, -inf
  %4750 = vmax.xlane.f32.xlu0 %v4749
  %v4751 = vpop.xlane.xlu0 %4750
  %v4752 = vsub.f32 %v4748, %v4751
  %v4753 = vmul.f32 %v4752, 1.442695
  %v4754 = vpow.pop %v4753
  %v4755 = vsel %vm137, %v4754, 0.0
  %4756 = vadd.xlane.f32.xlu0 %v4755
  %v4757 = vpop.xlane.xlu0 %4756
  %v4758 = vrcp.pop %v4757
  %v4759 = vmul.f32 %v4754, %v4758
  %v4760 = vpack.c.bf16 %v4759, %v4759
  %4761 = vrot.lane.b32.xlu0 %v4698, 96
  %v4762 = vpop.permute.xlu0 %4761
  %v4764 = vsel %vm137, %v4760, 0
  %v4767 = vsel %vm141, %v4762, 0
  %4769 = vmatprep.subr.bf16.mxu0 0
  %4770 = vmatpush1.bf16.msra.mxu0 0
  %4771 = vmatprep.subr.bf16.mxu0 0
  %4772 = vmatpush1.bf16.msra.mxu0 0
  %4773 = vmatprep.subr.bf16.mxu0 0
  %4774 = vmatpush1.bf16.msra.mxu0 0
  %4775 = vmatprep.subr.bf16.mxu0 0
  %4776 = vmatpush1.bf16.msra.mxu0 0
  %4777 = vmatprep.subr.bf16.mxu0 0
  %4778 = vmatpush1.bf16.msra.mxu0 0
  %4779 = vmatprep.subr.bf16.mxu0 0
  %4780 = vmatpush1.bf16.msra.mxu0 0
  %4781 = vmatprep.subr.bf16.mxu0 0
  %4782 = vmatpush1.bf16.msra.mxu0 0
  %4783 = vmatprep.subr.bf16.mxu0 0
  %4784 = vmatpush1.bf16.msra.mxu0 %v4767
  %4785 = vmatprep.subr.bf16.mxu0 0
  %4786 = vmatpush2.bf16.msra.mxu0 0
  %4787 = vmatprep.subr.bf16.mxu0 0
  %4788 = vmatpush2.bf16.msra.mxu0 0
  %4789 = vmatprep.subr.bf16.mxu0 0
  %4790 = vmatpush2.bf16.msra.mxu0 0
  %4791 = vmatprep.subr.bf16.mxu0 0
  %4792 = vmatpush2.bf16.msra.mxu0 0
  %4793 = vmatprep.subr.bf16.mxu0 0
  %4794 = vmatpush2.bf16.msra.mxu0 0
  %4795 = vmatprep.subr.bf16.mxu0 0
  %4796 = vmatpush2.bf16.msra.mxu0 0
  %4797 = vmatprep.subr.bf16.mxu0 0
  %4798 = vmatpush2.bf16.msra.mxu0 0
  %4799 = vmatprep.subr.bf16.mxu0 0
  %4800 = vmatpush2.bf16.msra.mxu0 0
  %4801 = vmatprep.mubr.bf16.mxu0 0
  %4802 = vmatmul.mubr.bf16.gmra.mxu0 %v4764
  %v4803 = vpop.f32.mrf.mxu0
  %v4804 = vadd.f32 0.0, %v4803
  %v4805 = vpop.f32.mrf.mxu0
  %v4806 = vpop.f32.mrf.mxu0
  %v4807 = vpop.f32.mrf.mxu0
  %4808 = vdwg.mxu0
  %4809 = vrot.lane.b32.xlu0 %v4698, 124
  %v4810 = vpop.permute.xlu0 %4809
  %4811 = vrot.lane.b32.xlu0 %v4698, 108
  %v4812 = vpop.permute.xlu0 %4811
  %v4814 = vsel %vm1174, %v4810, 0
  %v4817 = vsel %vm1174, %v4812, 0
  %4819 = vmatprep.subr.bf16.mxu0 0
  %4820 = vmatpush1.bf16.xpose.msra.mxu0 0
  %4821 = vmatprep.subr.bf16.mxu0 0
  %4822 = vmatpush1.bf16.xpose.msra.mxu0 0
  %4823 = vmatprep.subr.bf16.mxu0 0
  %4824 = vmatpush1.bf16.xpose.msra.mxu0 0
  %4825 = vmatprep.subr.bf16.mxu0 0
  %4826 = vmatpush1.bf16.xpose.msra.mxu0 0
  %4827 = vmatprep.subr.bf16.mxu0 0
  %4828 = vmatpush1.bf16.xpose.msra.mxu0 0
  %4829 = vmatprep.subr.bf16.mxu0 0
  %4830 = vmatpush1.bf16.xpose.msra.mxu0 0
  %4831 = vmatprep.subr.bf16.mxu0 0
  %4832 = vmatpush1.bf16.xpose.msra.mxu0 0
  %4833 = vmatprep.subr.bf16.mxu0 0
  %4834 = vmatpush1.bf16.xpose.msra.mxu0 %v4817
  %4835 = vmatprep.subr.bf16.mxu0 0
  %4836 = vmatpush2.bf16.xpose.msra.mxu0 0
  %4837 = vmatprep.subr.bf16.mxu0 0
  %4838 = vmatpush2.bf16.xpose.msra.mxu0 0
  %4839 = vmatprep.subr.bf16.mxu0 0
  %4840 = vmatpush2.bf16.xpose.msra.mxu0 0
  %4841 = vmatprep.subr.bf16.mxu0 0
  %4842 = vmatpush2.bf16.xpose.msra.mxu0 0
  %4843 = vmatprep.subr.bf16.mxu0 0
  %4844 = vmatpush2.bf16.xpose.msra.mxu0 0
  %4845 = vmatprep.subr.bf16.mxu0 0
  %4846 = vmatpush2.bf16.xpose.msra.mxu0 0
  %4847 = vmatprep.subr.bf16.mxu0 0
  %4848 = vmatpush2.bf16.xpose.msra.mxu0 0
  %4849 = vmatprep.subr.bf16.mxu0 0
  %4850 = vmatpush2.bf16.xpose.msra.mxu0 0
  %4851 = vmatprep.mubr.bf16.mxu0 0
  %4852 = vmatmul.mubr.bf16.gmra.mxu0 %v4814
  %v4853 = vpop.f32.mrf.mxu0
  %v4854 = vadd.f32 0.0, %v4853
  %v4855 = vpop.f32.mrf.mxu0
  %v4856 = vpop.f32.mrf.mxu0
  %v4857 = vpop.f32.mrf.mxu0
  %4858 = vdwg.mxu0
  %v4859 = vmul.f32 %v4854, 0.5
  %v4860 = vsel %vm137, %v4859, -inf
  %4861 = vmax.xlane.f32.xlu0 %v4860
  %v4862 = vpop.xlane.xlu0 %4861
  %v4863 = vsub.f32 %v4859, %v4862
  %v4864 = vmul.f32 %v4863, 1.442695
  %v4865 = vpow.pop %v4864
  %v4866 = vsel %vm137, %v4865, 0.0
  %4867 = vadd.xlane.f32.xlu0 %v4866
  %v4868 = vpop.xlane.xlu0 %4867
  %v4869 = vrcp.pop %v4868
  %v4870 = vmul.f32 %v4865, %v4869
  %v4871 = vpack.c.bf16 %v4870, %v4870
  %4872 = vrot.lane.b32.xlu0 %v4698, 92
  %v4873 = vpop.permute.xlu0 %4872
  %v4875 = vsel %vm137, %v4871, 0
  %v4878 = vsel %vm141, %v4873, 0
  %4880 = vmatprep.subr.bf16.mxu0 0
  %4881 = vmatpush1.bf16.msra.mxu0 0
  %4882 = vmatprep.subr.bf16.mxu0 0
  %4883 = vmatpush1.bf16.msra.mxu0 0
  %4884 = vmatprep.subr.bf16.mxu0 0
  %4885 = vmatpush1.bf16.msra.mxu0 0
  %4886 = vmatprep.subr.bf16.mxu0 0
  %4887 = vmatpush1.bf16.msra.mxu0 0
  %4888 = vmatprep.subr.bf16.mxu0 0
  %4889 = vmatpush1.bf16.msra.mxu0 0
  %4890 = vmatprep.subr.bf16.mxu0 0
  %4891 = vmatpush1.bf16.msra.mxu0 0
  %4892 = vmatprep.subr.bf16.mxu0 0
  %4893 = vmatpush1.bf16.msra.mxu0 0
  %4894 = vmatprep.subr.bf16.mxu0 0
  %4895 = vmatpush1.bf16.msra.mxu0 %v4878
  %4896 = vmatprep.subr.bf16.mxu0 0
  %4897 = vmatpush2.bf16.msra.mxu0 0
  %4898 = vmatprep.subr.bf16.mxu0 0
  %4899 = vmatpush2.bf16.msra.mxu0 0
  %4900 = vmatprep.subr.bf16.mxu0 0
  %4901 = vmatpush2.bf16.msra.mxu0 0
  %4902 = vmatprep.subr.bf16.mxu0 0
  %4903 = vmatpush2.bf16.msra.mxu0 0
  %4904 = vmatprep.subr.bf16.mxu0 0
  %4905 = vmatpush2.bf16.msra.mxu0 0
  %4906 = vmatprep.subr.bf16.mxu0 0
  %4907 = vmatpush2.bf16.msra.mxu0 0
  %4908 = vmatprep.subr.bf16.mxu0 0
  %4909 = vmatpush2.bf16.msra.mxu0 0
  %4910 = vmatprep.subr.bf16.mxu0 0
  %4911 = vmatpush2.bf16.msra.mxu0 0
  %4912 = vmatprep.mubr.bf16.mxu0 0
  %4913 = vmatmul.mubr.bf16.gmra.mxu0 %v4875
  %v4914 = vpop.f32.mrf.mxu0
  %v4915 = vadd.f32 0.0, %v4914
  %v4916 = vpop.f32.mrf.mxu0
  %v4917 = vpop.f32.mrf.mxu0
  %v4918 = vpop.f32.mrf.mxu0
  %4919 = vdwg.mxu0
  %4920 = vrot.lane.b32.xlu0 %v4698, 120
  %v4921 = vpop.permute.xlu0 %4920
  %4922 = vrot.lane.b32.xlu0 %v4698, 104
  %v4923 = vpop.permute.xlu0 %4922
  %v4925 = vsel %vm1174, %v4921, 0
  %v4928 = vsel %vm1174, %v4923, 0
  %4930 = vmatprep.subr.bf16.mxu0 0
  %4931 = vmatpush1.bf16.xpose.msra.mxu0 0
  %4932 = vmatprep.subr.bf16.mxu0 0
  %4933 = vmatpush1.bf16.xpose.msra.mxu0 0
  %4934 = vmatprep.subr.bf16.mxu0 0
  %4935 = vmatpush1.bf16.xpose.msra.mxu0 0
  %4936 = vmatprep.subr.bf16.mxu0 0
  %4937 = vmatpush1.bf16.xpose.msra.mxu0 0
  %4938 = vmatprep.subr.bf16.mxu0 0
  %4939 = vmatpush1.bf16.xpose.msra.mxu0 0
  %4940 = vmatprep.subr.bf16.mxu0 0
  %4941 = vmatpush1.bf16.xpose.msra.mxu0 0
  %4942 = vmatprep.subr.bf16.mxu0 0
  %4943 = vmatpush1.bf16.xpose.msra.mxu0 0
  %4944 = vmatprep.subr.bf16.mxu0 0
  %4945 = vmatpush1.bf16.xpose.msra.mxu0 %v4928
  %4946 = vmatprep.subr.bf16.mxu0 0
  %4947 = vmatpush2.bf16.xpose.msra.mxu0 0
  %4948 = vmatprep.subr.bf16.mxu0 0
  %4949 = vmatpush2.bf16.xpose.msra.mxu0 0
  %4950 = vmatprep.subr.bf16.mxu0 0
  %4951 = vmatpush2.bf16.xpose.msra.mxu0 0
  %4952 = vmatprep.subr.bf16.mxu0 0
  %4953 = vmatpush2.bf16.xpose.msra.mxu0 0
  %4954 = vmatprep.subr.bf16.mxu0 0
  %4955 = vmatpush2.bf16.xpose.msra.mxu0 0
  %4956 = vmatprep.subr.bf16.mxu0 0
  %4957 = vmatpush2.bf16.xpose.msra.mxu0 0
  %4958 = vmatprep.subr.bf16.mxu0 0
  %4959 = vmatpush2.bf16.xpose.msra.mxu0 0
  %4960 = vmatprep.subr.bf16.mxu0 0
  %4961 = vmatpush2.bf16.xpose.msra.mxu0 0
  %4962 = vmatprep.mubr.bf16.mxu0 0
  %4963 = vmatmul.mubr.bf16.gmra.mxu0 %v4925
  %v4964 = vpop.f32.mrf.mxu0
  %v4965 = vadd.f32 0.0, %v4964
  %v4966 = vpop.f32.mrf.mxu0
  %v4967 = vpop.f32.mrf.mxu0
  %v4968 = vpop.f32.mrf.mxu0
  %4969 = vdwg.mxu0
  %v4970 = vmul.f32 %v4965, 0.5
  %v4971 = vsel %vm137, %v4970, -inf
  %4972 = vmax.xlane.f32.xlu0 %v4971
  %v4973 = vpop.xlane.xlu0 %4972
  %v4974 = vsub.f32 %v4970, %v4973
  %v4975 = vmul.f32 %v4974, 1.442695
  %v4976 = vpow.pop %v4975
  %v4977 = vsel %vm137, %v4976, 0.0
  %4978 = vadd.xlane.f32.xlu0 %v4977
  %v4979 = vpop.xlane.xlu0 %4978
  %v4980 = vrcp.pop %v4979
  %v4981 = vmul.f32 %v4976, %v4980
  %v4982 = vpack.c.bf16 %v4981, %v4981
  %4983 = vrot.lane.b32.xlu0 %v4698, 88
  %v4984 = vpop.permute.xlu0 %4983
  %v4986 = vsel %vm137, %v4982, 0
  %v4989 = vsel %vm141, %v4984, 0
  %4991 = vmatprep.subr.bf16.mxu0 0
  %4992 = vmatpush1.bf16.msra.mxu0 0
  %4993 = vmatprep.subr.bf16.mxu0 0
  %4994 = vmatpush1.bf16.msra.mxu0 0
  %4995 = vmatprep.subr.bf16.mxu0 0
  %4996 = vmatpush1.bf16.msra.mxu0 0
  %4997 = vmatprep.subr.bf16.mxu0 0
  %4998 = vmatpush1.bf16.msra.mxu0 0
  %4999 = vmatprep.subr.bf16.mxu0 0
  %5000 = vmatpush1.bf16.msra.mxu0 0
  %5001 = vmatprep.subr.bf16.mxu0 0
  %5002 = vmatpush1.bf16.msra.mxu0 0
  %5003 = vmatprep.subr.bf16.mxu0 0
  %5004 = vmatpush1.bf16.msra.mxu0 0
  %5005 = vmatprep.subr.bf16.mxu0 0
  %5006 = vmatpush1.bf16.msra.mxu0 %v4989
  %5007 = vmatprep.subr.bf16.mxu0 0
  %5008 = vmatpush2.bf16.msra.mxu0 0
  %5009 = vmatprep.subr.bf16.mxu0 0
  %5010 = vmatpush2.bf16.msra.mxu0 0
  %5011 = vmatprep.subr.bf16.mxu0 0
  %5012 = vmatpush2.bf16.msra.mxu0 0
  %5013 = vmatprep.subr.bf16.mxu0 0
  %5014 = vmatpush2.bf16.msra.mxu0 0
  %5015 = vmatprep.subr.bf16.mxu0 0
  %5016 = vmatpush2.bf16.msra.mxu0 0
  %5017 = vmatprep.subr.bf16.mxu0 0
  %5018 = vmatpush2.bf16.msra.mxu0 0
  %5019 = vmatprep.subr.bf16.mxu0 0
  %5020 = vmatpush2.bf16.msra.mxu0 0
  %5021 = vmatprep.subr.bf16.mxu0 0
  %5022 = vmatpush2.bf16.msra.mxu0 0
  %5023 = vmatprep.mubr.bf16.mxu0 0
  %5024 = vmatmul.mubr.bf16.gmra.mxu0 %v4986
  %v5025 = vpop.f32.mrf.mxu0
  %v5026 = vadd.f32 0.0, %v5025
  %v5027 = vpop.f32.mrf.mxu0
  %v5028 = vpop.f32.mrf.mxu0
  %v5029 = vpop.f32.mrf.mxu0
  %5030 = vdwg.mxu0
  %5031 = vrot.lane.b32.xlu0 %v4698, 116
  %v5032 = vpop.permute.xlu0 %5031
  %5033 = vrot.lane.b32.xlu0 %v4698, 100
  %v5034 = vpop.permute.xlu0 %5033
  %v5036 = vsel %vm1174, %v5032, 0
  %v5039 = vsel %vm1174, %v5034, 0
  %5041 = vmatprep.subr.bf16.mxu0 0
  %5042 = vmatpush1.bf16.xpose.msra.mxu0 0
  %5043 = vmatprep.subr.bf16.mxu0 0
  %5044 = vmatpush1.bf16.xpose.msra.mxu0 0
  %5045 = vmatprep.subr.bf16.mxu0 0
  %5046 = vmatpush1.bf16.xpose.msra.mxu0 0
  %5047 = vmatprep.subr.bf16.mxu0 0
  %5048 = vmatpush1.bf16.xpose.msra.mxu0 0
  %5049 = vmatprep.subr.bf16.mxu0 0
  %5050 = vmatpush1.bf16.xpose.msra.mxu0 0
  %5051 = vmatprep.subr.bf16.mxu0 0
  %5052 = vmatpush1.bf16.xpose.msra.mxu0 0
  %5053 = vmatprep.subr.bf16.mxu0 0
  %5054 = vmatpush1.bf16.xpose.msra.mxu0 0
  %5055 = vmatprep.subr.bf16.mxu0 0
  %5056 = vmatpush1.bf16.xpose.msra.mxu0 %v5039
  %5057 = vmatprep.subr.bf16.mxu0 0
  %5058 = vmatpush2.bf16.xpose.msra.mxu0 0
  %5059 = vmatprep.subr.bf16.mxu0 0
  %5060 = vmatpush2.bf16.xpose.msra.mxu0 0
  %5061 = vmatprep.subr.bf16.mxu0 0
  %5062 = vmatpush2.bf16.xpose.msra.mxu0 0
  %5063 = vmatprep.subr.bf16.mxu0 0
  %5064 = vmatpush2.bf16.xpose.msra.mxu0 0
  %5065 = vmatprep.subr.bf16.mxu0 0
  %5066 = vmatpush2.bf16.xpose.msra.mxu0 0
  %5067 = vmatprep.subr.bf16.mxu0 0
  %5068 = vmatpush2.bf16.xpose.msra.mxu0 0
  %5069 = vmatprep.subr.bf16.mxu0 0
  %5070 = vmatpush2.bf16.xpose.msra.mxu0 0
  %5071 = vmatprep.subr.bf16.mxu0 0
  %5072 = vmatpush2.bf16.xpose.msra.mxu0 0
  %5073 = vmatprep.mubr.bf16.mxu0 0
  %5074 = vmatmul.mubr.bf16.gmra.mxu0 %v5036
  %v5075 = vpop.f32.mrf.mxu0
  %v5076 = vadd.f32 0.0, %v5075
  %v5077 = vpop.f32.mrf.mxu0
  %v5078 = vpop.f32.mrf.mxu0
  %v5079 = vpop.f32.mrf.mxu0
  %5080 = vdwg.mxu0
  %v5081 = vmul.f32 %v5076, 0.5
  %v5082 = vsel %vm137, %v5081, -inf
  %5083 = vmax.xlane.f32.xlu0 %v5082
  %v5084 = vpop.xlane.xlu0 %5083
  %v5085 = vsub.f32 %v5081, %v5084
  %v5086 = vmul.f32 %v5085, 1.442695
  %v5087 = vpow.pop %v5086
  %v5088 = vsel %vm137, %v5087, 0.0
  %5089 = vadd.xlane.f32.xlu0 %v5088
  %v5090 = vpop.xlane.xlu0 %5089
  %v5091 = vrcp.pop %v5090
  %v5092 = vmul.f32 %v5087, %v5091
  %v5093 = vpack.c.bf16 %v5092, %v5092
  %5094 = vrot.lane.b32.xlu0 %v4698, 84
  %v5095 = vpop.permute.xlu0 %5094
  %v5097 = vsel %vm137, %v5093, 0
  %v5100 = vsel %vm141, %v5095, 0
  %5102 = vmatprep.subr.bf16.mxu0 0
  %5103 = vmatpush1.bf16.msra.mxu0 0
  %5104 = vmatprep.subr.bf16.mxu0 0
  %5105 = vmatpush1.bf16.msra.mxu0 0
  %5106 = vmatprep.subr.bf16.mxu0 0
  %5107 = vmatpush1.bf16.msra.mxu0 0
  %5108 = vmatprep.subr.bf16.mxu0 0
  %5109 = vmatpush1.bf16.msra.mxu0 0
  %5110 = vmatprep.subr.bf16.mxu0 0
  %5111 = vmatpush1.bf16.msra.mxu0 0
  %5112 = vmatprep.subr.bf16.mxu0 0
  %5113 = vmatpush1.bf16.msra.mxu0 0
  %5114 = vmatprep.subr.bf16.mxu0 0
  %5115 = vmatpush1.bf16.msra.mxu0 0
  %5116 = vmatprep.subr.bf16.mxu0 0
  %5117 = vmatpush1.bf16.msra.mxu0 %v5100
  %5118 = vmatprep.subr.bf16.mxu0 0
  %5119 = vmatpush2.bf16.msra.mxu0 0
  %5120 = vmatprep.subr.bf16.mxu0 0
  %5121 = vmatpush2.bf16.msra.mxu0 0
  %5122 = vmatprep.subr.bf16.mxu0 0
  %5123 = vmatpush2.bf16.msra.mxu0 0
  %5124 = vmatprep.subr.bf16.mxu0 0
  %5125 = vmatpush2.bf16.msra.mxu0 0
  %5126 = vmatprep.subr.bf16.mxu0 0
  %5127 = vmatpush2.bf16.msra.mxu0 0
  %5128 = vmatprep.subr.bf16.mxu0 0
  %5129 = vmatpush2.bf16.msra.mxu0 0
  %5130 = vmatprep.subr.bf16.mxu0 0
  %5131 = vmatpush2.bf16.msra.mxu0 0
  %5132 = vmatprep.subr.bf16.mxu0 0
  %5133 = vmatpush2.bf16.msra.mxu0 0
  %5134 = vmatprep.mubr.bf16.mxu0 0
  %5135 = vmatmul.mubr.bf16.gmra.mxu0 %v5097
  %v5136 = vpop.f32.mrf.mxu0
  %v5137 = vadd.f32 0.0, %v5136
  %v5138 = vpop.f32.mrf.mxu0
  %v5139 = vpop.f32.mrf.mxu0
  %v5140 = vpop.f32.mrf.mxu0
  %5141 = vdwg.mxu0
  %5143 = vrot.lane.b32.xlu0 %v4915, 4
  %v5144 = vpop.permute.xlu0 %5143
  %5147 = vrot.lane.b32.xlu0 %v5026, 8
  %v5148 = vpop.permute.xlu0 %5147
  %5151 = vrot.lane.b32.xlu0 %v5137, 12
  %v5152 = vpop.permute.xlu0 %5151
  %v5154 = vsel %vm1174, %v4804, %v5144
  %v5155 = vsel %vm137, %v5154, %v5148
  %v5156 = vsel %vm1629, %v5155, %v5152
  %v5157 = vpack.c.bf16 %v5156, %v4697
  %s5158 = scalar_lea.vmem %s37, 8
  %v5159 = vld [vmem:[%s5158] sm:$0xf]
  %v5160 = vld [vmem:[%s5158 + $0x4] sm:$0xf]
  %s5161 = scalar_lea.vmem %s39, 1
  %v5162 = vld [vmem:[%s5161] sm:$0x1]
  %v5164 = vlaneseq
  %v5165 = vshrl.u32 %v5164, 7
  %v5166 = vsub.s32 0, %v5165
  %v5167 = vrot.slane %v5162, %v5166
  %v5171 = vunpack.c.l.b16 %v5159
  %v5172 = vunpack.c.l.b16 %v5160
  %v5173 = vpack.c.b16 %v5172, %v5171
  %v5176 = vsel %vm237, %v5157, 0
  %5178 = vmatprep.subr.bf16.mxu0 0
  %5179 = vmatpush1.bf16.msra.mxu0 0
  %5180 = vmatprep.subr.bf16.mxu0 0
  %5181 = vmatpush1.bf16.msra.mxu0 0
  %5182 = vmatprep.subr.bf16.mxu0 0
  %5183 = vmatpush1.bf16.msra.mxu0 0
  %5184 = vmatprep.subr.bf16.mxu0 0
  %5185 = vmatpush1.bf16.msra.mxu0 0
  %5186 = vmatprep.subr.bf16.mxu0 0
  %5187 = vmatpush1.bf16.msra.mxu0 0
  %5188 = vmatprep.subr.bf16.mxu0 0
  %5189 = vmatpush1.bf16.msra.mxu0 0
  %5190 = vmatprep.subr.bf16.mxu0 0
  %5191 = vmatpush1.bf16.msra.mxu0 0
  %5192 = vmatprep.subr.bf16.mxu0 0
  %5193 = vmatpush1.bf16.msra.mxu0 %v5173
  %5194 = vmatprep.subr.bf16.mxu0 0
  %5195 = vmatpush2.bf16.msra.mxu0 0
  %5196 = vmatprep.subr.bf16.mxu0 0
  %5197 = vmatpush2.bf16.msra.mxu0 0
  %5198 = vmatprep.subr.bf16.mxu0 0
  %5199 = vmatpush2.bf16.msra.mxu0 0
  %5200 = vmatprep.subr.bf16.mxu0 0
  %5201 = vmatpush2.bf16.msra.mxu0 0
  %5202 = vmatprep.subr.bf16.mxu0 0
  %5203 = vmatpush2.bf16.msra.mxu0 0
  %5204 = vmatprep.subr.bf16.mxu0 0
  %5205 = vmatpush2.bf16.msra.mxu0 0
  %5206 = vmatprep.subr.bf16.mxu0 0
  %5207 = vmatpush2.bf16.msra.mxu0 0
  %5208 = vmatprep.subr.bf16.mxu0 0
  %5209 = vmatpush2.bf16.msra.mxu0 0
  %5210 = vmatprep.mubr.bf16.mxu0 0
  %5211 = vmatmul.mubr.bf16.gmra.mxu0 %v5176
  %v5212 = vpop.f32.mrf.mxu0
  %v5213 = vadd.f32 %v5167, %v5212
  %v5214 = vpop.f32.mrf.mxu0
  %v5215 = vpop.f32.mrf.mxu0
  %v5216 = vadd.f32 %v5167, %v5215
  %v5217 = vpop.f32.mrf.mxu0
  %5218 = vdwg.mxu0
  %v5219 = vadd.f32 %v4175, %v5213
  %v5220 = vadd.f32 %v4176, %v5216
  %v5221 = vsel %vm237, %v5219, 0.0
  %5222 = vadd.xlane.f32.xlu0 %v5221
  %v5223 = vpop.xlane.xlu0 %5222
  %v5224 = vsel %vm237, %v5220, 0.0
  %5225 = vadd.xlane.f32.xlu0 %v5224
  %v5226 = vpop.xlane.xlu0 %5225
  %v5227 = vmul.f32 %v5223, %v1070
  %v5228 = vmul.f32 %v5226, %v1070
  %v5229 = vsub.f32 %v5219, %v5227
  %v5230 = vsub.f32 %v5220, %v5228
  %v5231 = vmul.f32 %v5229, %v5229
  %v5232 = vmul.f32 %v5230, %v5230
  %v5233 = vsel %vm237, %v5231, 0.0
  %5234 = vadd.xlane.f32.xlu0 %v5233
  %v5235 = vpop.xlane.xlu0 %5234
  %v5236 = vsel %vm237, %v5232, 0.0
  %5237 = vadd.xlane.f32.xlu0 %v5236
  %v5238 = vpop.xlane.xlu0 %5237
  %v5239 = vmul.f32 %v5235, %v1070
  %v5240 = vmul.f32 %v5238, %v1070
  %v5241 = vadd.f32 %v5239, 1e-05
  %v5242 = vadd.f32 %v5240, 1e-05
  %v5243 = vrsqrt.pop %v5241
  %v5244 = vrsqrt.pop %v5242
  %v5245 = vmul.f32 %v5229, %v5243
  %v5246 = vmul.f32 %v5230, %v5244
  %s5247 = scalar_lea.vmem %s41, 1
  %v5248 = vld [vmem:[%s5247] sm:$0x1]
  %v5250 = vlaneseq
  %v5251 = vshrl.u32 %v5250, 7
  %v5252 = vsub.s32 0, %v5251
  %v5253 = vrot.slane %v5248, %v5252
  %v5255 = vmul.f32 %v5245, %v5253
  %v5256 = vmul.f32 %v5246, %v5253
  %s5257 = scalar_lea.vmem %s43, 1
  %v5258 = vld [vmem:[%s5257] sm:$0x1]
  %v5260 = vlaneseq
  %v5261 = vshrl.u32 %v5260, 7
  %v5262 = vsub.s32 0, %v5261
  %v5263 = vrot.slane %v5258, %v5262
  %v5265 = vadd.f32 %v5255, %v5263
  %v5266 = vadd.f32 %v5256, %v5263
  %v5267 = vpack.c.bf16 %v5266, %v5265
  %s5268 = scalar_lea.vmem %s45, 128
  %v5269 = vld [vmem:[%s5268] sm:$0xff]
  %v5270 = vld [vmem:[%s5268 + $0x8] sm:$0xff]
  %v5271 = vld [vmem:[%s5268 + $0x10] sm:$0xff]
  %v5272 = vld [vmem:[%s5268 + $0x18] sm:$0xff]
  %v5273 = vld [vmem:[%s5268 + $0x20] sm:$0xff]
  %v5274 = vld [vmem:[%s5268 + $0x28] sm:$0xff]
  %v5275 = vld [vmem:[%s5268 + $0x30] sm:$0xff]
  %v5276 = vld [vmem:[%s5268 + $0x38] sm:$0xff]
  %v5277 = vld [vmem:[%s5268 + $0x40] sm:$0xff]
  %v5278 = vld [vmem:[%s5268 + $0x48] sm:$0xff]
  %v5279 = vld [vmem:[%s5268 + $0x50] sm:$0xff]
  %v5280 = vld [vmem:[%s5268 + $0x58] sm:$0xff]
  %v5281 = vld [vmem:[%s5268 + $0x60] sm:$0xff]
  %v5282 = vld [vmem:[%s5268 + $0x68] sm:$0xff]
  %v5283 = vld [vmem:[%s5268 + $0x70] sm:$0xff]
  %v5284 = vld [vmem:[%s5268 + $0x78] sm:$0xff]
  %s5285 = scalar_lea.vmem %s47, 16
  %v5286 = vld [vmem:[%s5285] sm:$0xff]
  %v5287 = vld [vmem:[%s5285 + $0x8] sm:$0xff]
  %v5290 = vlaneseq
  %v5291 = vshrl.u32 %v5290, 7
  %v5292 = vsub.s32 0, %v5291
  %v5293 = vrot.slane %v5286, %v5292
  %v5294 = vlaneseq
  %v5295 = vshrl.u32 %v5294, 7
  %v5296 = vsub.s32 1, %v5295
  %v5297 = vrot.slane %v5286, %v5296
  %v5298 = vlaneseq
  %v5299 = vshrl.u32 %v5298, 7
  %v5300 = vsub.s32 2, %v5299
  %v5301 = vrot.slane %v5286, %v5300
  %v5302 = vlaneseq
  %v5303 = vshrl.u32 %v5302, 7
  %v5304 = vsub.s32 3, %v5303
  %v5305 = vrot.slane %v5286, %v5304
  %v5306 = vlaneseq
  %v5307 = vshrl.u32 %v5306, 7
  %v5308 = vsub.s32 4, %v5307
  %v5309 = vrot.slane %v5286, %v5308
  %v5310 = vlaneseq
  %v5311 = vshrl.u32 %v5310, 7
  %v5312 = vsub.s32 5, %v5311
  %v5313 = vrot.slane %v5286, %v5312
  %v5314 = vlaneseq
  %v5315 = vshrl.u32 %v5314, 7
  %v5316 = vsub.s32 6, %v5315
  %v5317 = vrot.slane %v5286, %v5316
  %v5318 = vlaneseq
  %v5319 = vshrl.u32 %v5318, 7
  %v5320 = vsub.s32 7, %v5319
  %v5321 = vrot.slane %v5286, %v5320
  %v5322 = vlaneseq
  %v5323 = vshrl.u32 %v5322, 7
  %v5324 = vsub.s32 0, %v5323
  %v5325 = vrot.slane %v5287, %v5324
  %v5326 = vlaneseq
  %v5327 = vshrl.u32 %v5326, 7
  %v5328 = vsub.s32 1, %v5327
  %v5329 = vrot.slane %v5287, %v5328
  %v5330 = vlaneseq
  %v5331 = vshrl.u32 %v5330, 7
  %v5332 = vsub.s32 2, %v5331
  %v5333 = vrot.slane %v5287, %v5332
  %v5334 = vlaneseq
  %v5335 = vshrl.u32 %v5334, 7
  %v5336 = vsub.s32 3, %v5335
  %v5337 = vrot.slane %v5287, %v5336
  %v5338 = vlaneseq
  %v5339 = vshrl.u32 %v5338, 7
  %v5340 = vsub.s32 4, %v5339
  %v5341 = vrot.slane %v5287, %v5340
  %v5342 = vlaneseq
  %v5343 = vshrl.u32 %v5342, 7
  %v5344 = vsub.s32 5, %v5343
  %v5345 = vrot.slane %v5287, %v5344
  %v5346 = vlaneseq
  %v5347 = vshrl.u32 %v5346, 7
  %v5348 = vsub.s32 6, %v5347
  %v5349 = vrot.slane %v5287, %v5348
  %v5350 = vlaneseq
  %v5351 = vshrl.u32 %v5350, 7
  %v5352 = vsub.s32 7, %v5351
  %v5353 = vrot.slane %v5287, %v5352
  %v5386 = vunpack.c.l.b16 %v5269
  %v5387 = vunpack.c.h.b16 %v5269
  %v5388 = vunpack.c.l.b16 %v5270
  %v5389 = vunpack.c.h.b16 %v5270
  %v5390 = vunpack.c.l.b16 %v5271
  %v5391 = vunpack.c.h.b16 %v5271
  %v5392 = vunpack.c.l.b16 %v5272
  %v5393 = vunpack.c.h.b16 %v5272
  %v5394 = vunpack.c.l.b16 %v5273
  %v5395 = vunpack.c.h.b16 %v5273
  %v5396 = vunpack.c.l.b16 %v5274
  %v5397 = vunpack.c.h.b16 %v5274
  %v5398 = vunpack.c.l.b16 %v5275
  %v5399 = vunpack.c.h.b16 %v5275
  %v5400 = vunpack.c.l.b16 %v5276
  %v5401 = vunpack.c.h.b16 %v5276
  %v5402 = vunpack.c.l.b16 %v5277
  %v5403 = vunpack.c.h.b16 %v5277
  %v5404 = vunpack.c.l.b16 %v5278
  %v5405 = vunpack.c.h.b16 %v5278
  %v5406 = vunpack.c.l.b16 %v5279
  %v5407 = vunpack.c.h.b16 %v5279
  %v5408 = vunpack.c.l.b16 %v5280
  %v5409 = vunpack.c.h.b16 %v5280
  %v5410 = vunpack.c.l.b16 %v5281
  %v5411 = vunpack.c.h.b16 %v5281
  %v5412 = vunpack.c.l.b16 %v5282
  %v5413 = vunpack.c.h.b16 %v5282
  %v5414 = vunpack.c.l.b16 %v5283
  %v5415 = vunpack.c.h.b16 %v5283
  %v5416 = vunpack.c.l.b16 %v5284
  %v5417 = vunpack.c.h.b16 %v5284
  %v5418 = vpack.c.b16 %v5402, %v5386
  %v5419 = vpack.c.b16 %v5403, %v5387
  %v5420 = vpack.c.b16 %v5404, %v5388
  %v5421 = vpack.c.b16 %v5405, %v5389
  %v5422 = vpack.c.b16 %v5406, %v5390
  %v5423 = vpack.c.b16 %v5407, %v5391
  %v5424 = vpack.c.b16 %v5408, %v5392
  %v5425 = vpack.c.b16 %v5409, %v5393
  %v5426 = vpack.c.b16 %v5410, %v5394
  %v5427 = vpack.c.b16 %v5411, %v5395
  %v5428 = vpack.c.b16 %v5412, %v5396
  %v5429 = vpack.c.b16 %v5413, %v5397
  %v5430 = vpack.c.b16 %v5414, %v5398
  %v5431 = vpack.c.b16 %v5415, %v5399
  %v5432 = vpack.c.b16 %v5416, %v5400
  %v5433 = vpack.c.b16 %v5417, %v5401
  %v5451 = vsel %vm237, %v5267, 0
  %5453 = vmatprep.subr.bf16.mxu0 0
  %5454 = vmatpush1.bf16.msra.mxu0 0
  %5455 = vmatprep.subr.bf16.mxu0 0
  %5456 = vmatpush1.bf16.msra.mxu0 0
  %5457 = vmatprep.subr.bf16.mxu0 0
  %5458 = vmatpush1.bf16.msra.mxu0 0
  %5459 = vmatprep.subr.bf16.mxu0 0
  %5460 = vmatpush1.bf16.msra.mxu0 0
  %5461 = vmatprep.subr.bf16.mxu0 0
  %5462 = vmatpush1.bf16.msra.mxu0 0
  %5463 = vmatprep.subr.bf16.mxu0 0
  %5464 = vmatpush1.bf16.msra.mxu0 0
  %5465 = vmatprep.subr.bf16.mxu0 0
  %5466 = vmatpush1.bf16.msra.mxu0 0
  %5467 = vmatprep.subr.bf16.mxu0 %v5419
  %5468 = vmatpush1.bf16.msra.mxu0 %v5418
  %5469 = vmatprep.subr.bf16.mxu0 0
  %5470 = vmatpush2.bf16.msra.mxu0 0
  %5471 = vmatprep.subr.bf16.mxu0 0
  %5472 = vmatpush2.bf16.msra.mxu0 0
  %5473 = vmatprep.subr.bf16.mxu0 0
  %5474 = vmatpush2.bf16.msra.mxu0 0
  %5475 = vmatprep.subr.bf16.mxu0 0
  %5476 = vmatpush2.bf16.msra.mxu0 0
  %5477 = vmatprep.subr.bf16.mxu0 0
  %5478 = vmatpush2.bf16.msra.mxu0 0
  %5479 = vmatprep.subr.bf16.mxu0 0
  %5480 = vmatpush2.bf16.msra.mxu0 0
  %5481 = vmatprep.subr.bf16.mxu0 0
  %5482 = vmatpush2.bf16.msra.mxu0 0
  %5483 = vmatprep.subr.bf16.mxu0 0
  %5484 = vmatpush2.bf16.msra.mxu0 0
  %5485 = vmatprep.mubr.bf16.mxu0 0
  %5486 = vmatmul.mubr.bf16.gmra.mxu0 %v5451
  %v5487 = vpop.f32.mrf.mxu0
  %v5488 = vadd.f32 %v5293, %v5487
  %v5489 = vpop.f32.mrf.mxu0
  %v5490 = vadd.f32 %v5297, %v5489
  %v5491 = vpop.f32.mrf.mxu0
  %v5492 = vadd.f32 %v5293, %v5491
  %v5493 = vpop.f32.mrf.mxu0
  %v5494 = vadd.f32 %v5297, %v5493
  %5495 = vdwg.mxu0
  %5496 = vmatprep.subr.bf16.mxu0 0
  %5497 = vmatpush1.bf16.msra.mxu0 0
  %5498 = vmatprep.subr.bf16.mxu0 0
  %5499 = vmatpush1.bf16.msra.mxu0 0
  %5500 = vmatprep.subr.bf16.mxu0 0
  %5501 = vmatpush1.bf16.msra.mxu0 0
  %5502 = vmatprep.subr.bf16.mxu0 0
  %5503 = vmatpush1.bf16.msra.mxu0 0
  %5504 = vmatprep.subr.bf16.mxu0 0
  %5505 = vmatpush1.bf16.msra.mxu0 0
  %5506 = vmatprep.subr.bf16.mxu0 0
  %5507 = vmatpush1.bf16.msra.mxu0 0
  %5508 = vmatprep.subr.bf16.mxu0 0
  %5509 = vmatpush1.bf16.msra.mxu0 0
  %5510 = vmatprep.subr.bf16.mxu0 %v5421
  %5511 = vmatpush1.bf16.msra.mxu0 %v5420
  %5512 = vmatprep.subr.bf16.mxu0 0
  %5513 = vmatpush2.bf16.msra.mxu0 0
  %5514 = vmatprep.subr.bf16.mxu0 0
  %5515 = vmatpush2.bf16.msra.mxu0 0
  %5516 = vmatprep.subr.bf16.mxu0 0
  %5517 = vmatpush2.bf16.msra.mxu0 0
  %5518 = vmatprep.subr.bf16.mxu0 0
  %5519 = vmatpush2.bf16.msra.mxu0 0
  %5520 = vmatprep.subr.bf16.mxu0 0
  %5521 = vmatpush2.bf16.msra.mxu0 0
  %5522 = vmatprep.subr.bf16.mxu0 0
  %5523 = vmatpush2.bf16.msra.mxu0 0
  %5524 = vmatprep.subr.bf16.mxu0 0
  %5525 = vmatpush2.bf16.msra.mxu0 0
  %5526 = vmatprep.subr.bf16.mxu0 0
  %5527 = vmatpush2.bf16.msra.mxu0 0
  %5528 = vmatprep.mubr.bf16.mxu0 0
  %5529 = vmatmul.mubr.bf16.gmra.mxu0 %v5451
  %v5530 = vpop.f32.mrf.mxu0
  %v5531 = vadd.f32 %v5301, %v5530
  %v5532 = vpop.f32.mrf.mxu0
  %v5533 = vadd.f32 %v5305, %v5532
  %v5534 = vpop.f32.mrf.mxu0
  %v5535 = vadd.f32 %v5301, %v5534
  %v5536 = vpop.f32.mrf.mxu0
  %v5537 = vadd.f32 %v5305, %v5536
  %5538 = vdwg.mxu0
  %5539 = vmatprep.subr.bf16.mxu0 0
  %5540 = vmatpush1.bf16.msra.mxu0 0
  %5541 = vmatprep.subr.bf16.mxu0 0
  %5542 = vmatpush1.bf16.msra.mxu0 0
  %5543 = vmatprep.subr.bf16.mxu0 0
  %5544 = vmatpush1.bf16.msra.mxu0 0
  %5545 = vmatprep.subr.bf16.mxu0 0
  %5546 = vmatpush1.bf16.msra.mxu0 0
  %5547 = vmatprep.subr.bf16.mxu0 0
  %5548 = vmatpush1.bf16.msra.mxu0 0
  %5549 = vmatprep.subr.bf16.mxu0 0
  %5550 = vmatpush1.bf16.msra.mxu0 0
  %5551 = vmatprep.subr.bf16.mxu0 0
  %5552 = vmatpush1.bf16.msra.mxu0 0
  %5553 = vmatprep.subr.bf16.mxu0 %v5423
  %5554 = vmatpush1.bf16.msra.mxu0 %v5422
  %5555 = vmatprep.subr.bf16.mxu0 0
  %5556 = vmatpush2.bf16.msra.mxu0 0
  %5557 = vmatprep.subr.bf16.mxu0 0
  %5558 = vmatpush2.bf16.msra.mxu0 0
  %5559 = vmatprep.subr.bf16.mxu0 0
  %5560 = vmatpush2.bf16.msra.mxu0 0
  %5561 = vmatprep.subr.bf16.mxu0 0
  %5562 = vmatpush2.bf16.msra.mxu0 0
  %5563 = vmatprep.subr.bf16.mxu0 0
  %5564 = vmatpush2.bf16.msra.mxu0 0
  %5565 = vmatprep.subr.bf16.mxu0 0
  %5566 = vmatpush2.bf16.msra.mxu0 0
  %5567 = vmatprep.subr.bf16.mxu0 0
  %5568 = vmatpush2.bf16.msra.mxu0 0
  %5569 = vmatprep.subr.bf16.mxu0 0
  %5570 = vmatpush2.bf16.msra.mxu0 0
  %5571 = vmatprep.mubr.bf16.mxu0 0
  %5572 = vmatmul.mubr.bf16.gmra.mxu0 %v5451
  %v5573 = vpop.f32.mrf.mxu0
  %v5574 = vadd.f32 %v5309, %v5573
  %v5575 = vpop.f32.mrf.mxu0
  %v5576 = vadd.f32 %v5313, %v5575
  %v5577 = vpop.f32.mrf.mxu0
  %v5578 = vadd.f32 %v5309, %v5577
  %v5579 = vpop.f32.mrf.mxu0
  %v5580 = vadd.f32 %v5313, %v5579
  %5581 = vdwg.mxu0
  %5582 = vmatprep.subr.bf16.mxu0 0
  %5583 = vmatpush1.bf16.msra.mxu0 0
  %5584 = vmatprep.subr.bf16.mxu0 0
  %5585 = vmatpush1.bf16.msra.mxu0 0
  %5586 = vmatprep.subr.bf16.mxu0 0
  %5587 = vmatpush1.bf16.msra.mxu0 0
  %5588 = vmatprep.subr.bf16.mxu0 0
  %5589 = vmatpush1.bf16.msra.mxu0 0
  %5590 = vmatprep.subr.bf16.mxu0 0
  %5591 = vmatpush1.bf16.msra.mxu0 0
  %5592 = vmatprep.subr.bf16.mxu0 0
  %5593 = vmatpush1.bf16.msra.mxu0 0
  %5594 = vmatprep.subr.bf16.mxu0 0
  %5595 = vmatpush1.bf16.msra.mxu0 0
  %5596 = vmatprep.subr.bf16.mxu0 %v5425
  %5597 = vmatpush1.bf16.msra.mxu0 %v5424
  %5598 = vmatprep.subr.bf16.mxu0 0
  %5599 = vmatpush2.bf16.msra.mxu0 0
  %5600 = vmatprep.subr.bf16.mxu0 0
  %5601 = vmatpush2.bf16.msra.mxu0 0
  %5602 = vmatprep.subr.bf16.mxu0 0
  %5603 = vmatpush2.bf16.msra.mxu0 0
  %5604 = vmatprep.subr.bf16.mxu0 0
  %5605 = vmatpush2.bf16.msra.mxu0 0
  %5606 = vmatprep.subr.bf16.mxu0 0
  %5607 = vmatpush2.bf16.msra.mxu0 0
  %5608 = vmatprep.subr.bf16.mxu0 0
  %5609 = vmatpush2.bf16.msra.mxu0 0
  %5610 = vmatprep.subr.bf16.mxu0 0
  %5611 = vmatpush2.bf16.msra.mxu0 0
  %5612 = vmatprep.subr.bf16.mxu0 0
  %5613 = vmatpush2.bf16.msra.mxu0 0
  %5614 = vmatprep.mubr.bf16.mxu0 0
  %5615 = vmatmul.mubr.bf16.gmra.mxu0 %v5451
  %v5616 = vpop.f32.mrf.mxu0
  %v5617 = vadd.f32 %v5317, %v5616
  %v5618 = vpop.f32.mrf.mxu0
  %v5619 = vadd.f32 %v5321, %v5618
  %v5620 = vpop.f32.mrf.mxu0
  %v5621 = vadd.f32 %v5317, %v5620
  %v5622 = vpop.f32.mrf.mxu0
  %v5623 = vadd.f32 %v5321, %v5622
  %5624 = vdwg.mxu0
  %5625 = vmatprep.subr.bf16.mxu0 0
  %5626 = vmatpush1.bf16.msra.mxu0 0
  %5627 = vmatprep.subr.bf16.mxu0 0
  %5628 = vmatpush1.bf16.msra.mxu0 0
  %5629 = vmatprep.subr.bf16.mxu0 0
  %5630 = vmatpush1.bf16.msra.mxu0 0
  %5631 = vmatprep.subr.bf16.mxu0 0
  %5632 = vmatpush1.bf16.msra.mxu0 0
  %5633 = vmatprep.subr.bf16.mxu0 0
  %5634 = vmatpush1.bf16.msra.mxu0 0
  %5635 = vmatprep.subr.bf16.mxu0 0
  %5636 = vmatpush1.bf16.msra.mxu0 0
  %5637 = vmatprep.subr.bf16.mxu0 0
  %5638 = vmatpush1.bf16.msra.mxu0 0
  %5639 = vmatprep.subr.bf16.mxu0 %v5427
  %5640 = vmatpush1.bf16.msra.mxu0 %v5426
  %5641 = vmatprep.subr.bf16.mxu0 0
  %5642 = vmatpush2.bf16.msra.mxu0 0
  %5643 = vmatprep.subr.bf16.mxu0 0
  %5644 = vmatpush2.bf16.msra.mxu0 0
  %5645 = vmatprep.subr.bf16.mxu0 0
  %5646 = vmatpush2.bf16.msra.mxu0 0
  %5647 = vmatprep.subr.bf16.mxu0 0
  %5648 = vmatpush2.bf16.msra.mxu0 0
  %5649 = vmatprep.subr.bf16.mxu0 0
  %5650 = vmatpush2.bf16.msra.mxu0 0
  %5651 = vmatprep.subr.bf16.mxu0 0
  %5652 = vmatpush2.bf16.msra.mxu0 0
  %5653 = vmatprep.subr.bf16.mxu0 0
  %5654 = vmatpush2.bf16.msra.mxu0 0
  %5655 = vmatprep.subr.bf16.mxu0 0
  %5656 = vmatpush2.bf16.msra.mxu0 0
  %5657 = vmatprep.mubr.bf16.mxu0 0
  %5658 = vmatmul.mubr.bf16.gmra.mxu0 %v5451
  %v5659 = vpop.f32.mrf.mxu0
  %v5660 = vadd.f32 %v5325, %v5659
  %v5661 = vpop.f32.mrf.mxu0
  %v5662 = vadd.f32 %v5329, %v5661
  %v5663 = vpop.f32.mrf.mxu0
  %v5664 = vadd.f32 %v5325, %v5663
  %v5665 = vpop.f32.mrf.mxu0
  %v5666 = vadd.f32 %v5329, %v5665
  %5667 = vdwg.mxu0
  %5668 = vmatprep.subr.bf16.mxu0 0
  %5669 = vmatpush1.bf16.msra.mxu0 0
  %5670 = vmatprep.subr.bf16.mxu0 0
  %5671 = vmatpush1.bf16.msra.mxu0 0
  %5672 = vmatprep.subr.bf16.mxu0 0
  %5673 = vmatpush1.bf16.msra.mxu0 0
  %5674 = vmatprep.subr.bf16.mxu0 0
  %5675 = vmatpush1.bf16.msra.mxu0 0
  %5676 = vmatprep.subr.bf16.mxu0 0
  %5677 = vmatpush1.bf16.msra.mxu0 0
  %5678 = vmatprep.subr.bf16.mxu0 0
  %5679 = vmatpush1.bf16.msra.mxu0 0
  %5680 = vmatprep.subr.bf16.mxu0 0
  %5681 = vmatpush1.bf16.msra.mxu0 0
  %5682 = vmatprep.subr.bf16.mxu0 %v5429
  %5683 = vmatpush1.bf16.msra.mxu0 %v5428
  %5684 = vmatprep.subr.bf16.mxu0 0
  %5685 = vmatpush2.bf16.msra.mxu0 0
  %5686 = vmatprep.subr.bf16.mxu0 0
  %5687 = vmatpush2.bf16.msra.mxu0 0
  %5688 = vmatprep.subr.bf16.mxu0 0
  %5689 = vmatpush2.bf16.msra.mxu0 0
  %5690 = vmatprep.subr.bf16.mxu0 0
  %5691 = vmatpush2.bf16.msra.mxu0 0
  %5692 = vmatprep.subr.bf16.mxu0 0
  %5693 = vmatpush2.bf16.msra.mxu0 0
  %5694 = vmatprep.subr.bf16.mxu0 0
  %5695 = vmatpush2.bf16.msra.mxu0 0
  %5696 = vmatprep.subr.bf16.mxu0 0
  %5697 = vmatpush2.bf16.msra.mxu0 0
  %5698 = vmatprep.subr.bf16.mxu0 0
  %5699 = vmatpush2.bf16.msra.mxu0 0
  %5700 = vmatprep.mubr.bf16.mxu0 0
  %5701 = vmatmul.mubr.bf16.gmra.mxu0 %v5451
  %v5702 = vpop.f32.mrf.mxu0
  %v5703 = vadd.f32 %v5333, %v5702
  %v5704 = vpop.f32.mrf.mxu0
  %v5705 = vadd.f32 %v5337, %v5704
  %v5706 = vpop.f32.mrf.mxu0
  %v5707 = vadd.f32 %v5333, %v5706
  %v5708 = vpop.f32.mrf.mxu0
  %v5709 = vadd.f32 %v5337, %v5708
  %5710 = vdwg.mxu0
  %5711 = vmatprep.subr.bf16.mxu0 0
  %5712 = vmatpush1.bf16.msra.mxu0 0
  %5713 = vmatprep.subr.bf16.mxu0 0
  %5714 = vmatpush1.bf16.msra.mxu0 0
  %5715 = vmatprep.subr.bf16.mxu0 0
  %5716 = vmatpush1.bf16.msra.mxu0 0
  %5717 = vmatprep.subr.bf16.mxu0 0
  %5718 = vmatpush1.bf16.msra.mxu0 0
  %5719 = vmatprep.subr.bf16.mxu0 0
  %5720 = vmatpush1.bf16.msra.mxu0 0
  %5721 = vmatprep.subr.bf16.mxu0 0
  %5722 = vmatpush1.bf16.msra.mxu0 0
  %5723 = vmatprep.subr.bf16.mxu0 0
  %5724 = vmatpush1.bf16.msra.mxu0 0
  %5725 = vmatprep.subr.bf16.mxu0 %v5431
  %5726 = vmatpush1.bf16.msra.mxu0 %v5430
  %5727 = vmatprep.subr.bf16.mxu0 0
  %5728 = vmatpush2.bf16.msra.mxu0 0
  %5729 = vmatprep.subr.bf16.mxu0 0
  %5730 = vmatpush2.bf16.msra.mxu0 0
  %5731 = vmatprep.subr.bf16.mxu0 0
  %5732 = vmatpush2.bf16.msra.mxu0 0
  %5733 = vmatprep.subr.bf16.mxu0 0
  %5734 = vmatpush2.bf16.msra.mxu0 0
  %5735 = vmatprep.subr.bf16.mxu0 0
  %5736 = vmatpush2.bf16.msra.mxu0 0
  %5737 = vmatprep.subr.bf16.mxu0 0
  %5738 = vmatpush2.bf16.msra.mxu0 0
  %5739 = vmatprep.subr.bf16.mxu0 0
  %5740 = vmatpush2.bf16.msra.mxu0 0
  %5741 = vmatprep.subr.bf16.mxu0 0
  %5742 = vmatpush2.bf16.msra.mxu0 0
  %5743 = vmatprep.mubr.bf16.mxu0 0
  %5744 = vmatmul.mubr.bf16.gmra.mxu0 %v5451
  %v5745 = vpop.f32.mrf.mxu0
  %v5746 = vadd.f32 %v5341, %v5745
  %v5747 = vpop.f32.mrf.mxu0
  %v5748 = vadd.f32 %v5345, %v5747
  %v5749 = vpop.f32.mrf.mxu0
  %v5750 = vadd.f32 %v5341, %v5749
  %v5751 = vpop.f32.mrf.mxu0
  %v5752 = vadd.f32 %v5345, %v5751
  %5753 = vdwg.mxu0
  %5754 = vmatprep.subr.bf16.mxu0 0
  %5755 = vmatpush1.bf16.msra.mxu0 0
  %5756 = vmatprep.subr.bf16.mxu0 0
  %5757 = vmatpush1.bf16.msra.mxu0 0
  %5758 = vmatprep.subr.bf16.mxu0 0
  %5759 = vmatpush1.bf16.msra.mxu0 0
  %5760 = vmatprep.subr.bf16.mxu0 0
  %5761 = vmatpush1.bf16.msra.mxu0 0
  %5762 = vmatprep.subr.bf16.mxu0 0
  %5763 = vmatpush1.bf16.msra.mxu0 0
  %5764 = vmatprep.subr.bf16.mxu0 0
  %5765 = vmatpush1.bf16.msra.mxu0 0
  %5766 = vmatprep.subr.bf16.mxu0 0
  %5767 = vmatpush1.bf16.msra.mxu0 0
  %5768 = vmatprep.subr.bf16.mxu0 %v5433
  %5769 = vmatpush1.bf16.msra.mxu0 %v5432
  %5770 = vmatprep.subr.bf16.mxu0 0
  %5771 = vmatpush2.bf16.msra.mxu0 0
  %5772 = vmatprep.subr.bf16.mxu0 0
  %5773 = vmatpush2.bf16.msra.mxu0 0
  %5774 = vmatprep.subr.bf16.mxu0 0
  %5775 = vmatpush2.bf16.msra.mxu0 0
  %5776 = vmatprep.subr.bf16.mxu0 0
  %5777 = vmatpush2.bf16.msra.mxu0 0
  %5778 = vmatprep.subr.bf16.mxu0 0
  %5779 = vmatpush2.bf16.msra.mxu0 0
  %5780 = vmatprep.subr.bf16.mxu0 0
  %5781 = vmatpush2.bf16.msra.mxu0 0
  %5782 = vmatprep.subr.bf16.mxu0 0
  %5783 = vmatpush2.bf16.msra.mxu0 0
  %5784 = vmatprep.subr.bf16.mxu0 0
  %5785 = vmatpush2.bf16.msra.mxu0 0
  %5786 = vmatprep.mubr.bf16.mxu0 0
  %5787 = vmatmul.mubr.bf16.gmra.mxu0 %v5451
  %v5788 = vpop.f32.mrf.mxu0
  %v5789 = vadd.f32 %v5349, %v5788
  %v5790 = vpop.f32.mrf.mxu0
  %v5791 = vadd.f32 %v5353, %v5790
  %v5792 = vpop.f32.mrf.mxu0
  %v5793 = vadd.f32 %v5349, %v5792
  %v5794 = vpop.f32.mrf.mxu0
  %v5795 = vadd.f32 %v5353, %v5794
  %5796 = vdwg.mxu0
  %v5797 = vmax.f32 %v5488, 0.0
  %v5798 = vmax.f32 %v5490, 0.0
  %v5799 = vmax.f32 %v5531, 0.0
  %v5800 = vmax.f32 %v5533, 0.0
  %v5801 = vmax.f32 %v5574, 0.0
  %v5802 = vmax.f32 %v5576, 0.0
  %v5803 = vmax.f32 %v5617, 0.0
  %v5804 = vmax.f32 %v5619, 0.0
  %v5805 = vmax.f32 %v5660, 0.0
  %v5806 = vmax.f32 %v5662, 0.0
  %v5807 = vmax.f32 %v5703, 0.0
  %v5808 = vmax.f32 %v5705, 0.0
  %v5809 = vmax.f32 %v5746, 0.0
  %v5810 = vmax.f32 %v5748, 0.0
  %v5811 = vmax.f32 %v5789, 0.0
  %v5812 = vmax.f32 %v5791, 0.0
  %v5813 = vmax.f32 %v5492, 0.0
  %v5814 = vmax.f32 %v5494, 0.0
  %v5815 = vmax.f32 %v5535, 0.0
  %v5816 = vmax.f32 %v5537, 0.0
  %v5817 = vmax.f32 %v5578, 0.0
  %v5818 = vmax.f32 %v5580, 0.0
  %v5819 = vmax.f32 %v5621, 0.0
  %v5820 = vmax.f32 %v5623, 0.0
  %v5821 = vmax.f32 %v5664, 0.0
  %v5822 = vmax.f32 %v5666, 0.0
  %v5823 = vmax.f32 %v5707, 0.0
  %v5824 = vmax.f32 %v5709, 0.0
  %v5825 = vmax.f32 %v5750, 0.0
  %v5826 = vmax.f32 %v5752, 0.0
  %v5827 = vmax.f32 %v5793, 0.0
  %v5828 = vmax.f32 %v5795, 0.0
  %v5829 = vpack.c.bf16 %v5813, %v5797
  %v5830 = vpack.c.bf16 %v5814, %v5798
  %v5831 = vpack.c.bf16 %v5815, %v5799
  %v5832 = vpack.c.bf16 %v5816, %v5800
  %v5833 = vpack.c.bf16 %v5817, %v5801
  %v5834 = vpack.c.bf16 %v5818, %v5802
  %v5835 = vpack.c.bf16 %v5819, %v5803
  %v5836 = vpack.c.bf16 %v5820, %v5804
  %v5837 = vpack.c.bf16 %v5821, %v5805
  %v5838 = vpack.c.bf16 %v5822, %v5806
  %v5839 = vpack.c.bf16 %v5823, %v5807
  %v5840 = vpack.c.bf16 %v5824, %v5808
  %v5841 = vpack.c.bf16 %v5825, %v5809
  %v5842 = vpack.c.bf16 %v5826, %v5810
  %v5843 = vpack.c.bf16 %v5827, %v5811
  %v5844 = vpack.c.bf16 %v5828, %v5812
  %s5845 = scalar_lea.vmem %s49, 1024
  %v5846 = vld [vmem:[%s5845] sm:$0xf]
  %v5847 = vld [vmem:[%s5845 + $0x4] sm:$0xf]
  %v5848 = vld [vmem:[%s5845 + $0x8] sm:$0xf]
  %v5849 = vld [vmem:[%s5845 + $0xc] sm:$0xf]
  %v5850 = vld [vmem:[%s5845 + $0x10] sm:$0xf]
  %v5851 = vld [vmem:[%s5845 + $0x14] sm:$0xf]
  %v5852 = vld [vmem:[%s5845 + $0x18] sm:$0xf]
  %v5853 = vld [vmem:[%s5845 + $0x1c] sm:$0xf]
  %v5854 = vld [vmem:[%s5845 + $0x20] sm:$0xf]
  %v5855 = vld [vmem:[%s5845 + $0x24] sm:$0xf]
  %v5856 = vld [vmem:[%s5845 + $0x28] sm:$0xf]
  %v5857 = vld [vmem:[%s5845 + $0x2c] sm:$0xf]
  %v5858 = vld [vmem:[%s5845 + $0x30] sm:$0xf]
  %v5859 = vld [vmem:[%s5845 + $0x34] sm:$0xf]
  %v5860 = vld [vmem:[%s5845 + $0x38] sm:$0xf]
  %v5861 = vld [vmem:[%s5845 + $0x3c] sm:$0xf]
  %v5862 = vld [vmem:[%s5845 + $0x40] sm:$0xf]
  %v5863 = vld [vmem:[%s5845 + $0x44] sm:$0xf]
  %v5864 = vld [vmem:[%s5845 + $0x48] sm:$0xf]
  %v5865 = vld [vmem:[%s5845 + $0x4c] sm:$0xf]
  %v5866 = vld [vmem:[%s5845 + $0x50] sm:$0xf]
  %v5867 = vld [vmem:[%s5845 + $0x54] sm:$0xf]
  %v5868 = vld [vmem:[%s5845 + $0x58] sm:$0xf]
  %v5869 = vld [vmem:[%s5845 + $0x5c] sm:$0xf]
  %v5870 = vld [vmem:[%s5845 + $0x60] sm:$0xf]
  %v5871 = vld [vmem:[%s5845 + $0x64] sm:$0xf]
  %v5872 = vld [vmem:[%s5845 + $0x68] sm:$0xf]
  %v5873 = vld [vmem:[%s5845 + $0x6c] sm:$0xf]
  %v5874 = vld [vmem:[%s5845 + $0x70] sm:$0xf]
  %v5875 = vld [vmem:[%s5845 + $0x74] sm:$0xf]
  %v5876 = vld [vmem:[%s5845 + $0x78] sm:$0xf]
  %v5877 = vld [vmem:[%s5845 + $0x7c] sm:$0xf]
  %v5878 = vld [vmem:[%s5845 + $0x80] sm:$0xf]
  %v5879 = vld [vmem:[%s5845 + $0x84] sm:$0xf]
  %v5880 = vld [vmem:[%s5845 + $0x88] sm:$0xf]
  %v5881 = vld [vmem:[%s5845 + $0x8c] sm:$0xf]
  %v5882 = vld [vmem:[%s5845 + $0x90] sm:$0xf]
  %v5883 = vld [vmem:[%s5845 + $0x94] sm:$0xf]
  %v5884 = vld [vmem:[%s5845 + $0x98] sm:$0xf]
  %v5885 = vld [vmem:[%s5845 + $0x9c] sm:$0xf]
  %v5886 = vld [vmem:[%s5845 + $0xa0] sm:$0xf]
  %v5887 = vld [vmem:[%s5845 + $0xa4] sm:$0xf]
  %v5888 = vld [vmem:[%s5845 + $0xa8] sm:$0xf]
  %v5889 = vld [vmem:[%s5845 + $0xac] sm:$0xf]
  %v5890 = vld [vmem:[%s5845 + $0xb0] sm:$0xf]
  %v5891 = vld [vmem:[%s5845 + $0xb4] sm:$0xf]
  %v5892 = vld [vmem:[%s5845 + $0xb8] sm:$0xf]
  %v5893 = vld [vmem:[%s5845 + $0xbc] sm:$0xf]
  %v5894 = vld [vmem:[%s5845 + $0xc0] sm:$0xf]
  %v5895 = vld [vmem:[%s5845 + $0xc4] sm:$0xf]
  %v5896 = vld [vmem:[%s5845 + $0xc8] sm:$0xf]
  %v5897 = vld [vmem:[%s5845 + $0xcc] sm:$0xf]
  %v5898 = vld [vmem:[%s5845 + $0xd0] sm:$0xf]
  %v5899 = vld [vmem:[%s5845 + $0xd4] sm:$0xf]
  %v5900 = vld [vmem:[%s5845 + $0xd8] sm:$0xf]
  %v5901 = vld [vmem:[%s5845 + $0xdc] sm:$0xf]
  %v5902 = vld [vmem:[%s5845 + $0xe0] sm:$0xf]
  %v5903 = vld [vmem:[%s5845 + $0xe4] sm:$0xf]
  %v5904 = vld [vmem:[%s5845 + $0xe8] sm:$0xf]
  %v5905 = vld [vmem:[%s5845 + $0xec] sm:$0xf]
  %v5906 = vld [vmem:[%s5845 + $0xf0] sm:$0xf]
  %v5907 = vld [vmem:[%s5845 + $0xf4] sm:$0xf]
  %v5908 = vld [vmem:[%s5845 + $0xf8] sm:$0xf]
  %v5909 = vld [vmem:[%s5845 + $0xfc] sm:$0xf]
  %v5910 = vld [vmem:[%s5845 + $0x100] sm:$0xf]
  %v5911 = vld [vmem:[%s5845 + $0x104] sm:$0xf]
  %v5912 = vld [vmem:[%s5845 + $0x108] sm:$0xf]
  %v5913 = vld [vmem:[%s5845 + $0x10c] sm:$0xf]
  %v5914 = vld [vmem:[%s5845 + $0x110] sm:$0xf]
  %v5915 = vld [vmem:[%s5845 + $0x114] sm:$0xf]
  %v5916 = vld [vmem:[%s5845 + $0x118] sm:$0xf]
  %v5917 = vld [vmem:[%s5845 + $0x11c] sm:$0xf]
  %v5918 = vld [vmem:[%s5845 + $0x120] sm:$0xf]
  %v5919 = vld [vmem:[%s5845 + $0x124] sm:$0xf]
  %v5920 = vld [vmem:[%s5845 + $0x128] sm:$0xf]
  %v5921 = vld [vmem:[%s5845 + $0x12c] sm:$0xf]
  %v5922 = vld [vmem:[%s5845 + $0x130] sm:$0xf]
  %v5923 = vld [vmem:[%s5845 + $0x134] sm:$0xf]
  %v5924 = vld [vmem:[%s5845 + $0x138] sm:$0xf]
  %v5925 = vld [vmem:[%s5845 + $0x13c] sm:$0xf]
  %v5926 = vld [vmem:[%s5845 + $0x140] sm:$0xf]
  %v5927 = vld [vmem:[%s5845 + $0x144] sm:$0xf]
  %v5928 = vld [vmem:[%s5845 + $0x148] sm:$0xf]
  %v5929 = vld [vmem:[%s5845 + $0x14c] sm:$0xf]
  %v5930 = vld [vmem:[%s5845 + $0x150] sm:$0xf]
  %v5931 = vld [vmem:[%s5845 + $0x154] sm:$0xf]
  %v5932 = vld [vmem:[%s5845 + $0x158] sm:$0xf]
  %v5933 = vld [vmem:[%s5845 + $0x15c] sm:$0xf]
  %v5934 = vld [vmem:[%s5845 + $0x160] sm:$0xf]
  %v5935 = vld [vmem:[%s5845 + $0x164] sm:$0xf]
  %v5936 = vld [vmem:[%s5845 + $0x168] sm:$0xf]
  %v5937 = vld [vmem:[%s5845 + $0x16c] sm:$0xf]
  %v5938 = vld [vmem:[%s5845 + $0x170] sm:$0xf]
  %v5939 = vld [vmem:[%s5845 + $0x174] sm:$0xf]
  %v5940 = vld [vmem:[%s5845 + $0x178] sm:$0xf]
  %v5941 = vld [vmem:[%s5845 + $0x17c] sm:$0xf]
  %v5942 = vld [vmem:[%s5845 + $0x180] sm:$0xf]
  %v5943 = vld [vmem:[%s5845 + $0x184] sm:$0xf]
  %v5944 = vld [vmem:[%s5845 + $0x188] sm:$0xf]
  %v5945 = vld [vmem:[%s5845 + $0x18c] sm:$0xf]
  %v5946 = vld [vmem:[%s5845 + $0x190] sm:$0xf]
  %v5947 = vld [vmem:[%s5845 + $0x194] sm:$0xf]
  %v5948 = vld [vmem:[%s5845 + $0x198] sm:$0xf]
  %v5949 = vld [vmem:[%s5845 + $0x19c] sm:$0xf]
  %v5950 = vld [vmem:[%s5845 + $0x1a0] sm:$0xf]
  %v5951 = vld [vmem:[%s5845 + $0x1a4] sm:$0xf]
  %v5952 = vld [vmem:[%s5845 + $0x1a8] sm:$0xf]
  %v5953 = vld [vmem:[%s5845 + $0x1ac] sm:$0xf]
  %v5954 = vld [vmem:[%s5845 + $0x1b0] sm:$0xf]
  %v5955 = vld [vmem:[%s5845 + $0x1b4] sm:$0xf]
  %v5956 = vld [vmem:[%s5845 + $0x1b8] sm:$0xf]
  %v5957 = vld [vmem:[%s5845 + $0x1bc] sm:$0xf]
  %v5958 = vld [vmem:[%s5845 + $0x1c0] sm:$0xf]
  %v5959 = vld [vmem:[%s5845 + $0x1c4] sm:$0xf]
  %v5960 = vld [vmem:[%s5845 + $0x1c8] sm:$0xf]
  %v5961 = vld [vmem:[%s5845 + $0x1cc] sm:$0xf]
  %v5962 = vld [vmem:[%s5845 + $0x1d0] sm:$0xf]
  %v5963 = vld [vmem:[%s5845 + $0x1d4] sm:$0xf]
  %v5964 = vld [vmem:[%s5845 + $0x1d8] sm:$0xf]
  %v5965 = vld [vmem:[%s5845 + $0x1dc] sm:$0xf]
  %v5966 = vld [vmem:[%s5845 + $0x1e0] sm:$0xf]
  %v5967 = vld [vmem:[%s5845 + $0x1e4] sm:$0xf]
  %v5968 = vld [vmem:[%s5845 + $0x1e8] sm:$0xf]
  %v5969 = vld [vmem:[%s5845 + $0x1ec] sm:$0xf]
  %v5970 = vld [vmem:[%s5845 + $0x1f0] sm:$0xf]
  %v5971 = vld [vmem:[%s5845 + $0x1f4] sm:$0xf]
  %v5972 = vld [vmem:[%s5845 + $0x1f8] sm:$0xf]
  %v5973 = vld [vmem:[%s5845 + $0x1fc] sm:$0xf]
  %v5974 = vld [vmem:[%s5845 + $0x200] sm:$0xf]
  %v5975 = vld [vmem:[%s5845 + $0x204] sm:$0xf]
  %v5976 = vld [vmem:[%s5845 + $0x208] sm:$0xf]
  %v5977 = vld [vmem:[%s5845 + $0x20c] sm:$0xf]
  %v5978 = vld [vmem:[%s5845 + $0x210] sm:$0xf]
  %v5979 = vld [vmem:[%s5845 + $0x214] sm:$0xf]
  %v5980 = vld [vmem:[%s5845 + $0x218] sm:$0xf]
  %v5981 = vld [vmem:[%s5845 + $0x21c] sm:$0xf]
  %v5982 = vld [vmem:[%s5845 + $0x220] sm:$0xf]
  %v5983 = vld [vmem:[%s5845 + $0x224] sm:$0xf]
  %v5984 = vld [vmem:[%s5845 + $0x228] sm:$0xf]
  %v5985 = vld [vmem:[%s5845 + $0x22c] sm:$0xf]
  %v5986 = vld [vmem:[%s5845 + $0x230] sm:$0xf]
  %v5987 = vld [vmem:[%s5845 + $0x234] sm:$0xf]
  %v5988 = vld [vmem:[%s5845 + $0x238] sm:$0xf]
  %v5989 = vld [vmem:[%s5845 + $0x23c] sm:$0xf]
  %v5990 = vld [vmem:[%s5845 + $0x240] sm:$0xf]
  %v5991 = vld [vmem:[%s5845 + $0x244] sm:$0xf]
  %v5992 = vld [vmem:[%s5845 + $0x248] sm:$0xf]
  %v5993 = vld [vmem:[%s5845 + $0x24c] sm:$0xf]
  %v5994 = vld [vmem:[%s5845 + $0x250] sm:$0xf]
  %v5995 = vld [vmem:[%s5845 + $0x254] sm:$0xf]
  %v5996 = vld [vmem:[%s5845 + $0x258] sm:$0xf]
  %v5997 = vld [vmem:[%s5845 + $0x25c] sm:$0xf]
  %v5998 = vld [vmem:[%s5845 + $0x260] sm:$0xf]
  %v5999 = vld [vmem:[%s5845 + $0x264] sm:$0xf]
  %v6000 = vld [vmem:[%s5845 + $0x268] sm:$0xf]
  %v6001 = vld [vmem:[%s5845 + $0x26c] sm:$0xf]
  %v6002 = vld [vmem:[%s5845 + $0x270] sm:$0xf]
  %v6003 = vld [vmem:[%s5845 + $0x274] sm:$0xf]
  %v6004 = vld [vmem:[%s5845 + $0x278] sm:$0xf]
  %v6005 = vld [vmem:[%s5845 + $0x27c] sm:$0xf]
  %v6006 = vld [vmem:[%s5845 + $0x280] sm:$0xf]
  %v6007 = vld [vmem:[%s5845 + $0x284] sm:$0xf]
  %v6008 = vld [vmem:[%s5845 + $0x288] sm:$0xf]
  %v6009 = vld [vmem:[%s5845 + $0x28c] sm:$0xf]
  %v6010 = vld [vmem:[%s5845 + $0x290] sm:$0xf]
  %v6011 = vld [vmem:[%s5845 + $0x294] sm:$0xf]
  %v6012 = vld [vmem:[%s5845 + $0x298] sm:$0xf]
  %v6013 = vld [vmem:[%s5845 + $0x29c] sm:$0xf]
  %v6014 = vld [vmem:[%s5845 + $0x2a0] sm:$0xf]
  %v6015 = vld [vmem:[%s5845 + $0x2a4] sm:$0xf]
  %v6016 = vld [vmem:[%s5845 + $0x2a8] sm:$0xf]
  %v6017 = vld [vmem:[%s5845 + $0x2ac] sm:$0xf]
  %v6018 = vld [vmem:[%s5845 + $0x2b0] sm:$0xf]
  %v6019 = vld [vmem:[%s5845 + $0x2b4] sm:$0xf]
  %v6020 = vld [vmem:[%s5845 + $0x2b8] sm:$0xf]
  %v6021 = vld [vmem:[%s5845 + $0x2bc] sm:$0xf]
  %v6022 = vld [vmem:[%s5845 + $0x2c0] sm:$0xf]
  %v6023 = vld [vmem:[%s5845 + $0x2c4] sm:$0xf]
  %v6024 = vld [vmem:[%s5845 + $0x2c8] sm:$0xf]
  %v6025 = vld [vmem:[%s5845 + $0x2cc] sm:$0xf]
  %v6026 = vld [vmem:[%s5845 + $0x2d0] sm:$0xf]
  %v6027 = vld [vmem:[%s5845 + $0x2d4] sm:$0xf]
  %v6028 = vld [vmem:[%s5845 + $0x2d8] sm:$0xf]
  %v6029 = vld [vmem:[%s5845 + $0x2dc] sm:$0xf]
  %v6030 = vld [vmem:[%s5845 + $0x2e0] sm:$0xf]
  %v6031 = vld [vmem:[%s5845 + $0x2e4] sm:$0xf]
  %v6032 = vld [vmem:[%s5845 + $0x2e8] sm:$0xf]
  %v6033 = vld [vmem:[%s5845 + $0x2ec] sm:$0xf]
  %v6034 = vld [vmem:[%s5845 + $0x2f0] sm:$0xf]
  %v6035 = vld [vmem:[%s5845 + $0x2f4] sm:$0xf]
  %v6036 = vld [vmem:[%s5845 + $0x2f8] sm:$0xf]
  %v6037 = vld [vmem:[%s5845 + $0x2fc] sm:$0xf]
  %v6038 = vld [vmem:[%s5845 + $0x300] sm:$0xf]
  %v6039 = vld [vmem:[%s5845 + $0x304] sm:$0xf]
  %v6040 = vld [vmem:[%s5845 + $0x308] sm:$0xf]
  %v6041 = vld [vmem:[%s5845 + $0x30c] sm:$0xf]
  %v6042 = vld [vmem:[%s5845 + $0x310] sm:$0xf]
  %v6043 = vld [vmem:[%s5845 + $0x314] sm:$0xf]
  %v6044 = vld [vmem:[%s5845 + $0x318] sm:$0xf]
  %v6045 = vld [vmem:[%s5845 + $0x31c] sm:$0xf]
  %v6046 = vld [vmem:[%s5845 + $0x320] sm:$0xf]
  %v6047 = vld [vmem:[%s5845 + $0x324] sm:$0xf]
  %v6048 = vld [vmem:[%s5845 + $0x328] sm:$0xf]
  %v6049 = vld [vmem:[%s5845 + $0x32c] sm:$0xf]
  %v6050 = vld [vmem:[%s5845 + $0x330] sm:$0xf]
  %v6051 = vld [vmem:[%s5845 + $0x334] sm:$0xf]
  %v6052 = vld [vmem:[%s5845 + $0x338] sm:$0xf]
  %v6053 = vld [vmem:[%s5845 + $0x33c] sm:$0xf]
  %v6054 = vld [vmem:[%s5845 + $0x340] sm:$0xf]
  %v6055 = vld [vmem:[%s5845 + $0x344] sm:$0xf]
  %v6056 = vld [vmem:[%s5845 + $0x348] sm:$0xf]
  %v6057 = vld [vmem:[%s5845 + $0x34c] sm:$0xf]
  %v6058 = vld [vmem:[%s5845 + $0x350] sm:$0xf]
  %v6059 = vld [vmem:[%s5845 + $0x354] sm:$0xf]
  %v6060 = vld [vmem:[%s5845 + $0x358] sm:$0xf]
  %v6061 = vld [vmem:[%s5845 + $0x35c] sm:$0xf]
  %v6062 = vld [vmem:[%s5845 + $0x360] sm:$0xf]
  %v6063 = vld [vmem:[%s5845 + $0x364] sm:$0xf]
  %v6064 = vld [vmem:[%s5845 + $0x368] sm:$0xf]
  %v6065 = vld [vmem:[%s5845 + $0x36c] sm:$0xf]
  %v6066 = vld [vmem:[%s5845 + $0x370] sm:$0xf]
  %v6067 = vld [vmem:[%s5845 + $0x374] sm:$0xf]
  %v6068 = vld [vmem:[%s5845 + $0x378] sm:$0xf]
  %v6069 = vld [vmem:[%s5845 + $0x37c] sm:$0xf]
  %v6070 = vld [vmem:[%s5845 + $0x380] sm:$0xf]
  %v6071 = vld [vmem:[%s5845 + $0x384] sm:$0xf]
  %v6072 = vld [vmem:[%s5845 + $0x388] sm:$0xf]
  %v6073 = vld [vmem:[%s5845 + $0x38c] sm:$0xf]
  %v6074 = vld [vmem:[%s5845 + $0x390] sm:$0xf]
  %v6075 = vld [vmem:[%s5845 + $0x394] sm:$0xf]
  %v6076 = vld [vmem:[%s5845 + $0x398] sm:$0xf]
  %v6077 = vld [vmem:[%s5845 + $0x39c] sm:$0xf]
  %v6078 = vld [vmem:[%s5845 + $0x3a0] sm:$0xf]
  %v6079 = vld [vmem:[%s5845 + $0x3a4] sm:$0xf]
  %v6080 = vld [vmem:[%s5845 + $0x3a8] sm:$0xf]
  %v6081 = vld [vmem:[%s5845 + $0x3ac] sm:$0xf]
  %v6082 = vld [vmem:[%s5845 + $0x3b0] sm:$0xf]
  %v6083 = vld [vmem:[%s5845 + $0x3b4] sm:$0xf]
  %v6084 = vld [vmem:[%s5845 + $0x3b8] sm:$0xf]
  %v6085 = vld [vmem:[%s5845 + $0x3bc] sm:$0xf]
  %v6086 = vld [vmem:[%s5845 + $0x3c0] sm:$0xf]
  %v6087 = vld [vmem:[%s5845 + $0x3c4] sm:$0xf]
  %v6088 = vld [vmem:[%s5845 + $0x3c8] sm:$0xf]
  %v6089 = vld [vmem:[%s5845 + $0x3cc] sm:$0xf]
  %v6090 = vld [vmem:[%s5845 + $0x3d0] sm:$0xf]
  %v6091 = vld [vmem:[%s5845 + $0x3d4] sm:$0xf]
  %v6092 = vld [vmem:[%s5845 + $0x3d8] sm:$0xf]
  %v6093 = vld [vmem:[%s5845 + $0x3dc] sm:$0xf]
  %v6094 = vld [vmem:[%s5845 + $0x3e0] sm:$0xf]
  %v6095 = vld [vmem:[%s5845 + $0x3e4] sm:$0xf]
  %v6096 = vld [vmem:[%s5845 + $0x3e8] sm:$0xf]
  %v6097 = vld [vmem:[%s5845 + $0x3ec] sm:$0xf]
  %v6098 = vld [vmem:[%s5845 + $0x3f0] sm:$0xf]
  %v6099 = vld [vmem:[%s5845 + $0x3f4] sm:$0xf]
  %v6100 = vld [vmem:[%s5845 + $0x3f8] sm:$0xf]
  %v6101 = vld [vmem:[%s5845 + $0x3fc] sm:$0xf]
  %s6102 = scalar_lea.vmem %s51, 1
  %v6103 = vld [vmem:[%s6102] sm:$0x1]
  %v6105 = vlaneseq
  %v6106 = vshrl.u32 %v6105, 7
  %v6107 = vsub.s32 0, %v6106
  %v6108 = vrot.slane %v6103, %v6107
  %v6366 = vunpack.c.l.b16 %v5846
  %v6367 = vunpack.c.l.b16 %v5847
  %v6368 = vunpack.c.l.b16 %v5848
  %v6369 = vunpack.c.l.b16 %v5849
  %v6370 = vunpack.c.l.b16 %v5850
  %v6371 = vunpack.c.l.b16 %v5851
  %v6372 = vunpack.c.l.b16 %v5852
  %v6373 = vunpack.c.l.b16 %v5853
  %v6374 = vunpack.c.l.b16 %v5854
  %v6375 = vunpack.c.l.b16 %v5855
  %v6376 = vunpack.c.l.b16 %v5856
  %v6377 = vunpack.c.l.b16 %v5857
  %v6378 = vunpack.c.l.b16 %v5858
  %v6379 = vunpack.c.l.b16 %v5859
  %v6380 = vunpack.c.l.b16 %v5860
  %v6381 = vunpack.c.l.b16 %v5861
  %v6382 = vunpack.c.l.b16 %v5862
  %v6383 = vunpack.c.l.b16 %v5863
  %v6384 = vunpack.c.l.b16 %v5864
  %v6385 = vunpack.c.l.b16 %v5865
  %v6386 = vunpack.c.l.b16 %v5866
  %v6387 = vunpack.c.l.b16 %v5867
  %v6388 = vunpack.c.l.b16 %v5868
  %v6389 = vunpack.c.l.b16 %v5869
  %v6390 = vunpack.c.l.b16 %v5870
  %v6391 = vunpack.c.l.b16 %v5871
  %v6392 = vunpack.c.l.b16 %v5872
  %v6393 = vunpack.c.l.b16 %v5873
  %v6394 = vunpack.c.l.b16 %v5874
  %v6395 = vunpack.c.l.b16 %v5875
  %v6396 = vunpack.c.l.b16 %v5876
  %v6397 = vunpack.c.l.b16 %v5877
  %v6398 = vunpack.c.l.b16 %v5878
  %v6399 = vunpack.c.l.b16 %v5879
  %v6400 = vunpack.c.l.b16 %v5880
  %v6401 = vunpack.c.l.b16 %v5881
  %v6402 = vunpack.c.l.b16 %v5882
  %v6403 = vunpack.c.l.b16 %v5883
  %v6404 = vunpack.c.l.b16 %v5884
  %v6405 = vunpack.c.l.b16 %v5885
  %v6406 = vunpack.c.l.b16 %v5886
  %v6407 = vunpack.c.l.b16 %v5887
  %v6408 = vunpack.c.l.b16 %v5888
  %v6409 = vunpack.c.l.b16 %v5889
  %v6410 = vunpack.c.l.b16 %v5890
  %v6411 = vunpack.c.l.b16 %v5891
  %v6412 = vunpack.c.l.b16 %v5892
  %v6413 = vunpack.c.l.b16 %v5893
  %v6414 = vunpack.c.l.b16 %v5894
  %v6415 = vunpack.c.l.b16 %v5895
  %v6416 = vunpack.c.l.b16 %v5896
  %v6417 = vunpack.c.l.b16 %v5897
  %v6418 = vunpack.c.l.b16 %v5898
  %v6419 = vunpack.c.l.b16 %v5899
  %v6420 = vunpack.c.l.b16 %v5900
  %v6421 = vunpack.c.l.b16 %v5901
  %v6422 = vunpack.c.l.b16 %v5902
  %v6423 = vunpack.c.l.b16 %v5903
  %v6424 = vunpack.c.l.b16 %v5904
  %v6425 = vunpack.c.l.b16 %v5905
  %v6426 = vunpack.c.l.b16 %v5906
  %v6427 = vunpack.c.l.b16 %v5907
  %v6428 = vunpack.c.l.b16 %v5908
  %v6429 = vunpack.c.l.b16 %v5909
  %v6430 = vunpack.c.l.b16 %v5910
  %v6431 = vunpack.c.l.b16 %v5911
  %v6432 = vunpack.c.l.b16 %v5912
  %v6433 = vunpack.c.l.b16 %v5913
  %v6434 = vunpack.c.l.b16 %v5914
  %v6435 = vunpack.c.l.b16 %v5915
  %v6436 = vunpack.c.l.b16 %v5916
  %v6437 = vunpack.c.l.b16 %v5917
  %v6438 = vunpack.c.l.b16 %v5918
  %v6439 = vunpack.c.l.b16 %v5919
  %v6440 = vunpack.c.l.b16 %v5920
  %v6441 = vunpack.c.l.b16 %v5921
  %v6442 = vunpack.c.l.b16 %v5922
  %v6443 = vunpack.c.l.b16 %v5923
  %v6444 = vunpack.c.l.b16 %v5924
  %v6445 = vunpack.c.l.b16 %v5925
  %v6446 = vunpack.c.l.b16 %v5926
  %v6447 = vunpack.c.l.b16 %v5927
  %v6448 = vunpack.c.l.b16 %v5928
  %v6449 = vunpack.c.l.b16 %v5929
  %v6450 = vunpack.c.l.b16 %v5930
  %v6451 = vunpack.c.l.b16 %v5931
  %v6452 = vunpack.c.l.b16 %v5932
  %v6453 = vunpack.c.l.b16 %v5933
  %v6454 = vunpack.c.l.b16 %v5934
  %v6455 = vunpack.c.l.b16 %v5935
  %v6456 = vunpack.c.l.b16 %v5936
  %v6457 = vunpack.c.l.b16 %v5937
  %v6458 = vunpack.c.l.b16 %v5938
  %v6459 = vunpack.c.l.b16 %v5939
  %v6460 = vunpack.c.l.b16 %v5940
  %v6461 = vunpack.c.l.b16 %v5941
  %v6462 = vunpack.c.l.b16 %v5942
  %v6463 = vunpack.c.l.b16 %v5943
  %v6464 = vunpack.c.l.b16 %v5944
  %v6465 = vunpack.c.l.b16 %v5945
  %v6466 = vunpack.c.l.b16 %v5946
  %v6467 = vunpack.c.l.b16 %v5947
  %v6468 = vunpack.c.l.b16 %v5948
  %v6469 = vunpack.c.l.b16 %v5949
  %v6470 = vunpack.c.l.b16 %v5950
  %v6471 = vunpack.c.l.b16 %v5951
  %v6472 = vunpack.c.l.b16 %v5952
  %v6473 = vunpack.c.l.b16 %v5953
  %v6474 = vunpack.c.l.b16 %v5954
  %v6475 = vunpack.c.l.b16 %v5955
  %v6476 = vunpack.c.l.b16 %v5956
  %v6477 = vunpack.c.l.b16 %v5957
  %v6478 = vunpack.c.l.b16 %v5958
  %v6479 = vunpack.c.l.b16 %v5959
  %v6480 = vunpack.c.l.b16 %v5960
  %v6481 = vunpack.c.l.b16 %v5961
  %v6482 = vunpack.c.l.b16 %v5962
  %v6483 = vunpack.c.l.b16 %v5963
  %v6484 = vunpack.c.l.b16 %v5964
  %v6485 = vunpack.c.l.b16 %v5965
  %v6486 = vunpack.c.l.b16 %v5966
  %v6487 = vunpack.c.l.b16 %v5967
  %v6488 = vunpack.c.l.b16 %v5968
  %v6489 = vunpack.c.l.b16 %v5969
  %v6490 = vunpack.c.l.b16 %v5970
  %v6491 = vunpack.c.l.b16 %v5971
  %v6492 = vunpack.c.l.b16 %v5972
  %v6493 = vunpack.c.l.b16 %v5973
  %v6494 = vunpack.c.l.b16 %v5974
  %v6495 = vunpack.c.l.b16 %v5975
  %v6496 = vunpack.c.l.b16 %v5976
  %v6497 = vunpack.c.l.b16 %v5977
  %v6498 = vunpack.c.l.b16 %v5978
  %v6499 = vunpack.c.l.b16 %v5979
  %v6500 = vunpack.c.l.b16 %v5980
  %v6501 = vunpack.c.l.b16 %v5981
  %v6502 = vunpack.c.l.b16 %v5982
  %v6503 = vunpack.c.l.b16 %v5983
  %v6504 = vunpack.c.l.b16 %v5984
  %v6505 = vunpack.c.l.b16 %v5985
  %v6506 = vunpack.c.l.b16 %v5986
  %v6507 = vunpack.c.l.b16 %v5987
  %v6508 = vunpack.c.l.b16 %v5988
  %v6509 = vunpack.c.l.b16 %v5989
  %v6510 = vunpack.c.l.b16 %v5990
  %v6511 = vunpack.c.l.b16 %v5991
  %v6512 = vunpack.c.l.b16 %v5992
  %v6513 = vunpack.c.l.b16 %v5993
  %v6514 = vunpack.c.l.b16 %v5994
  %v6515 = vunpack.c.l.b16 %v5995
  %v6516 = vunpack.c.l.b16 %v5996
  %v6517 = vunpack.c.l.b16 %v5997
  %v6518 = vunpack.c.l.b16 %v5998
  %v6519 = vunpack.c.l.b16 %v5999
  %v6520 = vunpack.c.l.b16 %v6000
  %v6521 = vunpack.c.l.b16 %v6001
  %v6522 = vunpack.c.l.b16 %v6002
  %v6523 = vunpack.c.l.b16 %v6003
  %v6524 = vunpack.c.l.b16 %v6004
  %v6525 = vunpack.c.l.b16 %v6005
  %v6526 = vunpack.c.l.b16 %v6006
  %v6527 = vunpack.c.l.b16 %v6007
  %v6528 = vunpack.c.l.b16 %v6008
  %v6529 = vunpack.c.l.b16 %v6009
  %v6530 = vunpack.c.l.b16 %v6010
  %v6531 = vunpack.c.l.b16 %v6011
  %v6532 = vunpack.c.l.b16 %v6012
  %v6533 = vunpack.c.l.b16 %v6013
  %v6534 = vunpack.c.l.b16 %v6014
  %v6535 = vunpack.c.l.b16 %v6015
  %v6536 = vunpack.c.l.b16 %v6016
  %v6537 = vunpack.c.l.b16 %v6017
  %v6538 = vunpack.c.l.b16 %v6018
  %v6539 = vunpack.c.l.b16 %v6019
  %v6540 = vunpack.c.l.b16 %v6020
  %v6541 = vunpack.c.l.b16 %v6021
  %v6542 = vunpack.c.l.b16 %v6022
  %v6543 = vunpack.c.l.b16 %v6023
  %v6544 = vunpack.c.l.b16 %v6024
  %v6545 = vunpack.c.l.b16 %v6025
  %v6546 = vunpack.c.l.b16 %v6026
  %v6547 = vunpack.c.l.b16 %v6027
  %v6548 = vunpack.c.l.b16 %v6028
  %v6549 = vunpack.c.l.b16 %v6029
  %v6550 = vunpack.c.l.b16 %v6030
  %v6551 = vunpack.c.l.b16 %v6031
  %v6552 = vunpack.c.l.b16 %v6032
  %v6553 = vunpack.c.l.b16 %v6033
  %v6554 = vunpack.c.l.b16 %v6034
  %v6555 = vunpack.c.l.b16 %v6035
  %v6556 = vunpack.c.l.b16 %v6036
  %v6557 = vunpack.c.l.b16 %v6037
  %v6558 = vunpack.c.l.b16 %v6038
  %v6559 = vunpack.c.l.b16 %v6039
  %v6560 = vunpack.c.l.b16 %v6040
  %v6561 = vunpack.c.l.b16 %v6041
  %v6562 = vunpack.c.l.b16 %v6042
  %v6563 = vunpack.c.l.b16 %v6043
  %v6564 = vunpack.c.l.b16 %v6044
  %v6565 = vunpack.c.l.b16 %v6045
  %v6566 = vunpack.c.l.b16 %v6046
  %v6567 = vunpack.c.l.b16 %v6047
  %v6568 = vunpack.c.l.b16 %v6048
  %v6569 = vunpack.c.l.b16 %v6049
  %v6570 = vunpack.c.l.b16 %v6050
  %v6571 = vunpack.c.l.b16 %v6051
  %v6572 = vunpack.c.l.b16 %v6052
  %v6573 = vunpack.c.l.b16 %v6053
  %v6574 = vunpack.c.l.b16 %v6054
  %v6575 = vunpack.c.l.b16 %v6055
  %v6576 = vunpack.c.l.b16 %v6056
  %v6577 = vunpack.c.l.b16 %v6057
  %v6578 = vunpack.c.l.b16 %v6058
  %v6579 = vunpack.c.l.b16 %v6059
  %v6580 = vunpack.c.l.b16 %v6060
  %v6581 = vunpack.c.l.b16 %v6061
  %v6582 = vunpack.c.l.b16 %v6062
  %v6583 = vunpack.c.l.b16 %v6063
  %v6584 = vunpack.c.l.b16 %v6064
  %v6585 = vunpack.c.l.b16 %v6065
  %v6586 = vunpack.c.l.b16 %v6066
  %v6587 = vunpack.c.l.b16 %v6067
  %v6588 = vunpack.c.l.b16 %v6068
  %v6589 = vunpack.c.l.b16 %v6069
  %v6590 = vunpack.c.l.b16 %v6070
  %v6591 = vunpack.c.l.b16 %v6071
  %v6592 = vunpack.c.l.b16 %v6072
  %v6593 = vunpack.c.l.b16 %v6073
  %v6594 = vunpack.c.l.b16 %v6074
  %v6595 = vunpack.c.l.b16 %v6075
  %v6596 = vunpack.c.l.b16 %v6076
  %v6597 = vunpack.c.l.b16 %v6077
  %v6598 = vunpack.c.l.b16 %v6078
  %v6599 = vunpack.c.l.b16 %v6079
  %v6600 = vunpack.c.l.b16 %v6080
  %v6601 = vunpack.c.l.b16 %v6081
  %v6602 = vunpack.c.l.b16 %v6082
  %v6603 = vunpack.c.l.b16 %v6083
  %v6604 = vunpack.c.l.b16 %v6084
  %v6605 = vunpack.c.l.b16 %v6085
  %v6606 = vunpack.c.l.b16 %v6086
  %v6607 = vunpack.c.l.b16 %v6087
  %v6608 = vunpack.c.l.b16 %v6088
  %v6609 = vunpack.c.l.b16 %v6089
  %v6610 = vunpack.c.l.b16 %v6090
  %v6611 = vunpack.c.l.b16 %v6091
  %v6612 = vunpack.c.l.b16 %v6092
  %v6613 = vunpack.c.l.b16 %v6093
  %v6614 = vunpack.c.l.b16 %v6094
  %v6615 = vunpack.c.l.b16 %v6095
  %v6616 = vunpack.c.l.b16 %v6096
  %v6617 = vunpack.c.l.b16 %v6097
  %v6618 = vunpack.c.l.b16 %v6098
  %v6619 = vunpack.c.l.b16 %v6099
  %v6620 = vunpack.c.l.b16 %v6100
  %v6621 = vunpack.c.l.b16 %v6101
  %v6622 = vpack.c.b16 %v6367, %v6366
  %v6623 = vpack.c.b16 %v6369, %v6368
  %v6624 = vpack.c.b16 %v6371, %v6370
  %v6625 = vpack.c.b16 %v6373, %v6372
  %v6626 = vpack.c.b16 %v6375, %v6374
  %v6627 = vpack.c.b16 %v6377, %v6376
  %v6628 = vpack.c.b16 %v6379, %v6378
  %v6629 = vpack.c.b16 %v6381, %v6380
  %v6630 = vpack.c.b16 %v6383, %v6382
  %v6631 = vpack.c.b16 %v6385, %v6384
  %v6632 = vpack.c.b16 %v6387, %v6386
  %v6633 = vpack.c.b16 %v6389, %v6388
  %v6634 = vpack.c.b16 %v6391, %v6390
  %v6635 = vpack.c.b16 %v6393, %v6392
  %v6636 = vpack.c.b16 %v6395, %v6394
  %v6637 = vpack.c.b16 %v6397, %v6396
  %v6638 = vpack.c.b16 %v6399, %v6398
  %v6639 = vpack.c.b16 %v6401, %v6400
  %v6640 = vpack.c.b16 %v6403, %v6402
  %v6641 = vpack.c.b16 %v6405, %v6404
  %v6642 = vpack.c.b16 %v6407, %v6406
  %v6643 = vpack.c.b16 %v6409, %v6408
  %v6644 = vpack.c.b16 %v6411, %v6410
  %v6645 = vpack.c.b16 %v6413, %v6412
  %v6646 = vpack.c.b16 %v6415, %v6414
  %v6647 = vpack.c.b16 %v6417, %v6416
  %v6648 = vpack.c.b16 %v6419, %v6418
  %v6649 = vpack.c.b16 %v6421, %v6420
  %v6650 = vpack.c.b16 %v6423, %v6422
  %v6651 = vpack.c.b16 %v6425, %v6424
  %v6652 = vpack.c.b16 %v6427, %v6426
  %v6653 = vpack.c.b16 %v6429, %v6428
  %v6654 = vpack.c.b16 %v6431, %v6430
  %v6655 = vpack.c.b16 %v6433, %v6432
  %v6656 = vpack.c.b16 %v6435, %v6434
  %v6657 = vpack.c.b16 %v6437, %v6436
  %v6658 = vpack.c.b16 %v6439, %v6438
  %v6659 = vpack.c.b16 %v6441, %v6440
  %v6660 = vpack.c.b16 %v6443, %v6442
  %v6661 = vpack.c.b16 %v6445, %v6444
  %v6662 = vpack.c.b16 %v6447, %v6446
  %v6663 = vpack.c.b16 %v6449, %v6448
  %v6664 = vpack.c.b16 %v6451, %v6450
  %v6665 = vpack.c.b16 %v6453, %v6452
  %v6666 = vpack.c.b16 %v6455, %v6454
  %v6667 = vpack.c.b16 %v6457, %v6456
  %v6668 = vpack.c.b16 %v6459, %v6458
  %v6669 = vpack.c.b16 %v6461, %v6460
  %v6670 = vpack.c.b16 %v6463, %v6462
  %v6671 = vpack.c.b16 %v6465, %v6464
  %v6672 = vpack.c.b16 %v6467, %v6466
  %v6673 = vpack.c.b16 %v6469, %v6468
  %v6674 = vpack.c.b16 %v6471, %v6470
  %v6675 = vpack.c.b16 %v6473, %v6472
  %v6676 = vpack.c.b16 %v6475, %v6474
  %v6677 = vpack.c.b16 %v6477, %v6476
  %v6678 = vpack.c.b16 %v6479, %v6478
  %v6679 = vpack.c.b16 %v6481, %v6480
  %v6680 = vpack.c.b16 %v6483, %v6482
  %v6681 = vpack.c.b16 %v6485, %v6484
  %v6682 = vpack.c.b16 %v6487, %v6486
  %v6683 = vpack.c.b16 %v6489, %v6488
  %v6684 = vpack.c.b16 %v6491, %v6490
  %v6685 = vpack.c.b16 %v6493, %v6492
  %v6686 = vpack.c.b16 %v6495, %v6494
  %v6687 = vpack.c.b16 %v6497, %v6496
  %v6688 = vpack.c.b16 %v6499, %v6498
  %v6689 = vpack.c.b16 %v6501, %v6500
  %v6690 = vpack.c.b16 %v6503, %v6502
  %v6691 = vpack.c.b16 %v6505, %v6504
  %v6692 = vpack.c.b16 %v6507, %v6506
  %v6693 = vpack.c.b16 %v6509, %v6508
  %v6694 = vpack.c.b16 %v6511, %v6510
  %v6695 = vpack.c.b16 %v6513, %v6512
  %v6696 = vpack.c.b16 %v6515, %v6514
  %v6697 = vpack.c.b16 %v6517, %v6516
  %v6698 = vpack.c.b16 %v6519, %v6518
  %v6699 = vpack.c.b16 %v6521, %v6520
  %v6700 = vpack.c.b16 %v6523, %v6522
  %v6701 = vpack.c.b16 %v6525, %v6524
  %v6702 = vpack.c.b16 %v6527, %v6526
  %v6703 = vpack.c.b16 %v6529, %v6528
  %v6704 = vpack.c.b16 %v6531, %v6530
  %v6705 = vpack.c.b16 %v6533, %v6532
  %v6706 = vpack.c.b16 %v6535, %v6534
  %v6707 = vpack.c.b16 %v6537, %v6536
  %v6708 = vpack.c.b16 %v6539, %v6538
  %v6709 = vpack.c.b16 %v6541, %v6540
  %v6710 = vpack.c.b16 %v6543, %v6542
  %v6711 = vpack.c.b16 %v6545, %v6544
  %v6712 = vpack.c.b16 %v6547, %v6546
  %v6713 = vpack.c.b16 %v6549, %v6548
  %v6714 = vpack.c.b16 %v6551, %v6550
  %v6715 = vpack.c.b16 %v6553, %v6552
  %v6716 = vpack.c.b16 %v6555, %v6554
  %v6717 = vpack.c.b16 %v6557, %v6556
  %v6718 = vpack.c.b16 %v6559, %v6558
  %v6719 = vpack.c.b16 %v6561, %v6560
  %v6720 = vpack.c.b16 %v6563, %v6562
  %v6721 = vpack.c.b16 %v6565, %v6564
  %v6722 = vpack.c.b16 %v6567, %v6566
  %v6723 = vpack.c.b16 %v6569, %v6568
  %v6724 = vpack.c.b16 %v6571, %v6570
  %v6725 = vpack.c.b16 %v6573, %v6572
  %v6726 = vpack.c.b16 %v6575, %v6574
  %v6727 = vpack.c.b16 %v6577, %v6576
  %v6728 = vpack.c.b16 %v6579, %v6578
  %v6729 = vpack.c.b16 %v6581, %v6580
  %v6730 = vpack.c.b16 %v6583, %v6582
  %v6731 = vpack.c.b16 %v6585, %v6584
  %v6732 = vpack.c.b16 %v6587, %v6586
  %v6733 = vpack.c.b16 %v6589, %v6588
  %v6734 = vpack.c.b16 %v6591, %v6590
  %v6735 = vpack.c.b16 %v6593, %v6592
  %v6736 = vpack.c.b16 %v6595, %v6594
  %v6737 = vpack.c.b16 %v6597, %v6596
  %v6738 = vpack.c.b16 %v6599, %v6598
  %v6739 = vpack.c.b16 %v6601, %v6600
  %v6740 = vpack.c.b16 %v6603, %v6602
  %v6741 = vpack.c.b16 %v6605, %v6604
  %v6742 = vpack.c.b16 %v6607, %v6606
  %v6743 = vpack.c.b16 %v6609, %v6608
  %v6744 = vpack.c.b16 %v6611, %v6610
  %v6745 = vpack.c.b16 %v6613, %v6612
  %v6746 = vpack.c.b16 %v6615, %v6614
  %v6747 = vpack.c.b16 %v6617, %v6616
  %v6748 = vpack.c.b16 %v6619, %v6618
  %v6749 = vpack.c.b16 %v6621, %v6620
  %6878 = vmatprep.subr.bf16.mxu0 0
  %6879 = vmatpush1.bf16.msra.mxu0 %v6629
  %6880 = vmatprep.subr.bf16.mxu0 0
  %6881 = vmatpush1.bf16.msra.mxu0 %v6628
  %6882 = vmatprep.subr.bf16.mxu0 0
  %6883 = vmatpush1.bf16.msra.mxu0 %v6627
  %6884 = vmatprep.subr.bf16.mxu0 0
  %6885 = vmatpush1.bf16.msra.mxu0 %v6626
  %6886 = vmatprep.subr.bf16.mxu0 0
  %6887 = vmatpush1.bf16.msra.mxu0 %v6625
  %6888 = vmatprep.subr.bf16.mxu0 0
  %6889 = vmatpush1.bf16.msra.mxu0 %v6624
  %6890 = vmatprep.subr.bf16.mxu0 0
  %6891 = vmatpush1.bf16.msra.mxu0 %v6623
  %6892 = vmatprep.subr.bf16.mxu0 0
  %6893 = vmatpush1.bf16.msra.mxu0 %v6622
  %6894 = vmatprep.subr.bf16.mxu0 0
  %6895 = vmatpush2.bf16.msra.mxu0 %v6637
  %6896 = vmatprep.subr.bf16.mxu0 0
  %6897 = vmatpush2.bf16.msra.mxu0 %v6636
  %6898 = vmatprep.subr.bf16.mxu0 0
  %6899 = vmatpush2.bf16.msra.mxu0 %v6635
  %6900 = vmatprep.subr.bf16.mxu0 0
  %6901 = vmatpush2.bf16.msra.mxu0 %v6634
  %6902 = vmatprep.subr.bf16.mxu0 0
  %6903 = vmatpush2.bf16.msra.mxu0 %v6633
  %6904 = vmatprep.subr.bf16.mxu0 0
  %6905 = vmatpush2.bf16.msra.mxu0 %v6632
  %6906 = vmatprep.subr.bf16.mxu0 0
  %6907 = vmatpush2.bf16.msra.mxu0 %v6631
  %6908 = vmatprep.subr.bf16.mxu0 0
  %6909 = vmatpush2.bf16.msra.mxu0 %v6630
  %6910 = vmatprep.mubr.bf16.mxu0 %v5830
  %6911 = vmatmul.mubr.bf16.gmra.mxu0 %v5829
  %v6912 = vpop.f32.mrf.mxu0
  %v6913 = vadd.f32 %v6108, %v6912
  %v6914 = vpop.f32.mrf.mxu0
  %v6915 = vpop.f32.mrf.mxu0
  %v6916 = vadd.f32 %v6108, %v6915
  %v6917 = vpop.f32.mrf.mxu0
  %6918 = vdwg.mxu0
  %6919 = vmatprep.subr.bf16.mxu0 0
  %6920 = vmatpush1.bf16.msra.mxu0 %v6645
  %6921 = vmatprep.subr.bf16.mxu0 0
  %6922 = vmatpush1.bf16.msra.mxu0 %v6644
  %6923 = vmatprep.subr.bf16.mxu0 0
  %6924 = vmatpush1.bf16.msra.mxu0 %v6643
  %6925 = vmatprep.subr.bf16.mxu0 0
  %6926 = vmatpush1.bf16.msra.mxu0 %v6642
  %6927 = vmatprep.subr.bf16.mxu0 0
  %6928 = vmatpush1.bf16.msra.mxu0 %v6641
  %6929 = vmatprep.subr.bf16.mxu0 0
  %6930 = vmatpush1.bf16.msra.mxu0 %v6640
  %6931 = vmatprep.subr.bf16.mxu0 0
  %6932 = vmatpush1.bf16.msra.mxu0 %v6639
  %6933 = vmatprep.subr.bf16.mxu0 0
  %6934 = vmatpush1.bf16.msra.mxu0 %v6638
  %6935 = vmatprep.subr.bf16.mxu0 0
  %6936 = vmatpush2.bf16.msra.mxu0 %v6653
  %6937 = vmatprep.subr.bf16.mxu0 0
  %6938 = vmatpush2.bf16.msra.mxu0 %v6652
  %6939 = vmatprep.subr.bf16.mxu0 0
  %6940 = vmatpush2.bf16.msra.mxu0 %v6651
  %6941 = vmatprep.subr.bf16.mxu0 0
  %6942 = vmatpush2.bf16.msra.mxu0 %v6650
  %6943 = vmatprep.subr.bf16.mxu0 0
  %6944 = vmatpush2.bf16.msra.mxu0 %v6649
  %6945 = vmatprep.subr.bf16.mxu0 0
  %6946 = vmatpush2.bf16.msra.mxu0 %v6648
  %6947 = vmatprep.subr.bf16.mxu0 0
  %6948 = vmatpush2.bf16.msra.mxu0 %v6647
  %6949 = vmatprep.subr.bf16.mxu0 0
  %6950 = vmatpush2.bf16.msra.mxu0 %v6646
  %6951 = vmatprep.mubr.bf16.mxu0 %v5832
  %6952 = vmatmul.mubr.bf16.gmra.mxu0 %v5831
  %v6953 = vpop.f32.mrf.mxu0
  %v6954 = vadd.f32 %v6913, %v6953
  %v6955 = vpop.f32.mrf.mxu0
  %v6956 = vpop.f32.mrf.mxu0
  %v6957 = vadd.f32 %v6916, %v6956
  %v6958 = vpop.f32.mrf.mxu0
  %6959 = vdwg.mxu0
  %6960 = vmatprep.subr.bf16.mxu0 0
  %6961 = vmatpush1.bf16.msra.mxu0 %v6661
  %6962 = vmatprep.subr.bf16.mxu0 0
  %6963 = vmatpush1.bf16.msra.mxu0 %v6660
  %6964 = vmatprep.subr.bf16.mxu0 0
  %6965 = vmatpush1.bf16.msra.mxu0 %v6659
  %6966 = vmatprep.subr.bf16.mxu0 0
  %6967 = vmatpush1.bf16.msra.mxu0 %v6658
  %6968 = vmatprep.subr.bf16.mxu0 0
  %6969 = vmatpush1.bf16.msra.mxu0 %v6657
  %6970 = vmatprep.subr.bf16.mxu0 0
  %6971 = vmatpush1.bf16.msra.mxu0 %v6656
  %6972 = vmatprep.subr.bf16.mxu0 0
  %6973 = vmatpush1.bf16.msra.mxu0 %v6655
  %6974 = vmatprep.subr.bf16.mxu0 0
  %6975 = vmatpush1.bf16.msra.mxu0 %v6654
  %6976 = vmatprep.subr.bf16.mxu0 0
  %6977 = vmatpush2.bf16.msra.mxu0 %v6669
  %6978 = vmatprep.subr.bf16.mxu0 0
  %6979 = vmatpush2.bf16.msra.mxu0 %v6668
  %6980 = vmatprep.subr.bf16.mxu0 0
  %6981 = vmatpush2.bf16.msra.mxu0 %v6667
  %6982 = vmatprep.subr.bf16.mxu0 0
  %6983 = vmatpush2.bf16.msra.mxu0 %v6666
  %6984 = vmatprep.subr.bf16.mxu0 0
  %6985 = vmatpush2.bf16.msra.mxu0 %v6665
  %6986 = vmatprep.subr.bf16.mxu0 0
  %6987 = vmatpush2.bf16.msra.mxu0 %v6664
  %6988 = vmatprep.subr.bf16.mxu0 0
  %6989 = vmatpush2.bf16.msra.mxu0 %v6663
  %6990 = vmatprep.subr.bf16.mxu0 0
  %6991 = vmatpush2.bf16.msra.mxu0 %v6662
  %6992 = vmatprep.mubr.bf16.mxu0 %v5834
  %6993 = vmatmul.mubr.bf16.gmra.mxu0 %v5833
  %v6994 = vpop.f32.mrf.mxu0
  %v6995 = vadd.f32 %v6954, %v6994
  %v6996 = vpop.f32.mrf.mxu0
  %v6997 = vpop.f32.mrf.mxu0
  %v6998 = vadd.f32 %v6957, %v6997
  %v6999 = vpop.f32.mrf.mxu0
  %7000 = vdwg.mxu0
  %7001 = vmatprep.subr.bf16.mxu0 0
  %7002 = vmatpush1.bf16.msra.mxu0 %v6677
  %7003 = vmatprep.subr.bf16.mxu0 0
  %7004 = vmatpush1.bf16.msra.mxu0 %v6676
  %7005 = vmatprep.subr.bf16.mxu0 0
  %7006 = vmatpush1.bf16.msra.mxu0 %v6675
  %7007 = vmatprep.subr.bf16.mxu0 0
  %7008 = vmatpush1.bf16.msra.mxu0 %v6674
  %7009 = vmatprep.subr.bf16.mxu0 0
  %7010 = vmatpush1.bf16.msra.mxu0 %v6673
  %7011 = vmatprep.subr.bf16.mxu0 0
  %7012 = vmatpush1.bf16.msra.mxu0 %v6672
  %7013 = vmatprep.subr.bf16.mxu0 0
  %7014 = vmatpush1.bf16.msra.mxu0 %v6671
  %7015 = vmatprep.subr.bf16.mxu0 0
  %7016 = vmatpush1.bf16.msra.mxu0 %v6670
  %7017 = vmatprep.subr.bf16.mxu0 0
  %7018 = vmatpush2.bf16.msra.mxu0 %v6685
  %7019 = vmatprep.subr.bf16.mxu0 0
  %7020 = vmatpush2.bf16.msra.mxu0 %v6684
  %7021 = vmatprep.subr.bf16.mxu0 0
  %7022 = vmatpush2.bf16.msra.mxu0 %v6683
  %7023 = vmatprep.subr.bf16.mxu0 0
  %7024 = vmatpush2.bf16.msra.mxu0 %v6682
  %7025 = vmatprep.subr.bf16.mxu0 0
  %7026 = vmatpush2.bf16.msra.mxu0 %v6681
  %7027 = vmatprep.subr.bf16.mxu0 0
  %7028 = vmatpush2.bf16.msra.mxu0 %v6680
  %7029 = vmatprep.subr.bf16.mxu0 0
  %7030 = vmatpush2.bf16.msra.mxu0 %v6679
  %7031 = vmatprep.subr.bf16.mxu0 0
  %7032 = vmatpush2.bf16.msra.mxu0 %v6678
  %7033 = vmatprep.mubr.bf16.mxu0 %v5836
  %7034 = vmatmul.mubr.bf16.gmra.mxu0 %v5835
  %v7035 = vpop.f32.mrf.mxu0
  %v7036 = vadd.f32 %v6995, %v7035
  %v7037 = vpop.f32.mrf.mxu0
  %v7038 = vpop.f32.mrf.mxu0
  %v7039 = vadd.f32 %v6998, %v7038
  %v7040 = vpop.f32.mrf.mxu0
  %7041 = vdwg.mxu0
  %7042 = vmatprep.subr.bf16.mxu0 0
  %7043 = vmatpush1.bf16.msra.mxu0 %v6693
  %7044 = vmatprep.subr.bf16.mxu0 0
  %7045 = vmatpush1.bf16.msra.mxu0 %v6692
  %7046 = vmatprep.subr.bf16.mxu0 0
  %7047 = vmatpush1.bf16.msra.mxu0 %v6691
  %7048 = vmatprep.subr.bf16.mxu0 0
  %7049 = vmatpush1.bf16.msra.mxu0 %v6690
  %7050 = vmatprep.subr.bf16.mxu0 0
  %7051 = vmatpush1.bf16.msra.mxu0 %v6689
  %7052 = vmatprep.subr.bf16.mxu0 0
  %7053 = vmatpush1.bf16.msra.mxu0 %v6688
  %7054 = vmatprep.subr.bf16.mxu0 0
  %7055 = vmatpush1.bf16.msra.mxu0 %v6687
  %7056 = vmatprep.subr.bf16.mxu0 0
  %7057 = vmatpush1.bf16.msra.mxu0 %v6686
  %7058 = vmatprep.subr.bf16.mxu0 0
  %7059 = vmatpush2.bf16.msra.mxu0 %v6701
  %7060 = vmatprep.subr.bf16.mxu0 0
  %7061 = vmatpush2.bf16.msra.mxu0 %v6700
  %7062 = vmatprep.subr.bf16.mxu0 0
  %7063 = vmatpush2.bf16.msra.mxu0 %v6699
  %7064 = vmatprep.subr.bf16.mxu0 0
  %7065 = vmatpush2.bf16.msra.mxu0 %v6698
  %7066 = vmatprep.subr.bf16.mxu0 0
  %7067 = vmatpush2.bf16.msra.mxu0 %v6697
  %7068 = vmatprep.subr.bf16.mxu0 0
  %7069 = vmatpush2.bf16.msra.mxu0 %v6696
  %7070 = vmatprep.subr.bf16.mxu0 0
  %7071 = vmatpush2.bf16.msra.mxu0 %v6695
  %7072 = vmatprep.subr.bf16.mxu0 0
  %7073 = vmatpush2.bf16.msra.mxu0 %v6694
  %7074 = vmatprep.mubr.bf16.mxu0 %v5838
  %7075 = vmatmul.mubr.bf16.gmra.mxu0 %v5837
  %v7076 = vpop.f32.mrf.mxu0
  %v7077 = vadd.f32 %v7036, %v7076
  %v7078 = vpop.f32.mrf.mxu0
  %v7079 = vpop.f32.mrf.mxu0
  %v7080 = vadd.f32 %v7039, %v7079
  %v7081 = vpop.f32.mrf.mxu0
  %7082 = vdwg.mxu0
  %7083 = vmatprep.subr.bf16.mxu0 0
  %7084 = vmatpush1.bf16.msra.mxu0 %v6709
  %7085 = vmatprep.subr.bf16.mxu0 0
  %7086 = vmatpush1.bf16.msra.mxu0 %v6708
  %7087 = vmatprep.subr.bf16.mxu0 0
  %7088 = vmatpush1.bf16.msra.mxu0 %v6707
  %7089 = vmatprep.subr.bf16.mxu0 0
  %7090 = vmatpush1.bf16.msra.mxu0 %v6706
  %7091 = vmatprep.subr.bf16.mxu0 0
  %7092 = vmatpush1.bf16.msra.mxu0 %v6705
  %7093 = vmatprep.subr.bf16.mxu0 0
  %7094 = vmatpush1.bf16.msra.mxu0 %v6704
  %7095 = vmatprep.subr.bf16.mxu0 0
  %7096 = vmatpush1.bf16.msra.mxu0 %v6703
  %7097 = vmatprep.subr.bf16.mxu0 0
  %7098 = vmatpush1.bf16.msra.mxu0 %v6702
  %7099 = vmatprep.subr.bf16.mxu0 0
  %7100 = vmatpush2.bf16.msra.mxu0 %v6717
  %7101 = vmatprep.subr.bf16.mxu0 0
  %7102 = vmatpush2.bf16.msra.mxu0 %v6716
  %7103 = vmatprep.subr.bf16.mxu0 0
  %7104 = vmatpush2.bf16.msra.mxu0 %v6715
  %7105 = vmatprep.subr.bf16.mxu0 0
  %7106 = vmatpush2.bf16.msra.mxu0 %v6714
  %7107 = vmatprep.subr.bf16.mxu0 0
  %7108 = vmatpush2.bf16.msra.mxu0 %v6713
  %7109 = vmatprep.subr.bf16.mxu0 0
  %7110 = vmatpush2.bf16.msra.mxu0 %v6712
  %7111 = vmatprep.subr.bf16.mxu0 0
  %7112 = vmatpush2.bf16.msra.mxu0 %v6711
  %7113 = vmatprep.subr.bf16.mxu0 0
  %7114 = vmatpush2.bf16.msra.mxu0 %v6710
  %7115 = vmatprep.mubr.bf16.mxu0 %v5840
  %7116 = vmatmul.mubr.bf16.gmra.mxu0 %v5839
  %v7117 = vpop.f32.mrf.mxu0
  %v7118 = vadd.f32 %v7077, %v7117
  %v7119 = vpop.f32.mrf.mxu0
  %v7120 = vpop.f32.mrf.mxu0
  %v7121 = vadd.f32 %v7080, %v7120
  %v7122 = vpop.f32.mrf.mxu0
  %7123 = vdwg.mxu0
  %7124 = vmatprep.subr.bf16.mxu0 0
  %7125 = vmatpush1.bf16.msra.mxu0 %v6725
  %7126 = vmatprep.subr.bf16.mxu0 0
  %7127 = vmatpush1.bf16.msra.mxu0 %v6724
  %7128 = vmatprep.subr.bf16.mxu0 0
  %7129 = vmatpush1.bf16.msra.mxu0 %v6723
  %7130 = vmatprep.subr.bf16.mxu0 0
  %7131 = vmatpush1.bf16.msra.mxu0 %v6722
  %7132 = vmatprep.subr.bf16.mxu0 0
  %7133 = vmatpush1.bf16.msra.mxu0 %v6721
  %7134 = vmatprep.subr.bf16.mxu0 0
  %7135 = vmatpush1.bf16.msra.mxu0 %v6720
  %7136 = vmatprep.subr.bf16.mxu0 0
  %7137 = vmatpush1.bf16.msra.mxu0 %v6719
  %7138 = vmatprep.subr.bf16.mxu0 0
  %7139 = vmatpush1.bf16.msra.mxu0 %v6718
  %7140 = vmatprep.subr.bf16.mxu0 0
  %7141 = vmatpush2.bf16.msra.mxu0 %v6733
  %7142 = vmatprep.subr.bf16.mxu0 0
  %7143 = vmatpush2.bf16.msra.mxu0 %v6732
  %7144 = vmatprep.subr.bf16.mxu0 0
  %7145 = vmatpush2.bf16.msra.mxu0 %v6731
  %7146 = vmatprep.subr.bf16.mxu0 0
  %7147 = vmatpush2.bf16.msra.mxu0 %v6730
  %7148 = vmatprep.subr.bf16.mxu0 0
  %7149 = vmatpush2.bf16.msra.mxu0 %v6729
  %7150 = vmatprep.subr.bf16.mxu0 0
  %7151 = vmatpush2.bf16.msra.mxu0 %v6728
  %7152 = vmatprep.subr.bf16.mxu0 0
  %7153 = vmatpush2.bf16.msra.mxu0 %v6727
  %7154 = vmatprep.subr.bf16.mxu0 0
  %7155 = vmatpush2.bf16.msra.mxu0 %v6726
  %7156 = vmatprep.mubr.bf16.mxu0 %v5842
  %7157 = vmatmul.mubr.bf16.gmra.mxu0 %v5841
  %v7158 = vpop.f32.mrf.mxu0
  %v7159 = vadd.f32 %v7118, %v7158
  %v7160 = vpop.f32.mrf.mxu0
  %v7161 = vpop.f32.mrf.mxu0
  %v7162 = vadd.f32 %v7121, %v7161
  %v7163 = vpop.f32.mrf.mxu0
  %7164 = vdwg.mxu0
  %7165 = vmatprep.subr.bf16.mxu0 0
  %7166 = vmatpush1.bf16.msra.mxu0 %v6741
  %7167 = vmatprep.subr.bf16.mxu0 0
  %7168 = vmatpush1.bf16.msra.mxu0 %v6740
  %7169 = vmatprep.subr.bf16.mxu0 0
  %7170 = vmatpush1.bf16.msra.mxu0 %v6739
  %7171 = vmatprep.subr.bf16.mxu0 0
  %7172 = vmatpush1.bf16.msra.mxu0 %v6738
  %7173 = vmatprep.subr.bf16.mxu0 0
  %7174 = vmatpush1.bf16.msra.mxu0 %v6737
  %7175 = vmatprep.subr.bf16.mxu0 0
  %7176 = vmatpush1.bf16.msra.mxu0 %v6736
  %7177 = vmatprep.subr.bf16.mxu0 0
  %7178 = vmatpush1.bf16.msra.mxu0 %v6735
  %7179 = vmatprep.subr.bf16.mxu0 0
  %7180 = vmatpush1.bf16.msra.mxu0 %v6734
  %7181 = vmatprep.subr.bf16.mxu0 0
  %7182 = vmatpush2.bf16.msra.mxu0 %v6749
  %7183 = vmatprep.subr.bf16.mxu0 0
  %7184 = vmatpush2.bf16.msra.mxu0 %v6748
  %7185 = vmatprep.subr.bf16.mxu0 0
  %7186 = vmatpush2.bf16.msra.mxu0 %v6747
  %7187 = vmatprep.subr.bf16.mxu0 0
  %7188 = vmatpush2.bf16.msra.mxu0 %v6746
  %7189 = vmatprep.subr.bf16.mxu0 0
  %7190 = vmatpush2.bf16.msra.mxu0 %v6745
  %7191 = vmatprep.subr.bf16.mxu0 0
  %7192 = vmatpush2.bf16.msra.mxu0 %v6744
  %7193 = vmatprep.subr.bf16.mxu0 0
  %7194 = vmatpush2.bf16.msra.mxu0 %v6743
  %7195 = vmatprep.subr.bf16.mxu0 0
  %7196 = vmatpush2.bf16.msra.mxu0 %v6742
  %7197 = vmatprep.mubr.bf16.mxu0 %v5844
  %7198 = vmatmul.mubr.bf16.gmra.mxu0 %v5843
  %v7199 = vpop.f32.mrf.mxu0
  %v7200 = vadd.f32 %v7159, %v7199
  %v7201 = vpop.f32.mrf.mxu0
  %v7202 = vpop.f32.mrf.mxu0
  %v7203 = vadd.f32 %v7162, %v7202
  %v7204 = vpop.f32.mrf.mxu0
  %7205 = vdwg.mxu0
  %v7206 = vadd.f32 %v5265, %v7200
  %v7207 = vadd.f32 %v5266, %v7203
  %v7208 = vsel %vm237, %v7206, 0.0
  %7209 = vadd.xlane.f32.xlu0 %v7208
  %v7210 = vpop.xlane.xlu0 %7209
  %v7211 = vsel %vm237, %v7207, 0.0
  %7212 = vadd.xlane.f32.xlu0 %v7211
  %v7213 = vpop.xlane.xlu0 %7212
  %v7214 = vmul.f32 %v7210, %v1070
  %v7215 = vmul.f32 %v7213, %v1070
  %v7216 = vsub.f32 %v7206, %v7214
  %v7217 = vsub.f32 %v7207, %v7215
  %v7218 = vmul.f32 %v7216, %v7216
  %v7219 = vmul.f32 %v7217, %v7217
  %v7220 = vsel %vm237, %v7218, 0.0
  %7221 = vadd.xlane.f32.xlu0 %v7220
  %v7222 = vpop.xlane.xlu0 %7221
  %v7223 = vsel %vm237, %v7219, 0.0
  %7224 = vadd.xlane.f32.xlu0 %v7223
  %v7225 = vpop.xlane.xlu0 %7224
  %v7226 = vmul.f32 %v7222, %v1070
  %v7227 = vmul.f32 %v7225, %v1070
  %v7228 = vadd.f32 %v7226, 1e-05
  %v7229 = vadd.f32 %v7227, 1e-05
  %v7230 = vrsqrt.pop %v7228
  %v7231 = vrsqrt.pop %v7229
  %v7232 = vmul.f32 %v7216, %v7230
  %v7233 = vmul.f32 %v7217, %v7231
  %s7234 = scalar_lea.vmem %s53, 1
  %v7235 = vld [vmem:[%s7234] sm:$0x1]
  %v7237 = vlaneseq
  %v7238 = vshrl.u32 %v7237, 7
  %v7239 = vsub.s32 0, %v7238
  %v7240 = vrot.slane %v7235, %v7239
  %v7242 = vmul.f32 %v7232, %v7240
  %v7243 = vmul.f32 %v7233, %v7240
  %s7244 = scalar_lea.vmem %s55, 1
  %v7245 = vld [vmem:[%s7244] sm:$0x1]
  %v7247 = vlaneseq
  %v7248 = vshrl.u32 %v7247, 7
  %v7249 = vsub.s32 0, %v7248
  %v7250 = vrot.slane %v7245, %v7249
  %v7252 = vadd.f32 %v7242, %v7250
  %v7253 = vadd.f32 %v7243, %v7250
  %v7254 = vpack.c.bf16 %v7253, %v7252
  %v7255 = vld [vmem:[%s57] sm:$0xf]
  %v7256 = vld [vmem:[%s57 + $0x4] sm:$0xf]
  %v7257 = vld [vmem:[%s59] sm:$0x1]
  %v7259 = vlaneseq
  %v7260 = vshrl.u32 %v7259, 7
  %v7261 = vsub.s32 0, %v7260
  %v7262 = vrot.slane %v7257, %v7261
  %v7266 = vunpack.c.l.b16 %v7255
  %v7267 = vunpack.c.l.b16 %v7256
  %v7268 = vpack.c.b16 %v7267, %v7266
  %v7271 = vsel %vm237, %v7254, 0
  %7273 = vmatprep.subr.bf16.mxu0 0
  %7274 = vmatpush1.bf16.msra.mxu0 0
  %7275 = vmatprep.subr.bf16.mxu0 0
  %7276 = vmatpush1.bf16.msra.mxu0 0
  %7277 = vmatprep.subr.bf16.mxu0 0
  %7278 = vmatpush1.bf16.msra.mxu0 0
  %7279 = vmatprep.subr.bf16.mxu0 0
  %7280 = vmatpush1.bf16.msra.mxu0 0
  %7281 = vmatprep.subr.bf16.mxu0 0
  %7282 = vmatpush1.bf16.msra.mxu0 0
  %7283 = vmatprep.subr.bf16.mxu0 0
  %7284 = vmatpush1.bf16.msra.mxu0 0
  %7285 = vmatprep.subr.bf16.mxu0 0
  %7286 = vmatpush1.bf16.msra.mxu0 0
  %7287 = vmatprep.subr.bf16.mxu0 0
  %7288 = vmatpush1.bf16.msra.mxu0 %v7268
  %7289 = vmatprep.subr.bf16.mxu0 0
  %7290 = vmatpush2.bf16.msra.mxu0 0
  %7291 = vmatprep.subr.bf16.mxu0 0
  %7292 = vmatpush2.bf16.msra.mxu0 0
  %7293 = vmatprep.subr.bf16.mxu0 0
  %7294 = vmatpush2.bf16.msra.mxu0 0
  %7295 = vmatprep.subr.bf16.mxu0 0
  %7296 = vmatpush2.bf16.msra.mxu0 0
  %7297 = vmatprep.subr.bf16.mxu0 0
  %7298 = vmatpush2.bf16.msra.mxu0 0
  %7299 = vmatprep.subr.bf16.mxu0 0
  %7300 = vmatpush2.bf16.msra.mxu0 0
  %7301 = vmatprep.subr.bf16.mxu0 0
  %7302 = vmatpush2.bf16.msra.mxu0 0
  %7303 = vmatprep.subr.bf16.mxu0 0
  %7304 = vmatpush2.bf16.msra.mxu0 0
  %7305 = vmatprep.mubr.bf16.mxu0 0
  %7306 = vmatmul.mubr.bf16.gmra.mxu0 %v7271
  %v7307 = vpop.f32.mrf.mxu0
  %v7308 = vadd.f32 %v7262, %v7307
  %v7309 = vpop.f32.mrf.mxu0
  %v7310 = vpop.f32.mrf.mxu0
  %v7311 = vadd.f32 %v7262, %v7310
  %v7312 = vpop.f32.mrf.mxu0
  %7313 = vdwg.mxu0
  %7314 = vst [vmem:[%s61] sm:$0xff] %v7308
  %7315 = vst [vmem:[%s61 + $0x8] sm:$0xff] %v7311
  // Predicated region
  $region122: #{gnn_arma_transformer.1} parent=0 // pred_check
    _
  $region123: #{gnn_arma_transformer.1} parent=0 // pred_check_branch
    %7317 = sbr.rel (0) target = $region125
  $region124: #{gnn_arma_transformer.1} parent=0 // pred_region
    _
  $region125: #{gnn_arma_transformer.1} parent=0 // pred_fallthru
    _
  // Predicated region
  $region126: #{gnn_arma_transformer.1} parent=0 // pred_check
    _
  $region127: #{gnn_arma_transformer.1} parent=0 // pred_check_branch
    %7319 = sbr.rel (0) target = $region129
  $region128: #{gnn_arma_transformer.1} parent=0 // pred_region
    _
  $region129: #{gnn_arma_transformer.1} parent=0 // pred_fallthru
    _

</llo_original>
